<compile_context>
chip_gen: v5e
topology: v5e:2x2
jax: 0.10.0
libtpu: 0.0.40
codegen_flags: <defaults>
</compile_context>

<pallas_src>
import functools

import jax
import jax.numpy as jnp
from jax.experimental import pallas as pl
from jax.experimental.pallas import tpu as pltpu


# ---------------------------------------------------------------------------
# Pallas kernels
# ---------------------------------------------------------------------------

def _matmul_bias_kernel(x_ref, w_ref, b_ref, o_ref, *, relu):
    """x @ w (MXU, f32 accum) + bias [+ ReLU]."""
    acc = jnp.dot(x_ref[...], w_ref[...], preferred_element_type=jnp.float32)
    y = acc + b_ref[...]
    if relu:
        y = jnp.maximum(y, 0.0)
    o_ref[...] = y.astype(o_ref.dtype)


def _matmul_bias_res_kernel(x_ref, w_ref, b_ref, r_ref, o_ref, *, scale, relu):
    """(x @ w + bias) * scale + residual [+ ReLU]   (final conv2d epilogue)."""
    acc = jnp.dot(x_ref[...], w_ref[...], preferred_element_type=jnp.float32)
    y = (acc + b_ref[...]) * scale + r_ref[...]
    if relu:
        y = jnp.maximum(y, 0.0)
    o_ref[...] = y.astype(o_ref.dtype)


def _srm_gate_kernel(x_ref, c0_ref, c1_ref, s_ref, b_ref, o_ref, *, hw):
    """SRM: per-(N, C) mean / unbiased-std -> cfc mix -> BN -> sigmoid -> x*g."""
    x = x_ref[...]                                            # (N, HW, TC) f32
    mean = jnp.sum(x, axis=1, keepdims=True) * (1.0 / hw)     # (N, 1, TC)
    d = x - mean
    var = jnp.sum(d * d, axis=1, keepdims=True) * (1.0 / (hw - 1))  # unbiased
    std = jnp.sqrt(var + 1e-5)                                # matches eps=1e-5
    z = mean * c0_ref[...][None] + std * c1_ref[...][None]    # (N, 1, TC)
    zh = z * s_ref[...][None] + b_ref[...][None]              # folded BN(eps=1e-5)
    g = 1.0 / (1.0 + jnp.exp(-zh))                            # sigmoid (EUP)
    o_ref[...] = (x * g).astype(o_ref.dtype)


# ---------------------------------------------------------------------------
# Kernel wrappers
# ---------------------------------------------------------------------------

def _round_up(x, m):
    return ((x + m - 1) // m) * m


def _pick_tn(n):
    # Prefer 256-wide tiles (v6e/v7x MXU) when it still leaves >=2 grid steps,
    # otherwise 128 (v5e MXU width, divides every padded Cout we use).
    return 256 if (n % 256 == 0 and n >= 512) else 128


def _mm_bias(x_bf16, w_bf16, b_f32, *, relu):
    mp, k = x_bf16.shape
    k2, n = w_bf16.shape
    assert k == k2 and n % 128 == 0
    tn = _pick_tn(n)
    kern = functools.partial(_matmul_bias_kernel, relu=relu)
    return pl.pallas_call(
        kern,
        out_shape=jax.ShapeDtypeStruct((mp, n), jnp.float32),
        grid=(n // tn,),
        in_specs=[
            pl.BlockSpec((mp, k), lambda j: (0, 0)),     # activations resident
            pl.BlockSpec((k, tn), lambda j: (0, j)),     # stream weight tiles
            pl.BlockSpec((1, tn), lambda j: (0, j)),
        ],
        out_specs=pl.BlockSpec((mp, tn), lambda j: (0, j)),
        compiler_params=pltpu.CompilerParams(
            dimension_semantics=("parallel",)),
    )(x_bf16, w_bf16, b_f32)


def _mm_bias_res(x_bf16, w_bf16, b_f32, res_f32, *, scale, relu):
    mp, k = x_bf16.shape
    k2, n = w_bf16.shape
    assert k == k2 and n % 128 == 0 and res_f32.shape == (mp, n)
    tn = _pick_tn(n)
    kern = functools.partial(_matmul_bias_res_kernel, scale=scale, relu=relu)
    return pl.pallas_call(
        kern,
        out_shape=jax.ShapeDtypeStruct((mp, n), jnp.float32),
        grid=(n // tn,),
        in_specs=[
            pl.BlockSpec((mp, k), lambda j: (0, 0)),
            pl.BlockSpec((k, tn), lambda j: (0, j)),
            pl.BlockSpec((1, tn), lambda j: (0, j)),
            pl.BlockSpec((mp, tn), lambda j: (0, j)),
        ],
        out_specs=pl.BlockSpec((mp, tn), lambda j: (0, j)),
        compiler_params=pltpu.CompilerParams(
            dimension_semantics=("parallel",)),
    )(x_bf16, w_bf16, b_f32, res_f32)


def _srm_gate(x3, c0, c1, s, b):
    n, hw, c = x3.shape
    tc = 256
    assert c % tc == 0
    kern = functools.partial(_srm_gate_kernel, hw=hw)
    return pl.pallas_call(
        kern,
        out_shape=jax.ShapeDtypeStruct((n, hw, c), jnp.float32),
        grid=(c // tc,),
        in_specs=[
            pl.BlockSpec((n, hw, tc), lambda j: (0, 0, j)),
            pl.BlockSpec((1, tc), lambda j: (0, j)),
            pl.BlockSpec((1, tc), lambda j: (0, j)),
            pl.BlockSpec((1, tc), lambda j: (0, j)),
            pl.BlockSpec((1, tc), lambda j: (0, j)),
        ],
        out_specs=pl.BlockSpec((n, hw, tc), lambda j: (0, 0, j)),
        compiler_params=pltpu.CompilerParams(
            dimension_semantics=("parallel",)),
    )(x3, c0, c1, s, b)


# ---------------------------------------------------------------------------
# Glue (tiny, XLA-side): padding + 3-tap im2col for the (1,3)/(3,1) convs
# ---------------------------------------------------------------------------

def _pad_rows_to(a, mp):
    m = a.shape[0]
    if mp != m:
        a = jnp.pad(a, ((0, mp - m),) + ((0, 0),) * (a.ndim - 1))
    return a


def _pad_last_to(a, kp):
    k = a.shape[-1]
    if kp != k:
        a = jnp.pad(a, ((0, 0),) * (a.ndim - 1) + ((0, kp - k),))
    return a


def _im2col_1x3(y):
    """kernel (1,3), padding (0,1), stride 1 -> (M, 3*C), rows ordered (kw, c)."""
    n, h, w, c = y.shape
    yp = jnp.pad(y, ((0, 0), (0, 0), (1, 1), (0, 0)))
    taps = [yp[:, :, kw:kw + w, :] for kw in range(3)]
    return jnp.stack(taps, axis=3).reshape(n * h * w, 3 * c)


def _im2col_3x1(y):
    """kernel (3,1), padding (1,0), stride 1 -> (M, 3*C), rows ordered (kh, c)."""
    n, h, w, c = y.shape
    yp = jnp.pad(y, ((0, 0), (1, 1), (0, 0), (0, 0)))
    taps = [yp[:, kh:kh + h, :, :] for kh in range(3)]
    return jnp.stack(taps, axis=3).reshape(n * h * w, 3 * c)


# ---------------------------------------------------------------------------
# Parameters (synthetic, deterministic). BN folded offline, weights bf16.
# ---------------------------------------------------------------------------

def _init_basic_conv_folded(key, cin, cout, kh, kw):
    """BasicConv2d: conv(bias=False) + BN(eps=1e-3) folded to (K,Cout)W, bias."""
    k1, k2, k3, k4, k5 = jax.random.split(key, 5)
    w = jax.random.normal(k1, (cout, cin, kh, kw), jnp.float32) / jnp.sqrt(
        float(cin * kh * kw))
    gamma = 1.0 + 0.1 * jax.random.normal(k2, (cout,), jnp.float32)
    beta = 0.1 * jax.random.normal(k3, (cout,), jnp.float32)
    rmean = 0.1 * jax.random.normal(k4, (cout,), jnp.float32)
    rvar = 1.0 + 0.1 * jnp.abs(jax.random.normal(k5, (cout,), jnp.float32))
    scale = gamma / jnp.sqrt(rvar + 1e-3)
    wmat = jnp.transpose(w, (2, 3, 1, 0)).reshape(kh * kw * cin, cout)
    wmat = wmat * scale[None, :]
    bias = beta - rmean * scale
    return wmat, bias


def init_block8_params(key):
    C = 1792
    ks = jax.random.split(key, 10)

    # branch0 (1x1) and branch1[0] (1x1) share the input -> fuse into one W.
    w_b0, b_b0 = _init_basic_conv_folded(ks[0], C, 192, 1, 1)
    w_b10, b_b10 = _init_basic_conv_folded(ks[1], C, 192, 1, 1)
    w01 = jnp.concatenate([w_b0, w_b10], axis=1).astype(jnp.bfloat16)   # (1792,384)
    b01 = jnp.concatenate([b_b0, b_b10])[None, :].astype(jnp.float32)

    def _pad_wb(wmat, bias, kp, npad):                # lane-dense padding
        k, nc = wmat.shape
        wmat = jnp.pad(wmat, ((0, kp - k), (0, npad - nc)))
        bias = jnp.pad(bias, (0, npad - nc))
        return wmat.astype(jnp.bfloat16), bias[None, :].astype(jnp.float32)

    w11f, b11f = _init_basic_conv_folded(ks[2], 192, 192, 1, 3)   # (576,192)
    w11, b11 = _pad_wb(w11f, b11f, 640, 256)
    w12f, b12f = _init_basic_conv_folded(ks[3], 192, 192, 3, 1)
    w12, b12 = _pad_wb(w12f, b12f, 640, 256)

    # conv3d: Conv2d(2176, 384, 1) with bias (no BN / ReLU)
    w3 = (jax.random.normal(ks[4], (2176, 384), jnp.float32)
          / jnp.sqrt(2176.0)).astype(jnp.bfloat16)
    b3 = (0.05 * jax.random.normal(ks[5], (384,), jnp.float32))[None, :]

    # conv2d: Conv2d(384, 1792, 1) with bias
    w2 = (jax.random.normal(ks[6], (384, 1792), jnp.float32)
          / jnp.sqrt(384.0)).astype(jnp.bfloat16)
    b2 = (0.05 * jax.random.normal(ks[7], (1792,), jnp.float32))[None, :]

    # SRM: cfc (C,2) (PyTorch inits to 0 -> would give g=0.5; use small random
    # synthetic values to exercise the path), BN(C) eps=1e-5 folded.
    cfc = 0.1 * jax.random.normal(ks[8], (C, 2), jnp.float32)
    kb = jax.random.split(ks[9], 4)
    g = 1.0 + 0.1 * jax.random.normal(kb[0], (C,), jnp.float32)
    beta = 0.1 * jax.random.normal(kb[1], (C,), jnp.float32)
    rm = 0.1 * jax.random.normal(kb[2], (C,), jnp.float32)
    rv = 1.0 + 0.1 * jnp.abs(jax.random.normal(kb[3], (C,), jnp.float32))
    s_bn = g / jnp.sqrt(rv + 1e-5)
    b_bn = beta - rm * s_bn
    srm = (cfc[:, 0][None, :], cfc[:, 1][None, :],
           s_bn[None, :], b_bn[None, :])

    return {"w01": w01, "b01": b01, "w11": w11, "b11": b11,
            "w12": w12, "b12": b12, "w3": w3, "b3": b3,
            "w2": w2, "b2": b2, "srm": srm}


# ---------------------------------------------------------------------------
# Block8 forward
# ---------------------------------------------------------------------------

@functools.partial(jax.jit, static_argnames=("scale", "no_relu"))
def block8(x_nchw, params, *, scale=1.0, no_relu=False):
    x = jnp.transpose(x_nchw, (0, 2, 3, 1)).astype(jnp.float32)     # NHWC
    N, H, W, C = x.shape
    M = N * H * W
    Mp = _round_up(M, 16)                       # bf16 sublane-aligned rows

    xr_p = _pad_rows_to(x.reshape(M, C), Mp)    # f32 residual, padded rows = 0
    xr_bf = xr_p.astype(jnp.bfloat16)

    # --- branch2: SRM gating (x2 = x * g) ---
    x2 = _srm_gate(x.reshape(N, H * W, C), *params["srm"])          # (N,HW,C)
    x2_p = _pad_rows_to(x2.reshape(M, C), Mp)

    # --- branch0 + branch1[0]: fused 1x1 conv+BN+ReLU -> (Mp, 384) ---
    y01 = _mm_bias(xr_bf, params["w01"], params["b01"], relu=True)
    x0_p = y01[:, :192]                                             # branch0
    y = y01[:M, 192:384].reshape(N, H, W, 192)                      # branch1[0]

    # --- branch1[1]: (1,3) conv, padding (0,1) ---
    p = _im2col_1x3(y)
    p = _pad_last_to(_pad_rows_to(p, Mp), params["w11"].shape[0])
    y = _mm_bias(p.astype(jnp.bfloat16), params["w11"], params["b11"],
                 relu=True)[:M, :192].reshape(N, H, W, 192)

    # --- branch1[2]: (3,1) conv, padding (1,0) ---
    p = _im2col_3x1(y)
    p = _pad_last_to(_pad_rows_to(p, Mp), params["w12"].shape[0])
    x1_p = _mm_bias(p.astype(jnp.bfloat16), params["w12"], params["b12"],
                    relu=True)[:, :192]

    # --- concat (192 + 192 + 1792 = 2176 channels) + conv3d (bias only) ---
    cat = jnp.concatenate([x0_p, x1_p, x2_p], axis=-1)              # (Mp, 2176)
    y3 = _mm_bias(cat.astype(jnp.bfloat16), params["w3"], params["b3"],
                  relu=False)                                       # (Mp, 384)

    # --- conv2d + *scale + residual + ReLU, fused in one kernel ---
    out_p = _mm_bias_res(y3.astype(jnp.bfloat16), params["w2"], params["b2"],
                         xr_p, scale=float(scale), relu=not no_relu)

    out = out_p[:M].reshape(N, H, W, C)
    # TODO(synk): return NHWC directly if the downstream consumer accepts it
    # (saves the minor-dim transpose); NCHW kept to match the PyTorch module.
    return jnp.transpose(out, (0, 3, 1, 2))


# ---------------------------------------------------------------------------

if __name__ == "__main__":
    key = jax.random.PRNGKey(0)
    kp, kx = jax.random.split(key)
    params = init_block8_params(kp)

    # Module hard-codes 1792 input channels; Block8 normally sees 3x3 spatial.
    x = jax.random.normal(kx, (2, 1792, 3, 3), jnp.float32)

    out = block8(x, params, scale=1.0, no_relu=False)
    out = jax.block_until_ready(out)

    assert out.shape == (2, 1792, 3, 3), out.shape
    assert bool(jnp.all(jnp.isfinite(out)))
    assert bool(jnp.all(out >= 0.0))      # final ReLU
    print("KERNEL_OK")
</pallas_src>

<mosaic_0001>
module attributes {stable_mosaic.version = 11 : i64} {
  func.func @_matmul_bias_kernel(%arg0: i32, %arg1: memref<32x1792xbf16, #tpu.memory_space<vmem>>, %arg2: memref<1792x128xbf16, #tpu.memory_space<vmem>>, %arg3: memref<1x128xf32, #tpu.memory_space<vmem>>, %arg4: memref<32x128xf32, #tpu.memory_space<vmem>>) attributes {dimension_semantics = [#tpu.dimension_semantics<parallel>], iteration_bounds = array<i64: 3>, scalar_prefetch = 0 : i64, scratch_operands = 0 : i64, tpu.core_type = #tpu.core_type<tc>, window_params = [{pipeline_mode = #tpu.pipeline_mode<synchronous>, transform_indices = @transform_0, window_bounds = array<i64: 32, 1792>}, {transform_indices = @transform_1, window_bounds = array<i64: 1792, 128>}, {transform_indices = @transform_2, window_bounds = array<i64: 1, 128>}, {transform_indices = @transform_3, window_bounds = array<i64: 32, 128>}]} {
    %c0 = arith.constant 0 : index
    %c0_0 = arith.constant 0 : index
    %0 = vector.load %arg1[%c0, %c0_0] : memref<32x1792xbf16, #tpu.memory_space<vmem>>, vector<32x1792xbf16>
    %c0_1 = arith.constant 0 : index
    %c0_2 = arith.constant 0 : index
    %1 = vector.load %arg2[%c0_1, %c0_2] : memref<1792x128xbf16, #tpu.memory_space<vmem>>, vector<1792x128xbf16>
    %cst = arith.constant dense<0.000000e+00> : vector<32x128xf32>
    %2 = tpu.matmul %0, %1, %cst {dimension_numbers = #tpu.dot_dimension_numbers<[1], [0], [0], [1], [0, 0, 1, 1], [], []>} : vector<32x1792xbf16>, vector<1792x128xbf16>, vector<32x128xf32> -> vector<32x128xf32>
    %c0_3 = arith.constant 0 : index
    %c0_4 = arith.constant 0 : index
    %3 = vector.load %arg3[%c0_3, %c0_4] : memref<1x128xf32, #tpu.memory_space<vmem>>, vector<1x128xf32>
    %4 = vector.broadcast %3 : vector<1x128xf32> to vector<32x128xf32>
    %5 = arith.addf %2, %4 : vector<32x128xf32>
    %cst_5 = arith.constant 0.000000e+00 : f32
    %6 = vector.broadcast %cst_5 : f32 to vector<32x128xf32>
    %7 = arith.maximumf %5, %6 : vector<32x128xf32>
    %c0_6 = arith.constant 0 : index
    %c0_7 = arith.constant 0 : index
    %8 = vector.load %arg4[%c0_6, %c0_7] : memref<32x128xf32, #tpu.memory_space<vmem>>, vector<32x128xf32>
    tpu.vector_store %arg4[%c0_6, %c0_7], %7 {strides = array<i32>} : memref<32x128xf32, #tpu.memory_space<vmem>>, vector<32x128xf32>,
    return
  }
  func.func @transform_0(%arg0: i32) -> (i32, i32) {
    %c0_i32 = arith.constant 0 : i32
    %c0_i32_0 = arith.constant 0 : i32
    %c0_i32_1 = arith.constant 0 : i32
    return %c0_i32, %c0_i32_0 : i32, i32
  }
  func.func @transform_1(%arg0: i32) -> (i32, i32) {
    %c0_i32 = arith.constant 0 : i32
    %c0_i32_0 = arith.constant 0 : i32
    return %c0_i32, %arg0 : i32, i32
  }
  func.func @transform_2(%arg0: i32) -> (i32, i32) {
    %c0_i32 = arith.constant 0 : i32
    %c0_i32_0 = arith.constant 0 : i32
    return %c0_i32, %arg0 : i32, i32
  }
  func.func @transform_3(%arg0: i32) -> (i32, i32) {
    %c0_i32 = arith.constant 0 : i32
    %c0_i32_0 = arith.constant 0 : i32
    return %c0_i32, %arg0 : i32, i32
  }
}

module attributes {stable_mosaic.version = 11 : i64} {
  func.func @_matmul_bias_kernel(%arg0: i32, %arg1: memref<32x640xbf16, #tpu.memory_space<vmem>>, %arg2: memref<640x128xbf16, #tpu.memory_space<vmem>>, %arg3: memref<1x128xf32, #tpu.memory_space<vmem>>, %arg4: memref<32x128xf32, #tpu.memory_space<vmem>>) attributes {dimension_semantics = [#tpu.dimension_semantics<parallel>], iteration_bounds = array<i64: 2>, scalar_prefetch = 0 : i64, scratch_operands = 0 : i64, tpu.core_type = #tpu.core_type<tc>, window_params = [{pipeline_mode = #tpu.pipeline_mode<synchronous>, transform_indices = @transform_0, window_bounds = array<i64: 32, 640>}, {transform_indices = @transform_1, window_bounds = array<i64: 640, 128>}, {transform_indices = @transform_2, window_bounds = array<i64: 1, 128>}, {transform_indices = @transform_3, window_bounds = array<i64: 32, 128>}]} {
    %c0 = arith.constant 0 : index
    %c0_0 = arith.constant 0 : index
    %0 = vector.load %arg1[%c0, %c0_0] : memref<32x640xbf16, #tpu.memory_space<vmem>>, vector<32x640xbf16>
    %c0_1 = arith.constant 0 : index
    %c0_2 = arith.constant 0 : index
    %1 = vector.load %arg2[%c0_1, %c0_2] : memref<640x128xbf16, #tpu.memory_space<vmem>>, vector<640x128xbf16>
    %cst = arith.constant dense<0.000000e+00> : vector<32x128xf32>
    %2 = tpu.matmul %0, %1, %cst {dimension_numbers = #tpu.dot_dimension_numbers<[1], [0], [0], [1], [0, 0, 1, 1], [], []>} : vector<32x640xbf16>, vector<640x128xbf16>, vector<32x128xf32> -> vector<32x128xf32>
    %c0_3 = arith.constant 0 : index
    %c0_4 = arith.constant 0 : index
    %3 = vector.load %arg3[%c0_3, %c0_4] : memref<1x128xf32, #tpu.memory_space<vmem>>, vector<1x128xf32>
    %4 = vector.broadcast %3 : vector<1x128xf32> to vector<32x128xf32>
    %5 = arith.addf %2, %4 : vector<32x128xf32>
    %cst_5 = arith.constant 0.000000e+00 : f32
    %6 = vector.broadcast %cst_5 : f32 to vector<32x128xf32>
    %7 = arith.maximumf %5, %6 : vector<32x128xf32>
    %c0_6 = arith.constant 0 : index
    %c0_7 = arith.constant 0 : index
    %8 = vector.load %arg4[%c0_6, %c0_7] : memref<32x128xf32, #tpu.memory_space<vmem>>, vector<32x128xf32>
    tpu.vector_store %arg4[%c0_6, %c0_7], %7 {strides = array<i32>} : memref<32x128xf32, #tpu.memory_space<vmem>>, vector<32x128xf32>,
    return
  }
  func.func @transform_0(%arg0: i32) -> (i32, i32) {
    %c0_i32 = arith.constant 0 : i32
    %c0_i32_0 = arith.constant 0 : i32
    %c0_i32_1 = arith.constant 0 : i32
    return %c0_i32, %c0_i32_0 : i32, i32
  }
  func.func @transform_1(%arg0: i32) -> (i32, i32) {
    %c0_i32 = arith.constant 0 : i32
    %c0_i32_0 = arith.constant 0 : i32
    return %c0_i32, %arg0 : i32, i32
  }
  func.func @transform_2(%arg0: i32) -> (i32, i32) {
    %c0_i32 = arith.constant 0 : i32
    %c0_i32_0 = arith.constant 0 : i32
    return %c0_i32, %arg0 : i32, i32
  }
  func.func @transform_3(%arg0: i32) -> (i32, i32) {
    %c0_i32 = arith.constant 0 : i32
    %c0_i32_0 = arith.constant 0 : i32
    return %c0_i32, %arg0 : i32, i32
  }
}

module attributes {stable_mosaic.version = 11 : i64} {
  func.func @_srm_gate_kernel(%arg0: i32, %arg1: memref<2x9x256xf32, #tpu.memory_space<vmem>>, %arg2: memref<1x256xf32, #tpu.memory_space<vmem>>, %arg3: memref<1x256xf32, #tpu.memory_space<vmem>>, %arg4: memref<1x256xf32, #tpu.memory_space<vmem>>, %arg5: memref<1x256xf32, #tpu.memory_space<vmem>>, %arg6: memref<2x9x256xf32, #tpu.memory_space<vmem>>) attributes {dimension_semantics = [#tpu.dimension_semantics<parallel>], iteration_bounds = array<i64: 7>, scalar_prefetch = 0 : i64, scratch_operands = 0 : i64, tpu.core_type = #tpu.core_type<tc>, window_params = [{transform_indices = @transform_0, window_bounds = array<i64: 2, 9, 256>}, {transform_indices = @transform_1, window_bounds = array<i64: 1, 256>}, {transform_indices = @transform_2, window_bounds = array<i64: 1, 256>}, {transform_indices = @transform_3, window_bounds = array<i64: 1, 256>}, {transform_indices = @transform_4, window_bounds = array<i64: 1, 256>}, {transform_indices = @transform_5, window_bounds = array<i64: 2, 9, 256>}]} {
    %c0 = arith.constant 0 : index
    %c0_0 = arith.constant 0 : index
    %c0_1 = arith.constant 0 : index
    %0 = vector.load %arg1[%c0, %c0_0, %c0_1] : memref<2x9x256xf32, #tpu.memory_space<vmem>>, vector<2x9x256xf32>
    %cst = arith.constant dense<0.000000e+00> : vector<2x256xf32>
    %1 = vector.multi_reduction <add>, %0, %cst [1] : vector<2x9x256xf32> to vector<2x256xf32>
    %2 = vector.shape_cast %1 : vector<2x256xf32> to vector<2x1x256xf32>
    %cst_2 = arith.constant 0.111111112 : f32
    %3 = vector.broadcast %cst_2 : f32 to vector<2x1x256xf32>
    %4 = arith.mulf %2, %3 : vector<2x1x256xf32>
    %5 = vector.broadcast %4 : vector<2x1x256xf32> to vector<2x9x256xf32>
    %6 = arith.subf %0, %5 : vector<2x9x256xf32>
    %7 = arith.mulf %6, %6 : vector<2x9x256xf32>
    %cst_3 = arith.constant dense<0.000000e+00> : vector<2x256xf32>
    %8 = vector.multi_reduction <add>, %7, %cst_3 [1] : vector<2x9x256xf32> to vector<2x256xf32>
    %9 = vector.shape_cast %8 : vector<2x256xf32> to vector<2x1x256xf32>
    %cst_4 = arith.constant 1.250000e-01 : f32
    %10 = vector.broadcast %cst_4 : f32 to vector<2x1x256xf32>
    %11 = arith.mulf %9, %10 : vector<2x1x256xf32>
    %cst_5 = arith.constant 9.99999974E-6 : f32
    %12 = vector.broadcast %cst_5 : f32 to vector<2x1x256xf32>
    %13 = arith.addf %11, %12 : vector<2x1x256xf32>
    %14 = math.sqrt %13 : vector<2x1x256xf32>
    %c0_6 = arith.constant 0 : index
    %c0_7 = arith.constant 0 : index
    %15 = vector.load %arg2[%c0_6, %c0_7] : memref<1x256xf32, #tpu.memory_space<vmem>>, vector<1x256xf32>
    %16 = vector.shape_cast %15 : vector<1x256xf32> to vector<1x1x256xf32>
    %17 = vector.broadcast %16 : vector<1x1x256xf32> to vector<2x1x256xf32>
    %18 = arith.mulf %4, %17 : vector<2x1x256xf32>
    %c0_8 = arith.constant 0 : index
    %c0_9 = arith.constant 0 : index
    %19 = vector.load %arg3[%c0_8, %c0_9] : memref<1x256xf32, #tpu.memory_space<vmem>>, vector<1x256xf32>
    %20 = vector.shape_cast %19 : vector<1x256xf32> to vector<1x1x256xf32>
    %21 = vector.broadcast %20 : vector<1x1x256xf32> to vector<2x1x256xf32>
    %22 = arith.mulf %14, %21 : vector<2x1x256xf32>
    %23 = arith.addf %18, %22 : vector<2x1x256xf32>
    %c0_10 = arith.constant 0 : index
    %c0_11 = arith.constant 0 : index
    %24 = vector.load %arg4[%c0_10, %c0_11] : memref<1x256xf32, #tpu.memory_space<vmem>>, vector<1x256xf32>
    %25 = vector.shape_cast %24 : vector<1x256xf32> to vector<1x1x256xf32>
    %26 = vector.broadcast %25 : vector<1x1x256xf32> to vector<2x1x256xf32>
    %27 = arith.mulf %23, %26 : vector<2x1x256xf32>
    %c0_12 = arith.constant 0 : index
    %c0_13 = arith.constant 0 : index
    %28 = vector.load %arg5[%c0_12, %c0_13] : memref<1x256xf32, #tpu.memory_space<vmem>>, vector<1x256xf32>
    %29 = vector.shape_cast %28 : vector<1x256xf32> to vector<1x1x256xf32>
    %30 = vector.broadcast %29 : vector<1x1x256xf32> to vector<2x1x256xf32>
    %31 = arith.addf %27, %30 : vector<2x1x256xf32>
    %cst_14 = arith.constant 0.000000e+00 : f32
    %32 = vector.broadcast %cst_14 : f32 to vector<2x1x256xf32>
    %33 = arith.subf %32, %31 : vector<2x1x256xf32>
    %34 = math.exp %33 : vector<2x1x256xf32>
    %cst_15 = arith.constant 1.000000e+00 : f32
    %35 = vector.broadcast %cst_15 : f32 to vector<2x1x256xf32>
    %36 = arith.addf %35, %34 : vector<2x1x256xf32>
    %cst_16 = arith.constant 1.000000e+00 : f32
    %37 = vector.broadcast %cst_16 : f32 to vector<2x1x256xf32>
    %38 = arith.divf %37, %36 : vector<2x1x256xf32>
    %39 = vector.broadcast %38 : vector<2x1x256xf32> to vector<2x9x256xf32>
    %40 = arith.mulf %0, %39 : vector<2x9x256xf32>
    %c0_17 = arith.constant 0 : index
    %c0_18 = arith.constant 0 : index
    %c0_19 = arith.constant 0 : index
    %41 = vector.load %arg6[%c0_17, %c0_18, %c0_19] : memref<2x9x256xf32, #tpu.memory_space<vmem>>, vector<2x9x256xf32>
    tpu.vector_store %arg6[%c0_17, %c0_18, %c0_19], %40 {strides = array<i32>} : memref<2x9x256xf32, #tpu.memory_space<vmem>>, vector<2x9x256xf32>,
    return
  }
  func.func @transform_0(%arg0: i32) -> (i32, i32, i32) {
    %c0_i32 = arith.constant 0 : i32
    %c0_i32_0 = arith.constant 0 : i32
    %c0_i32_1 = arith.constant 0 : i32
    return %c0_i32, %c0_i32_0, %arg0 : i32, i32, i32
  }
  func.func @transform_1(%arg0: i32) -> (i32, i32) {
    %c0_i32 = arith.constant 0 : i32
    %c0_i32_0 = arith.constant 0 : i32
    return %c0_i32, %arg0 : i32, i32
  }
  func.func @transform_2(%arg0: i32) -> (i32, i32) {
    %c0_i32 = arith.constant 0 : i32
    %c0_i32_0 = arith.constant 0 : i32
    return %c0_i32, %arg0 : i32, i32
  }
  func.func @transform_3(%arg0: i32) -> (i32, i32) {
    %c0_i32 = arith.constant 0 : i32
    %c0_i32_0 = arith.constant 0 : i32
    return %c0_i32, %arg0 : i32, i32
  }
  func.func @transform_4(%arg0: i32) -> (i32, i32) {
    %c0_i32 = arith.constant 0 : i32
    %c0_i32_0 = arith.constant 0 : i32
    return %c0_i32, %arg0 : i32, i32
  }
  func.func @transform_5(%arg0: i32) -> (i32, i32, i32) {
    %c0_i32 = arith.constant 0 : i32
    %c0_i32_0 = arith.constant 0 : i32
    %c0_i32_1 = arith.constant 0 : i32
    return %c0_i32, %c0_i32_0, %arg0 : i32, i32, i32
  }
}

module attributes {stable_mosaic.version = 11 : i64} {
  func.func @_matmul_bias_kernel(%arg0: i32, %arg1: memref<32x2176xbf16, #tpu.memory_space<vmem>>, %arg2: memref<2176x128xbf16, #tpu.memory_space<vmem>>, %arg3: memref<1x128xf32, #tpu.memory_space<vmem>>, %arg4: memref<32x128xf32, #tpu.memory_space<vmem>>) attributes {dimension_semantics = [#tpu.dimension_semantics<parallel>], iteration_bounds = array<i64: 3>, scalar_prefetch = 0 : i64, scratch_operands = 0 : i64, tpu.core_type = #tpu.core_type<tc>, window_params = [{pipeline_mode = #tpu.pipeline_mode<synchronous>, transform_indices = @transform_0, window_bounds = array<i64: 32, 2176>}, {transform_indices = @transform_1, window_bounds = array<i64: 2176, 128>}, {transform_indices = @transform_2, window_bounds = array<i64: 1, 128>}, {transform_indices = @transform_3, window_bounds = array<i64: 32, 128>}]} {
    %c0 = arith.constant 0 : index
    %c0_0 = arith.constant 0 : index
    %0 = vector.load %arg1[%c0, %c0_0] : memref<32x2176xbf16, #tpu.memory_space<vmem>>, vector<32x2176xbf16>
    %c0_1 = arith.constant 0 : index
    %c0_2 = arith.constant 0 : index
    %1 = vector.load %arg2[%c0_1, %c0_2] : memref<2176x128xbf16, #tpu.memory_space<vmem>>, vector<2176x128xbf16>
    %cst = arith.constant dense<0.000000e+00> : vector<32x128xf32>
    %2 = tpu.matmul %0, %1, %cst {dimension_numbers = #tpu.dot_dimension_numbers<[1], [0], [0], [1], [0, 0, 1, 1], [], []>} : vector<32x2176xbf16>, vector<2176x128xbf16>, vector<32x128xf32> -> vector<32x128xf32>
    %c0_3 = arith.constant 0 : index
    %c0_4 = arith.constant 0 : index
    %3 = vector.load %arg3[%c0_3, %c0_4] : memref<1x128xf32, #tpu.memory_space<vmem>>, vector<1x128xf32>
    %4 = vector.broadcast %3 : vector<1x128xf32> to vector<32x128xf32>
    %5 = arith.addf %2, %4 : vector<32x128xf32>
    %c0_5 = arith.constant 0 : index
    %c0_6 = arith.constant 0 : index
    %6 = vector.load %arg4[%c0_5, %c0_6] : memref<32x128xf32, #tpu.memory_space<vmem>>, vector<32x128xf32>
    tpu.vector_store %arg4[%c0_5, %c0_6], %5 {strides = array<i32>} : memref<32x128xf32, #tpu.memory_space<vmem>>, vector<32x128xf32>,
    return
  }
  func.func @transform_0(%arg0: i32) -> (i32, i32) {
    %c0_i32 = arith.constant 0 : i32
    %c0_i32_0 = arith.constant 0 : i32
    %c0_i32_1 = arith.constant 0 : i32
    return %c0_i32, %c0_i32_0 : i32, i32
  }
  func.func @transform_1(%arg0: i32) -> (i32, i32) {
    %c0_i32 = arith.constant 0 : i32
    %c0_i32_0 = arith.constant 0 : i32
    return %c0_i32, %arg0 : i32, i32
  }
  func.func @transform_2(%arg0: i32) -> (i32, i32) {
    %c0_i32 = arith.constant 0 : i32
    %c0_i32_0 = arith.constant 0 : i32
    return %c0_i32, %arg0 : i32, i32
  }
  func.func @transform_3(%arg0: i32) -> (i32, i32) {
    %c0_i32 = arith.constant 0 : i32
    %c0_i32_0 = arith.constant 0 : i32
    return %c0_i32, %arg0 : i32, i32
  }
}

module attributes {stable_mosaic.version = 11 : i64} {
  func.func @_matmul_bias_res_kernel(%arg0: i32, %arg1: memref<32x384xbf16, #tpu.memory_space<vmem>>, %arg2: memref<384x256xbf16, #tpu.memory_space<vmem>>, %arg3: memref<1x256xf32, #tpu.memory_space<vmem>>, %arg4: memref<32x256xf32, #tpu.memory_space<vmem>>, %arg5: memref<32x256xf32, #tpu.memory_space<vmem>>) attributes {dimension_semantics = [#tpu.dimension_semantics<parallel>], iteration_bounds = array<i64: 7>, scalar_prefetch = 0 : i64, scratch_operands = 0 : i64, tpu.core_type = #tpu.core_type<tc>, window_params = [{pipeline_mode = #tpu.pipeline_mode<synchronous>, transform_indices = @transform_0, window_bounds = array<i64: 32, 384>}, {transform_indices = @transform_1, window_bounds = array<i64: 384, 256>}, {transform_indices = @transform_2, window_bounds = array<i64: 1, 256>}, {transform_indices = @transform_3, window_bounds = array<i64: 32, 256>}, {transform_indices = @transform_4, window_bounds = array<i64: 32, 256>}]} {
    %c0 = arith.constant 0 : index
    %c0_0 = arith.constant 0 : index
    %0 = vector.load %arg1[%c0, %c0_0] : memref<32x384xbf16, #tpu.memory_space<vmem>>, vector<32x384xbf16>
    %c0_1 = arith.constant 0 : index
    %c0_2 = arith.constant 0 : index
    %1 = vector.load %arg2[%c0_1, %c0_2] : memref<384x256xbf16, #tpu.memory_space<vmem>>, vector<384x256xbf16>
    %cst = arith.constant dense<0.000000e+00> : vector<32x256xf32>
    %2 = tpu.matmul %0, %1, %cst {dimension_numbers = #tpu.dot_dimension_numbers<[1], [0], [0], [1], [0, 0, 1, 1], [], []>} : vector<32x384xbf16>, vector<384x256xbf16>, vector<32x256xf32> -> vector<32x256xf32>
    %c0_3 = arith.constant 0 : index
    %c0_4 = arith.constant 0 : index
    %3 = vector.load %arg3[%c0_3, %c0_4] : memref<1x256xf32, #tpu.memory_space<vmem>>, vector<1x256xf32>
    %4 = vector.broadcast %3 : vector<1x256xf32> to vector<32x256xf32>
    %5 = arith.addf %2, %4 : vector<32x256xf32>
    %cst_5 = arith.constant 1.000000e+00 : f32
    %6 = vector.broadcast %cst_5 : f32 to vector<32x256xf32>
    %7 = arith.mulf %5, %6 : vector<32x256xf32>
    %c0_6 = arith.constant 0 : index
    %c0_7 = arith.constant 0 : index
    %8 = vector.load %arg4[%c0_6, %c0_7] : memref<32x256xf32, #tpu.memory_space<vmem>>, vector<32x256xf32>
    %9 = arith.addf %7, %8 : vector<32x256xf32>
    %cst_8 = arith.constant 0.000000e+00 : f32
    %10 = vector.broadcast %cst_8 : f32 to vector<32x256xf32>
    %11 = arith.maximumf %9, %10 : vector<32x256xf32>
    %c0_9 = arith.constant 0 : index
    %c0_10 = arith.constant 0 : index
    %12 = vector.load %arg5[%c0_9, %c0_10] : memref<32x256xf32, #tpu.memory_space<vmem>>, vector<32x256xf32>
    tpu.vector_store %arg5[%c0_9, %c0_10], %11 {strides = array<i32>} : memref<32x256xf32, #tpu.memory_space<vmem>>, vector<32x256xf32>,
    return
  }
  func.func @transform_0(%arg0: i32) -> (i32, i32) {
    %c0_i32 = arith.constant 0 : i32
    %c0_i32_0 = arith.constant 0 : i32
    %c0_i32_1 = arith.constant 0 : i32
    return %c0_i32, %c0_i32_0 : i32, i32
  }
  func.func @transform_1(%arg0: i32) -> (i32, i32) {
    %c0_i32 = arith.constant 0 : i32
    %c0_i32_0 = arith.constant 0 : i32
    return %c0_i32, %arg0 : i32, i32
  }
  func.func @transform_2(%arg0: i32) -> (i32, i32) {
    %c0_i32 = arith.constant 0 : i32
    %c0_i32_0 = arith.constant 0 : i32
    return %c0_i32, %arg0 : i32, i32
  }
  func.func @transform_3(%arg0: i32) -> (i32, i32) {
    %c0_i32 = arith.constant 0 : i32
    %c0_i32_0 = arith.constant 0 : i32
    return %c0_i32, %arg0 : i32, i32
  }
  func.func @transform_4(%arg0: i32) -> (i32, i32) {
    %c0_i32 = arith.constant 0 : i32
    %c0_i32_0 = arith.constant 0 : i32
    return %c0_i32, %arg0 : i32, i32
  }
}

</mosaic_0001>

<llo_original>
// kernel: block8.6
$region0: #{block8.6}
  #allocation0 [shape = 'u32[]', space=smem, size = 0x4, offset = 0x4, fixed_abs, tag = 'smem constant byte address 0x4 - core index']
  #allocation1 [shape = 'u32[72,128]{1,0:T(1,128)}', space=vmem, size = 0x9000, scoped, tag = 'internal scratch']
  %s0 = inlined_call_operand.vmem [shape: f32[2,9,1792], index: 0, kind: input, shape index: {}]
  %s1 = inlined_call_operand.vmem [shape: f32[1,1792], index: 1, kind: input, shape index: {}]
  %s2 = inlined_call_operand.vmem [shape: f32[1,1792], index: 2, kind: input, shape index: {}]
  %s3 = inlined_call_operand.vmem [shape: f32[1,1792], index: 3, kind: input, shape index: {}]
  %s4 = inlined_call_operand.vmem [shape: f32[1,1792], index: 4, kind: input, shape index: {}]
  %s5 = inlined_call_operand.vmem [shape: f32[2,9,1792], index: 5, kind: output, shape index: {}]
  %s6 = sld [smem:[#allocation0]]
  $region95: #{block8.6} parent=0
    _
  %s8 = ssub.s32 1, %s6
  %s9 = scalar_select 0, %s8, %s6
  $region1: #{block8.6} parent=0
    #allocation2 [shape = 'u8[65536]{0}', space=vmem, size = 0x10000, scoped, tag = 'input window, operand 0']
    #allocation3 [shape = 'u8[65536]{0}', space=vmem, size = 0x10000, scoped, tag = 'output window, operand 0']
    loop: start=0, step=1, limit=9
    $region2: #{block8.6} parent=1 // loop_pre_header
      _
    $region3: #{block8.6} parent=1 // loop_header
      %s11 = sphi 0, %s15
      %p12 = scmp.ge.s32.totalorder %s11, 9
      %s21 = sphi 0, %s23
      %s24 = sphi 0, %s21
      %s25 = sphi 0, %s24
      %s41 = sphi 0, %s25
      %s47 = sphi 0, %s49
      %s50 = sphi 0, %s47
      %s51 = sphi 0, %s50
      %s67 = sphi 0, %s51
      %s73 = sphi 0, %s75
      %s76 = sphi 0, %s73
      %s77 = sphi 0, %s76
      %s93 = sphi 0, %s77
      %s99 = sphi 0, %s101
      %s102 = sphi 0, %s99
      %s103 = sphi 0, %s102
      %s119 = sphi 0, %s103
      %s125 = sphi 0, %s127
      %s128 = sphi 0, %s125
      %s129 = sphi 0, %s128
      %s145 = sphi 0, %s129
      %s151 = sphi 0, %s153
      %s154 = sphi 0, %s151
      %s155 = sphi 0, %s154
      %s171 = sphi 0, %s155
    $region4: #{block8.6} parent=1 // loop_header_branch
      %14 = sbr.rel (%p12) target = $region8
    $region5: #{block8.6} parent=1 // loop_body
      %s16 = ssub.s32 %s11, 1
      %s17 = ssub.s32 %s11, 2
      %s18 = sadd.s32 %s11, 1
      %s19 = ssub.s32 %s11, %s18
      %p20 = scmp.eq.s32.totalorder %s19, 0
      %s22 = sadd.s32 %s21, 1
      %s23 = scalar_select %p20, %s21, %s22
      %p26 = pneg %p20
      %p27 = scmp.eq.s32.totalorder %s11, 6
      %p28 = por %p26, %p27
      %p29 = scmp.ne.s32.totalorder %s21, %s24
      %p30 = scmp.eq.s32.totalorder %s11, 0
      %p31 = por %p29, %p30
      %p32 = scmp.ne.s32.totalorder %s21, %s24
      %p33 = scmp.eq.s32.totalorder %s16, 6
      %p34 = por %p32, %p33
      %p35 = scmp.ne.s32.totalorder %s24, %s25
      %p36 = scmp.eq.s32.totalorder %s16, 0
      %p37 = por %p35, %p36
      %p38 = scmp.ne.s32.totalorder %s24, %s25
      %p39 = scmp.eq.s32.totalorder %s17, 6
      %p40 = por %p38, %p39
      %p42 = scmp.ne.s32.totalorder %s25, %s41
      %p43 = scmp.eq.s32.totalorder %s17, 0
      %p44 = por %p42, %p43
      %s45 = ssub.s32 %s11, %s18
      %p46 = scmp.eq.s32.totalorder %s45, 0
      %s48 = sadd.s32 %s47, 1
      %s49 = scalar_select %p46, %s47, %s48
      %p52 = pneg %p46
      %p53 = scmp.eq.s32.totalorder %s11, 6
      %p54 = por %p52, %p53
      %p55 = scmp.ne.s32.totalorder %s47, %s50
      %p56 = scmp.eq.s32.totalorder %s11, 0
      %p57 = por %p55, %p56
      %p58 = scmp.ne.s32.totalorder %s47, %s50
      %p59 = scmp.eq.s32.totalorder %s16, 6
      %p60 = por %p58, %p59
      %p61 = scmp.ne.s32.totalorder %s50, %s51
      %p62 = scmp.eq.s32.totalorder %s16, 0
      %p63 = por %p61, %p62
      %p64 = scmp.ne.s32.totalorder %s50, %s51
      %p65 = scmp.eq.s32.totalorder %s17, 6
      %p66 = por %p64, %p65
      %p68 = scmp.ne.s32.totalorder %s51, %s67
      %p69 = scmp.eq.s32.totalorder %s17, 0
      %p70 = por %p68, %p69
      %s71 = ssub.s32 %s11, %s18
      %p72 = scmp.eq.s32.totalorder %s71, 0
      %s74 = sadd.s32 %s73, 1
      %s75 = scalar_select %p72, %s73, %s74
      %p78 = pneg %p72
      %p79 = scmp.eq.s32.totalorder %s11, 6
      %p80 = por %p78, %p79
      %p81 = scmp.ne.s32.totalorder %s73, %s76
      %p82 = scmp.eq.s32.totalorder %s11, 0
      %p83 = por %p81, %p82
      %p84 = scmp.ne.s32.totalorder %s73, %s76
      %p85 = scmp.eq.s32.totalorder %s16, 6
      %p86 = por %p84, %p85
      %p87 = scmp.ne.s32.totalorder %s76, %s77
      %p88 = scmp.eq.s32.totalorder %s16, 0
      %p89 = por %p87, %p88
      %p90 = scmp.ne.s32.totalorder %s76, %s77
      %p91 = scmp.eq.s32.totalorder %s17, 6
      %p92 = por %p90, %p91
      %p94 = scmp.ne.s32.totalorder %s77, %s93
      %p95 = scmp.eq.s32.totalorder %s17, 0
      %p96 = por %p94, %p95
      %s97 = ssub.s32 %s11, %s18
      %p98 = scmp.eq.s32.totalorder %s97, 0
      %s100 = sadd.s32 %s99, 1
      %s101 = scalar_select %p98, %s99, %s100
      %p104 = pneg %p98
      %p105 = scmp.eq.s32.totalorder %s11, 6
      %p106 = por %p104, %p105
      %p107 = scmp.ne.s32.totalorder %s99, %s102
      %p108 = scmp.eq.s32.totalorder %s11, 0
      %p109 = por %p107, %p108
      %p110 = scmp.ne.s32.totalorder %s99, %s102
      %p111 = scmp.eq.s32.totalorder %s16, 6
      %p112 = por %p110, %p111
      %p113 = scmp.ne.s32.totalorder %s102, %s103
      %p114 = scmp.eq.s32.totalorder %s16, 0
      %p115 = por %p113, %p114
      %p116 = scmp.ne.s32.totalorder %s102, %s103
      %p117 = scmp.eq.s32.totalorder %s17, 6
      %p118 = por %p116, %p117
      %p120 = scmp.ne.s32.totalorder %s103, %s119
      %p121 = scmp.eq.s32.totalorder %s17, 0
      %p122 = por %p120, %p121
      %s123 = ssub.s32 %s11, %s18
      %p124 = scmp.eq.s32.totalorder %s123, 0
      %s126 = sadd.s32 %s125, 1
      %s127 = scalar_select %p124, %s125, %s126
      %p130 = pneg %p124
      %p131 = scmp.eq.s32.totalorder %s11, 6
      %p132 = por %p130, %p131
      %p133 = scmp.ne.s32.totalorder %s125, %s128
      %p134 = scmp.eq.s32.totalorder %s11, 0
      %p135 = por %p133, %p134
      %p136 = scmp.ne.s32.totalorder %s125, %s128
      %p137 = scmp.eq.s32.totalorder %s16, 6
      %p138 = por %p136, %p137
      %p139 = scmp.ne.s32.totalorder %s128, %s129
      %p140 = scmp.eq.s32.totalorder %s16, 0
      %p141 = por %p139, %p140
      %p142 = scmp.ne.s32.totalorder %s128, %s129
      %p143 = scmp.eq.s32.totalorder %s17, 6
      %p144 = por %p142, %p143
      %p146 = scmp.ne.s32.totalorder %s129, %s145
      %p147 = scmp.eq.s32.totalorder %s17, 0
      %p148 = por %p146, %p147
      %s149 = ssub.s32 %s11, %s18
      %p150 = scmp.eq.s32.totalorder %s149, 0
      %s152 = sadd.s32 %s151, 1
      %s153 = scalar_select %p150, %s151, %s152
      %p156 = pneg %p150
      %p157 = scmp.eq.s32.totalorder %s11, 6
      %p158 = por %p156, %p157
      %p159 = scmp.ne.s32.totalorder %s151, %s154
      %p160 = scmp.eq.s32.totalorder %s11, 0
      %p161 = por %p159, %p160
      %p162 = scmp.ne.s32.totalorder %s151, %s154
      %p163 = scmp.eq.s32.totalorder %s16, 6
      %p164 = por %p162, %p163
      %p165 = scmp.ne.s32.totalorder %s154, %s155
      %p166 = scmp.eq.s32.totalorder %s16, 0
      %p167 = por %p165, %p166
      %p168 = scmp.ne.s32.totalorder %s154, %s155
      %p169 = scmp.eq.s32.totalorder %s17, 6
      %p170 = por %p168, %p169
      %p172 = scmp.ne.s32.totalorder %s155, %s171
      %p173 = scmp.eq.s32.totalorder %s17, 0
      %p174 = por %p172, %p173
      %p175 = scmp.le.s32.totalorder 1, %s11
      %p176 = scmp.lt.s32.totalorder %s11, 8
      %p177 = pnand %p175, %p176
      %p178 = pneg %p177
      // Predicated region
      $region9: #{block8.6} parent=5 // pred_check
        _
      $region10: #{block8.6} parent=5 // pred_check_branch
        %180 = sbr.rel (%p177) target = $region12
      $region11: #{block8.6} parent=5 // pred_region
        %s181 = ssub.s32 %s11, 1
      $region12: #{block8.6} parent=5 // pred_fallthru
        _
      %p182 = scmp.lt.s32.totalorder %s11, 7
      // Predicated region
      $region13: #{block8.6} parent=5 // pred_check
        %p183 = pneg %p182
      $region14: #{block8.6} parent=5 // pred_check_branch
        %185 = sbr.rel (%p183) target = $region16
      $region15: #{block8.6} parent=5 // pred_region
        // Predicated region
        $region17: #{block8.6} parent=15 // pred_check
          %p186 = pneg %p31
        $region18: #{block8.6} parent=15 // pred_check_branch
          %188 = sbr.rel (%p186) target = $region20
        $region19: #{block8.6} parent=15 // pred_region
          %s189 = sand.u32 %s21, 1
          %s190 = sand.u32 %s21, 1
          %s191 = smul.addr %s190, 64
          %s192 = scalar_lea.vmem [#allocation2], %s191
          %s193 = smul.u32 2, %s11
          %s194 = smul.addr %s193, 8
          %s195 = scalar_lea.vmem %s0, %s194
          // Predicated region
          $region21: #{block8.6} parent=19 // pred_check
            _
          $region22: #{block8.6} parent=19 // pred_check_branch
            %197 = sbr.rel (0) target = $region24
          $region23: #{block8.6} parent=19 // pred_region
            // Predicated region
            $region25: #{block8.6} parent=23 // pred_check
              _
            $region26: #{block8.6} parent=23 // pred_check_branch
              %199 = sbr.rel (0) target = $region28
            $region27: #{block8.6} parent=23 // pred_region
              loop: start=0, step=1, limit=1
              $region29: #{block8.6} parent=27 // loop_pre_header
                _
              $region30: #{block8.6} parent=27 // loop_header
                %s201 = sphi 0, %s205
                %p202 = scmp.ge.s32.totalorder %s201, 1
                %s206 = sphi %s195, %s195
                %s207 = sphi %s192, %s192
              $region31: #{block8.6} parent=27 // loop_header_branch
                %204 = sbr.rel (%p202) target = $region35
              $region32: #{block8.6} parent=27 // loop_body
                %v208 = vld [vmem:[%s206] sm:$0xff]
                %209 = vst [vmem:[%s207] sm:$0xff] %v208
                %v210 = vld [vmem:[%s206 + $0x8] sm:$0xff]
                %211 = vst [vmem:[%s207 + $0x8] sm:$0xff] %v210
                %v212 = vld [vmem:[%s206 + $0x70] sm:$0xff]
                %213 = vst [vmem:[%s207 + $0x10] sm:$0xff] %v212
                %v214 = vld [vmem:[%s206 + $0x78] sm:$0xff]
                %215 = vst [vmem:[%s207 + $0x18] sm:$0xff] %v214
                %v216 = vld [vmem:[%s206 + $0xe0] sm:$0xff]
                %217 = vst [vmem:[%s207 + $0x20] sm:$0xff] %v216
                %v218 = vld [vmem:[%s206 + $0xe8] sm:$0xff]
                %219 = vst [vmem:[%s207 + $0x28] sm:$0xff] %v218
                %v220 = vld [vmem:[%s206 + $0x150] sm:$0xff]
                %221 = vst [vmem:[%s207 + $0x30] sm:$0xff] %v220
                %v222 = vld [vmem:[%s206 + $0x158] sm:$0xff]
                %223 = vst [vmem:[%s207 + $0x38] sm:$0xff] %v222
              $region33: #{block8.6} parent=27 // loop_footer
                %s205 = sadd.s32 1, %s201
              $region34: #{block8.6} parent=27 // loop_footer_branch
                %200 = sbr.rel target = $region30
              $region35: #{block8.6} parent=27 // loop_exit
                _
            $region28: #{block8.6} parent=23 // pred_fallthru
              _
            // Predicated region
            $region36: #{block8.6} parent=23 // pred_check
              _
            $region37: #{block8.6} parent=23 // pred_check_branch
              %225 = sbr.rel target = $region39
            $region38: #{block8.6} parent=23 // pred_region
              _
            $region39: #{block8.6} parent=23 // pred_fallthru
              _
          $region24: #{block8.6} parent=19 // pred_fallthru
            _
          %226 = vnop
        $region20: #{block8.6} parent=15 // pred_fallthru
          _
        // Predicated region
        $region40: #{block8.6} parent=15 // pred_check
          %p227 = pneg %p57
        $region41: #{block8.6} parent=15 // pred_check_branch
          %229 = sbr.rel (%p227) target = $region43
        $region42: #{block8.6} parent=15 // pred_region
          %s230 = smul.u32 2, %s11
          %p231 = scmp.lt.s32.totalorder %s230, 13
          %s232 = scalar_select %p231, %s230, 13
          %s233 = scalar_lea.vmem %s1, %s232
          %s234 = smul.u32 2, %s11
        $region43: #{block8.6} parent=15 // pred_fallthru
          _
        // Predicated region
        $region44: #{block8.6} parent=15 // pred_check
          %p235 = pneg %p83
        $region45: #{block8.6} parent=15 // pred_check_branch
          %237 = sbr.rel (%p235) target = $region47
        $region46: #{block8.6} parent=15 // pred_region
          %s238 = smul.u32 2, %s11
          %p239 = scmp.lt.s32.totalorder %s238, 13
          %s240 = scalar_select %p239, %s238, 13
          %s241 = scalar_lea.vmem %s2, %s240
          %s242 = smul.u32 2, %s11
        $region47: #{block8.6} parent=15 // pred_fallthru
          _
        // Predicated region
        $region48: #{block8.6} parent=15 // pred_check
          %p243 = pneg %p109
        $region49: #{block8.6} parent=15 // pred_check_branch
          %245 = sbr.rel (%p243) target = $region51
        $region50: #{block8.6} parent=15 // pred_region
          %s246 = smul.u32 2, %s11
          %p247 = scmp.lt.s32.totalorder %s246, 13
          %s248 = scalar_select %p247, %s246, 13
          %s249 = scalar_lea.vmem %s3, %s248
          %s250 = smul.u32 2, %s11
        $region51: #{block8.6} parent=15 // pred_fallthru
          _
        // Predicated region
        $region52: #{block8.6} parent=15 // pred_check
          %p251 = pneg %p135
        $region53: #{block8.6} parent=15 // pred_check_branch
          %253 = sbr.rel (%p251) target = $region55
        $region54: #{block8.6} parent=15 // pred_region
          %s254 = smul.u32 2, %s11
          %p255 = scmp.lt.s32.totalorder %s254, 13
          %s256 = scalar_select %p255, %s254, 13
          %s257 = scalar_lea.vmem %s4, %s256
          %s258 = smul.u32 2, %s11
        $region55: #{block8.6} parent=15 // pred_fallthru
          _
      $region16: #{block8.6} parent=5 // pred_fallthru
        _
      %p259 = scmp.le.s32.totalorder 1, %s11
      %p260 = scmp.lt.s32.totalorder %s11, 8
      %p261 = pnand %p259, %p260
      %p262 = pneg %p261
      // Predicated region
      $region56: #{block8.6} parent=5 // pred_check
        _
      $region57: #{block8.6} parent=5 // pred_check_branch
        %264 = sbr.rel (%p261) target = $region59
      $region58: #{block8.6} parent=5 // pred_region
        %s265 = ssub.s32 %s11, 1
        %s266 = sand.u32 %s24, 1
        %s267 = sand.u32 %s24, 1
        %s268 = smul.addr %s267, 64
        %s269 = scalar_lea.vmem [#allocation2], %s268
        // Predicated region
        $region60: #{block8.6} parent=58 // pred_check
          %p270 = pneg %p37
        $region61: #{block8.6} parent=58 // pred_check_branch
          %272 = sbr.rel (%p270) target = $region63
        $region62: #{block8.6} parent=58 // pred_region
          _
        $region63: #{block8.6} parent=58 // pred_fallthru
          _
        %s273 = sand.u32 %s24, 1
        %s274 = sand.u32 %s24, 1
        %s275 = smul.addr %s274, 64
        %s276 = scalar_lea.vmem [#allocation2], %s275
        %p277 = pneg %p37
        %p278 = pneg %p34
        %s279 = smul.u32 2, %s16
        %p280 = scmp.lt.s32.totalorder %s279, 13
        %s281 = scalar_select %p280, %s279, 13
        %s282 = scalar_lea.vmem %s1, %s281
        %p283 = pneg %p63
        %p284 = pneg %p60
        %s285 = smul.u32 2, %s16
        %p286 = scmp.lt.s32.totalorder %s285, 13
        %s287 = scalar_select %p286, %s285, 13
        %s288 = scalar_lea.vmem %s2, %s287
        %p289 = pneg %p89
        %p290 = pneg %p86
        %s291 = smul.u32 2, %s16
        %p292 = scmp.lt.s32.totalorder %s291, 13
        %s293 = scalar_select %p292, %s291, 13
        %s294 = scalar_lea.vmem %s3, %s293
        %p295 = pneg %p115
        %p296 = pneg %p112
        %s297 = smul.u32 2, %s16
        %p298 = scmp.lt.s32.totalorder %s297, 13
        %s299 = scalar_select %p298, %s297, 13
        %s300 = scalar_lea.vmem %s4, %s299
        %p301 = pneg %p141
        %p302 = pneg %p138
        %p303 = pneg %p167
        %p304 = pneg %p164
        %s305 = sand.u32 %s154, 1
        %s306 = sand.u32 %s154, 1
        %s307 = smul.addr %s306, 64
        %s308 = scalar_lea.vmem [#allocation3], %s307
        %s309 = smul.u32 2, %s16
        %s310 = smul.u32 2, %s16
        %p311 = scmp.lt.s32.totalorder %s310, 13
        %s312 = scalar_select %p311, %s310, 13
        %s313 = scalar_lea.vmem %s1, %s312
        %s314 = smul.u32 2, %s16
        %s315 = smul.u32 2, %s16
        %p316 = scmp.lt.s32.totalorder %s315, 13
        %s317 = scalar_select %p316, %s315, 13
        %s318 = scalar_lea.vmem %s2, %s317
        %s319 = smul.u32 2, %s16
        %s320 = smul.u32 2, %s16
        %p321 = scmp.lt.s32.totalorder %s320, 13
        %s322 = scalar_select %p321, %s320, 13
        %s323 = scalar_lea.vmem %s3, %s322
        %s324 = smul.u32 2, %s16
        %s325 = smul.u32 2, %s16
        %p326 = scmp.lt.s32.totalorder %s325, 13
        %s327 = scalar_select %p326, %s325, 13
        %s328 = scalar_lea.vmem %s4, %s327
        %s329 = smul.u32 2, %s16
        %s330 = smul.u32 2, %s16
        %v331 = vld [vmem:[%s269] sm:$0xff]
        %v332 = vld [vmem:[%s269 + $0x8] sm:$0xff]
        %v333 = vld [vmem:[%s269 + $0x10] sm:$0x1]
        %v334 = vld [vmem:[%s269 + $0x18] sm:$0x1]
        %v335 = vld [vmem:[%s269 + $0x20] sm:$0xff]
        %v336 = vld [vmem:[%s269 + $0x28] sm:$0xff]
        %v337 = vld [vmem:[%s269 + $0x30] sm:$0x1]
        %v338 = vld [vmem:[%s269 + $0x38] sm:$0x1]
        %vm339 = vcmask 1040384
        %v340 = vsel %vm339, %v333, 0.0
        %v341 = vadd.f32 %v331, %v340
        %v342 = vrot.slane %v341, 4
        %v343 = vadd.f32 %v341, %v342
        %v344 = vrot.slane %v343, 2
        %v345 = vadd.f32 %v343, %v344
        %v346 = vrot.slane %v345, 1
        %v347 = vadd.f32 %v345, %v346
        %v348 = vsel %vm339, %v334, 0.0
        %v349 = vadd.f32 %v332, %v348
        %v350 = vrot.slane %v349, 4
        %v351 = vadd.f32 %v349, %v350
        %v352 = vrot.slane %v351, 2
        %v353 = vadd.f32 %v351, %v352
        %v354 = vrot.slane %v353, 1
        %v355 = vadd.f32 %v353, %v354
        %v356 = vsel %vm339, %v337, 0.0
        %v357 = vadd.f32 %v335, %v356
        %v358 = vrot.slane %v357, 4
        %v359 = vadd.f32 %v357, %v358
        %v360 = vrot.slane %v359, 2
        %v361 = vadd.f32 %v359, %v360
        %v362 = vrot.slane %v361, 1
        %v363 = vadd.f32 %v361, %v362
        %v364 = vsel %vm339, %v338, 0.0
        %v365 = vadd.f32 %v336, %v364
        %v366 = vrot.slane %v365, 4
        %v367 = vadd.f32 %v365, %v366
        %v368 = vrot.slane %v367, 2
        %v369 = vadd.f32 %v367, %v368
        %v370 = vrot.slane %v369, 1
        %v371 = vadd.f32 %v369, %v370
        %v372 = vmul.f32 %v347, 0.11111111
        %v373 = vmul.f32 %v355, 0.11111111
        %v374 = vmul.f32 %v363, 0.11111111
        %v375 = vmul.f32 %v371, 0.11111111
        %v376 = vsub.f32 %v331, %v372
        %v377 = vsub.f32 %v332, %v373
        %v378 = vsub.f32 %v333, %v372
        %v379 = vsub.f32 %v334, %v373
        %v380 = vsub.f32 %v335, %v374
        %v381 = vsub.f32 %v336, %v375
        %v382 = vsub.f32 %v337, %v374
        %v383 = vsub.f32 %v338, %v375
        %v384 = vmul.f32 %v376, %v376
        %v385 = vmul.f32 %v377, %v377
        %v386 = vmul.f32 %v378, %v378
        %v387 = vmul.f32 %v379, %v379
        %v388 = vmul.f32 %v380, %v380
        %v389 = vmul.f32 %v381, %v381
        %v390 = vmul.f32 %v382, %v382
        %v391 = vmul.f32 %v383, %v383
        %v392 = vsel %vm339, %v386, 0.0
        %v393 = vadd.f32 %v384, %v392
        %v394 = vrot.slane %v393, 4
        %v395 = vadd.f32 %v393, %v394
        %v396 = vrot.slane %v395, 2
        %v397 = vadd.f32 %v395, %v396
        %v398 = vrot.slane %v397, 1
        %v399 = vadd.f32 %v397, %v398
        %v400 = vsel %vm339, %v387, 0.0
        %v401 = vadd.f32 %v385, %v400
        %v402 = vrot.slane %v401, 4
        %v403 = vadd.f32 %v401, %v402
        %v404 = vrot.slane %v403, 2
        %v405 = vadd.f32 %v403, %v404
        %v406 = vrot.slane %v405, 1
        %v407 = vadd.f32 %v405, %v406
        %v408 = vsel %vm339, %v390, 0.0
        %v409 = vadd.f32 %v388, %v408
        %v410 = vrot.slane %v409, 4
        %v411 = vadd.f32 %v409, %v410
        %v412 = vrot.slane %v411, 2
        %v413 = vadd.f32 %v411, %v412
        %v414 = vrot.slane %v413, 1
        %v415 = vadd.f32 %v413, %v414
        %v416 = vsel %vm339, %v391, 0.0
        %v417 = vadd.f32 %v389, %v416
        %v418 = vrot.slane %v417, 4
        %v419 = vadd.f32 %v417, %v418
        %v420 = vrot.slane %v419, 2
        %v421 = vadd.f32 %v419, %v420
        %v422 = vrot.slane %v421, 1
        %v423 = vadd.f32 %v421, %v422
        %v424 = vmul.f32 %v399, 0.125
        %v425 = vmul.f32 %v407, 0.125
        %v426 = vmul.f32 %v415, 0.125
        %v427 = vmul.f32 %v423, 0.125
        %v428 = vadd.f32 %v424, 1e-05
        %v429 = vadd.f32 %v425, 1e-05
        %v430 = vadd.f32 %v426, 1e-05
        %v431 = vadd.f32 %v427, 1e-05
        %v432 = vrsqrt.pop %v428
        %v433 = vmul.f32 %v432, %v428
        %v434 = vmul.f32 %v433, %v432
        %v435 = vmul.f32 0.5, %v434
        %v436 = vsub.f32 1.5, %v435
        %v437 = vmul.f32 %v432, %v436
        %v438 = vmul.f32 %v428, %v437
        %vm439 = vcmp.eq.f32.partialorder %v428, inf
        %v440 = vsel %vm439, %v428, %v438
        %vm441 = vcmp.eq.f32.partialorder %v428, 0.0
        %v442 = vand.u32 %v428, 2147483648
        %v443 = vsel %vm441, %v442, %v440
        %v444 = vrsqrt.pop %v429
        %v445 = vmul.f32 %v444, %v429
        %v446 = vmul.f32 %v445, %v444
        %v447 = vmul.f32 0.5, %v446
        %v448 = vsub.f32 1.5, %v447
        %v449 = vmul.f32 %v444, %v448
        %v450 = vmul.f32 %v429, %v449
        %vm451 = vcmp.eq.f32.partialorder %v429, inf
        %v452 = vsel %vm451, %v429, %v450
        %vm453 = vcmp.eq.f32.partialorder %v429, 0.0
        %v454 = vand.u32 %v429, 2147483648
        %v455 = vsel %vm453, %v454, %v452
        %v456 = vrsqrt.pop %v430
        %v457 = vmul.f32 %v456, %v430
        %v458 = vmul.f32 %v457, %v456
        %v459 = vmul.f32 0.5, %v458
        %v460 = vsub.f32 1.5, %v459
        %v461 = vmul.f32 %v456, %v460
        %v462 = vmul.f32 %v430, %v461
        %vm463 = vcmp.eq.f32.partialorder %v430, inf
        %v464 = vsel %vm463, %v430, %v462
        %vm465 = vcmp.eq.f32.partialorder %v430, 0.0
        %v466 = vand.u32 %v430, 2147483648
        %v467 = vsel %vm465, %v466, %v464
        %v468 = vrsqrt.pop %v431
        %v469 = vmul.f32 %v468, %v431
        %v470 = vmul.f32 %v469, %v468
        %v471 = vmul.f32 0.5, %v470
        %v472 = vsub.f32 1.5, %v471
        %v473 = vmul.f32 %v468, %v472
        %v474 = vmul.f32 %v431, %v473
        %vm475 = vcmp.eq.f32.partialorder %v431, inf
        %v476 = vsel %vm475, %v431, %v474
        %vm477 = vcmp.eq.f32.partialorder %v431, 0.0
        %v478 = vand.u32 %v431, 2147483648
        %v479 = vsel %vm477, %v478, %v476
        %v480 = vld [vmem:[%s313] sm:$0x3]
        %v482 = vperm.slane %v480, 0
        %v483 = vperm.slane %v480, 1
        %v486 = vmul.f32 %v372, %v482
        %v487 = vmul.f32 %v373, %v483
        %v488 = vmul.f32 %v374, %v482
        %v489 = vmul.f32 %v375, %v483
        %v490 = vld [vmem:[%s318] sm:$0x3]
        %v492 = vperm.slane %v490, 0
        %v493 = vperm.slane %v490, 1
        %v496 = vmul.f32 %v443, %v492
        %v497 = vmul.f32 %v455, %v493
        %v498 = vmul.f32 %v467, %v492
        %v499 = vmul.f32 %v479, %v493
        %v500 = vadd.f32 %v486, %v496
        %v501 = vadd.f32 %v487, %v497
        %v502 = vadd.f32 %v488, %v498
        %v503 = vadd.f32 %v489, %v499
        %v504 = vld [vmem:[%s323] sm:$0x3]
        %v506 = vperm.slane %v504, 0
        %v507 = vperm.slane %v504, 1
        %v510 = vmul.f32 %v500, %v506
        %v511 = vmul.f32 %v501, %v507
        %v512 = vmul.f32 %v502, %v506
        %v513 = vmul.f32 %v503, %v507
        %v514 = vld [vmem:[%s328] sm:$0x3]
        %v516 = vperm.slane %v514, 0
        %v517 = vperm.slane %v514, 1
        %v520 = vadd.f32 %v510, %v516
        %v521 = vadd.f32 %v511, %v517
        %v522 = vadd.f32 %v512, %v516
        %v523 = vadd.f32 %v513, %v517
        %v524 = vsub.f32 0.0, %v520
        %v525 = vsub.f32 0.0, %v521
        %v526 = vsub.f32 0.0, %v522
        %v527 = vsub.f32 0.0, %v523
        %v528 = vmul.f32 %v524, 1.442695
        %v529 = vpow.pop %v528
        %v530 = vmul.f32 %v525, 1.442695
        %v531 = vpow.pop %v530
        %v532 = vmul.f32 %v526, 1.442695
        %v533 = vpow.pop %v532
        %v534 = vmul.f32 %v527, 1.442695
        %v535 = vpow.pop %v534
        %v536 = vadd.f32 %v529, 1.0
        %v537 = vadd.f32 %v531, 1.0
        %v538 = vadd.f32 %v533, 1.0
        %v539 = vadd.f32 %v535, 1.0
        %v540 = vrcp.pop %v536
        %v541 = vmul.f32 %v536, %v540
        %v542 = vsub.f32 1.0, %v541
        %v543 = vmul.f32 %v540, %v542
        %v544 = vadd.f32 %v540, %v543
        %vm545 = vweird.f32 %v536
        %vm546 = vweird.f32 %v540
        %vm547 = vmor %vm545, %vm546
        %v548 = vsel %vm547, %v540, %v544
        %v549 = vand.u32 2147483647, %v536
        %vm550 = vcmp.eq.f32.partialorder %v549, 8.507059e+37
        %v551 = vand.u32 %v536, 2147483648
        %v552 = vor.u32 1.1754944e-38, %v551
        %v553 = vsel %vm550, %v552, %v548
        %v554 = vmul.f32 1.0, %v553
        %v555 = vrcp.pop %v537
        %v556 = vmul.f32 %v537, %v555
        %v557 = vsub.f32 1.0, %v556
        %v558 = vmul.f32 %v555, %v557
        %v559 = vadd.f32 %v555, %v558
        %vm560 = vweird.f32 %v537
        %vm561 = vweird.f32 %v555
        %vm562 = vmor %vm560, %vm561
        %v563 = vsel %vm562, %v555, %v559
        %v564 = vand.u32 2147483647, %v537
        %vm565 = vcmp.eq.f32.partialorder %v564, 8.507059e+37
        %v566 = vand.u32 %v537, 2147483648
        %v567 = vor.u32 1.1754944e-38, %v566
        %v568 = vsel %vm565, %v567, %v563
        %v569 = vmul.f32 1.0, %v568
        %v570 = vrcp.pop %v538
        %v571 = vmul.f32 %v538, %v570
        %v572 = vsub.f32 1.0, %v571
        %v573 = vmul.f32 %v570, %v572
        %v574 = vadd.f32 %v570, %v573
        %vm575 = vweird.f32 %v538
        %vm576 = vweird.f32 %v570
        %vm577 = vmor %vm575, %vm576
        %v578 = vsel %vm577, %v570, %v574
        %v579 = vand.u32 2147483647, %v538
        %vm580 = vcmp.eq.f32.partialorder %v579, 8.507059e+37
        %v581 = vand.u32 %v538, 2147483648
        %v582 = vor.u32 1.1754944e-38, %v581
        %v583 = vsel %vm580, %v582, %v578
        %v584 = vmul.f32 1.0, %v583
        %v585 = vrcp.pop %v539
        %v586 = vmul.f32 %v539, %v585
        %v587 = vsub.f32 1.0, %v586
        %v588 = vmul.f32 %v585, %v587
        %v589 = vadd.f32 %v585, %v588
        %vm590 = vweird.f32 %v539
        %vm591 = vweird.f32 %v585
        %vm592 = vmor %vm590, %vm591
        %v593 = vsel %vm592, %v585, %v589
        %v594 = vand.u32 2147483647, %v539
        %vm595 = vcmp.eq.f32.partialorder %v594, 8.507059e+37
        %v596 = vand.u32 %v539, 2147483648
        %v597 = vor.u32 1.1754944e-38, %v596
        %v598 = vsel %vm595, %v597, %v593
        %v599 = vmul.f32 1.0, %v598
        %v600 = vperm.slane %v554, 0
        %v601 = vperm.slane %v569, 0
        %v602 = vperm.slane %v584, 0
        %v603 = vperm.slane %v599, 0
        %v604 = vmul.f32 %v331, %v600
        %v605 = vmul.f32 %v332, %v601
        %v606 = vmul.f32 %v333, %v600
        %v607 = vmul.f32 %v334, %v601
        %v608 = vmul.f32 %v335, %v602
        %v609 = vmul.f32 %v336, %v603
        %v610 = vmul.f32 %v337, %v602
        %v611 = vmul.f32 %v338, %v603
        %612 = vst [vmem:[%s308] sm:$0xff] %v604
        %613 = vst [vmem:[%s308 + $0x8] sm:$0xff] %v605
        %614 = vst [vmem:[%s308 + $0x10] sm:$0x1] %v606
        %615 = vst [vmem:[%s308 + $0x18] sm:$0x1] %v607
        %616 = vst [vmem:[%s308 + $0x20] sm:$0xff] %v608
        %617 = vst [vmem:[%s308 + $0x28] sm:$0xff] %v609
        %618 = vst [vmem:[%s308 + $0x30] sm:$0x1] %v610
        %619 = vst [vmem:[%s308 + $0x38] sm:$0x1] %v611
        %s620 = sand.u32 %s154, 1
        %s621 = sand.u32 %s154, 1
        %s622 = smul.addr %s621, 64
        %s623 = scalar_lea.vmem [#allocation3], %s622
        // Predicated region
        $region64: #{block8.6} parent=58 // pred_check
          %p624 = pneg %p164
        $region65: #{block8.6} parent=58 // pred_check_branch
          %626 = sbr.rel (%p624) target = $region67
        $region66: #{block8.6} parent=58 // pred_region
          %s627 = smul.u32 2, %s16
          %s628 = smul.addr %s627, 8
          %s629 = scalar_lea.vmem %s5, %s628
          // Predicated region
          $region68: #{block8.6} parent=66 // pred_check
            _
          $region69: #{block8.6} parent=66 // pred_check_branch
            %631 = sbr.rel (0) target = $region71
          $region70: #{block8.6} parent=66 // pred_region
            // Predicated region
            $region72: #{block8.6} parent=70 // pred_check
              _
            $region73: #{block8.6} parent=70 // pred_check_branch
              %633 = sbr.rel (0) target = $region75
            $region74: #{block8.6} parent=70 // pred_region
              loop: start=0, step=1, limit=1
              $region76: #{block8.6} parent=74 // loop_pre_header
                _
              $region77: #{block8.6} parent=74 // loop_header
                %s635 = sphi 0, %s639
                %p636 = scmp.ge.s32.totalorder %s635, 1
                %s640 = sphi %s623, %s623
                %s641 = sphi %s629, %s629
              $region78: #{block8.6} parent=74 // loop_header_branch
                %638 = sbr.rel (%p636) target = $region82
              $region79: #{block8.6} parent=74 // loop_body
                %v642 = vld [vmem:[%s640] sm:$0xff]
                %643 = vst [vmem:[%s641] sm:$0xff] %v642
                %v644 = vld [vmem:[%s640 + $0x8] sm:$0xff]
                %645 = vst [vmem:[%s641 + $0x8] sm:$0xff] %v644
                %v646 = vld [vmem:[%s640 + $0x10] sm:$0xff]
                %647 = vst [vmem:[%s641 + $0x70] sm:$0xff] %v646
                %v648 = vld [vmem:[%s640 + $0x18] sm:$0xff]
                %649 = vst [vmem:[%s641 + $0x78] sm:$0xff] %v648
                %v650 = vld [vmem:[%s640 + $0x20] sm:$0xff]
                %651 = vst [vmem:[%s641 + $0xe0] sm:$0xff] %v650
                %v652 = vld [vmem:[%s640 + $0x28] sm:$0xff]
                %653 = vst [vmem:[%s641 + $0xe8] sm:$0xff] %v652
                %v654 = vld [vmem:[%s640 + $0x30] sm:$0xff]
                %655 = vst [vmem:[%s641 + $0x150] sm:$0xff] %v654
                %v656 = vld [vmem:[%s640 + $0x38] sm:$0xff]
                %657 = vst [vmem:[%s641 + $0x158] sm:$0xff] %v656
              $region80: #{block8.6} parent=74 // loop_footer
                %s639 = sadd.s32 1, %s635
              $region81: #{block8.6} parent=74 // loop_footer_branch
                %634 = sbr.rel target = $region77
              $region82: #{block8.6} parent=74 // loop_exit
                _
            $region75: #{block8.6} parent=70 // pred_fallthru
              _
            // Predicated region
            $region83: #{block8.6} parent=70 // pred_check
              _
            $region84: #{block8.6} parent=70 // pred_check_branch
              %659 = sbr.rel target = $region86
            $region85: #{block8.6} parent=70 // pred_region
              _
            $region86: #{block8.6} parent=70 // pred_fallthru
              _
          $region71: #{block8.6} parent=66 // pred_fallthru
            _
          %660 = vnop
        $region67: #{block8.6} parent=58 // pred_fallthru
          _
      $region59: #{block8.6} parent=5 // pred_fallthru
        _
      %p661 = scmp.le.s32.totalorder 2, %s11
      // Predicated region
      $region87: #{block8.6} parent=5 // pred_check
        %p662 = pneg %p661
      $region88: #{block8.6} parent=5 // pred_check_branch
        %664 = sbr.rel (%p662) target = $region90
      $region89: #{block8.6} parent=5 // pred_region
        %s665 = ssub.s32 %s11, 2
        // Predicated region
        $region91: #{block8.6} parent=89 // pred_check
          %p666 = pneg %p170
        $region92: #{block8.6} parent=89 // pred_check_branch
          %668 = sbr.rel (%p666) target = $region94
        $region93: #{block8.6} parent=89 // pred_region
          %s669 = sand.u32 %s155, 1
          %s670 = sand.u32 %s155, 1
          %s671 = smul.addr %s670, 64
          %s672 = scalar_lea.vmem [#allocation3], %s671
        $region94: #{block8.6} parent=89 // pred_fallthru
          _
      $region90: #{block8.6} parent=5 // pred_fallthru
        _
    $region6: #{block8.6} parent=1 // loop_footer
      %s15 = sadd.s32 1, %s11
    $region7: #{block8.6} parent=1 // loop_footer_branch
      %10 = sbr.rel target = $region3
    $region8: #{block8.6} parent=1 // loop_exit
      _

// kernel: block8.7
$region0: #{block8.7}
  #allocation0 [shape = 'u32[]', space=smem, size = 0x4, offset = 0x4, fixed_abs, tag = 'smem constant byte address 0x4 - core index']
  #allocation1 [shape = 'u32[72,128]{1,0:T(1,128)}', space=vmem, size = 0x9000, scoped, tag = 'internal scratch']
  %s0 = inlined_call_operand.vmem [shape: bf16[32,1792], index: 0, kind: input, shape index: {}]
  %s1 = inlined_call_operand.hbm [shape: bf16[1792,384], index: 1, kind: input, shape index: {}]
  %s2 = inlined_call_operand.hbm [shape: f32[1,384], index: 2, kind: input, shape index: {}]
  %s3 = inlined_call_operand.vmem [shape: f32[32,384], index: 3, kind: output, shape index: {}]
  %s4 = sld [smem:[#allocation0]]
  $region87: #{block8.7} parent=0
    _
  %s6 = ssub.s32 1, %s4
  %s7 = scalar_select 0, %s6, %s4
  $region1: #{block8.7} parent=0
    #allocation2 [shape = 'u8[917504]{0}', space=vmem, size = 0xe0000, scoped, tag = 'input window, operand 1']
    #allocation3 [shape = 's32[2]{0}', space=sflag, size = 0x8, scoped, tag = 'scoped memory for block8.7']
    #allocation4 [shape = 'u8[1024]{0}', space=vmem, size = 0x400, scoped, tag = 'input window, operand 2']
    #allocation5 [shape = 's32[2]{0}', space=sflag, size = 0x8, scoped, tag = 'scoped memory for block8.7']
    #allocation6 [shape = 'u8[32768]{0}', space=vmem, size = 0x8000, scoped, tag = 'output window, operand 0']
    %8 = vsyncpa [#allocation3], 0
    %s9 = scalar_lea.sflag [#allocation3], 1
    %10 = vsyncpa %s9, 0
    %11 = vsyncpa [#allocation5], 0
    %s12 = scalar_lea.sflag [#allocation5], 1
    %13 = vsyncpa %s12, 0
    loop: start=0, step=1, limit=5
    $region2: #{block8.7} parent=1 // loop_pre_header
      _
    $region3: #{block8.7} parent=1 // loop_header
      %s15 = sphi 0, %s19
      %p16 = scmp.ge.s32.totalorder %s15, 5
      %s23 = sphi 0, %s23
      %s25 = sphi 0, %s23
      %s26 = sphi 0, %s25
      %s40 = sphi 0, %s26
      %s46 = sphi 0, %s48
      %s49 = sphi 0, %s46
      %s50 = sphi 0, %s49
      %s66 = sphi 0, %s50
      %s72 = sphi 0, %s74
      %s75 = sphi 0, %s72
      %s76 = sphi 0, %s75
      %s92 = sphi 0, %s76
      %s98 = sphi 0, %s100
      %s101 = sphi 0, %s98
      %s102 = sphi 0, %s101
      %s118 = sphi 0, %s102
    $region4: #{block8.7} parent=1 // loop_header_branch
      %18 = sbr.rel (%p16) target = $region8
    $region5: #{block8.7} parent=1 // loop_body
      %s20 = ssub.s32 %s15, 1
      %s21 = ssub.s32 %s15, 2
      %s22 = sadd.s32 %s15, 1
      %s24 = sadd.s32 %s23, 1
      %p27 = scmp.eq.s32.totalorder %s15, 2
      %p28 = scmp.ne.s32.totalorder %s23, %s25
      %p29 = scmp.eq.s32.totalorder %s15, 0
      %p30 = por %p28, %p29
      %p31 = scmp.ne.s32.totalorder %s23, %s25
      %p32 = scmp.eq.s32.totalorder %s20, 2
      %p33 = por %p31, %p32
      %p34 = scmp.ne.s32.totalorder %s25, %s26
      %p35 = scmp.eq.s32.totalorder %s20, 0
      %p36 = por %p34, %p35
      %p37 = scmp.ne.s32.totalorder %s25, %s26
      %p38 = scmp.eq.s32.totalorder %s21, 2
      %p39 = por %p37, %p38
      %p41 = scmp.ne.s32.totalorder %s26, %s40
      %p42 = scmp.eq.s32.totalorder %s21, 0
      %p43 = por %p41, %p42
      %s44 = ssub.s32 %s15, %s22
      %p45 = scmp.eq.s32.totalorder %s44, 0
      %s47 = sadd.s32 %s46, 1
      %s48 = scalar_select %p45, %s46, %s47
      %p51 = pneg %p45
      %p52 = scmp.eq.s32.totalorder %s15, 2
      %p53 = por %p51, %p52
      %p54 = scmp.ne.s32.totalorder %s46, %s49
      %p55 = scmp.eq.s32.totalorder %s15, 0
      %p56 = por %p54, %p55
      %p57 = scmp.ne.s32.totalorder %s46, %s49
      %p58 = scmp.eq.s32.totalorder %s20, 2
      %p59 = por %p57, %p58
      %p60 = scmp.ne.s32.totalorder %s49, %s50
      %p61 = scmp.eq.s32.totalorder %s20, 0
      %p62 = por %p60, %p61
      %p63 = scmp.ne.s32.totalorder %s49, %s50
      %p64 = scmp.eq.s32.totalorder %s21, 2
      %p65 = por %p63, %p64
      %p67 = scmp.ne.s32.totalorder %s50, %s66
      %p68 = scmp.eq.s32.totalorder %s21, 0
      %p69 = por %p67, %p68
      %s70 = ssub.s32 %s15, %s22
      %p71 = scmp.eq.s32.totalorder %s70, 0
      %s73 = sadd.s32 %s72, 1
      %s74 = scalar_select %p71, %s72, %s73
      %p77 = pneg %p71
      %p78 = scmp.eq.s32.totalorder %s15, 2
      %p79 = por %p77, %p78
      %p80 = scmp.ne.s32.totalorder %s72, %s75
      %p81 = scmp.eq.s32.totalorder %s15, 0
      %p82 = por %p80, %p81
      %p83 = scmp.ne.s32.totalorder %s72, %s75
      %p84 = scmp.eq.s32.totalorder %s20, 2
      %p85 = por %p83, %p84
      %p86 = scmp.ne.s32.totalorder %s75, %s76
      %p87 = scmp.eq.s32.totalorder %s20, 0
      %p88 = por %p86, %p87
      %p89 = scmp.ne.s32.totalorder %s75, %s76
      %p90 = scmp.eq.s32.totalorder %s21, 2
      %p91 = por %p89, %p90
      %p93 = scmp.ne.s32.totalorder %s76, %s92
      %p94 = scmp.eq.s32.totalorder %s21, 0
      %p95 = por %p93, %p94
      %s96 = ssub.s32 %s15, %s22
      %p97 = scmp.eq.s32.totalorder %s96, 0
      %s99 = sadd.s32 %s98, 1
      %s100 = scalar_select %p97, %s98, %s99
      %p103 = pneg %p97
      %p104 = scmp.eq.s32.totalorder %s15, 2
      %p105 = por %p103, %p104
      %p106 = scmp.ne.s32.totalorder %s98, %s101
      %p107 = scmp.eq.s32.totalorder %s15, 0
      %p108 = por %p106, %p107
      %p109 = scmp.ne.s32.totalorder %s98, %s101
      %p110 = scmp.eq.s32.totalorder %s20, 2
      %p111 = por %p109, %p110
      %p112 = scmp.ne.s32.totalorder %s101, %s102
      %p113 = scmp.eq.s32.totalorder %s20, 0
      %p114 = por %p112, %p113
      %p115 = scmp.ne.s32.totalorder %s101, %s102
      %p116 = scmp.eq.s32.totalorder %s21, 2
      %p117 = por %p115, %p116
      %p119 = scmp.ne.s32.totalorder %s102, %s118
      %p120 = scmp.eq.s32.totalorder %s21, 0
      %p121 = por %p119, %p120
      %p122 = scmp.le.s32.totalorder 1, %s15
      %p123 = scmp.lt.s32.totalorder %s15, 4
      %p124 = pnand %p122, %p123
      %p125 = pneg %p124
      // Predicated region
      $region9: #{block8.7} parent=5 // pred_check
        _
      $region10: #{block8.7} parent=5 // pred_check_branch
        %127 = sbr.rel (%p124) target = $region12
      $region11: #{block8.7} parent=5 // pred_region
        %s128 = ssub.s32 %s15, 1
        // Predicated region
        $region13: #{block8.7} parent=11 // pred_check
          %p129 = pneg %p36
        $region14: #{block8.7} parent=11 // pred_check_branch
          %131 = sbr.rel (%p129) target = $region16
        $region15: #{block8.7} parent=11 // pred_region
          _
        $region16: #{block8.7} parent=11 // pred_fallthru
          _
      $region12: #{block8.7} parent=5 // pred_fallthru
        _
      %p132 = scmp.lt.s32.totalorder %s15, 3
      // Predicated region
      $region17: #{block8.7} parent=5 // pred_check
        %p133 = pneg %p132
      $region18: #{block8.7} parent=5 // pred_check_branch
        %135 = sbr.rel (%p133) target = $region20
      $region19: #{block8.7} parent=5 // pred_region
        // Predicated region
        $region21: #{block8.7} parent=19 // pred_check
          %p136 = pneg %p56
        $region22: #{block8.7} parent=19 // pred_check_branch
          %138 = sbr.rel (%p136) target = $region24
        $region23: #{block8.7} parent=19 // pred_region
          %s139 = sand.u32 %s46, 1
          %s140 = scalar_lea.sflag [#allocation3], %s139
          %s141 = sand.u32 %s46, 1
          %s142 = smul.addr %s141, 896
          %s143 = scalar_lea.vmem [#allocation2], %s142
          %145 = vsyncadd %s140, 0
          %s146 = smul.addr %s15, 4
          %s147 = scalar_lea.hbm %s1, %s146
          %s148 = sshll.u32 %s147, 4
          %s149 = int_to_ptr.hbm [resolvable:$true] %s148
          %s150 = sshll.u32 %s143, 4
          %s151 = int_to_ptr.vmem [resolvable:$true] %s150
          %156 = dma.hbm_to_vmem [thread:$0]  %s149, 14336, %s151, %s140, 192, 64, 4
        $region24: #{block8.7} parent=19 // pred_fallthru
          _
        // Predicated region
        $region25: #{block8.7} parent=19 // pred_check
          %p157 = pneg %p82
        $region26: #{block8.7} parent=19 // pred_check_branch
          %159 = sbr.rel (%p157) target = $region28
        $region27: #{block8.7} parent=19 // pred_region
          %s160 = sand.u32 %s72, 1
          %s161 = scalar_lea.sflag [#allocation5], %s160
          %s162 = sand.u32 %s72, 1
          %s163 = scalar_lea.vmem [#allocation4], %s162
          %165 = vsyncadd %s161, 0
          %s166 = scalar_lea.hbm %s2, %s15
          %s168 = sshll.u32 %s166, 4
          %s169 = int_to_ptr.hbm [resolvable:$true] %s168
          %s170 = sshll.u32 %s163, 4
          %s171 = int_to_ptr.vmem [resolvable:$true] %s170
          %173 = dma.hbm_to_vmem [thread:$0]  %s169, 16, %s171, %s161
        $region28: #{block8.7} parent=19 // pred_fallthru
          _
      $region20: #{block8.7} parent=5 // pred_fallthru
        _
      %p174 = scmp.le.s32.totalorder 1, %s15
      %p175 = scmp.lt.s32.totalorder %s15, 4
      %p176 = pnand %p174, %p175
      %p177 = pneg %p176
      // Predicated region
      $region29: #{block8.7} parent=5 // pred_check
        _
      $region30: #{block8.7} parent=5 // pred_check_branch
        %179 = sbr.rel (%p176) target = $region32
      $region31: #{block8.7} parent=5 // pred_region
        %s180 = ssub.s32 %s15, 1
        %s181 = sand.u32 %s49, 1
        %s182 = scalar_lea.sflag [#allocation3], %s181
        %s183 = sand.u32 %s49, 1
        %s184 = smul.addr %s183, 896
        %s185 = scalar_lea.vmem [#allocation2], %s184
        // Predicated region
        $region33: #{block8.7} parent=31 // pred_check
          %p186 = pneg %p62
        $region34: #{block8.7} parent=31 // pred_check_branch
          %188 = sbr.rel (%p186) target = $region36
        $region35: #{block8.7} parent=31 // pred_region
          %190 = dma.done %s182, 14336
        $region36: #{block8.7} parent=31 // pred_fallthru
          _
        %s191 = sand.u32 %s75, 1
        %s192 = scalar_lea.sflag [#allocation5], %s191
        %s193 = sand.u32 %s75, 1
        %s194 = scalar_lea.vmem [#allocation4], %s193
        // Predicated region
        $region37: #{block8.7} parent=31 // pred_check
          %p195 = pneg %p88
        $region38: #{block8.7} parent=31 // pred_check_branch
          %197 = sbr.rel (%p195) target = $region40
        $region39: #{block8.7} parent=31 // pred_region
          %199 = dma.done %s192, 16
        $region40: #{block8.7} parent=31 // pred_fallthru
          _
        %p200 = pneg %p36
        %p201 = pneg %p33
        %s202 = sand.u32 %s49, 1
        %s203 = scalar_lea.sflag [#allocation3], %s202
        %s204 = sand.u32 %s49, 1
        %s205 = smul.addr %s204, 896
        %s206 = scalar_lea.vmem [#allocation2], %s205
        %p207 = pneg %p62
        %p208 = pneg %p59
        %s209 = sand.u32 %s75, 1
        %s210 = scalar_lea.sflag [#allocation5], %s209
        %s211 = sand.u32 %s75, 1
        %s212 = scalar_lea.vmem [#allocation4], %s211
        %p213 = pneg %p88
        %p214 = pneg %p85
        %p215 = pneg %p114
        %p216 = pneg %p111
        %s217 = sand.u32 %s101, 1
        %s218 = sand.u32 %s101, 1
        %s219 = smul.addr %s218, 32
        %s220 = scalar_lea.vmem [#allocation6], %s219
        %v221 = vld [vmem:[%s0] sm:$0xff]
        %v222 = vld [vmem:[%s0 + $0x8] sm:$0xff]
        %v223 = vld [vmem:[%s0 + $0x10] sm:$0xff]
        %v224 = vld [vmem:[%s0 + $0x18] sm:$0xff]
        %v225 = vld [vmem:[%s0 + $0x20] sm:$0xff]
        %v226 = vld [vmem:[%s0 + $0x28] sm:$0xff]
        %v227 = vld [vmem:[%s0 + $0x30] sm:$0xff]
        %v228 = vld [vmem:[%s0 + $0x38] sm:$0xff]
        %v229 = vld [vmem:[%s0 + $0x40] sm:$0xff]
        %v230 = vld [vmem:[%s0 + $0x48] sm:$0xff]
        %v231 = vld [vmem:[%s0 + $0x50] sm:$0xff]
        %v232 = vld [vmem:[%s0 + $0x58] sm:$0xff]
        %v233 = vld [vmem:[%s0 + $0x60] sm:$0xff]
        %v234 = vld [vmem:[%s0 + $0x68] sm:$0xff]
        %v235 = vld [vmem:[%s0 + $0x70] sm:$0xff]
        %v236 = vld [vmem:[%s0 + $0x78] sm:$0xff]
        %v237 = vld [vmem:[%s0 + $0x80] sm:$0xff]
        %v238 = vld [vmem:[%s0 + $0x88] sm:$0xff]
        %v239 = vld [vmem:[%s0 + $0x90] sm:$0xff]
        %v240 = vld [vmem:[%s0 + $0x98] sm:$0xff]
        %v241 = vld [vmem:[%s0 + $0xa0] sm:$0xff]
        %v242 = vld [vmem:[%s0 + $0xa8] sm:$0xff]
        %v243 = vld [vmem:[%s0 + $0xb0] sm:$0xff]
        %v244 = vld [vmem:[%s0 + $0xb8] sm:$0xff]
        %v245 = vld [vmem:[%s0 + $0xc0] sm:$0xff]
        %v246 = vld [vmem:[%s0 + $0xc8] sm:$0xff]
        %v247 = vld [vmem:[%s0 + $0xd0] sm:$0xff]
        %v248 = vld [vmem:[%s0 + $0xd8] sm:$0xff]
        %v249 = vld [vmem:[%s185] sm:$0xf]
        %v250 = vld [vmem:[%s185 + $0x4] sm:$0xf]
        %v251 = vld [vmem:[%s185 + $0x8] sm:$0xf]
        %v252 = vld [vmem:[%s185 + $0xc] sm:$0xf]
        %v253 = vld [vmem:[%s185 + $0x10] sm:$0xf]
        %v254 = vld [vmem:[%s185 + $0x14] sm:$0xf]
        %v255 = vld [vmem:[%s185 + $0x18] sm:$0xf]
        %v256 = vld [vmem:[%s185 + $0x1c] sm:$0xf]
        %v257 = vld [vmem:[%s185 + $0x20] sm:$0xf]
        %v258 = vld [vmem:[%s185 + $0x24] sm:$0xf]
        %v259 = vld [vmem:[%s185 + $0x28] sm:$0xf]
        %v260 = vld [vmem:[%s185 + $0x2c] sm:$0xf]
        %v261 = vld [vmem:[%s185 + $0x30] sm:$0xf]
        %v262 = vld [vmem:[%s185 + $0x34] sm:$0xf]
        %v263 = vld [vmem:[%s185 + $0x38] sm:$0xf]
        %v264 = vld [vmem:[%s185 + $0x3c] sm:$0xf]
        %v265 = vld [vmem:[%s185 + $0x40] sm:$0xf]
        %v266 = vld [vmem:[%s185 + $0x44] sm:$0xf]
        %v267 = vld [vmem:[%s185 + $0x48] sm:$0xf]
        %v268 = vld [vmem:[%s185 + $0x4c] sm:$0xf]
        %v269 = vld [vmem:[%s185 + $0x50] sm:$0xf]
        %v270 = vld [vmem:[%s185 + $0x54] sm:$0xf]
        %v271 = vld [vmem:[%s185 + $0x58] sm:$0xf]
        %v272 = vld [vmem:[%s185 + $0x5c] sm:$0xf]
        %v273 = vld [vmem:[%s185 + $0x60] sm:$0xf]
        %v274 = vld [vmem:[%s185 + $0x64] sm:$0xf]
        %v275 = vld [vmem:[%s185 + $0x68] sm:$0xf]
        %v276 = vld [vmem:[%s185 + $0x6c] sm:$0xf]
        %v277 = vld [vmem:[%s185 + $0x70] sm:$0xf]
        %v278 = vld [vmem:[%s185 + $0x74] sm:$0xf]
        %v279 = vld [vmem:[%s185 + $0x78] sm:$0xf]
        %v280 = vld [vmem:[%s185 + $0x7c] sm:$0xf]
        %v281 = vld [vmem:[%s185 + $0x80] sm:$0xf]
        %v282 = vld [vmem:[%s185 + $0x84] sm:$0xf]
        %v283 = vld [vmem:[%s185 + $0x88] sm:$0xf]
        %v284 = vld [vmem:[%s185 + $0x8c] sm:$0xf]
        %v285 = vld [vmem:[%s185 + $0x90] sm:$0xf]
        %v286 = vld [vmem:[%s185 + $0x94] sm:$0xf]
        %v287 = vld [vmem:[%s185 + $0x98] sm:$0xf]
        %v288 = vld [vmem:[%s185 + $0x9c] sm:$0xf]
        %v289 = vld [vmem:[%s185 + $0xa0] sm:$0xf]
        %v290 = vld [vmem:[%s185 + $0xa4] sm:$0xf]
        %v291 = vld [vmem:[%s185 + $0xa8] sm:$0xf]
        %v292 = vld [vmem:[%s185 + $0xac] sm:$0xf]
        %v293 = vld [vmem:[%s185 + $0xb0] sm:$0xf]
        %v294 = vld [vmem:[%s185 + $0xb4] sm:$0xf]
        %v295 = vld [vmem:[%s185 + $0xb8] sm:$0xf]
        %v296 = vld [vmem:[%s185 + $0xbc] sm:$0xf]
        %v297 = vld [vmem:[%s185 + $0xc0] sm:$0xf]
        %v298 = vld [vmem:[%s185 + $0xc4] sm:$0xf]
        %v299 = vld [vmem:[%s185 + $0xc8] sm:$0xf]
        %v300 = vld [vmem:[%s185 + $0xcc] sm:$0xf]
        %v301 = vld [vmem:[%s185 + $0xd0] sm:$0xf]
        %v302 = vld [vmem:[%s185 + $0xd4] sm:$0xf]
        %v303 = vld [vmem:[%s185 + $0xd8] sm:$0xf]
        %v304 = vld [vmem:[%s185 + $0xdc] sm:$0xf]
        %v305 = vld [vmem:[%s185 + $0xe0] sm:$0xf]
        %v306 = vld [vmem:[%s185 + $0xe4] sm:$0xf]
        %v307 = vld [vmem:[%s185 + $0xe8] sm:$0xf]
        %v308 = vld [vmem:[%s185 + $0xec] sm:$0xf]
        %v309 = vld [vmem:[%s185 + $0xf0] sm:$0xf]
        %v310 = vld [vmem:[%s185 + $0xf4] sm:$0xf]
        %v311 = vld [vmem:[%s185 + $0xf8] sm:$0xf]
        %v312 = vld [vmem:[%s185 + $0xfc] sm:$0xf]
        %v313 = vld [vmem:[%s185 + $0x100] sm:$0xf]
        %v314 = vld [vmem:[%s185 + $0x104] sm:$0xf]
        %v315 = vld [vmem:[%s185 + $0x108] sm:$0xf]
        %v316 = vld [vmem:[%s185 + $0x10c] sm:$0xf]
        %v317 = vld [vmem:[%s185 + $0x110] sm:$0xf]
        %v318 = vld [vmem:[%s185 + $0x114] sm:$0xf]
        %v319 = vld [vmem:[%s185 + $0x118] sm:$0xf]
        %v320 = vld [vmem:[%s185 + $0x11c] sm:$0xf]
        %v321 = vld [vmem:[%s185 + $0x120] sm:$0xf]
        %v322 = vld [vmem:[%s185 + $0x124] sm:$0xf]
        %v323 = vld [vmem:[%s185 + $0x128] sm:$0xf]
        %v324 = vld [vmem:[%s185 + $0x12c] sm:$0xf]
        %v325 = vld [vmem:[%s185 + $0x130] sm:$0xf]
        %v326 = vld [vmem:[%s185 + $0x134] sm:$0xf]
        %v327 = vld [vmem:[%s185 + $0x138] sm:$0xf]
        %v328 = vld [vmem:[%s185 + $0x13c] sm:$0xf]
        %v329 = vld [vmem:[%s185 + $0x140] sm:$0xf]
        %v330 = vld [vmem:[%s185 + $0x144] sm:$0xf]
        %v331 = vld [vmem:[%s185 + $0x148] sm:$0xf]
        %v332 = vld [vmem:[%s185 + $0x14c] sm:$0xf]
        %v333 = vld [vmem:[%s185 + $0x150] sm:$0xf]
        %v334 = vld [vmem:[%s185 + $0x154] sm:$0xf]
        %v335 = vld [vmem:[%s185 + $0x158] sm:$0xf]
        %v336 = vld [vmem:[%s185 + $0x15c] sm:$0xf]
        %v337 = vld [vmem:[%s185 + $0x160] sm:$0xf]
        %v338 = vld [vmem:[%s185 + $0x164] sm:$0xf]
        %v339 = vld [vmem:[%s185 + $0x168] sm:$0xf]
        %v340 = vld [vmem:[%s185 + $0x16c] sm:$0xf]
        %v341 = vld [vmem:[%s185 + $0x170] sm:$0xf]
        %v342 = vld [vmem:[%s185 + $0x174] sm:$0xf]
        %v343 = vld [vmem:[%s185 + $0x178] sm:$0xf]
        %v344 = vld [vmem:[%s185 + $0x17c] sm:$0xf]
        %v345 = vld [vmem:[%s185 + $0x180] sm:$0xf]
        %v346 = vld [vmem:[%s185 + $0x184] sm:$0xf]
        %v347 = vld [vmem:[%s185 + $0x188] sm:$0xf]
        %v348 = vld [vmem:[%s185 + $0x18c] sm:$0xf]
        %v349 = vld [vmem:[%s185 + $0x190] sm:$0xf]
        %v350 = vld [vmem:[%s185 + $0x194] sm:$0xf]
        %v351 = vld [vmem:[%s185 + $0x198] sm:$0xf]
        %v352 = vld [vmem:[%s185 + $0x19c] sm:$0xf]
        %v353 = vld [vmem:[%s185 + $0x1a0] sm:$0xf]
        %v354 = vld [vmem:[%s185 + $0x1a4] sm:$0xf]
        %v355 = vld [vmem:[%s185 + $0x1a8] sm:$0xf]
        %v356 = vld [vmem:[%s185 + $0x1ac] sm:$0xf]
        %v357 = vld [vmem:[%s185 + $0x1b0] sm:$0xf]
        %v358 = vld [vmem:[%s185 + $0x1b4] sm:$0xf]
        %v359 = vld [vmem:[%s185 + $0x1b8] sm:$0xf]
        %v360 = vld [vmem:[%s185 + $0x1bc] sm:$0xf]
        %v361 = vld [vmem:[%s185 + $0x1c0] sm:$0xf]
        %v362 = vld [vmem:[%s185 + $0x1c4] sm:$0xf]
        %v363 = vld [vmem:[%s185 + $0x1c8] sm:$0xf]
        %v364 = vld [vmem:[%s185 + $0x1cc] sm:$0xf]
        %v365 = vld [vmem:[%s185 + $0x1d0] sm:$0xf]
        %v366 = vld [vmem:[%s185 + $0x1d4] sm:$0xf]
        %v367 = vld [vmem:[%s185 + $0x1d8] sm:$0xf]
        %v368 = vld [vmem:[%s185 + $0x1dc] sm:$0xf]
        %v369 = vld [vmem:[%s185 + $0x1e0] sm:$0xf]
        %v370 = vld [vmem:[%s185 + $0x1e4] sm:$0xf]
        %v371 = vld [vmem:[%s185 + $0x1e8] sm:$0xf]
        %v372 = vld [vmem:[%s185 + $0x1ec] sm:$0xf]
        %v373 = vld [vmem:[%s185 + $0x1f0] sm:$0xf]
        %v374 = vld [vmem:[%s185 + $0x1f4] sm:$0xf]
        %v375 = vld [vmem:[%s185 + $0x1f8] sm:$0xf]
        %v376 = vld [vmem:[%s185 + $0x1fc] sm:$0xf]
        %v377 = vld [vmem:[%s185 + $0x200] sm:$0xf]
        %v378 = vld [vmem:[%s185 + $0x204] sm:$0xf]
        %v379 = vld [vmem:[%s185 + $0x208] sm:$0xf]
        %v380 = vld [vmem:[%s185 + $0x20c] sm:$0xf]
        %v381 = vld [vmem:[%s185 + $0x210] sm:$0xf]
        %v382 = vld [vmem:[%s185 + $0x214] sm:$0xf]
        %v383 = vld [vmem:[%s185 + $0x218] sm:$0xf]
        %v384 = vld [vmem:[%s185 + $0x21c] sm:$0xf]
        %v385 = vld [vmem:[%s185 + $0x220] sm:$0xf]
        %v386 = vld [vmem:[%s185 + $0x224] sm:$0xf]
        %v387 = vld [vmem:[%s185 + $0x228] sm:$0xf]
        %v388 = vld [vmem:[%s185 + $0x22c] sm:$0xf]
        %v389 = vld [vmem:[%s185 + $0x230] sm:$0xf]
        %v390 = vld [vmem:[%s185 + $0x234] sm:$0xf]
        %v391 = vld [vmem:[%s185 + $0x238] sm:$0xf]
        %v392 = vld [vmem:[%s185 + $0x23c] sm:$0xf]
        %v393 = vld [vmem:[%s185 + $0x240] sm:$0xf]
        %v394 = vld [vmem:[%s185 + $0x244] sm:$0xf]
        %v395 = vld [vmem:[%s185 + $0x248] sm:$0xf]
        %v396 = vld [vmem:[%s185 + $0x24c] sm:$0xf]
        %v397 = vld [vmem:[%s185 + $0x250] sm:$0xf]
        %v398 = vld [vmem:[%s185 + $0x254] sm:$0xf]
        %v399 = vld [vmem:[%s185 + $0x258] sm:$0xf]
        %v400 = vld [vmem:[%s185 + $0x25c] sm:$0xf]
        %v401 = vld [vmem:[%s185 + $0x260] sm:$0xf]
        %v402 = vld [vmem:[%s185 + $0x264] sm:$0xf]
        %v403 = vld [vmem:[%s185 + $0x268] sm:$0xf]
        %v404 = vld [vmem:[%s185 + $0x26c] sm:$0xf]
        %v405 = vld [vmem:[%s185 + $0x270] sm:$0xf]
        %v406 = vld [vmem:[%s185 + $0x274] sm:$0xf]
        %v407 = vld [vmem:[%s185 + $0x278] sm:$0xf]
        %v408 = vld [vmem:[%s185 + $0x27c] sm:$0xf]
        %v409 = vld [vmem:[%s185 + $0x280] sm:$0xf]
        %v410 = vld [vmem:[%s185 + $0x284] sm:$0xf]
        %v411 = vld [vmem:[%s185 + $0x288] sm:$0xf]
        %v412 = vld [vmem:[%s185 + $0x28c] sm:$0xf]
        %v413 = vld [vmem:[%s185 + $0x290] sm:$0xf]
        %v414 = vld [vmem:[%s185 + $0x294] sm:$0xf]
        %v415 = vld [vmem:[%s185 + $0x298] sm:$0xf]
        %v416 = vld [vmem:[%s185 + $0x29c] sm:$0xf]
        %v417 = vld [vmem:[%s185 + $0x2a0] sm:$0xf]
        %v418 = vld [vmem:[%s185 + $0x2a4] sm:$0xf]
        %v419 = vld [vmem:[%s185 + $0x2a8] sm:$0xf]
        %v420 = vld [vmem:[%s185 + $0x2ac] sm:$0xf]
        %v421 = vld [vmem:[%s185 + $0x2b0] sm:$0xf]
        %v422 = vld [vmem:[%s185 + $0x2b4] sm:$0xf]
        %v423 = vld [vmem:[%s185 + $0x2b8] sm:$0xf]
        %v424 = vld [vmem:[%s185 + $0x2bc] sm:$0xf]
        %v425 = vld [vmem:[%s185 + $0x2c0] sm:$0xf]
        %v426 = vld [vmem:[%s185 + $0x2c4] sm:$0xf]
        %v427 = vld [vmem:[%s185 + $0x2c8] sm:$0xf]
        %v428 = vld [vmem:[%s185 + $0x2cc] sm:$0xf]
        %v429 = vld [vmem:[%s185 + $0x2d0] sm:$0xf]
        %v430 = vld [vmem:[%s185 + $0x2d4] sm:$0xf]
        %v431 = vld [vmem:[%s185 + $0x2d8] sm:$0xf]
        %v432 = vld [vmem:[%s185 + $0x2dc] sm:$0xf]
        %v433 = vld [vmem:[%s185 + $0x2e0] sm:$0xf]
        %v434 = vld [vmem:[%s185 + $0x2e4] sm:$0xf]
        %v435 = vld [vmem:[%s185 + $0x2e8] sm:$0xf]
        %v436 = vld [vmem:[%s185 + $0x2ec] sm:$0xf]
        %v437 = vld [vmem:[%s185 + $0x2f0] sm:$0xf]
        %v438 = vld [vmem:[%s185 + $0x2f4] sm:$0xf]
        %v439 = vld [vmem:[%s185 + $0x2f8] sm:$0xf]
        %v440 = vld [vmem:[%s185 + $0x2fc] sm:$0xf]
        %v441 = vld [vmem:[%s185 + $0x300] sm:$0xf]
        %v442 = vld [vmem:[%s185 + $0x304] sm:$0xf]
        %v443 = vld [vmem:[%s185 + $0x308] sm:$0xf]
        %v444 = vld [vmem:[%s185 + $0x30c] sm:$0xf]
        %v445 = vld [vmem:[%s185 + $0x310] sm:$0xf]
        %v446 = vld [vmem:[%s185 + $0x314] sm:$0xf]
        %v447 = vld [vmem:[%s185 + $0x318] sm:$0xf]
        %v448 = vld [vmem:[%s185 + $0x31c] sm:$0xf]
        %v449 = vld [vmem:[%s185 + $0x320] sm:$0xf]
        %v450 = vld [vmem:[%s185 + $0x324] sm:$0xf]
        %v451 = vld [vmem:[%s185 + $0x328] sm:$0xf]
        %v452 = vld [vmem:[%s185 + $0x32c] sm:$0xf]
        %v453 = vld [vmem:[%s185 + $0x330] sm:$0xf]
        %v454 = vld [vmem:[%s185 + $0x334] sm:$0xf]
        %v455 = vld [vmem:[%s185 + $0x338] sm:$0xf]
        %v456 = vld [vmem:[%s185 + $0x33c] sm:$0xf]
        %v457 = vld [vmem:[%s185 + $0x340] sm:$0xf]
        %v458 = vld [vmem:[%s185 + $0x344] sm:$0xf]
        %v459 = vld [vmem:[%s185 + $0x348] sm:$0xf]
        %v460 = vld [vmem:[%s185 + $0x34c] sm:$0xf]
        %v461 = vld [vmem:[%s185 + $0x350] sm:$0xf]
        %v462 = vld [vmem:[%s185 + $0x354] sm:$0xf]
        %v463 = vld [vmem:[%s185 + $0x358] sm:$0xf]
        %v464 = vld [vmem:[%s185 + $0x35c] sm:$0xf]
        %v465 = vld [vmem:[%s185 + $0x360] sm:$0xf]
        %v466 = vld [vmem:[%s185 + $0x364] sm:$0xf]
        %v467 = vld [vmem:[%s185 + $0x368] sm:$0xf]
        %v468 = vld [vmem:[%s185 + $0x36c] sm:$0xf]
        %v469 = vld [vmem:[%s185 + $0x370] sm:$0xf]
        %v470 = vld [vmem:[%s185 + $0x374] sm:$0xf]
        %v471 = vld [vmem:[%s185 + $0x378] sm:$0xf]
        %v472 = vld [vmem:[%s185 + $0x37c] sm:$0xf]
        %v473 = vld [vmem:[%s194] sm:$0x1]
        %v475 = vperm.slane %v473, 0
        %v505 = vunpack.c.l.b16 %v221
        %v506 = vunpack.c.h.b16 %v221
        %v507 = vunpack.c.l.b16 %v222
        %v508 = vunpack.c.h.b16 %v222
        %v509 = vunpack.c.l.b16 %v223
        %v510 = vunpack.c.h.b16 %v223
        %v511 = vunpack.c.l.b16 %v224
        %v512 = vunpack.c.h.b16 %v224
        %v513 = vunpack.c.l.b16 %v225
        %v514 = vunpack.c.h.b16 %v225
        %v515 = vunpack.c.l.b16 %v226
        %v516 = vunpack.c.h.b16 %v226
        %v517 = vunpack.c.l.b16 %v227
        %v518 = vunpack.c.h.b16 %v227
        %v519 = vunpack.c.l.b16 %v228
        %v520 = vunpack.c.h.b16 %v228
        %v521 = vunpack.c.l.b16 %v229
        %v522 = vunpack.c.h.b16 %v229
        %v523 = vunpack.c.l.b16 %v230
        %v524 = vunpack.c.h.b16 %v230
        %v525 = vunpack.c.l.b16 %v231
        %v526 = vunpack.c.h.b16 %v231
        %v527 = vunpack.c.l.b16 %v232
        %v528 = vunpack.c.h.b16 %v232
        %v529 = vunpack.c.l.b16 %v233
        %v530 = vunpack.c.h.b16 %v233
        %v531 = vunpack.c.l.b16 %v234
        %v532 = vunpack.c.h.b16 %v234
        %v533 = vunpack.c.l.b16 %v235
        %v534 = vunpack.c.h.b16 %v235
        %v535 = vunpack.c.l.b16 %v236
        %v536 = vunpack.c.h.b16 %v236
        %v537 = vunpack.c.l.b16 %v237
        %v538 = vunpack.c.h.b16 %v237
        %v539 = vunpack.c.l.b16 %v238
        %v540 = vunpack.c.h.b16 %v238
        %v541 = vunpack.c.l.b16 %v239
        %v542 = vunpack.c.h.b16 %v239
        %v543 = vunpack.c.l.b16 %v240
        %v544 = vunpack.c.h.b16 %v240
        %v545 = vunpack.c.l.b16 %v241
        %v546 = vunpack.c.h.b16 %v241
        %v547 = vunpack.c.l.b16 %v242
        %v548 = vunpack.c.h.b16 %v242
        %v549 = vunpack.c.l.b16 %v243
        %v550 = vunpack.c.h.b16 %v243
        %v551 = vunpack.c.l.b16 %v244
        %v552 = vunpack.c.h.b16 %v244
        %v553 = vunpack.c.l.b16 %v245
        %v554 = vunpack.c.h.b16 %v245
        %v555 = vunpack.c.l.b16 %v246
        %v556 = vunpack.c.h.b16 %v246
        %v557 = vunpack.c.l.b16 %v247
        %v558 = vunpack.c.h.b16 %v247
        %v559 = vunpack.c.l.b16 %v248
        %v560 = vunpack.c.h.b16 %v248
        %v561 = vpack.c.b16 %v519, %v505
        %v562 = vpack.c.b16 %v520, %v506
        %v563 = vpack.c.b16 %v521, %v507
        %v564 = vpack.c.b16 %v522, %v508
        %v565 = vpack.c.b16 %v523, %v509
        %v566 = vpack.c.b16 %v524, %v510
        %v567 = vpack.c.b16 %v525, %v511
        %v568 = vpack.c.b16 %v526, %v512
        %v569 = vpack.c.b16 %v527, %v513
        %v570 = vpack.c.b16 %v528, %v514
        %v571 = vpack.c.b16 %v529, %v515
        %v572 = vpack.c.b16 %v530, %v516
        %v573 = vpack.c.b16 %v531, %v517
        %v574 = vpack.c.b16 %v532, %v518
        %v575 = vpack.c.b16 %v547, %v533
        %v576 = vpack.c.b16 %v548, %v534
        %v577 = vpack.c.b16 %v549, %v535
        %v578 = vpack.c.b16 %v550, %v536
        %v579 = vpack.c.b16 %v551, %v537
        %v580 = vpack.c.b16 %v552, %v538
        %v581 = vpack.c.b16 %v553, %v539
        %v582 = vpack.c.b16 %v554, %v540
        %v583 = vpack.c.b16 %v555, %v541
        %v584 = vpack.c.b16 %v556, %v542
        %v585 = vpack.c.b16 %v557, %v543
        %v586 = vpack.c.b16 %v558, %v544
        %v587 = vpack.c.b16 %v559, %v545
        %v588 = vpack.c.b16 %v560, %v546
        %v841 = vunpack.c.l.b16 %v249
        %v842 = vunpack.c.l.b16 %v250
        %v843 = vunpack.c.l.b16 %v251
        %v844 = vunpack.c.l.b16 %v252
        %v845 = vunpack.c.l.b16 %v253
        %v846 = vunpack.c.l.b16 %v254
        %v847 = vunpack.c.l.b16 %v255
        %v848 = vunpack.c.l.b16 %v256
        %v849 = vunpack.c.l.b16 %v257
        %v850 = vunpack.c.l.b16 %v258
        %v851 = vunpack.c.l.b16 %v259
        %v852 = vunpack.c.l.b16 %v260
        %v853 = vunpack.c.l.b16 %v261
        %v854 = vunpack.c.l.b16 %v262
        %v855 = vunpack.c.l.b16 %v263
        %v856 = vunpack.c.l.b16 %v264
        %v857 = vunpack.c.l.b16 %v265
        %v858 = vunpack.c.l.b16 %v266
        %v859 = vunpack.c.l.b16 %v267
        %v860 = vunpack.c.l.b16 %v268
        %v861 = vunpack.c.l.b16 %v269
        %v862 = vunpack.c.l.b16 %v270
        %v863 = vunpack.c.l.b16 %v271
        %v864 = vunpack.c.l.b16 %v272
        %v865 = vunpack.c.l.b16 %v273
        %v866 = vunpack.c.l.b16 %v274
        %v867 = vunpack.c.l.b16 %v275
        %v868 = vunpack.c.l.b16 %v276
        %v869 = vunpack.c.l.b16 %v277
        %v870 = vunpack.c.l.b16 %v278
        %v871 = vunpack.c.l.b16 %v279
        %v872 = vunpack.c.l.b16 %v280
        %v873 = vunpack.c.l.b16 %v281
        %v874 = vunpack.c.l.b16 %v282
        %v875 = vunpack.c.l.b16 %v283
        %v876 = vunpack.c.l.b16 %v284
        %v877 = vunpack.c.l.b16 %v285
        %v878 = vunpack.c.l.b16 %v286
        %v879 = vunpack.c.l.b16 %v287
        %v880 = vunpack.c.l.b16 %v288
        %v881 = vunpack.c.l.b16 %v289
        %v882 = vunpack.c.l.b16 %v290
        %v883 = vunpack.c.l.b16 %v291
        %v884 = vunpack.c.l.b16 %v292
        %v885 = vunpack.c.l.b16 %v293
        %v886 = vunpack.c.l.b16 %v294
        %v887 = vunpack.c.l.b16 %v295
        %v888 = vunpack.c.l.b16 %v296
        %v889 = vunpack.c.l.b16 %v297
        %v890 = vunpack.c.l.b16 %v298
        %v891 = vunpack.c.l.b16 %v299
        %v892 = vunpack.c.l.b16 %v300
        %v893 = vunpack.c.l.b16 %v301
        %v894 = vunpack.c.l.b16 %v302
        %v895 = vunpack.c.l.b16 %v303
        %v896 = vunpack.c.l.b16 %v304
        %v897 = vunpack.c.l.b16 %v305
        %v898 = vunpack.c.l.b16 %v306
        %v899 = vunpack.c.l.b16 %v307
        %v900 = vunpack.c.l.b16 %v308
        %v901 = vunpack.c.l.b16 %v309
        %v902 = vunpack.c.l.b16 %v310
        %v903 = vunpack.c.l.b16 %v311
        %v904 = vunpack.c.l.b16 %v312
        %v905 = vunpack.c.l.b16 %v313
        %v906 = vunpack.c.l.b16 %v314
        %v907 = vunpack.c.l.b16 %v315
        %v908 = vunpack.c.l.b16 %v316
        %v909 = vunpack.c.l.b16 %v317
        %v910 = vunpack.c.l.b16 %v318
        %v911 = vunpack.c.l.b16 %v319
        %v912 = vunpack.c.l.b16 %v320
        %v913 = vunpack.c.l.b16 %v321
        %v914 = vunpack.c.l.b16 %v322
        %v915 = vunpack.c.l.b16 %v323
        %v916 = vunpack.c.l.b16 %v324
        %v917 = vunpack.c.l.b16 %v325
        %v918 = vunpack.c.l.b16 %v326
        %v919 = vunpack.c.l.b16 %v327
        %v920 = vunpack.c.l.b16 %v328
        %v921 = vunpack.c.l.b16 %v329
        %v922 = vunpack.c.l.b16 %v330
        %v923 = vunpack.c.l.b16 %v331
        %v924 = vunpack.c.l.b16 %v332
        %v925 = vunpack.c.l.b16 %v333
        %v926 = vunpack.c.l.b16 %v334
        %v927 = vunpack.c.l.b16 %v335
        %v928 = vunpack.c.l.b16 %v336
        %v929 = vunpack.c.l.b16 %v337
        %v930 = vunpack.c.l.b16 %v338
        %v931 = vunpack.c.l.b16 %v339
        %v932 = vunpack.c.l.b16 %v340
        %v933 = vunpack.c.l.b16 %v341
        %v934 = vunpack.c.l.b16 %v342
        %v935 = vunpack.c.l.b16 %v343
        %v936 = vunpack.c.l.b16 %v344
        %v937 = vunpack.c.l.b16 %v345
        %v938 = vunpack.c.l.b16 %v346
        %v939 = vunpack.c.l.b16 %v347
        %v940 = vunpack.c.l.b16 %v348
        %v941 = vunpack.c.l.b16 %v349
        %v942 = vunpack.c.l.b16 %v350
        %v943 = vunpack.c.l.b16 %v351
        %v944 = vunpack.c.l.b16 %v352
        %v945 = vunpack.c.l.b16 %v353
        %v946 = vunpack.c.l.b16 %v354
        %v947 = vunpack.c.l.b16 %v355
        %v948 = vunpack.c.l.b16 %v356
        %v949 = vunpack.c.l.b16 %v357
        %v950 = vunpack.c.l.b16 %v358
        %v951 = vunpack.c.l.b16 %v359
        %v952 = vunpack.c.l.b16 %v360
        %v953 = vunpack.c.l.b16 %v361
        %v954 = vunpack.c.l.b16 %v362
        %v955 = vunpack.c.l.b16 %v363
        %v956 = vunpack.c.l.b16 %v364
        %v957 = vunpack.c.l.b16 %v365
        %v958 = vunpack.c.l.b16 %v366
        %v959 = vunpack.c.l.b16 %v367
        %v960 = vunpack.c.l.b16 %v368
        %v961 = vunpack.c.l.b16 %v369
        %v962 = vunpack.c.l.b16 %v370
        %v963 = vunpack.c.l.b16 %v371
        %v964 = vunpack.c.l.b16 %v372
        %v965 = vunpack.c.l.b16 %v373
        %v966 = vunpack.c.l.b16 %v374
        %v967 = vunpack.c.l.b16 %v375
        %v968 = vunpack.c.l.b16 %v376
        %v969 = vunpack.c.l.b16 %v377
        %v970 = vunpack.c.l.b16 %v378
        %v971 = vunpack.c.l.b16 %v379
        %v972 = vunpack.c.l.b16 %v380
        %v973 = vunpack.c.l.b16 %v381
        %v974 = vunpack.c.l.b16 %v382
        %v975 = vunpack.c.l.b16 %v383
        %v976 = vunpack.c.l.b16 %v384
        %v977 = vunpack.c.l.b16 %v385
        %v978 = vunpack.c.l.b16 %v386
        %v979 = vunpack.c.l.b16 %v387
        %v980 = vunpack.c.l.b16 %v388
        %v981 = vunpack.c.l.b16 %v389
        %v982 = vunpack.c.l.b16 %v390
        %v983 = vunpack.c.l.b16 %v391
        %v984 = vunpack.c.l.b16 %v392
        %v985 = vunpack.c.l.b16 %v393
        %v986 = vunpack.c.l.b16 %v394
        %v987 = vunpack.c.l.b16 %v395
        %v988 = vunpack.c.l.b16 %v396
        %v989 = vunpack.c.l.b16 %v397
        %v990 = vunpack.c.l.b16 %v398
        %v991 = vunpack.c.l.b16 %v399
        %v992 = vunpack.c.l.b16 %v400
        %v993 = vunpack.c.l.b16 %v401
        %v994 = vunpack.c.l.b16 %v402
        %v995 = vunpack.c.l.b16 %v403
        %v996 = vunpack.c.l.b16 %v404
        %v997 = vunpack.c.l.b16 %v405
        %v998 = vunpack.c.l.b16 %v406
        %v999 = vunpack.c.l.b16 %v407
        %v1000 = vunpack.c.l.b16 %v408
        %v1001 = vunpack.c.l.b16 %v409
        %v1002 = vunpack.c.l.b16 %v410
        %v1003 = vunpack.c.l.b16 %v411
        %v1004 = vunpack.c.l.b16 %v412
        %v1005 = vunpack.c.l.b16 %v413
        %v1006 = vunpack.c.l.b16 %v414
        %v1007 = vunpack.c.l.b16 %v415
        %v1008 = vunpack.c.l.b16 %v416
        %v1009 = vunpack.c.l.b16 %v417
        %v1010 = vunpack.c.l.b16 %v418
        %v1011 = vunpack.c.l.b16 %v419
        %v1012 = vunpack.c.l.b16 %v420
        %v1013 = vunpack.c.l.b16 %v421
        %v1014 = vunpack.c.l.b16 %v422
        %v1015 = vunpack.c.l.b16 %v423
        %v1016 = vunpack.c.l.b16 %v424
        %v1017 = vunpack.c.l.b16 %v425
        %v1018 = vunpack.c.l.b16 %v426
        %v1019 = vunpack.c.l.b16 %v427
        %v1020 = vunpack.c.l.b16 %v428
        %v1021 = vunpack.c.l.b16 %v429
        %v1022 = vunpack.c.l.b16 %v430
        %v1023 = vunpack.c.l.b16 %v431
        %v1024 = vunpack.c.l.b16 %v432
        %v1025 = vunpack.c.l.b16 %v433
        %v1026 = vunpack.c.l.b16 %v434
        %v1027 = vunpack.c.l.b16 %v435
        %v1028 = vunpack.c.l.b16 %v436
        %v1029 = vunpack.c.l.b16 %v437
        %v1030 = vunpack.c.l.b16 %v438
        %v1031 = vunpack.c.l.b16 %v439
        %v1032 = vunpack.c.l.b16 %v440
        %v1033 = vunpack.c.l.b16 %v441
        %v1034 = vunpack.c.l.b16 %v442
        %v1035 = vunpack.c.l.b16 %v443
        %v1036 = vunpack.c.l.b16 %v444
        %v1037 = vunpack.c.l.b16 %v445
        %v1038 = vunpack.c.l.b16 %v446
        %v1039 = vunpack.c.l.b16 %v447
        %v1040 = vunpack.c.l.b16 %v448
        %v1041 = vunpack.c.l.b16 %v449
        %v1042 = vunpack.c.l.b16 %v450
        %v1043 = vunpack.c.l.b16 %v451
        %v1044 = vunpack.c.l.b16 %v452
        %v1045 = vunpack.c.l.b16 %v453
        %v1046 = vunpack.c.l.b16 %v454
        %v1047 = vunpack.c.l.b16 %v455
        %v1048 = vunpack.c.l.b16 %v456
        %v1049 = vunpack.c.l.b16 %v457
        %v1050 = vunpack.c.l.b16 %v458
        %v1051 = vunpack.c.l.b16 %v459
        %v1052 = vunpack.c.l.b16 %v460
        %v1053 = vunpack.c.l.b16 %v461
        %v1054 = vunpack.c.l.b16 %v462
        %v1055 = vunpack.c.l.b16 %v463
        %v1056 = vunpack.c.l.b16 %v464
        %v1057 = vunpack.c.l.b16 %v465
        %v1058 = vunpack.c.l.b16 %v466
        %v1059 = vunpack.c.l.b16 %v467
        %v1060 = vunpack.c.l.b16 %v468
        %v1061 = vunpack.c.l.b16 %v469
        %v1062 = vunpack.c.l.b16 %v470
        %v1063 = vunpack.c.l.b16 %v471
        %v1064 = vunpack.c.l.b16 %v472
        %v1065 = vpack.c.b16 %v842, %v841
        %v1066 = vpack.c.b16 %v844, %v843
        %v1067 = vpack.c.b16 %v846, %v845
        %v1068 = vpack.c.b16 %v848, %v847
        %v1069 = vpack.c.b16 %v850, %v849
        %v1070 = vpack.c.b16 %v852, %v851
        %v1071 = vpack.c.b16 %v854, %v853
        %v1072 = vpack.c.b16 %v856, %v855
        %v1073 = vpack.c.b16 %v858, %v857
        %v1074 = vpack.c.b16 %v860, %v859
        %v1075 = vpack.c.b16 %v862, %v861
        %v1076 = vpack.c.b16 %v864, %v863
        %v1077 = vpack.c.b16 %v866, %v865
        %v1078 = vpack.c.b16 %v868, %v867
        %v1079 = vpack.c.b16 %v870, %v869
        %v1080 = vpack.c.b16 %v872, %v871
        %v1081 = vpack.c.b16 %v874, %v873
        %v1082 = vpack.c.b16 %v876, %v875
        %v1083 = vpack.c.b16 %v878, %v877
        %v1084 = vpack.c.b16 %v880, %v879
        %v1085 = vpack.c.b16 %v882, %v881
        %v1086 = vpack.c.b16 %v884, %v883
        %v1087 = vpack.c.b16 %v886, %v885
        %v1088 = vpack.c.b16 %v888, %v887
        %v1089 = vpack.c.b16 %v890, %v889
        %v1090 = vpack.c.b16 %v892, %v891
        %v1091 = vpack.c.b16 %v894, %v893
        %v1092 = vpack.c.b16 %v896, %v895
        %v1093 = vpack.c.b16 %v898, %v897
        %v1094 = vpack.c.b16 %v900, %v899
        %v1095 = vpack.c.b16 %v902, %v901
        %v1096 = vpack.c.b16 %v904, %v903
        %v1097 = vpack.c.b16 %v906, %v905
        %v1098 = vpack.c.b16 %v908, %v907
        %v1099 = vpack.c.b16 %v910, %v909
        %v1100 = vpack.c.b16 %v912, %v911
        %v1101 = vpack.c.b16 %v914, %v913
        %v1102 = vpack.c.b16 %v916, %v915
        %v1103 = vpack.c.b16 %v918, %v917
        %v1104 = vpack.c.b16 %v920, %v919
        %v1105 = vpack.c.b16 %v922, %v921
        %v1106 = vpack.c.b16 %v924, %v923
        %v1107 = vpack.c.b16 %v926, %v925
        %v1108 = vpack.c.b16 %v928, %v927
        %v1109 = vpack.c.b16 %v930, %v929
        %v1110 = vpack.c.b16 %v932, %v931
        %v1111 = vpack.c.b16 %v934, %v933
        %v1112 = vpack.c.b16 %v936, %v935
        %v1113 = vpack.c.b16 %v938, %v937
        %v1114 = vpack.c.b16 %v940, %v939
        %v1115 = vpack.c.b16 %v942, %v941
        %v1116 = vpack.c.b16 %v944, %v943
        %v1117 = vpack.c.b16 %v946, %v945
        %v1118 = vpack.c.b16 %v948, %v947
        %v1119 = vpack.c.b16 %v950, %v949
        %v1120 = vpack.c.b16 %v952, %v951
        %v1121 = vpack.c.b16 %v954, %v953
        %v1122 = vpack.c.b16 %v956, %v955
        %v1123 = vpack.c.b16 %v958, %v957
        %v1124 = vpack.c.b16 %v960, %v959
        %v1125 = vpack.c.b16 %v962, %v961
        %v1126 = vpack.c.b16 %v964, %v963
        %v1127 = vpack.c.b16 %v966, %v965
        %v1128 = vpack.c.b16 %v968, %v967
        %v1129 = vpack.c.b16 %v970, %v969
        %v1130 = vpack.c.b16 %v972, %v971
        %v1131 = vpack.c.b16 %v974, %v973
        %v1132 = vpack.c.b16 %v976, %v975
        %v1133 = vpack.c.b16 %v978, %v977
        %v1134 = vpack.c.b16 %v980, %v979
        %v1135 = vpack.c.b16 %v982, %v981
        %v1136 = vpack.c.b16 %v984, %v983
        %v1137 = vpack.c.b16 %v986, %v985
        %v1138 = vpack.c.b16 %v988, %v987
        %v1139 = vpack.c.b16 %v990, %v989
        %v1140 = vpack.c.b16 %v992, %v991
        %v1141 = vpack.c.b16 %v994, %v993
        %v1142 = vpack.c.b16 %v996, %v995
        %v1143 = vpack.c.b16 %v998, %v997
        %v1144 = vpack.c.b16 %v1000, %v999
        %v1145 = vpack.c.b16 %v1002, %v1001
        %v1146 = vpack.c.b16 %v1004, %v1003
        %v1147 = vpack.c.b16 %v1006, %v1005
        %v1148 = vpack.c.b16 %v1008, %v1007
        %v1149 = vpack.c.b16 %v1010, %v1009
        %v1150 = vpack.c.b16 %v1012, %v1011
        %v1151 = vpack.c.b16 %v1014, %v1013
        %v1152 = vpack.c.b16 %v1016, %v1015
        %v1153 = vpack.c.b16 %v1018, %v1017
        %v1154 = vpack.c.b16 %v1020, %v1019
        %v1155 = vpack.c.b16 %v1022, %v1021
        %v1156 = vpack.c.b16 %v1024, %v1023
        %v1157 = vpack.c.b16 %v1026, %v1025
        %v1158 = vpack.c.b16 %v1028, %v1027
        %v1159 = vpack.c.b16 %v1030, %v1029
        %v1160 = vpack.c.b16 %v1032, %v1031
        %v1161 = vpack.c.b16 %v1034, %v1033
        %v1162 = vpack.c.b16 %v1036, %v1035
        %v1163 = vpack.c.b16 %v1038, %v1037
        %v1164 = vpack.c.b16 %v1040, %v1039
        %v1165 = vpack.c.b16 %v1042, %v1041
        %v1166 = vpack.c.b16 %v1044, %v1043
        %v1167 = vpack.c.b16 %v1046, %v1045
        %v1168 = vpack.c.b16 %v1048, %v1047
        %v1169 = vpack.c.b16 %v1050, %v1049
        %v1170 = vpack.c.b16 %v1052, %v1051
        %v1171 = vpack.c.b16 %v1054, %v1053
        %v1172 = vpack.c.b16 %v1056, %v1055
        %v1173 = vpack.c.b16 %v1058, %v1057
        %v1174 = vpack.c.b16 %v1060, %v1059
        %v1175 = vpack.c.b16 %v1062, %v1061
        %v1176 = vpack.c.b16 %v1064, %v1063
        %1289 = vmatpush.bf16.msra.mxu0 %v1072
        %1290 = vmatpush.bf16.msra.mxu0 %v1071
        %1291 = vmatpush.bf16.msra.mxu0 %v1070
        %1292 = vmatpush.bf16.msra.mxu0 %v1069
        %1293 = vmatpush.bf16.msra.mxu0 %v1068
        %1294 = vmatpush.bf16.msra.mxu0 %v1067
        %1295 = vmatpush.bf16.msra.mxu0 %v1066
        %1296 = vmatpush.bf16.msra.mxu0 %v1065
        %1297 = vmatmul.bf16.gmra.mxu0 %v561
        %v1298 = vpop.f32.mrf.mxu0
        %v1299 = vadd.f32 %v475, %v1298
        %v1300 = vpop.f32.mrf.mxu0
        %v1301 = vadd.f32 %v475, %v1300
        %1302 = vmatmul.bf16.gmra.mxu0 %v575
        %v1303 = vpop.f32.mrf.mxu0
        %v1304 = vadd.f32 %v475, %v1303
        %v1305 = vpop.f32.mrf.mxu0
        %v1306 = vadd.f32 %v475, %v1305
        %1307 = vdwg.mxu0
        %1308 = vmatpush.bf16.msra.mxu0 %v1080
        %1309 = vmatpush.bf16.msra.mxu0 %v1079
        %1310 = vmatpush.bf16.msra.mxu0 %v1078
        %1311 = vmatpush.bf16.msra.mxu0 %v1077
        %1312 = vmatpush.bf16.msra.mxu0 %v1076
        %1313 = vmatpush.bf16.msra.mxu0 %v1075
        %1314 = vmatpush.bf16.msra.mxu0 %v1074
        %1315 = vmatpush.bf16.msra.mxu0 %v1073
        %1316 = vmatmul.bf16.gmra.mxu0 %v562
        %v1317 = vpop.f32.mrf.mxu0
        %v1318 = vadd.f32 %v1299, %v1317
        %v1319 = vpop.f32.mrf.mxu0
        %v1320 = vadd.f32 %v1301, %v1319
        %1321 = vmatmul.bf16.gmra.mxu0 %v576
        %v1322 = vpop.f32.mrf.mxu0
        %v1323 = vadd.f32 %v1304, %v1322
        %v1324 = vpop.f32.mrf.mxu0
        %v1325 = vadd.f32 %v1306, %v1324
        %1326 = vdwg.mxu0
        %1327 = vmatpush.bf16.msra.mxu0 %v1088
        %1328 = vmatpush.bf16.msra.mxu0 %v1087
        %1329 = vmatpush.bf16.msra.mxu0 %v1086
        %1330 = vmatpush.bf16.msra.mxu0 %v1085
        %1331 = vmatpush.bf16.msra.mxu0 %v1084
        %1332 = vmatpush.bf16.msra.mxu0 %v1083
        %1333 = vmatpush.bf16.msra.mxu0 %v1082
        %1334 = vmatpush.bf16.msra.mxu0 %v1081
        %1335 = vmatmul.bf16.gmra.mxu0 %v563
        %v1336 = vpop.f32.mrf.mxu0
        %v1337 = vadd.f32 %v1318, %v1336
        %v1338 = vpop.f32.mrf.mxu0
        %v1339 = vadd.f32 %v1320, %v1338
        %1340 = vmatmul.bf16.gmra.mxu0 %v577
        %v1341 = vpop.f32.mrf.mxu0
        %v1342 = vadd.f32 %v1323, %v1341
        %v1343 = vpop.f32.mrf.mxu0
        %v1344 = vadd.f32 %v1325, %v1343
        %1345 = vdwg.mxu0
        %1346 = vmatpush.bf16.msra.mxu0 %v1096
        %1347 = vmatpush.bf16.msra.mxu0 %v1095
        %1348 = vmatpush.bf16.msra.mxu0 %v1094
        %1349 = vmatpush.bf16.msra.mxu0 %v1093
        %1350 = vmatpush.bf16.msra.mxu0 %v1092
        %1351 = vmatpush.bf16.msra.mxu0 %v1091
        %1352 = vmatpush.bf16.msra.mxu0 %v1090
        %1353 = vmatpush.bf16.msra.mxu0 %v1089
        %1354 = vmatmul.bf16.gmra.mxu0 %v564
        %v1355 = vpop.f32.mrf.mxu0
        %v1356 = vadd.f32 %v1337, %v1355
        %v1357 = vpop.f32.mrf.mxu0
        %v1358 = vadd.f32 %v1339, %v1357
        %1359 = vmatmul.bf16.gmra.mxu0 %v578
        %v1360 = vpop.f32.mrf.mxu0
        %v1361 = vadd.f32 %v1342, %v1360
        %v1362 = vpop.f32.mrf.mxu0
        %v1363 = vadd.f32 %v1344, %v1362
        %1364 = vdwg.mxu0
        %1365 = vmatpush.bf16.msra.mxu0 %v1104
        %1366 = vmatpush.bf16.msra.mxu0 %v1103
        %1367 = vmatpush.bf16.msra.mxu0 %v1102
        %1368 = vmatpush.bf16.msra.mxu0 %v1101
        %1369 = vmatpush.bf16.msra.mxu0 %v1100
        %1370 = vmatpush.bf16.msra.mxu0 %v1099
        %1371 = vmatpush.bf16.msra.mxu0 %v1098
        %1372 = vmatpush.bf16.msra.mxu0 %v1097
        %1373 = vmatmul.bf16.gmra.mxu0 %v565
        %v1374 = vpop.f32.mrf.mxu0
        %v1375 = vadd.f32 %v1356, %v1374
        %v1376 = vpop.f32.mrf.mxu0
        %v1377 = vadd.f32 %v1358, %v1376
        %1378 = vmatmul.bf16.gmra.mxu0 %v579
        %v1379 = vpop.f32.mrf.mxu0
        %v1380 = vadd.f32 %v1361, %v1379
        %v1381 = vpop.f32.mrf.mxu0
        %v1382 = vadd.f32 %v1363, %v1381
        %1383 = vdwg.mxu0
        %1384 = vmatpush.bf16.msra.mxu0 %v1112
        %1385 = vmatpush.bf16.msra.mxu0 %v1111
        %1386 = vmatpush.bf16.msra.mxu0 %v1110
        %1387 = vmatpush.bf16.msra.mxu0 %v1109
        %1388 = vmatpush.bf16.msra.mxu0 %v1108
        %1389 = vmatpush.bf16.msra.mxu0 %v1107
        %1390 = vmatpush.bf16.msra.mxu0 %v1106
        %1391 = vmatpush.bf16.msra.mxu0 %v1105
        %1392 = vmatmul.bf16.gmra.mxu0 %v566
        %v1393 = vpop.f32.mrf.mxu0
        %v1394 = vadd.f32 %v1375, %v1393
        %v1395 = vpop.f32.mrf.mxu0
        %v1396 = vadd.f32 %v1377, %v1395
        %1397 = vmatmul.bf16.gmra.mxu0 %v580
        %v1398 = vpop.f32.mrf.mxu0
        %v1399 = vadd.f32 %v1380, %v1398
        %v1400 = vpop.f32.mrf.mxu0
        %v1401 = vadd.f32 %v1382, %v1400
        %1402 = vdwg.mxu0
        %1403 = vmatpush.bf16.msra.mxu0 %v1120
        %1404 = vmatpush.bf16.msra.mxu0 %v1119
        %1405 = vmatpush.bf16.msra.mxu0 %v1118
        %1406 = vmatpush.bf16.msra.mxu0 %v1117
        %1407 = vmatpush.bf16.msra.mxu0 %v1116
        %1408 = vmatpush.bf16.msra.mxu0 %v1115
        %1409 = vmatpush.bf16.msra.mxu0 %v1114
        %1410 = vmatpush.bf16.msra.mxu0 %v1113
        %1411 = vmatmul.bf16.gmra.mxu0 %v567
        %v1412 = vpop.f32.mrf.mxu0
        %v1413 = vadd.f32 %v1394, %v1412
        %v1414 = vpop.f32.mrf.mxu0
        %v1415 = vadd.f32 %v1396, %v1414
        %1416 = vmatmul.bf16.gmra.mxu0 %v581
        %v1417 = vpop.f32.mrf.mxu0
        %v1418 = vadd.f32 %v1399, %v1417
        %v1419 = vpop.f32.mrf.mxu0
        %v1420 = vadd.f32 %v1401, %v1419
        %1421 = vdwg.mxu0
        %1422 = vmatpush.bf16.msra.mxu0 %v1128
        %1423 = vmatpush.bf16.msra.mxu0 %v1127
        %1424 = vmatpush.bf16.msra.mxu0 %v1126
        %1425 = vmatpush.bf16.msra.mxu0 %v1125
        %1426 = vmatpush.bf16.msra.mxu0 %v1124
        %1427 = vmatpush.bf16.msra.mxu0 %v1123
        %1428 = vmatpush.bf16.msra.mxu0 %v1122
        %1429 = vmatpush.bf16.msra.mxu0 %v1121
        %1430 = vmatmul.bf16.gmra.mxu0 %v568
        %v1431 = vpop.f32.mrf.mxu0
        %v1432 = vadd.f32 %v1413, %v1431
        %v1433 = vpop.f32.mrf.mxu0
        %v1434 = vadd.f32 %v1415, %v1433
        %1435 = vmatmul.bf16.gmra.mxu0 %v582
        %v1436 = vpop.f32.mrf.mxu0
        %v1437 = vadd.f32 %v1418, %v1436
        %v1438 = vpop.f32.mrf.mxu0
        %v1439 = vadd.f32 %v1420, %v1438
        %1440 = vdwg.mxu0
        %1441 = vmatpush.bf16.msra.mxu0 %v1136
        %1442 = vmatpush.bf16.msra.mxu0 %v1135
        %1443 = vmatpush.bf16.msra.mxu0 %v1134
        %1444 = vmatpush.bf16.msra.mxu0 %v1133
        %1445 = vmatpush.bf16.msra.mxu0 %v1132
        %1446 = vmatpush.bf16.msra.mxu0 %v1131
        %1447 = vmatpush.bf16.msra.mxu0 %v1130
        %1448 = vmatpush.bf16.msra.mxu0 %v1129
        %1449 = vmatmul.bf16.gmra.mxu0 %v569
        %v1450 = vpop.f32.mrf.mxu0
        %v1451 = vadd.f32 %v1432, %v1450
        %v1452 = vpop.f32.mrf.mxu0
        %v1453 = vadd.f32 %v1434, %v1452
        %1454 = vmatmul.bf16.gmra.mxu0 %v583
        %v1455 = vpop.f32.mrf.mxu0
        %v1456 = vadd.f32 %v1437, %v1455
        %v1457 = vpop.f32.mrf.mxu0
        %v1458 = vadd.f32 %v1439, %v1457
        %1459 = vdwg.mxu0
        %1460 = vmatpush.bf16.msra.mxu0 %v1144
        %1461 = vmatpush.bf16.msra.mxu0 %v1143
        %1462 = vmatpush.bf16.msra.mxu0 %v1142
        %1463 = vmatpush.bf16.msra.mxu0 %v1141
        %1464 = vmatpush.bf16.msra.mxu0 %v1140
        %1465 = vmatpush.bf16.msra.mxu0 %v1139
        %1466 = vmatpush.bf16.msra.mxu0 %v1138
        %1467 = vmatpush.bf16.msra.mxu0 %v1137
        %1468 = vmatmul.bf16.gmra.mxu0 %v570
        %v1469 = vpop.f32.mrf.mxu0
        %v1470 = vadd.f32 %v1451, %v1469
        %v1471 = vpop.f32.mrf.mxu0
        %v1472 = vadd.f32 %v1453, %v1471
        %1473 = vmatmul.bf16.gmra.mxu0 %v584
        %v1474 = vpop.f32.mrf.mxu0
        %v1475 = vadd.f32 %v1456, %v1474
        %v1476 = vpop.f32.mrf.mxu0
        %v1477 = vadd.f32 %v1458, %v1476
        %1478 = vdwg.mxu0
        %1479 = vmatpush.bf16.msra.mxu0 %v1152
        %1480 = vmatpush.bf16.msra.mxu0 %v1151
        %1481 = vmatpush.bf16.msra.mxu0 %v1150
        %1482 = vmatpush.bf16.msra.mxu0 %v1149
        %1483 = vmatpush.bf16.msra.mxu0 %v1148
        %1484 = vmatpush.bf16.msra.mxu0 %v1147
        %1485 = vmatpush.bf16.msra.mxu0 %v1146
        %1486 = vmatpush.bf16.msra.mxu0 %v1145
        %1487 = vmatmul.bf16.gmra.mxu0 %v571
        %v1488 = vpop.f32.mrf.mxu0
        %v1489 = vadd.f32 %v1470, %v1488
        %v1490 = vpop.f32.mrf.mxu0
        %v1491 = vadd.f32 %v1472, %v1490
        %1492 = vmatmul.bf16.gmra.mxu0 %v585
        %v1493 = vpop.f32.mrf.mxu0
        %v1494 = vadd.f32 %v1475, %v1493
        %v1495 = vpop.f32.mrf.mxu0
        %v1496 = vadd.f32 %v1477, %v1495
        %1497 = vdwg.mxu0
        %1498 = vmatpush.bf16.msra.mxu0 %v1160
        %1499 = vmatpush.bf16.msra.mxu0 %v1159
        %1500 = vmatpush.bf16.msra.mxu0 %v1158
        %1501 = vmatpush.bf16.msra.mxu0 %v1157
        %1502 = vmatpush.bf16.msra.mxu0 %v1156
        %1503 = vmatpush.bf16.msra.mxu0 %v1155
        %1504 = vmatpush.bf16.msra.mxu0 %v1154
        %1505 = vmatpush.bf16.msra.mxu0 %v1153
        %1506 = vmatmul.bf16.gmra.mxu0 %v572
        %v1507 = vpop.f32.mrf.mxu0
        %v1508 = vadd.f32 %v1489, %v1507
        %v1509 = vpop.f32.mrf.mxu0
        %v1510 = vadd.f32 %v1491, %v1509
        %1511 = vmatmul.bf16.gmra.mxu0 %v586
        %v1512 = vpop.f32.mrf.mxu0
        %v1513 = vadd.f32 %v1494, %v1512
        %v1514 = vpop.f32.mrf.mxu0
        %v1515 = vadd.f32 %v1496, %v1514
        %1516 = vdwg.mxu0
        %1517 = vmatpush.bf16.msra.mxu0 %v1168
        %1518 = vmatpush.bf16.msra.mxu0 %v1167
        %1519 = vmatpush.bf16.msra.mxu0 %v1166
        %1520 = vmatpush.bf16.msra.mxu0 %v1165
        %1521 = vmatpush.bf16.msra.mxu0 %v1164
        %1522 = vmatpush.bf16.msra.mxu0 %v1163
        %1523 = vmatpush.bf16.msra.mxu0 %v1162
        %1524 = vmatpush.bf16.msra.mxu0 %v1161
        %1525 = vmatmul.bf16.gmra.mxu0 %v573
        %v1526 = vpop.f32.mrf.mxu0
        %v1527 = vadd.f32 %v1508, %v1526
        %v1528 = vpop.f32.mrf.mxu0
        %v1529 = vadd.f32 %v1510, %v1528
        %1530 = vmatmul.bf16.gmra.mxu0 %v587
        %v1531 = vpop.f32.mrf.mxu0
        %v1532 = vadd.f32 %v1513, %v1531
        %v1533 = vpop.f32.mrf.mxu0
        %v1534 = vadd.f32 %v1515, %v1533
        %1535 = vdwg.mxu0
        %1536 = vmatpush.bf16.msra.mxu0 %v1176
        %1537 = vmatpush.bf16.msra.mxu0 %v1175
        %1538 = vmatpush.bf16.msra.mxu0 %v1174
        %1539 = vmatpush.bf16.msra.mxu0 %v1173
        %1540 = vmatpush.bf16.msra.mxu0 %v1172
        %1541 = vmatpush.bf16.msra.mxu0 %v1171
        %1542 = vmatpush.bf16.msra.mxu0 %v1170
        %1543 = vmatpush.bf16.msra.mxu0 %v1169
        %1544 = vmatmul.bf16.gmra.mxu0 %v574
        %v1545 = vpop.f32.mrf.mxu0
        %v1546 = vadd.f32 %v1527, %v1545
        %v1547 = vpop.f32.mrf.mxu0
        %v1548 = vadd.f32 %v1529, %v1547
        %1549 = vmatmul.bf16.gmra.mxu0 %v588
        %v1550 = vpop.f32.mrf.mxu0
        %v1551 = vadd.f32 %v1532, %v1550
        %v1552 = vpop.f32.mrf.mxu0
        %v1553 = vadd.f32 %v1534, %v1552
        %1554 = vdwg.mxu0
        %v1555 = vmax.f32 %v1546, 0.0
        %v1556 = vmax.f32 %v1548, 0.0
        %v1557 = vmax.f32 %v1551, 0.0
        %v1558 = vmax.f32 %v1553, 0.0
        %1559 = vst [vmem:[%s220] sm:$0xff] %v1555
        %1560 = vst [vmem:[%s220 + $0x8] sm:$0xff] %v1556
        %1561 = vst [vmem:[%s220 + $0x10] sm:$0xff] %v1557
        %1562 = vst [vmem:[%s220 + $0x18] sm:$0xff] %v1558
        %s1563 = sand.u32 %s101, 1
        %s1564 = sand.u32 %s101, 1
        %s1565 = smul.addr %s1564, 32
        %s1566 = scalar_lea.vmem [#allocation6], %s1565
        // Predicated region
        $region41: #{block8.7} parent=31 // pred_check
          %p1567 = pneg %p111
        $region42: #{block8.7} parent=31 // pred_check_branch
          %1569 = sbr.rel (%p1567) target = $region44
        $region43: #{block8.7} parent=31 // pred_region
          %s1570 = smul.addr %s20, 8
          %s1571 = scalar_lea.vmem %s3, %s1570
          // Predicated region
          $region45: #{block8.7} parent=43 // pred_check
            _
          $region46: #{block8.7} parent=43 // pred_check_branch
            %1573 = sbr.rel (0) target = $region48
          $region47: #{block8.7} parent=43 // pred_region
            // Predicated region
            $region49: #{block8.7} parent=47 // pred_check
              _
            $region50: #{block8.7} parent=47 // pred_check_branch
              %1575 = sbr.rel (0) target = $region52
            $region51: #{block8.7} parent=47 // pred_region
              // Predicated region
              $region64: #{block8.7} parent=51 // pred_check
                _
              $region65: #{block8.7} parent=51 // pred_check_branch
                %1597 = sbr.rel (0) target = $region67
              $region66: #{block8.7} parent=51 // pred_region
                loop: start=0, step=1, limit=1
                $region68: #{block8.7} parent=66 // loop_pre_header
                  _
                $region69: #{block8.7} parent=66 // loop_header
                  %s1599 = sphi 0, %s1603
                  %p1600 = scmp.ge.s32.totalorder %s1599, 1
                  %s1604 = sphi %s1566, %s1566
                  %s1605 = sphi %s1571, %s1571
                $region70: #{block8.7} parent=66 // loop_header_branch
                  %1602 = sbr.rel (%p1600) target = $region74
                $region71: #{block8.7} parent=66 // loop_body
                  %v1606 = vld [vmem:[%s1604] sm:$0xff]
                  %1607 = vst [vmem:[%s1605] sm:$0xff] %v1606
                  %v1608 = vld [vmem:[%s1604 + $0x8] sm:$0xff]
                  %1609 = vst [vmem:[%s1605 + $0x18] sm:$0xff] %v1608
                  %v1610 = vld [vmem:[%s1604 + $0x10] sm:$0xff]
                  %1611 = vst [vmem:[%s1605 + $0x30] sm:$0xff] %v1610
                  %v1612 = vld [vmem:[%s1604 + $0x18] sm:$0xff]
                  %1613 = vst [vmem:[%s1605 + $0x48] sm:$0xff] %v1612
                $region72: #{block8.7} parent=66 // loop_footer
                  %s1603 = sadd.s32 1, %s1599
                $region73: #{block8.7} parent=66 // loop_footer_branch
                  %1598 = sbr.rel target = $region69
                $region74: #{block8.7} parent=66 // loop_exit
                  _
              $region67: #{block8.7} parent=51 // pred_fallthru
                _
              // Predicated region
              $region75: #{block8.7} parent=51 // pred_check
                _
              $region76: #{block8.7} parent=51 // pred_check_branch
                %1615 = sbr.rel target = $region78
              $region77: #{block8.7} parent=51 // pred_region
                _
              $region78: #{block8.7} parent=51 // pred_fallthru
                _
            $region52: #{block8.7} parent=47 // pred_fallthru
              _
            // Predicated region
            $region53: #{block8.7} parent=47 // pred_check
              _
            $region54: #{block8.7} parent=47 // pred_check_branch
              %1577 = sbr.rel target = $region56
            $region55: #{block8.7} parent=47 // pred_region
              %s1579 = ssub.s32 256, 1
              loop: start=0, step=1, limit=1
              $region57: #{block8.7} parent=55 // loop_pre_header
                _
              $region58: #{block8.7} parent=55 // loop_header
                %s1581 = sphi 0, %s1585
                %p1582 = scmp.ge.s32.totalorder %s1581, 1
                %s1586 = sphi %s1566, %s1566
                %s1587 = sphi %s1571, %s1571
              $region59: #{block8.7} parent=55 // loop_header_branch
                %1584 = sbr.rel (%p1582) target = $region63
              $region60: #{block8.7} parent=55 // loop_body
                %v1588 = vld [vmem:[%s1586] sm:%s1579]
                %1589 = vst [vmem:[%s1587] sm:%s1579] %v1588
                %v1590 = vld [vmem:[%s1586 + $0x8] sm:%s1579]
                %1591 = vst [vmem:[%s1587 + $0x18] sm:%s1579] %v1590
                %v1592 = vld [vmem:[%s1586 + $0x10] sm:%s1579]
                %1593 = vst [vmem:[%s1587 + $0x30] sm:%s1579] %v1592
                %v1594 = vld [vmem:[%s1586 + $0x18] sm:%s1579]
                %1595 = vst [vmem:[%s1587 + $0x48] sm:%s1579] %v1594
              $region61: #{block8.7} parent=55 // loop_footer
                %s1585 = sadd.s32 1, %s1581
              $region62: #{block8.7} parent=55 // loop_footer_branch
                %1580 = sbr.rel target = $region58
              $region63: #{block8.7} parent=55 // loop_exit
                _
            $region56: #{block8.7} parent=47 // pred_fallthru
              _
          $region48: #{block8.7} parent=43 // pred_fallthru
            _
          %1616 = vnop
        $region44: #{block8.7} parent=31 // pred_fallthru
          _
      $region32: #{block8.7} parent=5 // pred_fallthru
        _
      %p1617 = scmp.le.s32.totalorder 2, %s15
      // Predicated region
      $region79: #{block8.7} parent=5 // pred_check
        %p1618 = pneg %p1617
      $region80: #{block8.7} parent=5 // pred_check_branch
        %1620 = sbr.rel (%p1618) target = $region82
      $region81: #{block8.7} parent=5 // pred_region
        %s1621 = ssub.s32 %s15, 2
        // Predicated region
        $region83: #{block8.7} parent=81 // pred_check
          %p1622 = pneg %p117
        $region84: #{block8.7} parent=81 // pred_check_branch
          %1624 = sbr.rel (%p1622) target = $region86
        $region85: #{block8.7} parent=81 // pred_region
          %s1625 = sand.u32 %s102, 1
          %s1626 = sand.u32 %s102, 1
          %s1627 = smul.addr %s1626, 32
          %s1628 = scalar_lea.vmem [#allocation6], %s1627
        $region86: #{block8.7} parent=81 // pred_fallthru
          _
      $region82: #{block8.7} parent=5 // pred_fallthru
        _
    $region6: #{block8.7} parent=1 // loop_footer
      %s19 = sadd.s32 1, %s15
    $region7: #{block8.7} parent=1 // loop_footer_branch
      %14 = sbr.rel target = $region3
    $region8: #{block8.7} parent=1 // loop_exit
      _
    %1629 = vsyncpa [#allocation3], 1
    %s1630 = scalar_lea.sflag [#allocation3], 1
    %1631 = vsyncpa %s1630, 1
    %1632 = vsyncpa [#allocation5], 1
    %s1633 = scalar_lea.sflag [#allocation5], 1
    %1634 = vsyncpa %s1633, 1

// kernel: block8.8
$region0: #{block8.8}
  #allocation0 [shape = 'u32[]', space=smem, size = 0x4, offset = 0x4, fixed_abs, tag = 'smem constant byte address 0x4 - core index']
  #allocation1 [shape = 'u32[72,128]{1,0:T(1,128)}', space=vmem, size = 0x9000, scoped, tag = 'internal scratch']
  %s0 = inlined_call_operand.vmem [shape: bf16[32,640], index: 0, kind: input, shape index: {}]
  %s1 = inlined_call_operand.hbm [shape: bf16[640,256], index: 1, kind: input, shape index: {}]
  %s2 = inlined_call_operand.vmem [shape: f32[1,256], index: 2, kind: input, shape index: {}]
  %s3 = inlined_call_operand.vmem [shape: f32[32,256], index: 3, kind: output, shape index: {}]
  %s4 = sld [smem:[#allocation0]]
  $region83: #{block8.8} parent=0
    _
  %s6 = ssub.s32 1, %s4
  %s7 = scalar_select 0, %s6, %s4
  $region1: #{block8.8} parent=0
    #allocation2 [shape = 'u8[327680]{0}', space=vmem, size = 0x50000, scoped, tag = 'input window, operand 1']
    #allocation3 [shape = 's32[2]{0}', space=sflag, size = 0x8, scoped, tag = 'scoped memory for block8.8']
    #allocation4 [shape = 'u8[32768]{0}', space=vmem, size = 0x8000, scoped, tag = 'output window, operand 0']
    %8 = vsyncpa [#allocation3], 0
    %s9 = scalar_lea.sflag [#allocation3], 1
    %10 = vsyncpa %s9, 0
    loop: start=0, step=1, limit=4
    $region2: #{block8.8} parent=1 // loop_pre_header
      _
    $region3: #{block8.8} parent=1 // loop_header
      %s12 = sphi 0, %s16
      %p13 = scmp.ge.s32.totalorder %s12, 4
      %s20 = sphi 0, %s20
      %s22 = sphi 0, %s20
      %s23 = sphi 0, %s22
      %s37 = sphi 0, %s23
      %s43 = sphi 0, %s45
      %s46 = sphi 0, %s43
      %s47 = sphi 0, %s46
      %s63 = sphi 0, %s47
      %s69 = sphi 0, %s71
      %s72 = sphi 0, %s69
      %s73 = sphi 0, %s72
      %s89 = sphi 0, %s73
      %s95 = sphi 0, %s97
      %s98 = sphi 0, %s95
      %s99 = sphi 0, %s98
      %s115 = sphi 0, %s99
    $region4: #{block8.8} parent=1 // loop_header_branch
      %15 = sbr.rel (%p13) target = $region8
    $region5: #{block8.8} parent=1 // loop_body
      %s17 = ssub.s32 %s12, 1
      %s18 = ssub.s32 %s12, 2
      %s19 = sadd.s32 %s12, 1
      %s21 = sadd.s32 %s20, 1
      %p24 = scmp.eq.s32.totalorder %s12, 1
      %p25 = scmp.ne.s32.totalorder %s20, %s22
      %p26 = scmp.eq.s32.totalorder %s12, 0
      %p27 = por %p25, %p26
      %p28 = scmp.ne.s32.totalorder %s20, %s22
      %p29 = scmp.eq.s32.totalorder %s17, 1
      %p30 = por %p28, %p29
      %p31 = scmp.ne.s32.totalorder %s22, %s23
      %p32 = scmp.eq.s32.totalorder %s17, 0
      %p33 = por %p31, %p32
      %p34 = scmp.ne.s32.totalorder %s22, %s23
      %p35 = scmp.eq.s32.totalorder %s18, 1
      %p36 = por %p34, %p35
      %p38 = scmp.ne.s32.totalorder %s23, %s37
      %p39 = scmp.eq.s32.totalorder %s18, 0
      %p40 = por %p38, %p39
      %s41 = ssub.s32 %s12, %s19
      %p42 = scmp.eq.s32.totalorder %s41, 0
      %s44 = sadd.s32 %s43, 1
      %s45 = scalar_select %p42, %s43, %s44
      %p48 = pneg %p42
      %p49 = scmp.eq.s32.totalorder %s12, 1
      %p50 = por %p48, %p49
      %p51 = scmp.ne.s32.totalorder %s43, %s46
      %p52 = scmp.eq.s32.totalorder %s12, 0
      %p53 = por %p51, %p52
      %p54 = scmp.ne.s32.totalorder %s43, %s46
      %p55 = scmp.eq.s32.totalorder %s17, 1
      %p56 = por %p54, %p55
      %p57 = scmp.ne.s32.totalorder %s46, %s47
      %p58 = scmp.eq.s32.totalorder %s17, 0
      %p59 = por %p57, %p58
      %p60 = scmp.ne.s32.totalorder %s46, %s47
      %p61 = scmp.eq.s32.totalorder %s18, 1
      %p62 = por %p60, %p61
      %p64 = scmp.ne.s32.totalorder %s47, %s63
      %p65 = scmp.eq.s32.totalorder %s18, 0
      %p66 = por %p64, %p65
      %s67 = ssub.s32 %s12, %s19
      %p68 = scmp.eq.s32.totalorder %s67, 0
      %s70 = sadd.s32 %s69, 1
      %s71 = scalar_select %p68, %s69, %s70
      %p74 = pneg %p68
      %p75 = scmp.eq.s32.totalorder %s12, 1
      %p76 = por %p74, %p75
      %p77 = scmp.ne.s32.totalorder %s69, %s72
      %p78 = scmp.eq.s32.totalorder %s12, 0
      %p79 = por %p77, %p78
      %p80 = scmp.ne.s32.totalorder %s69, %s72
      %p81 = scmp.eq.s32.totalorder %s17, 1
      %p82 = por %p80, %p81
      %p83 = scmp.ne.s32.totalorder %s72, %s73
      %p84 = scmp.eq.s32.totalorder %s17, 0
      %p85 = por %p83, %p84
      %p86 = scmp.ne.s32.totalorder %s72, %s73
      %p87 = scmp.eq.s32.totalorder %s18, 1
      %p88 = por %p86, %p87
      %p90 = scmp.ne.s32.totalorder %s73, %s89
      %p91 = scmp.eq.s32.totalorder %s18, 0
      %p92 = por %p90, %p91
      %s93 = ssub.s32 %s12, %s19
      %p94 = scmp.eq.s32.totalorder %s93, 0
      %s96 = sadd.s32 %s95, 1
      %s97 = scalar_select %p94, %s95, %s96
      %p100 = pneg %p94
      %p101 = scmp.eq.s32.totalorder %s12, 1
      %p102 = por %p100, %p101
      %p103 = scmp.ne.s32.totalorder %s95, %s98
      %p104 = scmp.eq.s32.totalorder %s12, 0
      %p105 = por %p103, %p104
      %p106 = scmp.ne.s32.totalorder %s95, %s98
      %p107 = scmp.eq.s32.totalorder %s17, 1
      %p108 = por %p106, %p107
      %p109 = scmp.ne.s32.totalorder %s98, %s99
      %p110 = scmp.eq.s32.totalorder %s17, 0
      %p111 = por %p109, %p110
      %p112 = scmp.ne.s32.totalorder %s98, %s99
      %p113 = scmp.eq.s32.totalorder %s18, 1
      %p114 = por %p112, %p113
      %p116 = scmp.ne.s32.totalorder %s99, %s115
      %p117 = scmp.eq.s32.totalorder %s18, 0
      %p118 = por %p116, %p117
      %p119 = scmp.le.s32.totalorder 1, %s12
      %p120 = scmp.lt.s32.totalorder %s12, 3
      %p121 = pnand %p119, %p120
      %p122 = pneg %p121
      // Predicated region
      $region9: #{block8.8} parent=5 // pred_check
        _
      $region10: #{block8.8} parent=5 // pred_check_branch
        %124 = sbr.rel (%p121) target = $region12
      $region11: #{block8.8} parent=5 // pred_region
        %s125 = ssub.s32 %s12, 1
        // Predicated region
        $region13: #{block8.8} parent=11 // pred_check
          %p126 = pneg %p33
        $region14: #{block8.8} parent=11 // pred_check_branch
          %128 = sbr.rel (%p126) target = $region16
        $region15: #{block8.8} parent=11 // pred_region
          _
        $region16: #{block8.8} parent=11 // pred_fallthru
          _
      $region12: #{block8.8} parent=5 // pred_fallthru
        _
      %p129 = scmp.lt.s32.totalorder %s12, 2
      // Predicated region
      $region17: #{block8.8} parent=5 // pred_check
        %p130 = pneg %p129
      $region18: #{block8.8} parent=5 // pred_check_branch
        %132 = sbr.rel (%p130) target = $region20
      $region19: #{block8.8} parent=5 // pred_region
        // Predicated region
        $region21: #{block8.8} parent=19 // pred_check
          %p133 = pneg %p53
        $region22: #{block8.8} parent=19 // pred_check_branch
          %135 = sbr.rel (%p133) target = $region24
        $region23: #{block8.8} parent=19 // pred_region
          %s136 = sand.u32 %s43, 1
          %s137 = scalar_lea.sflag [#allocation3], %s136
          %s138 = sand.u32 %s43, 1
          %s139 = smul.addr %s138, 320
          %s140 = scalar_lea.vmem [#allocation2], %s139
          %142 = vsyncadd %s137, 0
          %s143 = smul.addr %s12, 4
          %s144 = scalar_lea.hbm %s1, %s143
          %s145 = sshll.u32 %s144, 4
          %s146 = int_to_ptr.hbm [resolvable:$true] %s145
          %s147 = sshll.u32 %s140, 4
          %s148 = int_to_ptr.vmem [resolvable:$true] %s147
          %153 = dma.hbm_to_vmem [thread:$0]  %s146, 5120, %s148, %s137, 128, 64, 4
        $region24: #{block8.8} parent=19 // pred_fallthru
          _
        // Predicated region
        $region25: #{block8.8} parent=19 // pred_check
          %p154 = pneg %p79
        $region26: #{block8.8} parent=19 // pred_check_branch
          %156 = sbr.rel (%p154) target = $region28
        $region27: #{block8.8} parent=19 // pred_region
          %p157 = scmp.lt.s32.totalorder %s12, 1
          %s158 = scalar_select %p157, %s12, 1
          %s159 = scalar_lea.vmem %s2, %s158
        $region28: #{block8.8} parent=19 // pred_fallthru
          _
      $region20: #{block8.8} parent=5 // pred_fallthru
        _
      %p160 = scmp.le.s32.totalorder 1, %s12
      %p161 = scmp.lt.s32.totalorder %s12, 3
      %p162 = pnand %p160, %p161
      %p163 = pneg %p162
      // Predicated region
      $region29: #{block8.8} parent=5 // pred_check
        _
      $region30: #{block8.8} parent=5 // pred_check_branch
        %165 = sbr.rel (%p162) target = $region32
      $region31: #{block8.8} parent=5 // pred_region
        %s166 = ssub.s32 %s12, 1
        %s167 = sand.u32 %s46, 1
        %s168 = scalar_lea.sflag [#allocation3], %s167
        %s169 = sand.u32 %s46, 1
        %s170 = smul.addr %s169, 320
        %s171 = scalar_lea.vmem [#allocation2], %s170
        // Predicated region
        $region33: #{block8.8} parent=31 // pred_check
          %p172 = pneg %p59
        $region34: #{block8.8} parent=31 // pred_check_branch
          %174 = sbr.rel (%p172) target = $region36
        $region35: #{block8.8} parent=31 // pred_region
          %176 = dma.done %s168, 5120
        $region36: #{block8.8} parent=31 // pred_fallthru
          _
        %p177 = pneg %p33
        %p178 = pneg %p30
        %s179 = sand.u32 %s46, 1
        %s180 = scalar_lea.sflag [#allocation3], %s179
        %s181 = sand.u32 %s46, 1
        %s182 = smul.addr %s181, 320
        %s183 = scalar_lea.vmem [#allocation2], %s182
        %p184 = pneg %p59
        %p185 = pneg %p56
        %p186 = scmp.lt.s32.totalorder %s17, 1
        %s187 = scalar_select %p186, %s17, 1
        %s188 = scalar_lea.vmem %s2, %s187
        %p189 = pneg %p85
        %p190 = pneg %p82
        %p191 = pneg %p111
        %p192 = pneg %p108
        %s193 = sand.u32 %s98, 1
        %s194 = sand.u32 %s98, 1
        %s195 = smul.addr %s194, 32
        %s196 = scalar_lea.vmem [#allocation4], %s195
        %p197 = scmp.lt.s32.totalorder %s17, 1
        %s198 = scalar_select %p197, %s17, 1
        %s199 = scalar_lea.vmem %s2, %s198
        %v200 = vld [vmem:[%s0] sm:$0xff]
        %v201 = vld [vmem:[%s0 + $0x8] sm:$0xff]
        %v202 = vld [vmem:[%s0 + $0x10] sm:$0xf]
        %v203 = vld [vmem:[%s0 + $0x14] sm:$0xff]
        %v204 = vld [vmem:[%s0 + $0x1c] sm:$0xff]
        %v205 = vld [vmem:[%s0 + $0x24] sm:$0xf]
        %v206 = vld [vmem:[%s0 + $0x28] sm:$0xff]
        %v207 = vld [vmem:[%s0 + $0x30] sm:$0xff]
        %v208 = vld [vmem:[%s0 + $0x38] sm:$0xf]
        %v209 = vld [vmem:[%s0 + $0x3c] sm:$0xff]
        %v210 = vld [vmem:[%s0 + $0x44] sm:$0xff]
        %v211 = vld [vmem:[%s0 + $0x4c] sm:$0xf]
        %v212 = vld [vmem:[%s171] sm:$0xf]
        %v213 = vld [vmem:[%s171 + $0x4] sm:$0xf]
        %v214 = vld [vmem:[%s171 + $0x8] sm:$0xf]
        %v215 = vld [vmem:[%s171 + $0xc] sm:$0xf]
        %v216 = vld [vmem:[%s171 + $0x10] sm:$0xf]
        %v217 = vld [vmem:[%s171 + $0x14] sm:$0xf]
        %v218 = vld [vmem:[%s171 + $0x18] sm:$0xf]
        %v219 = vld [vmem:[%s171 + $0x1c] sm:$0xf]
        %v220 = vld [vmem:[%s171 + $0x20] sm:$0xf]
        %v221 = vld [vmem:[%s171 + $0x24] sm:$0xf]
        %v222 = vld [vmem:[%s171 + $0x28] sm:$0xf]
        %v223 = vld [vmem:[%s171 + $0x2c] sm:$0xf]
        %v224 = vld [vmem:[%s171 + $0x30] sm:$0xf]
        %v225 = vld [vmem:[%s171 + $0x34] sm:$0xf]
        %v226 = vld [vmem:[%s171 + $0x38] sm:$0xf]
        %v227 = vld [vmem:[%s171 + $0x3c] sm:$0xf]
        %v228 = vld [vmem:[%s171 + $0x40] sm:$0xf]
        %v229 = vld [vmem:[%s171 + $0x44] sm:$0xf]
        %v230 = vld [vmem:[%s171 + $0x48] sm:$0xf]
        %v231 = vld [vmem:[%s171 + $0x4c] sm:$0xf]
        %v232 = vld [vmem:[%s171 + $0x50] sm:$0xf]
        %v233 = vld [vmem:[%s171 + $0x54] sm:$0xf]
        %v234 = vld [vmem:[%s171 + $0x58] sm:$0xf]
        %v235 = vld [vmem:[%s171 + $0x5c] sm:$0xf]
        %v236 = vld [vmem:[%s171 + $0x60] sm:$0xf]
        %v237 = vld [vmem:[%s171 + $0x64] sm:$0xf]
        %v238 = vld [vmem:[%s171 + $0x68] sm:$0xf]
        %v239 = vld [vmem:[%s171 + $0x6c] sm:$0xf]
        %v240 = vld [vmem:[%s171 + $0x70] sm:$0xf]
        %v241 = vld [vmem:[%s171 + $0x74] sm:$0xf]
        %v242 = vld [vmem:[%s171 + $0x78] sm:$0xf]
        %v243 = vld [vmem:[%s171 + $0x7c] sm:$0xf]
        %v244 = vld [vmem:[%s171 + $0x80] sm:$0xf]
        %v245 = vld [vmem:[%s171 + $0x84] sm:$0xf]
        %v246 = vld [vmem:[%s171 + $0x88] sm:$0xf]
        %v247 = vld [vmem:[%s171 + $0x8c] sm:$0xf]
        %v248 = vld [vmem:[%s171 + $0x90] sm:$0xf]
        %v249 = vld [vmem:[%s171 + $0x94] sm:$0xf]
        %v250 = vld [vmem:[%s171 + $0x98] sm:$0xf]
        %v251 = vld [vmem:[%s171 + $0x9c] sm:$0xf]
        %v252 = vld [vmem:[%s171 + $0xa0] sm:$0xf]
        %v253 = vld [vmem:[%s171 + $0xa4] sm:$0xf]
        %v254 = vld [vmem:[%s171 + $0xa8] sm:$0xf]
        %v255 = vld [vmem:[%s171 + $0xac] sm:$0xf]
        %v256 = vld [vmem:[%s171 + $0xb0] sm:$0xf]
        %v257 = vld [vmem:[%s171 + $0xb4] sm:$0xf]
        %v258 = vld [vmem:[%s171 + $0xb8] sm:$0xf]
        %v259 = vld [vmem:[%s171 + $0xbc] sm:$0xf]
        %v260 = vld [vmem:[%s171 + $0xc0] sm:$0xf]
        %v261 = vld [vmem:[%s171 + $0xc4] sm:$0xf]
        %v262 = vld [vmem:[%s171 + $0xc8] sm:$0xf]
        %v263 = vld [vmem:[%s171 + $0xcc] sm:$0xf]
        %v264 = vld [vmem:[%s171 + $0xd0] sm:$0xf]
        %v265 = vld [vmem:[%s171 + $0xd4] sm:$0xf]
        %v266 = vld [vmem:[%s171 + $0xd8] sm:$0xf]
        %v267 = vld [vmem:[%s171 + $0xdc] sm:$0xf]
        %v268 = vld [vmem:[%s171 + $0xe0] sm:$0xf]
        %v269 = vld [vmem:[%s171 + $0xe4] sm:$0xf]
        %v270 = vld [vmem:[%s171 + $0xe8] sm:$0xf]
        %v271 = vld [vmem:[%s171 + $0xec] sm:$0xf]
        %v272 = vld [vmem:[%s171 + $0xf0] sm:$0xf]
        %v273 = vld [vmem:[%s171 + $0xf4] sm:$0xf]
        %v274 = vld [vmem:[%s171 + $0xf8] sm:$0xf]
        %v275 = vld [vmem:[%s171 + $0xfc] sm:$0xf]
        %v276 = vld [vmem:[%s171 + $0x100] sm:$0xf]
        %v277 = vld [vmem:[%s171 + $0x104] sm:$0xf]
        %v278 = vld [vmem:[%s171 + $0x108] sm:$0xf]
        %v279 = vld [vmem:[%s171 + $0x10c] sm:$0xf]
        %v280 = vld [vmem:[%s171 + $0x110] sm:$0xf]
        %v281 = vld [vmem:[%s171 + $0x114] sm:$0xf]
        %v282 = vld [vmem:[%s171 + $0x118] sm:$0xf]
        %v283 = vld [vmem:[%s171 + $0x11c] sm:$0xf]
        %v284 = vld [vmem:[%s171 + $0x120] sm:$0xf]
        %v285 = vld [vmem:[%s171 + $0x124] sm:$0xf]
        %v286 = vld [vmem:[%s171 + $0x128] sm:$0xf]
        %v287 = vld [vmem:[%s171 + $0x12c] sm:$0xf]
        %v288 = vld [vmem:[%s171 + $0x130] sm:$0xf]
        %v289 = vld [vmem:[%s171 + $0x134] sm:$0xf]
        %v290 = vld [vmem:[%s171 + $0x138] sm:$0xf]
        %v291 = vld [vmem:[%s171 + $0x13c] sm:$0xf]
        %v292 = vld [vmem:[%s199] sm:$0x1]
        %v294 = vperm.slane %v292, 0
        %v308 = vunpack.c.l.b16 %v200
        %v309 = vunpack.c.h.b16 %v200
        %v310 = vunpack.c.l.b16 %v201
        %v311 = vunpack.c.h.b16 %v201
        %v312 = vunpack.c.l.b16 %v202
        %v313 = vunpack.c.l.b16 %v203
        %v314 = vunpack.c.h.b16 %v203
        %v315 = vunpack.c.l.b16 %v204
        %v316 = vunpack.c.h.b16 %v204
        %v317 = vunpack.c.l.b16 %v205
        %v318 = vunpack.c.l.b16 %v206
        %v319 = vunpack.c.h.b16 %v206
        %v320 = vunpack.c.l.b16 %v207
        %v321 = vunpack.c.h.b16 %v207
        %v322 = vunpack.c.l.b16 %v208
        %v323 = vunpack.c.l.b16 %v209
        %v324 = vunpack.c.h.b16 %v209
        %v325 = vunpack.c.l.b16 %v210
        %v326 = vunpack.c.h.b16 %v210
        %v327 = vunpack.c.l.b16 %v211
        %v328 = vpack.c.b16 %v313, %v308
        %v329 = vpack.c.b16 %v314, %v309
        %v330 = vpack.c.b16 %v315, %v310
        %v331 = vpack.c.b16 %v316, %v311
        %v332 = vpack.c.b16 %v317, %v312
        %v333 = vpack.c.b16 %v323, %v318
        %v334 = vpack.c.b16 %v324, %v319
        %v335 = vpack.c.b16 %v325, %v320
        %v336 = vpack.c.b16 %v326, %v321
        %v337 = vpack.c.b16 %v327, %v322
        %v428 = vunpack.c.l.b16 %v212
        %v429 = vunpack.c.l.b16 %v213
        %v430 = vunpack.c.l.b16 %v214
        %v431 = vunpack.c.l.b16 %v215
        %v432 = vunpack.c.l.b16 %v216
        %v433 = vunpack.c.l.b16 %v217
        %v434 = vunpack.c.l.b16 %v218
        %v435 = vunpack.c.l.b16 %v219
        %v436 = vunpack.c.l.b16 %v220
        %v437 = vunpack.c.l.b16 %v221
        %v438 = vunpack.c.l.b16 %v222
        %v439 = vunpack.c.l.b16 %v223
        %v440 = vunpack.c.l.b16 %v224
        %v441 = vunpack.c.l.b16 %v225
        %v442 = vunpack.c.l.b16 %v226
        %v443 = vunpack.c.l.b16 %v227
        %v444 = vunpack.c.l.b16 %v228
        %v445 = vunpack.c.l.b16 %v229
        %v446 = vunpack.c.l.b16 %v230
        %v447 = vunpack.c.l.b16 %v231
        %v448 = vunpack.c.l.b16 %v232
        %v449 = vunpack.c.l.b16 %v233
        %v450 = vunpack.c.l.b16 %v234
        %v451 = vunpack.c.l.b16 %v235
        %v452 = vunpack.c.l.b16 %v236
        %v453 = vunpack.c.l.b16 %v237
        %v454 = vunpack.c.l.b16 %v238
        %v455 = vunpack.c.l.b16 %v239
        %v456 = vunpack.c.l.b16 %v240
        %v457 = vunpack.c.l.b16 %v241
        %v458 = vunpack.c.l.b16 %v242
        %v459 = vunpack.c.l.b16 %v243
        %v460 = vunpack.c.l.b16 %v244
        %v461 = vunpack.c.l.b16 %v245
        %v462 = vunpack.c.l.b16 %v246
        %v463 = vunpack.c.l.b16 %v247
        %v464 = vunpack.c.l.b16 %v248
        %v465 = vunpack.c.l.b16 %v249
        %v466 = vunpack.c.l.b16 %v250
        %v467 = vunpack.c.l.b16 %v251
        %v468 = vunpack.c.l.b16 %v252
        %v469 = vunpack.c.l.b16 %v253
        %v470 = vunpack.c.l.b16 %v254
        %v471 = vunpack.c.l.b16 %v255
        %v472 = vunpack.c.l.b16 %v256
        %v473 = vunpack.c.l.b16 %v257
        %v474 = vunpack.c.l.b16 %v258
        %v475 = vunpack.c.l.b16 %v259
        %v476 = vunpack.c.l.b16 %v260
        %v477 = vunpack.c.l.b16 %v261
        %v478 = vunpack.c.l.b16 %v262
        %v479 = vunpack.c.l.b16 %v263
        %v480 = vunpack.c.l.b16 %v264
        %v481 = vunpack.c.l.b16 %v265
        %v482 = vunpack.c.l.b16 %v266
        %v483 = vunpack.c.l.b16 %v267
        %v484 = vunpack.c.l.b16 %v268
        %v485 = vunpack.c.l.b16 %v269
        %v486 = vunpack.c.l.b16 %v270
        %v487 = vunpack.c.l.b16 %v271
        %v488 = vunpack.c.l.b16 %v272
        %v489 = vunpack.c.l.b16 %v273
        %v490 = vunpack.c.l.b16 %v274
        %v491 = vunpack.c.l.b16 %v275
        %v492 = vunpack.c.l.b16 %v276
        %v493 = vunpack.c.l.b16 %v277
        %v494 = vunpack.c.l.b16 %v278
        %v495 = vunpack.c.l.b16 %v279
        %v496 = vunpack.c.l.b16 %v280
        %v497 = vunpack.c.l.b16 %v281
        %v498 = vunpack.c.l.b16 %v282
        %v499 = vunpack.c.l.b16 %v283
        %v500 = vunpack.c.l.b16 %v284
        %v501 = vunpack.c.l.b16 %v285
        %v502 = vunpack.c.l.b16 %v286
        %v503 = vunpack.c.l.b16 %v287
        %v504 = vunpack.c.l.b16 %v288
        %v505 = vunpack.c.l.b16 %v289
        %v506 = vunpack.c.l.b16 %v290
        %v507 = vunpack.c.l.b16 %v291
        %v508 = vpack.c.b16 %v429, %v428
        %v509 = vpack.c.b16 %v431, %v430
        %v510 = vpack.c.b16 %v433, %v432
        %v511 = vpack.c.b16 %v435, %v434
        %v512 = vpack.c.b16 %v437, %v436
        %v513 = vpack.c.b16 %v439, %v438
        %v514 = vpack.c.b16 %v441, %v440
        %v515 = vpack.c.b16 %v443, %v442
        %v516 = vpack.c.b16 %v445, %v444
        %v517 = vpack.c.b16 %v447, %v446
        %v518 = vpack.c.b16 %v449, %v448
        %v519 = vpack.c.b16 %v451, %v450
        %v520 = vpack.c.b16 %v453, %v452
        %v521 = vpack.c.b16 %v455, %v454
        %v522 = vpack.c.b16 %v457, %v456
        %v523 = vpack.c.b16 %v459, %v458
        %v524 = vpack.c.b16 %v461, %v460
        %v525 = vpack.c.b16 %v463, %v462
        %v526 = vpack.c.b16 %v465, %v464
        %v527 = vpack.c.b16 %v467, %v466
        %v528 = vpack.c.b16 %v469, %v468
        %v529 = vpack.c.b16 %v471, %v470
        %v530 = vpack.c.b16 %v473, %v472
        %v531 = vpack.c.b16 %v475, %v474
        %v532 = vpack.c.b16 %v477, %v476
        %v533 = vpack.c.b16 %v479, %v478
        %v534 = vpack.c.b16 %v481, %v480
        %v535 = vpack.c.b16 %v483, %v482
        %v536 = vpack.c.b16 %v485, %v484
        %v537 = vpack.c.b16 %v487, %v486
        %v538 = vpack.c.b16 %v489, %v488
        %v539 = vpack.c.b16 %v491, %v490
        %v540 = vpack.c.b16 %v493, %v492
        %v541 = vpack.c.b16 %v495, %v494
        %v542 = vpack.c.b16 %v497, %v496
        %v543 = vpack.c.b16 %v499, %v498
        %v544 = vpack.c.b16 %v501, %v500
        %v545 = vpack.c.b16 %v503, %v502
        %v546 = vpack.c.b16 %v505, %v504
        %v547 = vpack.c.b16 %v507, %v506
        %588 = vmatpush.bf16.msra.mxu0 %v515
        %589 = vmatpush.bf16.msra.mxu0 %v514
        %590 = vmatpush.bf16.msra.mxu0 %v513
        %591 = vmatpush.bf16.msra.mxu0 %v512
        %592 = vmatpush.bf16.msra.mxu0 %v511
        %593 = vmatpush.bf16.msra.mxu0 %v510
        %594 = vmatpush.bf16.msra.mxu0 %v509
        %595 = vmatpush.bf16.msra.mxu0 %v508
        %596 = vmatmul.bf16.gmra.mxu0 %v328
        %v597 = vpop.f32.mrf.mxu0
        %v598 = vadd.f32 %v294, %v597
        %v599 = vpop.f32.mrf.mxu0
        %v600 = vadd.f32 %v294, %v599
        %601 = vmatmul.bf16.gmra.mxu0 %v333
        %v602 = vpop.f32.mrf.mxu0
        %v603 = vadd.f32 %v294, %v602
        %v604 = vpop.f32.mrf.mxu0
        %v605 = vadd.f32 %v294, %v604
        %606 = vdwg.mxu0
        %607 = vmatpush.bf16.msra.mxu0 %v523
        %608 = vmatpush.bf16.msra.mxu0 %v522
        %609 = vmatpush.bf16.msra.mxu0 %v521
        %610 = vmatpush.bf16.msra.mxu0 %v520
        %611 = vmatpush.bf16.msra.mxu0 %v519
        %612 = vmatpush.bf16.msra.mxu0 %v518
        %613 = vmatpush.bf16.msra.mxu0 %v517
        %614 = vmatpush.bf16.msra.mxu0 %v516
        %615 = vmatmul.bf16.gmra.mxu0 %v329
        %v616 = vpop.f32.mrf.mxu0
        %v617 = vadd.f32 %v598, %v616
        %v618 = vpop.f32.mrf.mxu0
        %v619 = vadd.f32 %v600, %v618
        %620 = vmatmul.bf16.gmra.mxu0 %v334
        %v621 = vpop.f32.mrf.mxu0
        %v622 = vadd.f32 %v603, %v621
        %v623 = vpop.f32.mrf.mxu0
        %v624 = vadd.f32 %v605, %v623
        %625 = vdwg.mxu0
        %626 = vmatpush.bf16.msra.mxu0 %v531
        %627 = vmatpush.bf16.msra.mxu0 %v530
        %628 = vmatpush.bf16.msra.mxu0 %v529
        %629 = vmatpush.bf16.msra.mxu0 %v528
        %630 = vmatpush.bf16.msra.mxu0 %v527
        %631 = vmatpush.bf16.msra.mxu0 %v526
        %632 = vmatpush.bf16.msra.mxu0 %v525
        %633 = vmatpush.bf16.msra.mxu0 %v524
        %634 = vmatmul.bf16.gmra.mxu0 %v330
        %v635 = vpop.f32.mrf.mxu0
        %v636 = vadd.f32 %v617, %v635
        %v637 = vpop.f32.mrf.mxu0
        %v638 = vadd.f32 %v619, %v637
        %639 = vmatmul.bf16.gmra.mxu0 %v335
        %v640 = vpop.f32.mrf.mxu0
        %v641 = vadd.f32 %v622, %v640
        %v642 = vpop.f32.mrf.mxu0
        %v643 = vadd.f32 %v624, %v642
        %644 = vdwg.mxu0
        %645 = vmatpush.bf16.msra.mxu0 %v539
        %646 = vmatpush.bf16.msra.mxu0 %v538
        %647 = vmatpush.bf16.msra.mxu0 %v537
        %648 = vmatpush.bf16.msra.mxu0 %v536
        %649 = vmatpush.bf16.msra.mxu0 %v535
        %650 = vmatpush.bf16.msra.mxu0 %v534
        %651 = vmatpush.bf16.msra.mxu0 %v533
        %652 = vmatpush.bf16.msra.mxu0 %v532
        %653 = vmatmul.bf16.gmra.mxu0 %v331
        %v654 = vpop.f32.mrf.mxu0
        %v655 = vadd.f32 %v636, %v654
        %v656 = vpop.f32.mrf.mxu0
        %v657 = vadd.f32 %v638, %v656
        %658 = vmatmul.bf16.gmra.mxu0 %v336
        %v659 = vpop.f32.mrf.mxu0
        %v660 = vadd.f32 %v641, %v659
        %v661 = vpop.f32.mrf.mxu0
        %v662 = vadd.f32 %v643, %v661
        %663 = vdwg.mxu0
        %664 = vmatpush.bf16.msra.mxu0 %v547
        %665 = vmatpush.bf16.msra.mxu0 %v546
        %666 = vmatpush.bf16.msra.mxu0 %v545
        %667 = vmatpush.bf16.msra.mxu0 %v544
        %668 = vmatpush.bf16.msra.mxu0 %v543
        %669 = vmatpush.bf16.msra.mxu0 %v542
        %670 = vmatpush.bf16.msra.mxu0 %v541
        %671 = vmatpush.bf16.msra.mxu0 %v540
        %672 = vmatmul.bf16.gmra.mxu0 %v332
        %v673 = vpop.f32.mrf.mxu0
        %v674 = vadd.f32 %v655, %v673
        %v675 = vpop.f32.mrf.mxu0
        %v676 = vadd.f32 %v657, %v675
        %677 = vmatmul.bf16.gmra.mxu0 %v337
        %v678 = vpop.f32.mrf.mxu0
        %v679 = vadd.f32 %v660, %v678
        %v680 = vpop.f32.mrf.mxu0
        %v681 = vadd.f32 %v662, %v680
        %682 = vdwg.mxu0
        %v683 = vmax.f32 %v674, 0.0
        %v684 = vmax.f32 %v676, 0.0
        %v685 = vmax.f32 %v679, 0.0
        %v686 = vmax.f32 %v681, 0.0
        %687 = vst [vmem:[%s196] sm:$0xff] %v683
        %688 = vst [vmem:[%s196 + $0x8] sm:$0xff] %v684
        %689 = vst [vmem:[%s196 + $0x10] sm:$0xff] %v685
        %690 = vst [vmem:[%s196 + $0x18] sm:$0xff] %v686
        %s691 = sand.u32 %s98, 1
        %s692 = sand.u32 %s98, 1
        %s693 = smul.addr %s692, 32
        %s694 = scalar_lea.vmem [#allocation4], %s693
        // Predicated region
        $region37: #{block8.8} parent=31 // pred_check
          %p695 = pneg %p108
        $region38: #{block8.8} parent=31 // pred_check_branch
          %697 = sbr.rel (%p695) target = $region40
        $region39: #{block8.8} parent=31 // pred_region
          %s698 = smul.addr %s17, 8
          %s699 = scalar_lea.vmem %s3, %s698
          // Predicated region
          $region41: #{block8.8} parent=39 // pred_check
            _
          $region42: #{block8.8} parent=39 // pred_check_branch
            %701 = sbr.rel (0) target = $region44
          $region43: #{block8.8} parent=39 // pred_region
            // Predicated region
            $region45: #{block8.8} parent=43 // pred_check
              _
            $region46: #{block8.8} parent=43 // pred_check_branch
              %703 = sbr.rel (0) target = $region48
            $region47: #{block8.8} parent=43 // pred_region
              // Predicated region
              $region60: #{block8.8} parent=47 // pred_check
                _
              $region61: #{block8.8} parent=47 // pred_check_branch
                %725 = sbr.rel (0) target = $region63
              $region62: #{block8.8} parent=47 // pred_region
                loop: start=0, step=1, limit=1
                $region64: #{block8.8} parent=62 // loop_pre_header
                  _
                $region65: #{block8.8} parent=62 // loop_header
                  %s727 = sphi 0, %s731
                  %p728 = scmp.ge.s32.totalorder %s727, 1
                  %s732 = sphi %s694, %s694
                  %s733 = sphi %s699, %s699
                $region66: #{block8.8} parent=62 // loop_header_branch
                  %730 = sbr.rel (%p728) target = $region70
                $region67: #{block8.8} parent=62 // loop_body
                  %v734 = vld [vmem:[%s732] sm:$0xff]
                  %735 = vst [vmem:[%s733] sm:$0xff] %v734
                  %v736 = vld [vmem:[%s732 + $0x8] sm:$0xff]
                  %737 = vst [vmem:[%s733 + $0x10] sm:$0xff] %v736
                  %v738 = vld [vmem:[%s732 + $0x10] sm:$0xff]
                  %739 = vst [vmem:[%s733 + $0x20] sm:$0xff] %v738
                  %v740 = vld [vmem:[%s732 + $0x18] sm:$0xff]
                  %741 = vst [vmem:[%s733 + $0x30] sm:$0xff] %v740
                $region68: #{block8.8} parent=62 // loop_footer
                  %s731 = sadd.s32 1, %s727
                $region69: #{block8.8} parent=62 // loop_footer_branch
                  %726 = sbr.rel target = $region65
                $region70: #{block8.8} parent=62 // loop_exit
                  _
              $region63: #{block8.8} parent=47 // pred_fallthru
                _
              // Predicated region
              $region71: #{block8.8} parent=47 // pred_check
                _
              $region72: #{block8.8} parent=47 // pred_check_branch
                %743 = sbr.rel target = $region74
              $region73: #{block8.8} parent=47 // pred_region
                _
              $region74: #{block8.8} parent=47 // pred_fallthru
                _
            $region48: #{block8.8} parent=43 // pred_fallthru
              _
            // Predicated region
            $region49: #{block8.8} parent=43 // pred_check
              _
            $region50: #{block8.8} parent=43 // pred_check_branch
              %705 = sbr.rel target = $region52
            $region51: #{block8.8} parent=43 // pred_region
              %s707 = ssub.s32 256, 1
              loop: start=0, step=1, limit=1
              $region53: #{block8.8} parent=51 // loop_pre_header
                _
              $region54: #{block8.8} parent=51 // loop_header
                %s709 = sphi 0, %s713
                %p710 = scmp.ge.s32.totalorder %s709, 1
                %s714 = sphi %s694, %s694
                %s715 = sphi %s699, %s699
              $region55: #{block8.8} parent=51 // loop_header_branch
                %712 = sbr.rel (%p710) target = $region59
              $region56: #{block8.8} parent=51 // loop_body
                %v716 = vld [vmem:[%s714] sm:%s707]
                %717 = vst [vmem:[%s715] sm:%s707] %v716
                %v718 = vld [vmem:[%s714 + $0x8] sm:%s707]
                %719 = vst [vmem:[%s715 + $0x10] sm:%s707] %v718
                %v720 = vld [vmem:[%s714 + $0x10] sm:%s707]
                %721 = vst [vmem:[%s715 + $0x20] sm:%s707] %v720
                %v722 = vld [vmem:[%s714 + $0x18] sm:%s707]
                %723 = vst [vmem:[%s715 + $0x30] sm:%s707] %v722
              $region57: #{block8.8} parent=51 // loop_footer
                %s713 = sadd.s32 1, %s709
              $region58: #{block8.8} parent=51 // loop_footer_branch
                %708 = sbr.rel target = $region54
              $region59: #{block8.8} parent=51 // loop_exit
                _
            $region52: #{block8.8} parent=43 // pred_fallthru
              _
          $region44: #{block8.8} parent=39 // pred_fallthru
            _
          %744 = vnop
        $region40: #{block8.8} parent=31 // pred_fallthru
          _
      $region32: #{block8.8} parent=5 // pred_fallthru
        _
      %p745 = scmp.le.s32.totalorder 2, %s12
      // Predicated region
      $region75: #{block8.8} parent=5 // pred_check
        %p746 = pneg %p745
      $region76: #{block8.8} parent=5 // pred_check_branch
        %748 = sbr.rel (%p746) target = $region78
      $region77: #{block8.8} parent=5 // pred_region
        %s749 = ssub.s32 %s12, 2
        // Predicated region
        $region79: #{block8.8} parent=77 // pred_check
          %p750 = pneg %p114
        $region80: #{block8.8} parent=77 // pred_check_branch
          %752 = sbr.rel (%p750) target = $region82
        $region81: #{block8.8} parent=77 // pred_region
          %s753 = sand.u32 %s99, 1
          %s754 = sand.u32 %s99, 1
          %s755 = smul.addr %s754, 32
          %s756 = scalar_lea.vmem [#allocation4], %s755
        $region82: #{block8.8} parent=77 // pred_fallthru
          _
      $region78: #{block8.8} parent=5 // pred_fallthru
        _
    $region6: #{block8.8} parent=1 // loop_footer
      %s16 = sadd.s32 1, %s12
    $region7: #{block8.8} parent=1 // loop_footer_branch
      %11 = sbr.rel target = $region3
    $region8: #{block8.8} parent=1 // loop_exit
      _
    %757 = vsyncpa [#allocation3], 1
    %s758 = scalar_lea.sflag [#allocation3], 1
    %759 = vsyncpa %s758, 1

// kernel: block8.11
$region0: #{block8.11}
  #allocation0 [shape = 'u32[]', space=smem, size = 0x4, offset = 0x4, fixed_abs, tag = 'smem constant byte address 0x4 - core index']
  #allocation1 [shape = 'u32[72,128]{1,0:T(1,128)}', space=vmem, size = 0x9000, scoped, tag = 'internal scratch']
  %s0 = inlined_call_operand.vmem [shape: bf16[32,384], index: 0, kind: input, shape index: {}]
  %s1 = inlined_call_operand.vmem [shape: bf16[384,1792], index: 1, kind: input, shape index: {}]
  %s2 = inlined_call_operand.vmem [shape: f32[1,1792], index: 2, kind: input, shape index: {}]
  %s3 = inlined_call_operand.vmem [shape: f32[32,1792], index: 3, kind: input, shape index: {}]
  %s4 = inlined_call_operand.vmem [shape: f32[32,1792], index: 4, kind: output, shape index: {}]
  %s5 = sld [smem:[#allocation0]]
  $region129: #{block8.11} parent=0
    _
  %s7 = ssub.s32 1, %s5
  %s8 = scalar_select 0, %s7, %s5
  $region1: #{block8.11} parent=0
    #allocation2 [shape = 'u8[393216]{0}', space=vmem, size = 0x60000, scoped, tag = 'input window, operand 1']
    #allocation3 [shape = 'u8[65536]{0}', space=vmem, size = 0x10000, scoped, tag = 'input window, operand 3']
    #allocation4 [shape = 'u8[65536]{0}', space=vmem, size = 0x10000, scoped, tag = 'output window, operand 0']
    loop: start=0, step=1, limit=9
    $region2: #{block8.11} parent=1 // loop_pre_header
      _
    $region3: #{block8.11} parent=1 // loop_header
      %s10 = sphi 0, %s14
      %p11 = scmp.ge.s32.totalorder %s10, 9
      %s18 = sphi 0, %s18
      %s20 = sphi 0, %s18
      %s21 = sphi 0, %s20
      %s35 = sphi 0, %s21
      %s41 = sphi 0, %s43
      %s44 = sphi 0, %s41
      %s45 = sphi 0, %s44
      %s61 = sphi 0, %s45
      %s67 = sphi 0, %s69
      %s70 = sphi 0, %s67
      %s71 = sphi 0, %s70
      %s87 = sphi 0, %s71
      %s93 = sphi 0, %s95
      %s96 = sphi 0, %s93
      %s97 = sphi 0, %s96
      %s113 = sphi 0, %s97
      %s119 = sphi 0, %s121
      %s122 = sphi 0, %s119
      %s123 = sphi 0, %s122
      %s139 = sphi 0, %s123
    $region4: #{block8.11} parent=1 // loop_header_branch
      %13 = sbr.rel (%p11) target = $region8
    $region5: #{block8.11} parent=1 // loop_body
      %s15 = ssub.s32 %s10, 1
      %s16 = ssub.s32 %s10, 2
      %s17 = sadd.s32 %s10, 1
      %s19 = sadd.s32 %s18, 1
      %p22 = scmp.eq.s32.totalorder %s10, 6
      %p23 = scmp.ne.s32.totalorder %s18, %s20
      %p24 = scmp.eq.s32.totalorder %s10, 0
      %p25 = por %p23, %p24
      %p26 = scmp.ne.s32.totalorder %s18, %s20
      %p27 = scmp.eq.s32.totalorder %s15, 6
      %p28 = por %p26, %p27
      %p29 = scmp.ne.s32.totalorder %s20, %s21
      %p30 = scmp.eq.s32.totalorder %s15, 0
      %p31 = por %p29, %p30
      %p32 = scmp.ne.s32.totalorder %s20, %s21
      %p33 = scmp.eq.s32.totalorder %s16, 6
      %p34 = por %p32, %p33
      %p36 = scmp.ne.s32.totalorder %s21, %s35
      %p37 = scmp.eq.s32.totalorder %s16, 0
      %p38 = por %p36, %p37
      %s39 = ssub.s32 %s10, %s17
      %p40 = scmp.eq.s32.totalorder %s39, 0
      %s42 = sadd.s32 %s41, 1
      %s43 = scalar_select %p40, %s41, %s42
      %p46 = pneg %p40
      %p47 = scmp.eq.s32.totalorder %s10, 6
      %p48 = por %p46, %p47
      %p49 = scmp.ne.s32.totalorder %s41, %s44
      %p50 = scmp.eq.s32.totalorder %s10, 0
      %p51 = por %p49, %p50
      %p52 = scmp.ne.s32.totalorder %s41, %s44
      %p53 = scmp.eq.s32.totalorder %s15, 6
      %p54 = por %p52, %p53
      %p55 = scmp.ne.s32.totalorder %s44, %s45
      %p56 = scmp.eq.s32.totalorder %s15, 0
      %p57 = por %p55, %p56
      %p58 = scmp.ne.s32.totalorder %s44, %s45
      %p59 = scmp.eq.s32.totalorder %s16, 6
      %p60 = por %p58, %p59
      %p62 = scmp.ne.s32.totalorder %s45, %s61
      %p63 = scmp.eq.s32.totalorder %s16, 0
      %p64 = por %p62, %p63
      %s65 = ssub.s32 %s10, %s17
      %p66 = scmp.eq.s32.totalorder %s65, 0
      %s68 = sadd.s32 %s67, 1
      %s69 = scalar_select %p66, %s67, %s68
      %p72 = pneg %p66
      %p73 = scmp.eq.s32.totalorder %s10, 6
      %p74 = por %p72, %p73
      %p75 = scmp.ne.s32.totalorder %s67, %s70
      %p76 = scmp.eq.s32.totalorder %s10, 0
      %p77 = por %p75, %p76
      %p78 = scmp.ne.s32.totalorder %s67, %s70
      %p79 = scmp.eq.s32.totalorder %s15, 6
      %p80 = por %p78, %p79
      %p81 = scmp.ne.s32.totalorder %s70, %s71
      %p82 = scmp.eq.s32.totalorder %s15, 0
      %p83 = por %p81, %p82
      %p84 = scmp.ne.s32.totalorder %s70, %s71
      %p85 = scmp.eq.s32.totalorder %s16, 6
      %p86 = por %p84, %p85
      %p88 = scmp.ne.s32.totalorder %s71, %s87
      %p89 = scmp.eq.s32.totalorder %s16, 0
      %p90 = por %p88, %p89
      %s91 = ssub.s32 %s10, %s17
      %p92 = scmp.eq.s32.totalorder %s91, 0
      %s94 = sadd.s32 %s93, 1
      %s95 = scalar_select %p92, %s93, %s94
      %p98 = pneg %p92
      %p99 = scmp.eq.s32.totalorder %s10, 6
      %p100 = por %p98, %p99
      %p101 = scmp.ne.s32.totalorder %s93, %s96
      %p102 = scmp.eq.s32.totalorder %s10, 0
      %p103 = por %p101, %p102
      %p104 = scmp.ne.s32.totalorder %s93, %s96
      %p105 = scmp.eq.s32.totalorder %s15, 6
      %p106 = por %p104, %p105
      %p107 = scmp.ne.s32.totalorder %s96, %s97
      %p108 = scmp.eq.s32.totalorder %s15, 0
      %p109 = por %p107, %p108
      %p110 = scmp.ne.s32.totalorder %s96, %s97
      %p111 = scmp.eq.s32.totalorder %s16, 6
      %p112 = por %p110, %p111
      %p114 = scmp.ne.s32.totalorder %s97, %s113
      %p115 = scmp.eq.s32.totalorder %s16, 0
      %p116 = por %p114, %p115
      %s117 = ssub.s32 %s10, %s17
      %p118 = scmp.eq.s32.totalorder %s117, 0
      %s120 = sadd.s32 %s119, 1
      %s121 = scalar_select %p118, %s119, %s120
      %p124 = pneg %p118
      %p125 = scmp.eq.s32.totalorder %s10, 6
      %p126 = por %p124, %p125
      %p127 = scmp.ne.s32.totalorder %s119, %s122
      %p128 = scmp.eq.s32.totalorder %s10, 0
      %p129 = por %p127, %p128
      %p130 = scmp.ne.s32.totalorder %s119, %s122
      %p131 = scmp.eq.s32.totalorder %s15, 6
      %p132 = por %p130, %p131
      %p133 = scmp.ne.s32.totalorder %s122, %s123
      %p134 = scmp.eq.s32.totalorder %s15, 0
      %p135 = por %p133, %p134
      %p136 = scmp.ne.s32.totalorder %s122, %s123
      %p137 = scmp.eq.s32.totalorder %s16, 6
      %p138 = por %p136, %p137
      %p140 = scmp.ne.s32.totalorder %s123, %s139
      %p141 = scmp.eq.s32.totalorder %s16, 0
      %p142 = por %p140, %p141
      %p143 = scmp.le.s32.totalorder 1, %s10
      %p144 = scmp.lt.s32.totalorder %s10, 8
      %p145 = pnand %p143, %p144
      %p146 = pneg %p145
      // Predicated region
      $region9: #{block8.11} parent=5 // pred_check
        _
      $region10: #{block8.11} parent=5 // pred_check_branch
        %148 = sbr.rel (%p145) target = $region12
      $region11: #{block8.11} parent=5 // pred_region
        %s149 = ssub.s32 %s10, 1
        // Predicated region
        $region13: #{block8.11} parent=11 // pred_check
          %p150 = pneg %p31
        $region14: #{block8.11} parent=11 // pred_check_branch
          %152 = sbr.rel (%p150) target = $region16
        $region15: #{block8.11} parent=11 // pred_region
          _
        $region16: #{block8.11} parent=11 // pred_fallthru
          _
      $region12: #{block8.11} parent=5 // pred_fallthru
        _
      %p153 = scmp.lt.s32.totalorder %s10, 7
      // Predicated region
      $region17: #{block8.11} parent=5 // pred_check
        %p154 = pneg %p153
      $region18: #{block8.11} parent=5 // pred_check_branch
        %156 = sbr.rel (%p154) target = $region20
      $region19: #{block8.11} parent=5 // pred_region
        // Predicated region
        $region21: #{block8.11} parent=19 // pred_check
          %p157 = pneg %p51
        $region22: #{block8.11} parent=19 // pred_check_branch
          %159 = sbr.rel (%p157) target = $region24
        $region23: #{block8.11} parent=19 // pred_region
          %s160 = sand.u32 %s41, 1
          %s161 = sand.u32 %s41, 1
          %s162 = smul.addr %s161, 384
          %s163 = scalar_lea.vmem [#allocation2], %s162
          %s164 = smul.u32 2, %s10
          %s165 = smul.addr %s164, 4
          %s166 = scalar_lea.vmem %s1, %s165
          // Predicated region
          $region25: #{block8.11} parent=23 // pred_check
            _
          $region26: #{block8.11} parent=23 // pred_check_branch
            %168 = sbr.rel (0) target = $region28
          $region27: #{block8.11} parent=23 // pred_region
            // Predicated region
            $region29: #{block8.11} parent=27 // pred_check
              _
            $region30: #{block8.11} parent=27 // pred_check_branch
              %170 = sbr.rel (0) target = $region32
            $region31: #{block8.11} parent=27 // pred_region
              // Predicated region
              $region44: #{block8.11} parent=31 // pred_check
                _
              $region45: #{block8.11} parent=31 // pred_check_branch
                %280 = sbr.rel (0) target = $region47
              $region46: #{block8.11} parent=31 // pred_region
                loop: start=0, step=1, limit=1
                $region48: #{block8.11} parent=46 // loop_pre_header
                  _
                $region49: #{block8.11} parent=46 // loop_header
                  %s282 = sphi 0, %s286
                  %p283 = scmp.ge.s32.totalorder %s282, 1
                  %s287 = sphi %s166, %s166
                  %s288 = sphi %s163, %s163
                $region50: #{block8.11} parent=46 // loop_header_branch
                  %285 = sbr.rel (%p283) target = $region54
                $region51: #{block8.11} parent=46 // loop_body
                  %v289 = vld [vmem:[%s287] sm:$0xff]
                  %290 = vst [vmem:[%s288] sm:$0xff] %v289
                  %v291 = vld [vmem:[%s287 + $0x38] sm:$0xff]
                  %292 = vst [vmem:[%s288 + $0x8] sm:$0xff] %v291
                  %v293 = vld [vmem:[%s287 + $0x70] sm:$0xff]
                  %294 = vst [vmem:[%s288 + $0x10] sm:$0xff] %v293
                  %v295 = vld [vmem:[%s287 + $0xa8] sm:$0xff]
                  %296 = vst [vmem:[%s288 + $0x18] sm:$0xff] %v295
                  %v297 = vld [vmem:[%s287 + $0xe0] sm:$0xff]
                  %298 = vst [vmem:[%s288 + $0x20] sm:$0xff] %v297
                  %v299 = vld [vmem:[%s287 + $0x118] sm:$0xff]
                  %300 = vst [vmem:[%s288 + $0x28] sm:$0xff] %v299
                  %v301 = vld [vmem:[%s287 + $0x150] sm:$0xff]
                  %302 = vst [vmem:[%s288 + $0x30] sm:$0xff] %v301
                  %v303 = vld [vmem:[%s287 + $0x188] sm:$0xff]
                  %304 = vst [vmem:[%s288 + $0x38] sm:$0xff] %v303
                  %v305 = vld [vmem:[%s287 + $0x1c0] sm:$0xff]
                  %306 = vst [vmem:[%s288 + $0x40] sm:$0xff] %v305
                  %v307 = vld [vmem:[%s287 + $0x1f8] sm:$0xff]
                  %308 = vst [vmem:[%s288 + $0x48] sm:$0xff] %v307
                  %v309 = vld [vmem:[%s287 + $0x230] sm:$0xff]
                  %310 = vst [vmem:[%s288 + $0x50] sm:$0xff] %v309
                  %v311 = vld [vmem:[%s287 + $0x268] sm:$0xff]
                  %312 = vst [vmem:[%s288 + $0x58] sm:$0xff] %v311
                  %v313 = vld [vmem:[%s287 + $0x2a0] sm:$0xff]
                  %314 = vst [vmem:[%s288 + $0x60] sm:$0xff] %v313
                  %v315 = vld [vmem:[%s287 + $0x2d8] sm:$0xff]
                  %316 = vst [vmem:[%s288 + $0x68] sm:$0xff] %v315
                  %v317 = vld [vmem:[%s287 + $0x310] sm:$0xff]
                  %318 = vst [vmem:[%s288 + $0x70] sm:$0xff] %v317
                  %v319 = vld [vmem:[%s287 + $0x348] sm:$0xff]
                  %320 = vst [vmem:[%s288 + $0x78] sm:$0xff] %v319
                  %v321 = vld [vmem:[%s287 + $0x380] sm:$0xff]
                  %322 = vst [vmem:[%s288 + $0x80] sm:$0xff] %v321
                  %v323 = vld [vmem:[%s287 + $0x3b8] sm:$0xff]
                  %324 = vst [vmem:[%s288 + $0x88] sm:$0xff] %v323
                  %v325 = vld [vmem:[%s287 + $0x3f0] sm:$0xff]
                  %326 = vst [vmem:[%s288 + $0x90] sm:$0xff] %v325
                  %v327 = vld [vmem:[%s287 + $0x428] sm:$0xff]
                  %328 = vst [vmem:[%s288 + $0x98] sm:$0xff] %v327
                  %v329 = vld [vmem:[%s287 + $0x460] sm:$0xff]
                  %330 = vst [vmem:[%s288 + $0xa0] sm:$0xff] %v329
                  %v331 = vld [vmem:[%s287 + $0x498] sm:$0xff]
                  %332 = vst [vmem:[%s288 + $0xa8] sm:$0xff] %v331
                  %v333 = vld [vmem:[%s287 + $0x4d0] sm:$0xff]
                  %334 = vst [vmem:[%s288 + $0xb0] sm:$0xff] %v333
                  %v335 = vld [vmem:[%s287 + $0x508] sm:$0xff]
                  %336 = vst [vmem:[%s288 + $0xb8] sm:$0xff] %v335
                  %v337 = vld [vmem:[%s287 + $0x540] sm:$0xff]
                  %338 = vst [vmem:[%s288 + $0xc0] sm:$0xff] %v337
                  %v339 = vld [vmem:[%s287 + $0x578] sm:$0xff]
                  %340 = vst [vmem:[%s288 + $0xc8] sm:$0xff] %v339
                  %v341 = vld [vmem:[%s287 + $0x5b0] sm:$0xff]
                  %342 = vst [vmem:[%s288 + $0xd0] sm:$0xff] %v341
                  %v343 = vld [vmem:[%s287 + $0x5e8] sm:$0xff]
                  %344 = vst [vmem:[%s288 + $0xd8] sm:$0xff] %v343
                  %v345 = vld [vmem:[%s287 + $0x620] sm:$0xff]
                  %346 = vst [vmem:[%s288 + $0xe0] sm:$0xff] %v345
                  %v347 = vld [vmem:[%s287 + $0x658] sm:$0xff]
                  %348 = vst [vmem:[%s288 + $0xe8] sm:$0xff] %v347
                  %v349 = vld [vmem:[%s287 + $0x690] sm:$0xff]
                  %350 = vst [vmem:[%s288 + $0xf0] sm:$0xff] %v349
                  %v351 = vld [vmem:[%s287 + $0x6c8] sm:$0xff]
                  %352 = vst [vmem:[%s288 + $0xf8] sm:$0xff] %v351
                  %v353 = vld [vmem:[%s287 + $0x700] sm:$0xff]
                  %354 = vst [vmem:[%s288 + $0x100] sm:$0xff] %v353
                  %v355 = vld [vmem:[%s287 + $0x738] sm:$0xff]
                  %356 = vst [vmem:[%s288 + $0x108] sm:$0xff] %v355
                  %v357 = vld [vmem:[%s287 + $0x770] sm:$0xff]
                  %358 = vst [vmem:[%s288 + $0x110] sm:$0xff] %v357
                  %v359 = vld [vmem:[%s287 + $0x7a8] sm:$0xff]
                  %360 = vst [vmem:[%s288 + $0x118] sm:$0xff] %v359
                  %v361 = vld [vmem:[%s287 + $0x7e0] sm:$0xff]
                  %362 = vst [vmem:[%s288 + $0x120] sm:$0xff] %v361
                  %v363 = vld [vmem:[%s287 + $0x818] sm:$0xff]
                  %364 = vst [vmem:[%s288 + $0x128] sm:$0xff] %v363
                  %v365 = vld [vmem:[%s287 + $0x850] sm:$0xff]
                  %366 = vst [vmem:[%s288 + $0x130] sm:$0xff] %v365
                  %v367 = vld [vmem:[%s287 + $0x888] sm:$0xff]
                  %368 = vst [vmem:[%s288 + $0x138] sm:$0xff] %v367
                  %v369 = vld [vmem:[%s287 + $0x8c0] sm:$0xff]
                  %370 = vst [vmem:[%s288 + $0x140] sm:$0xff] %v369
                  %v371 = vld [vmem:[%s287 + $0x8f8] sm:$0xff]
                  %372 = vst [vmem:[%s288 + $0x148] sm:$0xff] %v371
                  %v373 = vld [vmem:[%s287 + $0x930] sm:$0xff]
                  %374 = vst [vmem:[%s288 + $0x150] sm:$0xff] %v373
                  %v375 = vld [vmem:[%s287 + $0x968] sm:$0xff]
                  %376 = vst [vmem:[%s288 + $0x158] sm:$0xff] %v375
                  %v377 = vld [vmem:[%s287 + $0x9a0] sm:$0xff]
                  %378 = vst [vmem:[%s288 + $0x160] sm:$0xff] %v377
                  %v379 = vld [vmem:[%s287 + $0x9d8] sm:$0xff]
                  %380 = vst [vmem:[%s288 + $0x168] sm:$0xff] %v379
                  %v381 = vld [vmem:[%s287 + $0xa10] sm:$0xff]
                  %382 = vst [vmem:[%s288 + $0x170] sm:$0xff] %v381
                  %v383 = vld [vmem:[%s287 + $0xa48] sm:$0xff]
                  %384 = vst [vmem:[%s288 + $0x178] sm:$0xff] %v383
                $region52: #{block8.11} parent=46 // loop_footer
                  %s286 = sadd.s32 1, %s282
                $region53: #{block8.11} parent=46 // loop_footer_branch
                  %281 = sbr.rel target = $region49
                $region54: #{block8.11} parent=46 // loop_exit
                  _
              $region47: #{block8.11} parent=31 // pred_fallthru
                _
              // Predicated region
              $region55: #{block8.11} parent=31 // pred_check
                _
              $region56: #{block8.11} parent=31 // pred_check_branch
                %386 = sbr.rel target = $region58
              $region57: #{block8.11} parent=31 // pred_region
                _
              $region58: #{block8.11} parent=31 // pred_fallthru
                _
            $region32: #{block8.11} parent=27 // pred_fallthru
              _
            // Predicated region
            $region33: #{block8.11} parent=27 // pred_check
              _
            $region34: #{block8.11} parent=27 // pred_check_branch
              %172 = sbr.rel target = $region36
            $region35: #{block8.11} parent=27 // pred_region
              %s174 = ssub.s32 256, 1
              loop: start=0, step=1, limit=1
              $region37: #{block8.11} parent=35 // loop_pre_header
                _
              $region38: #{block8.11} parent=35 // loop_header
                %s176 = sphi 0, %s180
                %p177 = scmp.ge.s32.totalorder %s176, 1
                %s181 = sphi %s166, %s166
                %s182 = sphi %s163, %s163
              $region39: #{block8.11} parent=35 // loop_header_branch
                %179 = sbr.rel (%p177) target = $region43
              $region40: #{block8.11} parent=35 // loop_body
                %v183 = vld [vmem:[%s181] sm:%s174]
                %184 = vst [vmem:[%s182] sm:%s174] %v183
                %v185 = vld [vmem:[%s181 + $0x38] sm:%s174]
                %186 = vst [vmem:[%s182 + $0x8] sm:%s174] %v185
                %v187 = vld [vmem:[%s181 + $0x70] sm:%s174]
                %188 = vst [vmem:[%s182 + $0x10] sm:%s174] %v187
                %v189 = vld [vmem:[%s181 + $0xa8] sm:%s174]
                %190 = vst [vmem:[%s182 + $0x18] sm:%s174] %v189
                %v191 = vld [vmem:[%s181 + $0xe0] sm:%s174]
                %192 = vst [vmem:[%s182 + $0x20] sm:%s174] %v191
                %v193 = vld [vmem:[%s181 + $0x118] sm:%s174]
                %194 = vst [vmem:[%s182 + $0x28] sm:%s174] %v193
                %v195 = vld [vmem:[%s181 + $0x150] sm:%s174]
                %196 = vst [vmem:[%s182 + $0x30] sm:%s174] %v195
                %v197 = vld [vmem:[%s181 + $0x188] sm:%s174]
                %198 = vst [vmem:[%s182 + $0x38] sm:%s174] %v197
                %v199 = vld [vmem:[%s181 + $0x1c0] sm:%s174]
                %200 = vst [vmem:[%s182 + $0x40] sm:%s174] %v199
                %v201 = vld [vmem:[%s181 + $0x1f8] sm:%s174]
                %202 = vst [vmem:[%s182 + $0x48] sm:%s174] %v201
                %v203 = vld [vmem:[%s181 + $0x230] sm:%s174]
                %204 = vst [vmem:[%s182 + $0x50] sm:%s174] %v203
                %v205 = vld [vmem:[%s181 + $0x268] sm:%s174]
                %206 = vst [vmem:[%s182 + $0x58] sm:%s174] %v205
                %v207 = vld [vmem:[%s181 + $0x2a0] sm:%s174]
                %208 = vst [vmem:[%s182 + $0x60] sm:%s174] %v207
                %v209 = vld [vmem:[%s181 + $0x2d8] sm:%s174]
                %210 = vst [vmem:[%s182 + $0x68] sm:%s174] %v209
                %v211 = vld [vmem:[%s181 + $0x310] sm:%s174]
                %212 = vst [vmem:[%s182 + $0x70] sm:%s174] %v211
                %v213 = vld [vmem:[%s181 + $0x348] sm:%s174]
                %214 = vst [vmem:[%s182 + $0x78] sm:%s174] %v213
                %v215 = vld [vmem:[%s181 + $0x380] sm:%s174]
                %216 = vst [vmem:[%s182 + $0x80] sm:%s174] %v215
                %v217 = vld [vmem:[%s181 + $0x3b8] sm:%s174]
                %218 = vst [vmem:[%s182 + $0x88] sm:%s174] %v217
                %v219 = vld [vmem:[%s181 + $0x3f0] sm:%s174]
                %220 = vst [vmem:[%s182 + $0x90] sm:%s174] %v219
                %v221 = vld [vmem:[%s181 + $0x428] sm:%s174]
                %222 = vst [vmem:[%s182 + $0x98] sm:%s174] %v221
                %v223 = vld [vmem:[%s181 + $0x460] sm:%s174]
                %224 = vst [vmem:[%s182 + $0xa0] sm:%s174] %v223
                %v225 = vld [vmem:[%s181 + $0x498] sm:%s174]
                %226 = vst [vmem:[%s182 + $0xa8] sm:%s174] %v225
                %v227 = vld [vmem:[%s181 + $0x4d0] sm:%s174]
                %228 = vst [vmem:[%s182 + $0xb0] sm:%s174] %v227
                %v229 = vld [vmem:[%s181 + $0x508] sm:%s174]
                %230 = vst [vmem:[%s182 + $0xb8] sm:%s174] %v229
                %v231 = vld [vmem:[%s181 + $0x540] sm:%s174]
                %232 = vst [vmem:[%s182 + $0xc0] sm:%s174] %v231
                %v233 = vld [vmem:[%s181 + $0x578] sm:%s174]
                %234 = vst [vmem:[%s182 + $0xc8] sm:%s174] %v233
                %v235 = vld [vmem:[%s181 + $0x5b0] sm:%s174]
                %236 = vst [vmem:[%s182 + $0xd0] sm:%s174] %v235
                %v237 = vld [vmem:[%s181 + $0x5e8] sm:%s174]
                %238 = vst [vmem:[%s182 + $0xd8] sm:%s174] %v237
                %v239 = vld [vmem:[%s181 + $0x620] sm:%s174]
                %240 = vst [vmem:[%s182 + $0xe0] sm:%s174] %v239
                %v241 = vld [vmem:[%s181 + $0x658] sm:%s174]
                %242 = vst [vmem:[%s182 + $0xe8] sm:%s174] %v241
                %v243 = vld [vmem:[%s181 + $0x690] sm:%s174]
                %244 = vst [vmem:[%s182 + $0xf0] sm:%s174] %v243
                %v245 = vld [vmem:[%s181 + $0x6c8] sm:%s174]
                %246 = vst [vmem:[%s182 + $0xf8] sm:%s174] %v245
                %v247 = vld [vmem:[%s181 + $0x700] sm:%s174]
                %248 = vst [vmem:[%s182 + $0x100] sm:%s174] %v247
                %v249 = vld [vmem:[%s181 + $0x738] sm:%s174]
                %250 = vst [vmem:[%s182 + $0x108] sm:%s174] %v249
                %v251 = vld [vmem:[%s181 + $0x770] sm:%s174]
                %252 = vst [vmem:[%s182 + $0x110] sm:%s174] %v251
                %v253 = vld [vmem:[%s181 + $0x7a8] sm:%s174]
                %254 = vst [vmem:[%s182 + $0x118] sm:%s174] %v253
                %v255 = vld [vmem:[%s181 + $0x7e0] sm:%s174]
                %256 = vst [vmem:[%s182 + $0x120] sm:%s174] %v255
                %v257 = vld [vmem:[%s181 + $0x818] sm:%s174]
                %258 = vst [vmem:[%s182 + $0x128] sm:%s174] %v257
                %v259 = vld [vmem:[%s181 + $0x850] sm:%s174]
                %260 = vst [vmem:[%s182 + $0x130] sm:%s174] %v259
                %v261 = vld [vmem:[%s181 + $0x888] sm:%s174]
                %262 = vst [vmem:[%s182 + $0x138] sm:%s174] %v261
                %v263 = vld [vmem:[%s181 + $0x8c0] sm:%s174]
                %264 = vst [vmem:[%s182 + $0x140] sm:%s174] %v263
                %v265 = vld [vmem:[%s181 + $0x8f8] sm:%s174]
                %266 = vst [vmem:[%s182 + $0x148] sm:%s174] %v265
                %v267 = vld [vmem:[%s181 + $0x930] sm:%s174]
                %268 = vst [vmem:[%s182 + $0x150] sm:%s174] %v267
                %v269 = vld [vmem:[%s181 + $0x968] sm:%s174]
                %270 = vst [vmem:[%s182 + $0x158] sm:%s174] %v269
                %v271 = vld [vmem:[%s181 + $0x9a0] sm:%s174]
                %272 = vst [vmem:[%s182 + $0x160] sm:%s174] %v271
                %v273 = vld [vmem:[%s181 + $0x9d8] sm:%s174]
                %274 = vst [vmem:[%s182 + $0x168] sm:%s174] %v273
                %v275 = vld [vmem:[%s181 + $0xa10] sm:%s174]
                %276 = vst [vmem:[%s182 + $0x170] sm:%s174] %v275
                %v277 = vld [vmem:[%s181 + $0xa48] sm:%s174]
                %278 = vst [vmem:[%s182 + $0x178] sm:%s174] %v277
              $region41: #{block8.11} parent=35 // loop_footer
                %s180 = sadd.s32 1, %s176
              $region42: #{block8.11} parent=35 // loop_footer_branch
                %175 = sbr.rel target = $region38
              $region43: #{block8.11} parent=35 // loop_exit
                _
            $region36: #{block8.11} parent=27 // pred_fallthru
              _
          $region28: #{block8.11} parent=23 // pred_fallthru
            _
          %387 = vnop
        $region24: #{block8.11} parent=19 // pred_fallthru
          _
        // Predicated region
        $region59: #{block8.11} parent=19 // pred_check
          %p388 = pneg %p77
        $region60: #{block8.11} parent=19 // pred_check_branch
          %390 = sbr.rel (%p388) target = $region62
        $region61: #{block8.11} parent=19 // pred_region
          %s391 = smul.u32 2, %s10
          %p392 = scmp.lt.s32.totalorder %s391, 13
          %s393 = scalar_select %p392, %s391, 13
          %s394 = scalar_lea.vmem %s2, %s393
          %s395 = smul.u32 2, %s10
        $region62: #{block8.11} parent=19 // pred_fallthru
          _
        // Predicated region
        $region63: #{block8.11} parent=19 // pred_check
          %p396 = pneg %p103
        $region64: #{block8.11} parent=19 // pred_check_branch
          %398 = sbr.rel (%p396) target = $region66
        $region65: #{block8.11} parent=19 // pred_region
          %s399 = sand.u32 %s93, 1
          %s400 = sand.u32 %s93, 1
          %s401 = smul.addr %s400, 64
          %s402 = scalar_lea.vmem [#allocation3], %s401
          %s403 = smul.u32 2, %s10
          %s404 = smul.addr %s403, 8
          %s405 = scalar_lea.vmem %s3, %s404
          // Predicated region
          $region67: #{block8.11} parent=65 // pred_check
            _
          $region68: #{block8.11} parent=65 // pred_check_branch
            %407 = sbr.rel (0) target = $region70
          $region69: #{block8.11} parent=65 // pred_region
            // Predicated region
            $region71: #{block8.11} parent=69 // pred_check
              _
            $region72: #{block8.11} parent=69 // pred_check_branch
              %409 = sbr.rel (0) target = $region74
            $region73: #{block8.11} parent=69 // pred_region
              loop: start=0, step=1, limit=1
              $region75: #{block8.11} parent=73 // loop_pre_header
                _
              $region76: #{block8.11} parent=73 // loop_header
                %s411 = sphi 0, %s415
                %p412 = scmp.ge.s32.totalorder %s411, 1
                %s416 = sphi %s405, %s405
                %s417 = sphi %s402, %s402
              $region77: #{block8.11} parent=73 // loop_header_branch
                %414 = sbr.rel (%p412) target = $region81
              $region78: #{block8.11} parent=73 // loop_body
                %v418 = vld [vmem:[%s416] sm:$0xff]
                %419 = vst [vmem:[%s417] sm:$0xff] %v418
                %v420 = vld [vmem:[%s416 + $0x8] sm:$0xff]
                %421 = vst [vmem:[%s417 + $0x8] sm:$0xff] %v420
                %v422 = vld [vmem:[%s416 + $0x70] sm:$0xff]
                %423 = vst [vmem:[%s417 + $0x10] sm:$0xff] %v422
                %v424 = vld [vmem:[%s416 + $0x78] sm:$0xff]
                %425 = vst [vmem:[%s417 + $0x18] sm:$0xff] %v424
                %v426 = vld [vmem:[%s416 + $0xe0] sm:$0xff]
                %427 = vst [vmem:[%s417 + $0x20] sm:$0xff] %v426
                %v428 = vld [vmem:[%s416 + $0xe8] sm:$0xff]
                %429 = vst [vmem:[%s417 + $0x28] sm:$0xff] %v428
                %v430 = vld [vmem:[%s416 + $0x150] sm:$0xff]
                %431 = vst [vmem:[%s417 + $0x30] sm:$0xff] %v430
                %v432 = vld [vmem:[%s416 + $0x158] sm:$0xff]
                %433 = vst [vmem:[%s417 + $0x38] sm:$0xff] %v432
              $region79: #{block8.11} parent=73 // loop_footer
                %s415 = sadd.s32 1, %s411
              $region80: #{block8.11} parent=73 // loop_footer_branch
                %410 = sbr.rel target = $region76
              $region81: #{block8.11} parent=73 // loop_exit
                _
            $region74: #{block8.11} parent=69 // pred_fallthru
              _
            // Predicated region
            $region82: #{block8.11} parent=69 // pred_check
              _
            $region83: #{block8.11} parent=69 // pred_check_branch
              %435 = sbr.rel target = $region85
            $region84: #{block8.11} parent=69 // pred_region
              _
            $region85: #{block8.11} parent=69 // pred_fallthru
              _
          $region70: #{block8.11} parent=65 // pred_fallthru
            _
          %436 = vnop
        $region66: #{block8.11} parent=19 // pred_fallthru
          _
      $region20: #{block8.11} parent=5 // pred_fallthru
        _
      %p437 = scmp.le.s32.totalorder 1, %s10
      %p438 = scmp.lt.s32.totalorder %s10, 8
      %p439 = pnand %p437, %p438
      %p440 = pneg %p439
      // Predicated region
      $region86: #{block8.11} parent=5 // pred_check
        _
      $region87: #{block8.11} parent=5 // pred_check_branch
        %442 = sbr.rel (%p439) target = $region89
      $region88: #{block8.11} parent=5 // pred_region
        %s443 = ssub.s32 %s10, 1
        %s444 = sand.u32 %s44, 1
        %s445 = sand.u32 %s44, 1
        %s446 = smul.addr %s445, 384
        %s447 = scalar_lea.vmem [#allocation2], %s446
        // Predicated region
        $region90: #{block8.11} parent=88 // pred_check
          %p448 = pneg %p57
        $region91: #{block8.11} parent=88 // pred_check_branch
          %450 = sbr.rel (%p448) target = $region93
        $region92: #{block8.11} parent=88 // pred_region
          _
        $region93: #{block8.11} parent=88 // pred_fallthru
          _
        %s451 = sand.u32 %s96, 1
        %s452 = sand.u32 %s96, 1
        %s453 = smul.addr %s452, 64
        %s454 = scalar_lea.vmem [#allocation3], %s453
        // Predicated region
        $region94: #{block8.11} parent=88 // pred_check
          %p455 = pneg %p109
        $region95: #{block8.11} parent=88 // pred_check_branch
          %457 = sbr.rel (%p455) target = $region97
        $region96: #{block8.11} parent=88 // pred_region
          _
        $region97: #{block8.11} parent=88 // pred_fallthru
          _
        %p458 = pneg %p31
        %p459 = pneg %p28
        %s460 = sand.u32 %s44, 1
        %s461 = sand.u32 %s44, 1
        %s462 = smul.addr %s461, 384
        %s463 = scalar_lea.vmem [#allocation2], %s462
        %p464 = pneg %p57
        %p465 = pneg %p54
        %s466 = smul.u32 2, %s15
        %p467 = scmp.lt.s32.totalorder %s466, 13
        %s468 = scalar_select %p467, %s466, 13
        %s469 = scalar_lea.vmem %s2, %s468
        %p470 = pneg %p83
        %p471 = pneg %p80
        %s472 = sand.u32 %s96, 1
        %s473 = sand.u32 %s96, 1
        %s474 = smul.addr %s473, 64
        %s475 = scalar_lea.vmem [#allocation3], %s474
        %p476 = pneg %p109
        %p477 = pneg %p106
        %p478 = pneg %p135
        %p479 = pneg %p132
        %s480 = sand.u32 %s122, 1
        %s481 = sand.u32 %s122, 1
        %s482 = smul.addr %s481, 64
        %s483 = scalar_lea.vmem [#allocation4], %s482
        %s484 = smul.u32 2, %s15
        %s485 = smul.u32 2, %s15
        %p486 = scmp.lt.s32.totalorder %s485, 13
        %s487 = scalar_select %p486, %s485, 13
        %s488 = scalar_lea.vmem %s2, %s487
        %s489 = smul.u32 2, %s15
        %s490 = smul.u32 2, %s15
        %s491 = smul.u32 2, %s15
        %v492 = vld [vmem:[%s0] sm:$0xff]
        %v493 = vld [vmem:[%s0 + $0x8] sm:$0xf]
        %v494 = vld [vmem:[%s0 + $0xc] sm:$0xff]
        %v495 = vld [vmem:[%s0 + $0x14] sm:$0xf]
        %v496 = vld [vmem:[%s0 + $0x18] sm:$0xff]
        %v497 = vld [vmem:[%s0 + $0x20] sm:$0xf]
        %v498 = vld [vmem:[%s0 + $0x24] sm:$0xff]
        %v499 = vld [vmem:[%s0 + $0x2c] sm:$0xf]
        %v500 = vld [vmem:[%s447] sm:$0xff]
        %v501 = vld [vmem:[%s447 + $0x8] sm:$0xff]
        %v502 = vld [vmem:[%s447 + $0x10] sm:$0xff]
        %v503 = vld [vmem:[%s447 + $0x18] sm:$0xff]
        %v504 = vld [vmem:[%s447 + $0x20] sm:$0xff]
        %v505 = vld [vmem:[%s447 + $0x28] sm:$0xff]
        %v506 = vld [vmem:[%s447 + $0x30] sm:$0xff]
        %v507 = vld [vmem:[%s447 + $0x38] sm:$0xff]
        %v508 = vld [vmem:[%s447 + $0x40] sm:$0xff]
        %v509 = vld [vmem:[%s447 + $0x48] sm:$0xff]
        %v510 = vld [vmem:[%s447 + $0x50] sm:$0xff]
        %v511 = vld [vmem:[%s447 + $0x58] sm:$0xff]
        %v512 = vld [vmem:[%s447 + $0x60] sm:$0xff]
        %v513 = vld [vmem:[%s447 + $0x68] sm:$0xff]
        %v514 = vld [vmem:[%s447 + $0x70] sm:$0xff]
        %v515 = vld [vmem:[%s447 + $0x78] sm:$0xff]
        %v516 = vld [vmem:[%s447 + $0x80] sm:$0xff]
        %v517 = vld [vmem:[%s447 + $0x88] sm:$0xff]
        %v518 = vld [vmem:[%s447 + $0x90] sm:$0xff]
        %v519 = vld [vmem:[%s447 + $0x98] sm:$0xff]
        %v520 = vld [vmem:[%s447 + $0xa0] sm:$0xff]
        %v521 = vld [vmem:[%s447 + $0xa8] sm:$0xff]
        %v522 = vld [vmem:[%s447 + $0xb0] sm:$0xff]
        %v523 = vld [vmem:[%s447 + $0xb8] sm:$0xff]
        %v524 = vld [vmem:[%s447 + $0xc0] sm:$0xff]
        %v525 = vld [vmem:[%s447 + $0xc8] sm:$0xff]
        %v526 = vld [vmem:[%s447 + $0xd0] sm:$0xff]
        %v527 = vld [vmem:[%s447 + $0xd8] sm:$0xff]
        %v528 = vld [vmem:[%s447 + $0xe0] sm:$0xff]
        %v529 = vld [vmem:[%s447 + $0xe8] sm:$0xff]
        %v530 = vld [vmem:[%s447 + $0xf0] sm:$0xff]
        %v531 = vld [vmem:[%s447 + $0xf8] sm:$0xff]
        %v532 = vld [vmem:[%s447 + $0x100] sm:$0xff]
        %v533 = vld [vmem:[%s447 + $0x108] sm:$0xff]
        %v534 = vld [vmem:[%s447 + $0x110] sm:$0xff]
        %v535 = vld [vmem:[%s447 + $0x118] sm:$0xff]
        %v536 = vld [vmem:[%s447 + $0x120] sm:$0xff]
        %v537 = vld [vmem:[%s447 + $0x128] sm:$0xff]
        %v538 = vld [vmem:[%s447 + $0x130] sm:$0xff]
        %v539 = vld [vmem:[%s447 + $0x138] sm:$0xff]
        %v540 = vld [vmem:[%s447 + $0x140] sm:$0xff]
        %v541 = vld [vmem:[%s447 + $0x148] sm:$0xff]
        %v542 = vld [vmem:[%s447 + $0x150] sm:$0xff]
        %v543 = vld [vmem:[%s447 + $0x158] sm:$0xff]
        %v544 = vld [vmem:[%s447 + $0x160] sm:$0xff]
        %v545 = vld [vmem:[%s447 + $0x168] sm:$0xff]
        %v546 = vld [vmem:[%s447 + $0x170] sm:$0xff]
        %v547 = vld [vmem:[%s447 + $0x178] sm:$0xff]
        %v548 = vld [vmem:[%s488] sm:$0x3]
        %v550 = vperm.slane %v548, 0
        %v551 = vperm.slane %v548, 1
        %v562 = vunpack.c.l.b16 %v492
        %v563 = vunpack.c.h.b16 %v492
        %v564 = vunpack.c.l.b16 %v493
        %v565 = vunpack.c.l.b16 %v494
        %v566 = vunpack.c.h.b16 %v494
        %v567 = vunpack.c.l.b16 %v495
        %v568 = vunpack.c.l.b16 %v496
        %v569 = vunpack.c.h.b16 %v496
        %v570 = vunpack.c.l.b16 %v497
        %v571 = vunpack.c.l.b16 %v498
        %v572 = vunpack.c.h.b16 %v498
        %v573 = vunpack.c.l.b16 %v499
        %v574 = vpack.c.b16 %v565, %v562
        %v575 = vpack.c.b16 %v566, %v563
        %v576 = vpack.c.b16 %v567, %v564
        %v577 = vpack.c.b16 %v571, %v568
        %v578 = vpack.c.b16 %v572, %v569
        %v579 = vpack.c.b16 %v573, %v570
        %v634 = vunpack.c.l.b16 %v500
        %v635 = vunpack.c.h.b16 %v500
        %v636 = vunpack.c.l.b16 %v501
        %v637 = vunpack.c.h.b16 %v501
        %v638 = vunpack.c.l.b16 %v502
        %v639 = vunpack.c.h.b16 %v502
        %v640 = vunpack.c.l.b16 %v503
        %v641 = vunpack.c.h.b16 %v503
        %v642 = vunpack.c.l.b16 %v504
        %v643 = vunpack.c.h.b16 %v504
        %v644 = vunpack.c.l.b16 %v505
        %v645 = vunpack.c.h.b16 %v505
        %v646 = vunpack.c.l.b16 %v506
        %v647 = vunpack.c.h.b16 %v506
        %v648 = vunpack.c.l.b16 %v507
        %v649 = vunpack.c.h.b16 %v507
        %v650 = vunpack.c.l.b16 %v508
        %v651 = vunpack.c.h.b16 %v508
        %v652 = vunpack.c.l.b16 %v509
        %v653 = vunpack.c.h.b16 %v509
        %v654 = vunpack.c.l.b16 %v510
        %v655 = vunpack.c.h.b16 %v510
        %v656 = vunpack.c.l.b16 %v511
        %v657 = vunpack.c.h.b16 %v511
        %v658 = vunpack.c.l.b16 %v512
        %v659 = vunpack.c.h.b16 %v512
        %v660 = vunpack.c.l.b16 %v513
        %v661 = vunpack.c.h.b16 %v513
        %v662 = vunpack.c.l.b16 %v514
        %v663 = vunpack.c.h.b16 %v514
        %v664 = vunpack.c.l.b16 %v515
        %v665 = vunpack.c.h.b16 %v515
        %v666 = vunpack.c.l.b16 %v516
        %v667 = vunpack.c.h.b16 %v516
        %v668 = vunpack.c.l.b16 %v517
        %v669 = vunpack.c.h.b16 %v517
        %v670 = vunpack.c.l.b16 %v518
        %v671 = vunpack.c.h.b16 %v518
        %v672 = vunpack.c.l.b16 %v519
        %v673 = vunpack.c.h.b16 %v519
        %v674 = vunpack.c.l.b16 %v520
        %v675 = vunpack.c.h.b16 %v520
        %v676 = vunpack.c.l.b16 %v521
        %v677 = vunpack.c.h.b16 %v521
        %v678 = vunpack.c.l.b16 %v522
        %v679 = vunpack.c.h.b16 %v522
        %v680 = vunpack.c.l.b16 %v523
        %v681 = vunpack.c.h.b16 %v523
        %v682 = vunpack.c.l.b16 %v524
        %v683 = vunpack.c.h.b16 %v524
        %v684 = vunpack.c.l.b16 %v525
        %v685 = vunpack.c.h.b16 %v525
        %v686 = vunpack.c.l.b16 %v526
        %v687 = vunpack.c.h.b16 %v526
        %v688 = vunpack.c.l.b16 %v527
        %v689 = vunpack.c.h.b16 %v527
        %v690 = vunpack.c.l.b16 %v528
        %v691 = vunpack.c.h.b16 %v528
        %v692 = vunpack.c.l.b16 %v529
        %v693 = vunpack.c.h.b16 %v529
        %v694 = vunpack.c.l.b16 %v530
        %v695 = vunpack.c.h.b16 %v530
        %v696 = vunpack.c.l.b16 %v531
        %v697 = vunpack.c.h.b16 %v531
        %v698 = vunpack.c.l.b16 %v532
        %v699 = vunpack.c.h.b16 %v532
        %v700 = vunpack.c.l.b16 %v533
        %v701 = vunpack.c.h.b16 %v533
        %v702 = vunpack.c.l.b16 %v534
        %v703 = vunpack.c.h.b16 %v534
        %v704 = vunpack.c.l.b16 %v535
        %v705 = vunpack.c.h.b16 %v535
        %v706 = vunpack.c.l.b16 %v536
        %v707 = vunpack.c.h.b16 %v536
        %v708 = vunpack.c.l.b16 %v537
        %v709 = vunpack.c.h.b16 %v537
        %v710 = vunpack.c.l.b16 %v538
        %v711 = vunpack.c.h.b16 %v538
        %v712 = vunpack.c.l.b16 %v539
        %v713 = vunpack.c.h.b16 %v539
        %v714 = vunpack.c.l.b16 %v540
        %v715 = vunpack.c.h.b16 %v540
        %v716 = vunpack.c.l.b16 %v541
        %v717 = vunpack.c.h.b16 %v541
        %v718 = vunpack.c.l.b16 %v542
        %v719 = vunpack.c.h.b16 %v542
        %v720 = vunpack.c.l.b16 %v543
        %v721 = vunpack.c.h.b16 %v543
        %v722 = vunpack.c.l.b16 %v544
        %v723 = vunpack.c.h.b16 %v544
        %v724 = vunpack.c.l.b16 %v545
        %v725 = vunpack.c.h.b16 %v545
        %v726 = vunpack.c.l.b16 %v546
        %v727 = vunpack.c.h.b16 %v546
        %v728 = vunpack.c.l.b16 %v547
        %v729 = vunpack.c.h.b16 %v547
        %v730 = vpack.c.b16 %v636, %v634
        %v731 = vpack.c.b16 %v637, %v635
        %v732 = vpack.c.b16 %v640, %v638
        %v733 = vpack.c.b16 %v641, %v639
        %v734 = vpack.c.b16 %v644, %v642
        %v735 = vpack.c.b16 %v645, %v643
        %v736 = vpack.c.b16 %v648, %v646
        %v737 = vpack.c.b16 %v649, %v647
        %v738 = vpack.c.b16 %v652, %v650
        %v739 = vpack.c.b16 %v653, %v651
        %v740 = vpack.c.b16 %v656, %v654
        %v741 = vpack.c.b16 %v657, %v655
        %v742 = vpack.c.b16 %v660, %v658
        %v743 = vpack.c.b16 %v661, %v659
        %v744 = vpack.c.b16 %v664, %v662
        %v745 = vpack.c.b16 %v665, %v663
        %v746 = vpack.c.b16 %v668, %v666
        %v747 = vpack.c.b16 %v669, %v667
        %v748 = vpack.c.b16 %v672, %v670
        %v749 = vpack.c.b16 %v673, %v671
        %v750 = vpack.c.b16 %v676, %v674
        %v751 = vpack.c.b16 %v677, %v675
        %v752 = vpack.c.b16 %v680, %v678
        %v753 = vpack.c.b16 %v681, %v679
        %v754 = vpack.c.b16 %v684, %v682
        %v755 = vpack.c.b16 %v685, %v683
        %v756 = vpack.c.b16 %v688, %v686
        %v757 = vpack.c.b16 %v689, %v687
        %v758 = vpack.c.b16 %v692, %v690
        %v759 = vpack.c.b16 %v693, %v691
        %v760 = vpack.c.b16 %v696, %v694
        %v761 = vpack.c.b16 %v697, %v695
        %v762 = vpack.c.b16 %v700, %v698
        %v763 = vpack.c.b16 %v701, %v699
        %v764 = vpack.c.b16 %v704, %v702
        %v765 = vpack.c.b16 %v705, %v703
        %v766 = vpack.c.b16 %v708, %v706
        %v767 = vpack.c.b16 %v709, %v707
        %v768 = vpack.c.b16 %v712, %v710
        %v769 = vpack.c.b16 %v713, %v711
        %v770 = vpack.c.b16 %v716, %v714
        %v771 = vpack.c.b16 %v717, %v715
        %v772 = vpack.c.b16 %v720, %v718
        %v773 = vpack.c.b16 %v721, %v719
        %v774 = vpack.c.b16 %v724, %v722
        %v775 = vpack.c.b16 %v725, %v723
        %v776 = vpack.c.b16 %v728, %v726
        %v777 = vpack.c.b16 %v729, %v727
        %826 = vmatpush.bf16.msra.mxu0 %v744
        %827 = vmatpush.bf16.msra.mxu0 %v742
        %828 = vmatpush.bf16.msra.mxu0 %v740
        %829 = vmatpush.bf16.msra.mxu0 %v738
        %830 = vmatpush.bf16.msra.mxu0 %v736
        %831 = vmatpush.bf16.msra.mxu0 %v734
        %832 = vmatpush.bf16.msra.mxu0 %v732
        %833 = vmatpush.bf16.msra.mxu0 %v730
        %834 = vmatmul.bf16.gmra.mxu0 %v574
        %v835 = vpop.f32.mrf.mxu0
        %v836 = vadd.f32 %v550, %v835
        %v837 = vpop.f32.mrf.mxu0
        %v838 = vadd.f32 %v550, %v837
        %839 = vmatmul.bf16.gmra.mxu0 %v577
        %v840 = vpop.f32.mrf.mxu0
        %v841 = vadd.f32 %v550, %v840
        %v842 = vpop.f32.mrf.mxu0
        %v843 = vadd.f32 %v550, %v842
        %844 = vdwg.mxu0
        %845 = vmatpush.bf16.msra.mxu0 %v760
        %846 = vmatpush.bf16.msra.mxu0 %v758
        %847 = vmatpush.bf16.msra.mxu0 %v756
        %848 = vmatpush.bf16.msra.mxu0 %v754
        %849 = vmatpush.bf16.msra.mxu0 %v752
        %850 = vmatpush.bf16.msra.mxu0 %v750
        %851 = vmatpush.bf16.msra.mxu0 %v748
        %852 = vmatpush.bf16.msra.mxu0 %v746
        %853 = vmatmul.bf16.gmra.mxu0 %v575
        %v854 = vpop.f32.mrf.mxu0
        %v855 = vadd.f32 %v836, %v854
        %v856 = vpop.f32.mrf.mxu0
        %v857 = vadd.f32 %v838, %v856
        %858 = vmatmul.bf16.gmra.mxu0 %v578
        %v859 = vpop.f32.mrf.mxu0
        %v860 = vadd.f32 %v841, %v859
        %v861 = vpop.f32.mrf.mxu0
        %v862 = vadd.f32 %v843, %v861
        %863 = vdwg.mxu0
        %864 = vmatpush.bf16.msra.mxu0 %v776
        %865 = vmatpush.bf16.msra.mxu0 %v774
        %866 = vmatpush.bf16.msra.mxu0 %v772
        %867 = vmatpush.bf16.msra.mxu0 %v770
        %868 = vmatpush.bf16.msra.mxu0 %v768
        %869 = vmatpush.bf16.msra.mxu0 %v766
        %870 = vmatpush.bf16.msra.mxu0 %v764
        %871 = vmatpush.bf16.msra.mxu0 %v762
        %872 = vmatmul.bf16.gmra.mxu0 %v576
        %v873 = vpop.f32.mrf.mxu0
        %v874 = vadd.f32 %v855, %v873
        %v875 = vpop.f32.mrf.mxu0
        %v876 = vadd.f32 %v857, %v875
        %877 = vmatmul.bf16.gmra.mxu0 %v579
        %v878 = vpop.f32.mrf.mxu0
        %v879 = vadd.f32 %v860, %v878
        %v880 = vpop.f32.mrf.mxu0
        %v881 = vadd.f32 %v862, %v880
        %882 = vdwg.mxu0
        %883 = vmatpush.bf16.msra.mxu0 %v745
        %884 = vmatpush.bf16.msra.mxu0 %v743
        %885 = vmatpush.bf16.msra.mxu0 %v741
        %886 = vmatpush.bf16.msra.mxu0 %v739
        %887 = vmatpush.bf16.msra.mxu0 %v737
        %888 = vmatpush.bf16.msra.mxu0 %v735
        %889 = vmatpush.bf16.msra.mxu0 %v733
        %890 = vmatpush.bf16.msra.mxu0 %v731
        %891 = vmatmul.bf16.gmra.mxu0 %v574
        %v892 = vpop.f32.mrf.mxu0
        %v893 = vadd.f32 %v551, %v892
        %v894 = vpop.f32.mrf.mxu0
        %v895 = vadd.f32 %v551, %v894
        %896 = vmatmul.bf16.gmra.mxu0 %v577
        %v897 = vpop.f32.mrf.mxu0
        %v898 = vadd.f32 %v551, %v897
        %v899 = vpop.f32.mrf.mxu0
        %v900 = vadd.f32 %v551, %v899
        %901 = vdwg.mxu0
        %902 = vmatpush.bf16.msra.mxu0 %v761
        %903 = vmatpush.bf16.msra.mxu0 %v759
        %904 = vmatpush.bf16.msra.mxu0 %v757
        %905 = vmatpush.bf16.msra.mxu0 %v755
        %906 = vmatpush.bf16.msra.mxu0 %v753
        %907 = vmatpush.bf16.msra.mxu0 %v751
        %908 = vmatpush.bf16.msra.mxu0 %v749
        %909 = vmatpush.bf16.msra.mxu0 %v747
        %910 = vmatmul.bf16.gmra.mxu0 %v575
        %v911 = vpop.f32.mrf.mxu0
        %v912 = vadd.f32 %v893, %v911
        %v913 = vpop.f32.mrf.mxu0
        %v914 = vadd.f32 %v895, %v913
        %915 = vmatmul.bf16.gmra.mxu0 %v578
        %v916 = vpop.f32.mrf.mxu0
        %v917 = vadd.f32 %v898, %v916
        %v918 = vpop.f32.mrf.mxu0
        %v919 = vadd.f32 %v900, %v918
        %920 = vdwg.mxu0
        %921 = vmatpush.bf16.msra.mxu0 %v777
        %922 = vmatpush.bf16.msra.mxu0 %v775
        %923 = vmatpush.bf16.msra.mxu0 %v773
        %924 = vmatpush.bf16.msra.mxu0 %v771
        %925 = vmatpush.bf16.msra.mxu0 %v769
        %926 = vmatpush.bf16.msra.mxu0 %v767
        %927 = vmatpush.bf16.msra.mxu0 %v765
        %928 = vmatpush.bf16.msra.mxu0 %v763
        %929 = vmatmul.bf16.gmra.mxu0 %v576
        %v930 = vpop.f32.mrf.mxu0
        %v931 = vadd.f32 %v912, %v930
        %v932 = vpop.f32.mrf.mxu0
        %v933 = vadd.f32 %v914, %v932
        %934 = vmatmul.bf16.gmra.mxu0 %v579
        %v935 = vpop.f32.mrf.mxu0
        %v936 = vadd.f32 %v917, %v935
        %v937 = vpop.f32.mrf.mxu0
        %v938 = vadd.f32 %v919, %v937
        %939 = vdwg.mxu0
        %v940 = vld [vmem:[%s454] sm:$0xff]
        %v941 = vld [vmem:[%s454 + $0x8] sm:$0xff]
        %v942 = vld [vmem:[%s454 + $0x10] sm:$0xff]
        %v943 = vld [vmem:[%s454 + $0x18] sm:$0xff]
        %v944 = vld [vmem:[%s454 + $0x20] sm:$0xff]
        %v945 = vld [vmem:[%s454 + $0x28] sm:$0xff]
        %v946 = vld [vmem:[%s454 + $0x30] sm:$0xff]
        %v947 = vld [vmem:[%s454 + $0x38] sm:$0xff]
        %v948 = vadd.f32 %v874, %v940
        %v949 = vadd.f32 %v931, %v941
        %v950 = vadd.f32 %v876, %v942
        %v951 = vadd.f32 %v933, %v943
        %v952 = vadd.f32 %v879, %v944
        %v953 = vadd.f32 %v936, %v945
        %v954 = vadd.f32 %v881, %v946
        %v955 = vadd.f32 %v938, %v947
        %v956 = vmax.f32 %v948, 0.0
        %v957 = vmax.f32 %v949, 0.0
        %v958 = vmax.f32 %v950, 0.0
        %v959 = vmax.f32 %v951, 0.0
        %v960 = vmax.f32 %v952, 0.0
        %v961 = vmax.f32 %v953, 0.0
        %v962 = vmax.f32 %v954, 0.0
        %v963 = vmax.f32 %v955, 0.0
        %964 = vst [vmem:[%s483] sm:$0xff] %v956
        %965 = vst [vmem:[%s483 + $0x8] sm:$0xff] %v957
        %966 = vst [vmem:[%s483 + $0x10] sm:$0xff] %v958
        %967 = vst [vmem:[%s483 + $0x18] sm:$0xff] %v959
        %968 = vst [vmem:[%s483 + $0x20] sm:$0xff] %v960
        %969 = vst [vmem:[%s483 + $0x28] sm:$0xff] %v961
        %970 = vst [vmem:[%s483 + $0x30] sm:$0xff] %v962
        %971 = vst [vmem:[%s483 + $0x38] sm:$0xff] %v963
        %s972 = sand.u32 %s122, 1
        %s973 = sand.u32 %s122, 1
        %s974 = smul.addr %s973, 64
        %s975 = scalar_lea.vmem [#allocation4], %s974
        // Predicated region
        $region98: #{block8.11} parent=88 // pred_check
          %p976 = pneg %p132
        $region99: #{block8.11} parent=88 // pred_check_branch
          %978 = sbr.rel (%p976) target = $region101
        $region100: #{block8.11} parent=88 // pred_region
          %s979 = smul.u32 2, %s15
          %s980 = smul.addr %s979, 8
          %s981 = scalar_lea.vmem %s4, %s980
          // Predicated region
          $region102: #{block8.11} parent=100 // pred_check
            _
          $region103: #{block8.11} parent=100 // pred_check_branch
            %983 = sbr.rel (0) target = $region105
          $region104: #{block8.11} parent=100 // pred_region
            // Predicated region
            $region106: #{block8.11} parent=104 // pred_check
              _
            $region107: #{block8.11} parent=104 // pred_check_branch
              %985 = sbr.rel (0) target = $region109
            $region108: #{block8.11} parent=104 // pred_region
              loop: start=0, step=1, limit=1
              $region110: #{block8.11} parent=108 // loop_pre_header
                _
              $region111: #{block8.11} parent=108 // loop_header
                %s987 = sphi 0, %s991
                %p988 = scmp.ge.s32.totalorder %s987, 1
                %s992 = sphi %s975, %s975
                %s993 = sphi %s981, %s981
              $region112: #{block8.11} parent=108 // loop_header_branch
                %990 = sbr.rel (%p988) target = $region116
              $region113: #{block8.11} parent=108 // loop_body
                %v994 = vld [vmem:[%s992] sm:$0xff]
                %995 = vst [vmem:[%s993] sm:$0xff] %v994
                %v996 = vld [vmem:[%s992 + $0x8] sm:$0xff]
                %997 = vst [vmem:[%s993 + $0x8] sm:$0xff] %v996
                %v998 = vld [vmem:[%s992 + $0x10] sm:$0xff]
                %999 = vst [vmem:[%s993 + $0x70] sm:$0xff] %v998
                %v1000 = vld [vmem:[%s992 + $0x18] sm:$0xff]
                %1001 = vst [vmem:[%s993 + $0x78] sm:$0xff] %v1000
                %v1002 = vld [vmem:[%s992 + $0x20] sm:$0xff]
                %1003 = vst [vmem:[%s993 + $0xe0] sm:$0xff] %v1002
                %v1004 = vld [vmem:[%s992 + $0x28] sm:$0xff]
                %1005 = vst [vmem:[%s993 + $0xe8] sm:$0xff] %v1004
                %v1006 = vld [vmem:[%s992 + $0x30] sm:$0xff]
                %1007 = vst [vmem:[%s993 + $0x150] sm:$0xff] %v1006
                %v1008 = vld [vmem:[%s992 + $0x38] sm:$0xff]
                %1009 = vst [vmem:[%s993 + $0x158] sm:$0xff] %v1008
              $region114: #{block8.11} parent=108 // loop_footer
                %s991 = sadd.s32 1, %s987
              $region115: #{block8.11} parent=108 // loop_footer_branch
                %986 = sbr.rel target = $region111
              $region116: #{block8.11} parent=108 // loop_exit
                _
            $region109: #{block8.11} parent=104 // pred_fallthru
              _
            // Predicated region
            $region117: #{block8.11} parent=104 // pred_check
              _
            $region118: #{block8.11} parent=104 // pred_check_branch
              %1011 = sbr.rel target = $region120
            $region119: #{block8.11} parent=104 // pred_region
              _
            $region120: #{block8.11} parent=104 // pred_fallthru
              _
          $region105: #{block8.11} parent=100 // pred_fallthru
            _
          %1012 = vnop
        $region101: #{block8.11} parent=88 // pred_fallthru
          _
      $region89: #{block8.11} parent=5 // pred_fallthru
        _
      %p1013 = scmp.le.s32.totalorder 2, %s10
      // Predicated region
      $region121: #{block8.11} parent=5 // pred_check
        %p1014 = pneg %p1013
      $region122: #{block8.11} parent=5 // pred_check_branch
        %1016 = sbr.rel (%p1014) target = $region124
      $region123: #{block8.11} parent=5 // pred_region
        %s1017 = ssub.s32 %s10, 2
        // Predicated region
        $region125: #{block8.11} parent=123 // pred_check
          %p1018 = pneg %p138
        $region126: #{block8.11} parent=123 // pred_check_branch
          %1020 = sbr.rel (%p1018) target = $region128
        $region127: #{block8.11} parent=123 // pred_region
          %s1021 = sand.u32 %s123, 1
          %s1022 = sand.u32 %s123, 1
          %s1023 = smul.addr %s1022, 64
          %s1024 = scalar_lea.vmem [#allocation4], %s1023
        $region128: #{block8.11} parent=123 // pred_fallthru
          _
      $region124: #{block8.11} parent=5 // pred_fallthru
        _
    $region6: #{block8.11} parent=1 // loop_footer
      %s14 = sadd.s32 1, %s10
    $region7: #{block8.11} parent=1 // loop_footer_branch
      %9 = sbr.rel target = $region3
    $region8: #{block8.11} parent=1 // loop_exit
      _

// kernel: block8.10
$region0: #{block8.10}
  #allocation0 [shape = 'u32[]', space=smem, size = 0x4, offset = 0x4, fixed_abs, tag = 'smem constant byte address 0x4 - core index']
  #allocation1 [shape = 'u32[72,128]{1,0:T(1,128)}', space=vmem, size = 0x9000, scoped, tag = 'internal scratch']
  %s0 = inlined_call_operand.vmem [shape: bf16[32,2176], index: 0, kind: input, shape index: {}]
  %s1 = inlined_call_operand.vmem [shape: bf16[2176,384], index: 1, kind: input, shape index: {}]
  %s2 = inlined_call_operand.vmem [shape: f32[1,384], index: 2, kind: input, shape index: {}]
  %s3 = inlined_call_operand.vmem [shape: f32[32,384], index: 3, kind: output, shape index: {}]
  %s4 = sld [smem:[#allocation0]]
  $region131: #{block8.10} parent=0
    _
  %s6 = ssub.s32 1, %s4
  %s7 = scalar_select 0, %s6, %s4
  $region1: #{block8.10} parent=0
    #allocation2 [shape = 'u8[1114112]{0}', space=vmem, size = 0x110000, scoped, tag = 'input window, operand 1']
    #allocation3 [shape = 'u8[32768]{0}', space=vmem, size = 0x8000, scoped, tag = 'output window, operand 0']
    loop: start=0, step=1, limit=5
    $region2: #{block8.10} parent=1 // loop_pre_header
      _
    $region3: #{block8.10} parent=1 // loop_header
      %s9 = sphi 0, %s13
      %p10 = scmp.ge.s32.totalorder %s9, 5
      %s17 = sphi 0, %s17
      %s19 = sphi 0, %s17
      %s20 = sphi 0, %s19
      %s34 = sphi 0, %s20
      %s40 = sphi 0, %s42
      %s43 = sphi 0, %s40
      %s44 = sphi 0, %s43
      %s60 = sphi 0, %s44
      %s66 = sphi 0, %s68
      %s69 = sphi 0, %s66
      %s70 = sphi 0, %s69
      %s86 = sphi 0, %s70
      %s92 = sphi 0, %s94
      %s95 = sphi 0, %s92
      %s96 = sphi 0, %s95
      %s112 = sphi 0, %s96
    $region4: #{block8.10} parent=1 // loop_header_branch
      %12 = sbr.rel (%p10) target = $region8
    $region5: #{block8.10} parent=1 // loop_body
      %s14 = ssub.s32 %s9, 1
      %s15 = ssub.s32 %s9, 2
      %s16 = sadd.s32 %s9, 1
      %s18 = sadd.s32 %s17, 1
      %p21 = scmp.eq.s32.totalorder %s9, 2
      %p22 = scmp.ne.s32.totalorder %s17, %s19
      %p23 = scmp.eq.s32.totalorder %s9, 0
      %p24 = por %p22, %p23
      %p25 = scmp.ne.s32.totalorder %s17, %s19
      %p26 = scmp.eq.s32.totalorder %s14, 2
      %p27 = por %p25, %p26
      %p28 = scmp.ne.s32.totalorder %s19, %s20
      %p29 = scmp.eq.s32.totalorder %s14, 0
      %p30 = por %p28, %p29
      %p31 = scmp.ne.s32.totalorder %s19, %s20
      %p32 = scmp.eq.s32.totalorder %s15, 2
      %p33 = por %p31, %p32
      %p35 = scmp.ne.s32.totalorder %s20, %s34
      %p36 = scmp.eq.s32.totalorder %s15, 0
      %p37 = por %p35, %p36
      %s38 = ssub.s32 %s9, %s16
      %p39 = scmp.eq.s32.totalorder %s38, 0
      %s41 = sadd.s32 %s40, 1
      %s42 = scalar_select %p39, %s40, %s41
      %p45 = pneg %p39
      %p46 = scmp.eq.s32.totalorder %s9, 2
      %p47 = por %p45, %p46
      %p48 = scmp.ne.s32.totalorder %s40, %s43
      %p49 = scmp.eq.s32.totalorder %s9, 0
      %p50 = por %p48, %p49
      %p51 = scmp.ne.s32.totalorder %s40, %s43
      %p52 = scmp.eq.s32.totalorder %s14, 2
      %p53 = por %p51, %p52
      %p54 = scmp.ne.s32.totalorder %s43, %s44
      %p55 = scmp.eq.s32.totalorder %s14, 0
      %p56 = por %p54, %p55
      %p57 = scmp.ne.s32.totalorder %s43, %s44
      %p58 = scmp.eq.s32.totalorder %s15, 2
      %p59 = por %p57, %p58
      %p61 = scmp.ne.s32.totalorder %s44, %s60
      %p62 = scmp.eq.s32.totalorder %s15, 0
      %p63 = por %p61, %p62
      %s64 = ssub.s32 %s9, %s16
      %p65 = scmp.eq.s32.totalorder %s64, 0
      %s67 = sadd.s32 %s66, 1
      %s68 = scalar_select %p65, %s66, %s67
      %p71 = pneg %p65
      %p72 = scmp.eq.s32.totalorder %s9, 2
      %p73 = por %p71, %p72
      %p74 = scmp.ne.s32.totalorder %s66, %s69
      %p75 = scmp.eq.s32.totalorder %s9, 0
      %p76 = por %p74, %p75
      %p77 = scmp.ne.s32.totalorder %s66, %s69
      %p78 = scmp.eq.s32.totalorder %s14, 2
      %p79 = por %p77, %p78
      %p80 = scmp.ne.s32.totalorder %s69, %s70
      %p81 = scmp.eq.s32.totalorder %s14, 0
      %p82 = por %p80, %p81
      %p83 = scmp.ne.s32.totalorder %s69, %s70
      %p84 = scmp.eq.s32.totalorder %s15, 2
      %p85 = por %p83, %p84
      %p87 = scmp.ne.s32.totalorder %s70, %s86
      %p88 = scmp.eq.s32.totalorder %s15, 0
      %p89 = por %p87, %p88
      %s90 = ssub.s32 %s9, %s16
      %p91 = scmp.eq.s32.totalorder %s90, 0
      %s93 = sadd.s32 %s92, 1
      %s94 = scalar_select %p91, %s92, %s93
      %p97 = pneg %p91
      %p98 = scmp.eq.s32.totalorder %s9, 2
      %p99 = por %p97, %p98
      %p100 = scmp.ne.s32.totalorder %s92, %s95
      %p101 = scmp.eq.s32.totalorder %s9, 0
      %p102 = por %p100, %p101
      %p103 = scmp.ne.s32.totalorder %s92, %s95
      %p104 = scmp.eq.s32.totalorder %s14, 2
      %p105 = por %p103, %p104
      %p106 = scmp.ne.s32.totalorder %s95, %s96
      %p107 = scmp.eq.s32.totalorder %s14, 0
      %p108 = por %p106, %p107
      %p109 = scmp.ne.s32.totalorder %s95, %s96
      %p110 = scmp.eq.s32.totalorder %s15, 2
      %p111 = por %p109, %p110
      %p113 = scmp.ne.s32.totalorder %s96, %s112
      %p114 = scmp.eq.s32.totalorder %s15, 0
      %p115 = por %p113, %p114
      %p116 = scmp.le.s32.totalorder 1, %s9
      %p117 = scmp.lt.s32.totalorder %s9, 4
      %p118 = pnand %p116, %p117
      %p119 = pneg %p118
      // Predicated region
      $region9: #{block8.10} parent=5 // pred_check
        _
      $region10: #{block8.10} parent=5 // pred_check_branch
        %121 = sbr.rel (%p118) target = $region12
      $region11: #{block8.10} parent=5 // pred_region
        %s122 = ssub.s32 %s9, 1
        // Predicated region
        $region13: #{block8.10} parent=11 // pred_check
          %p123 = pneg %p30
        $region14: #{block8.10} parent=11 // pred_check_branch
          %125 = sbr.rel (%p123) target = $region16
        $region15: #{block8.10} parent=11 // pred_region
          _
        $region16: #{block8.10} parent=11 // pred_fallthru
          _
      $region12: #{block8.10} parent=5 // pred_fallthru
        _
      %p126 = scmp.lt.s32.totalorder %s9, 3
      // Predicated region
      $region17: #{block8.10} parent=5 // pred_check
        %p127 = pneg %p126
      $region18: #{block8.10} parent=5 // pred_check_branch
        %129 = sbr.rel (%p127) target = $region20
      $region19: #{block8.10} parent=5 // pred_region
        // Predicated region
        $region21: #{block8.10} parent=19 // pred_check
          %p130 = pneg %p50
        $region22: #{block8.10} parent=19 // pred_check_branch
          %132 = sbr.rel (%p130) target = $region24
        $region23: #{block8.10} parent=19 // pred_region
          %s133 = sand.u32 %s40, 1
          %s134 = sand.u32 %s40, 1
          %s135 = smul.addr %s134, 1088
          %s136 = scalar_lea.vmem [#allocation2], %s135
          %s137 = smul.addr %s9, 4
          %s138 = scalar_lea.vmem %s1, %s137
          // Predicated region
          $region25: #{block8.10} parent=23 // pred_check
            _
          $region26: #{block8.10} parent=23 // pred_check_branch
            %140 = sbr.rel (0) target = $region28
          $region27: #{block8.10} parent=23 // pred_region
            // Predicated region
            $region29: #{block8.10} parent=27 // pred_check
              _
            $region30: #{block8.10} parent=27 // pred_check_branch
              %142 = sbr.rel target = $region32
            $region31: #{block8.10} parent=27 // pred_region
              // Predicated region
              $region44: #{block8.10} parent=31 // pred_check
                _
              $region45: #{block8.10} parent=31 // pred_check_branch
                %700 = sbr.rel target = $region47
              $region46: #{block8.10} parent=31 // pred_region
                loop: start=0, step=1, limit=0
                $region48: #{block8.10} parent=46 // loop_pre_header
                  _
                $region49: #{block8.10} parent=46 // loop_header
                  %s702 = sphi 0, %s706
                  %p703 = scmp.ge.s32.totalorder %s702, 0
                  %s707 = sphi 0, %s1256
                  %s708 = sphi %s138, %s1259
                  %s709 = sphi %s136, %s1260
                $region50: #{block8.10} parent=46 // loop_header_branch
                  %705 = sbr.rel (%p703) target = $region54
                $region51: #{block8.10} parent=46 // loop_body
                  %v710 = vld [vmem:[%s708] sm:$0xff]
                  %711 = vst [vmem:[%s709] sm:$0xff] %v710
                  %v712 = vld [vmem:[%s708 + $0xc] sm:$0xff]
                  %713 = vst [vmem:[%s709 + $0x4] sm:$0xff] %v712
                  %v714 = vld [vmem:[%s708 + $0x18] sm:$0xff]
                  %715 = vst [vmem:[%s709 + $0x8] sm:$0xff] %v714
                  %v716 = vld [vmem:[%s708 + $0x24] sm:$0xff]
                  %717 = vst [vmem:[%s709 + $0xc] sm:$0xff] %v716
                  %v718 = vld [vmem:[%s708 + $0x30] sm:$0xff]
                  %719 = vst [vmem:[%s709 + $0x10] sm:$0xff] %v718
                  %v720 = vld [vmem:[%s708 + $0x3c] sm:$0xff]
                  %721 = vst [vmem:[%s709 + $0x14] sm:$0xff] %v720
                  %v722 = vld [vmem:[%s708 + $0x48] sm:$0xff]
                  %723 = vst [vmem:[%s709 + $0x18] sm:$0xff] %v722
                  %v724 = vld [vmem:[%s708 + $0x54] sm:$0xff]
                  %725 = vst [vmem:[%s709 + $0x1c] sm:$0xff] %v724
                  %v726 = vld [vmem:[%s708 + $0x60] sm:$0xff]
                  %727 = vst [vmem:[%s709 + $0x20] sm:$0xff] %v726
                  %v728 = vld [vmem:[%s708 + $0x6c] sm:$0xff]
                  %729 = vst [vmem:[%s709 + $0x24] sm:$0xff] %v728
                  %v730 = vld [vmem:[%s708 + $0x78] sm:$0xff]
                  %731 = vst [vmem:[%s709 + $0x28] sm:$0xff] %v730
                  %v732 = vld [vmem:[%s708 + $0x84] sm:$0xff]
                  %733 = vst [vmem:[%s709 + $0x2c] sm:$0xff] %v732
                  %v734 = vld [vmem:[%s708 + $0x90] sm:$0xff]
                  %735 = vst [vmem:[%s709 + $0x30] sm:$0xff] %v734
                  %v736 = vld [vmem:[%s708 + $0x9c] sm:$0xff]
                  %737 = vst [vmem:[%s709 + $0x34] sm:$0xff] %v736
                  %v738 = vld [vmem:[%s708 + $0xa8] sm:$0xff]
                  %739 = vst [vmem:[%s709 + $0x38] sm:$0xff] %v738
                  %v740 = vld [vmem:[%s708 + $0xb4] sm:$0xff]
                  %741 = vst [vmem:[%s709 + $0x3c] sm:$0xff] %v740
                  %v742 = vld [vmem:[%s708 + $0xc0] sm:$0xff]
                  %743 = vst [vmem:[%s709 + $0x40] sm:$0xff] %v742
                  %v744 = vld [vmem:[%s708 + $0xcc] sm:$0xff]
                  %745 = vst [vmem:[%s709 + $0x44] sm:$0xff] %v744
                  %v746 = vld [vmem:[%s708 + $0xd8] sm:$0xff]
                  %747 = vst [vmem:[%s709 + $0x48] sm:$0xff] %v746
                  %v748 = vld [vmem:[%s708 + $0xe4] sm:$0xff]
                  %749 = vst [vmem:[%s709 + $0x4c] sm:$0xff] %v748
                  %v750 = vld [vmem:[%s708 + $0xf0] sm:$0xff]
                  %751 = vst [vmem:[%s709 + $0x50] sm:$0xff] %v750
                  %v752 = vld [vmem:[%s708 + $0xfc] sm:$0xff]
                  %753 = vst [vmem:[%s709 + $0x54] sm:$0xff] %v752
                  %v754 = vld [vmem:[%s708 + $0x108] sm:$0xff]
                  %755 = vst [vmem:[%s709 + $0x58] sm:$0xff] %v754
                  %v756 = vld [vmem:[%s708 + $0x114] sm:$0xff]
                  %757 = vst [vmem:[%s709 + $0x5c] sm:$0xff] %v756
                  %v758 = vld [vmem:[%s708 + $0x120] sm:$0xff]
                  %759 = vst [vmem:[%s709 + $0x60] sm:$0xff] %v758
                  %v760 = vld [vmem:[%s708 + $0x12c] sm:$0xff]
                  %761 = vst [vmem:[%s709 + $0x64] sm:$0xff] %v760
                  %v762 = vld [vmem:[%s708 + $0x138] sm:$0xff]
                  %763 = vst [vmem:[%s709 + $0x68] sm:$0xff] %v762
                  %v764 = vld [vmem:[%s708 + $0x144] sm:$0xff]
                  %765 = vst [vmem:[%s709 + $0x6c] sm:$0xff] %v764
                  %v766 = vld [vmem:[%s708 + $0x150] sm:$0xff]
                  %767 = vst [vmem:[%s709 + $0x70] sm:$0xff] %v766
                  %v768 = vld [vmem:[%s708 + $0x15c] sm:$0xff]
                  %769 = vst [vmem:[%s709 + $0x74] sm:$0xff] %v768
                  %v770 = vld [vmem:[%s708 + $0x168] sm:$0xff]
                  %771 = vst [vmem:[%s709 + $0x78] sm:$0xff] %v770
                  %v772 = vld [vmem:[%s708 + $0x174] sm:$0xff]
                  %773 = vst [vmem:[%s709 + $0x7c] sm:$0xff] %v772
                  %v774 = vld [vmem:[%s708 + $0x180] sm:$0xff]
                  %775 = vst [vmem:[%s709 + $0x80] sm:$0xff] %v774
                  %v776 = vld [vmem:[%s708 + $0x18c] sm:$0xff]
                  %777 = vst [vmem:[%s709 + $0x84] sm:$0xff] %v776
                  %v778 = vld [vmem:[%s708 + $0x198] sm:$0xff]
                  %779 = vst [vmem:[%s709 + $0x88] sm:$0xff] %v778
                  %v780 = vld [vmem:[%s708 + $0x1a4] sm:$0xff]
                  %781 = vst [vmem:[%s709 + $0x8c] sm:$0xff] %v780
                  %v782 = vld [vmem:[%s708 + $0x1b0] sm:$0xff]
                  %783 = vst [vmem:[%s709 + $0x90] sm:$0xff] %v782
                  %v784 = vld [vmem:[%s708 + $0x1bc] sm:$0xff]
                  %785 = vst [vmem:[%s709 + $0x94] sm:$0xff] %v784
                  %v786 = vld [vmem:[%s708 + $0x1c8] sm:$0xff]
                  %787 = vst [vmem:[%s709 + $0x98] sm:$0xff] %v786
                  %v788 = vld [vmem:[%s708 + $0x1d4] sm:$0xff]
                  %789 = vst [vmem:[%s709 + $0x9c] sm:$0xff] %v788
                  %v790 = vld [vmem:[%s708 + $0x1e0] sm:$0xff]
                  %791 = vst [vmem:[%s709 + $0xa0] sm:$0xff] %v790
                  %v792 = vld [vmem:[%s708 + $0x1ec] sm:$0xff]
                  %793 = vst [vmem:[%s709 + $0xa4] sm:$0xff] %v792
                  %v794 = vld [vmem:[%s708 + $0x1f8] sm:$0xff]
                  %795 = vst [vmem:[%s709 + $0xa8] sm:$0xff] %v794
                  %v796 = vld [vmem:[%s708 + $0x204] sm:$0xff]
                  %797 = vst [vmem:[%s709 + $0xac] sm:$0xff] %v796
                  %v798 = vld [vmem:[%s708 + $0x210] sm:$0xff]
                  %799 = vst [vmem:[%s709 + $0xb0] sm:$0xff] %v798
                  %v800 = vld [vmem:[%s708 + $0x21c] sm:$0xff]
                  %801 = vst [vmem:[%s709 + $0xb4] sm:$0xff] %v800
                  %v802 = vld [vmem:[%s708 + $0x228] sm:$0xff]
                  %803 = vst [vmem:[%s709 + $0xb8] sm:$0xff] %v802
                  %v804 = vld [vmem:[%s708 + $0x234] sm:$0xff]
                  %805 = vst [vmem:[%s709 + $0xbc] sm:$0xff] %v804
                  %v806 = vld [vmem:[%s708 + $0x240] sm:$0xff]
                  %807 = vst [vmem:[%s709 + $0xc0] sm:$0xff] %v806
                  %v808 = vld [vmem:[%s708 + $0x24c] sm:$0xff]
                  %809 = vst [vmem:[%s709 + $0xc4] sm:$0xff] %v808
                  %v810 = vld [vmem:[%s708 + $0x258] sm:$0xff]
                  %811 = vst [vmem:[%s709 + $0xc8] sm:$0xff] %v810
                  %v812 = vld [vmem:[%s708 + $0x264] sm:$0xff]
                  %813 = vst [vmem:[%s709 + $0xcc] sm:$0xff] %v812
                  %v814 = vld [vmem:[%s708 + $0x270] sm:$0xff]
                  %815 = vst [vmem:[%s709 + $0xd0] sm:$0xff] %v814
                  %v816 = vld [vmem:[%s708 + $0x27c] sm:$0xff]
                  %817 = vst [vmem:[%s709 + $0xd4] sm:$0xff] %v816
                  %v818 = vld [vmem:[%s708 + $0x288] sm:$0xff]
                  %819 = vst [vmem:[%s709 + $0xd8] sm:$0xff] %v818
                  %v820 = vld [vmem:[%s708 + $0x294] sm:$0xff]
                  %821 = vst [vmem:[%s709 + $0xdc] sm:$0xff] %v820
                  %v822 = vld [vmem:[%s708 + $0x2a0] sm:$0xff]
                  %823 = vst [vmem:[%s709 + $0xe0] sm:$0xff] %v822
                  %v824 = vld [vmem:[%s708 + $0x2ac] sm:$0xff]
                  %825 = vst [vmem:[%s709 + $0xe4] sm:$0xff] %v824
                  %v826 = vld [vmem:[%s708 + $0x2b8] sm:$0xff]
                  %827 = vst [vmem:[%s709 + $0xe8] sm:$0xff] %v826
                  %v828 = vld [vmem:[%s708 + $0x2c4] sm:$0xff]
                  %829 = vst [vmem:[%s709 + $0xec] sm:$0xff] %v828
                  %v830 = vld [vmem:[%s708 + $0x2d0] sm:$0xff]
                  %831 = vst [vmem:[%s709 + $0xf0] sm:$0xff] %v830
                  %v832 = vld [vmem:[%s708 + $0x2dc] sm:$0xff]
                  %833 = vst [vmem:[%s709 + $0xf4] sm:$0xff] %v832
                  %v834 = vld [vmem:[%s708 + $0x2e8] sm:$0xff]
                  %835 = vst [vmem:[%s709 + $0xf8] sm:$0xff] %v834
                  %v836 = vld [vmem:[%s708 + $0x2f4] sm:$0xff]
                  %837 = vst [vmem:[%s709 + $0xfc] sm:$0xff] %v836
                  %v838 = vld [vmem:[%s708 + $0x300] sm:$0xff]
                  %839 = vst [vmem:[%s709 + $0x100] sm:$0xff] %v838
                  %v840 = vld [vmem:[%s708 + $0x30c] sm:$0xff]
                  %841 = vst [vmem:[%s709 + $0x104] sm:$0xff] %v840
                  %v842 = vld [vmem:[%s708 + $0x318] sm:$0xff]
                  %843 = vst [vmem:[%s709 + $0x108] sm:$0xff] %v842
                  %v844 = vld [vmem:[%s708 + $0x324] sm:$0xff]
                  %845 = vst [vmem:[%s709 + $0x10c] sm:$0xff] %v844
                  %v846 = vld [vmem:[%s708 + $0x330] sm:$0xff]
                  %847 = vst [vmem:[%s709 + $0x110] sm:$0xff] %v846
                  %v848 = vld [vmem:[%s708 + $0x33c] sm:$0xff]
                  %849 = vst [vmem:[%s709 + $0x114] sm:$0xff] %v848
                  %v850 = vld [vmem:[%s708 + $0x348] sm:$0xff]
                  %851 = vst [vmem:[%s709 + $0x118] sm:$0xff] %v850
                  %v852 = vld [vmem:[%s708 + $0x354] sm:$0xff]
                  %853 = vst [vmem:[%s709 + $0x11c] sm:$0xff] %v852
                  %v854 = vld [vmem:[%s708 + $0x360] sm:$0xff]
                  %855 = vst [vmem:[%s709 + $0x120] sm:$0xff] %v854
                  %v856 = vld [vmem:[%s708 + $0x36c] sm:$0xff]
                  %857 = vst [vmem:[%s709 + $0x124] sm:$0xff] %v856
                  %v858 = vld [vmem:[%s708 + $0x378] sm:$0xff]
                  %859 = vst [vmem:[%s709 + $0x128] sm:$0xff] %v858
                  %v860 = vld [vmem:[%s708 + $0x384] sm:$0xff]
                  %861 = vst [vmem:[%s709 + $0x12c] sm:$0xff] %v860
                  %v862 = vld [vmem:[%s708 + $0x390] sm:$0xff]
                  %863 = vst [vmem:[%s709 + $0x130] sm:$0xff] %v862
                  %v864 = vld [vmem:[%s708 + $0x39c] sm:$0xff]
                  %865 = vst [vmem:[%s709 + $0x134] sm:$0xff] %v864
                  %v866 = vld [vmem:[%s708 + $0x3a8] sm:$0xff]
                  %867 = vst [vmem:[%s709 + $0x138] sm:$0xff] %v866
                  %v868 = vld [vmem:[%s708 + $0x3b4] sm:$0xff]
                  %869 = vst [vmem:[%s709 + $0x13c] sm:$0xff] %v868
                  %v870 = vld [vmem:[%s708 + $0x3c0] sm:$0xff]
                  %871 = vst [vmem:[%s709 + $0x140] sm:$0xff] %v870
                  %v872 = vld [vmem:[%s708 + $0x3cc] sm:$0xff]
                  %873 = vst [vmem:[%s709 + $0x144] sm:$0xff] %v872
                  %v874 = vld [vmem:[%s708 + $0x3d8] sm:$0xff]
                  %875 = vst [vmem:[%s709 + $0x148] sm:$0xff] %v874
                  %v876 = vld [vmem:[%s708 + $0x3e4] sm:$0xff]
                  %877 = vst [vmem:[%s709 + $0x14c] sm:$0xff] %v876
                  %v878 = vld [vmem:[%s708 + $0x3f0] sm:$0xff]
                  %879 = vst [vmem:[%s709 + $0x150] sm:$0xff] %v878
                  %v880 = vld [vmem:[%s708 + $0x3fc] sm:$0xff]
                  %881 = vst [vmem:[%s709 + $0x154] sm:$0xff] %v880
                  %v882 = vld [vmem:[%s708 + $0x408] sm:$0xff]
                  %883 = vst [vmem:[%s709 + $0x158] sm:$0xff] %v882
                  %v884 = vld [vmem:[%s708 + $0x414] sm:$0xff]
                  %885 = vst [vmem:[%s709 + $0x15c] sm:$0xff] %v884
                  %v886 = vld [vmem:[%s708 + $0x420] sm:$0xff]
                  %887 = vst [vmem:[%s709 + $0x160] sm:$0xff] %v886
                  %v888 = vld [vmem:[%s708 + $0x42c] sm:$0xff]
                  %889 = vst [vmem:[%s709 + $0x164] sm:$0xff] %v888
                  %v890 = vld [vmem:[%s708 + $0x438] sm:$0xff]
                  %891 = vst [vmem:[%s709 + $0x168] sm:$0xff] %v890
                  %v892 = vld [vmem:[%s708 + $0x444] sm:$0xff]
                  %893 = vst [vmem:[%s709 + $0x16c] sm:$0xff] %v892
                  %v894 = vld [vmem:[%s708 + $0x450] sm:$0xff]
                  %895 = vst [vmem:[%s709 + $0x170] sm:$0xff] %v894
                  %v896 = vld [vmem:[%s708 + $0x45c] sm:$0xff]
                  %897 = vst [vmem:[%s709 + $0x174] sm:$0xff] %v896
                  %v898 = vld [vmem:[%s708 + $0x468] sm:$0xff]
                  %899 = vst [vmem:[%s709 + $0x178] sm:$0xff] %v898
                  %v900 = vld [vmem:[%s708 + $0x474] sm:$0xff]
                  %901 = vst [vmem:[%s709 + $0x17c] sm:$0xff] %v900
                  %v902 = vld [vmem:[%s708 + $0x480] sm:$0xff]
                  %903 = vst [vmem:[%s709 + $0x180] sm:$0xff] %v902
                  %v904 = vld [vmem:[%s708 + $0x48c] sm:$0xff]
                  %905 = vst [vmem:[%s709 + $0x184] sm:$0xff] %v904
                  %v906 = vld [vmem:[%s708 + $0x498] sm:$0xff]
                  %907 = vst [vmem:[%s709 + $0x188] sm:$0xff] %v906
                  %v908 = vld [vmem:[%s708 + $0x4a4] sm:$0xff]
                  %909 = vst [vmem:[%s709 + $0x18c] sm:$0xff] %v908
                  %v910 = vld [vmem:[%s708 + $0x4b0] sm:$0xff]
                  %911 = vst [vmem:[%s709 + $0x190] sm:$0xff] %v910
                  %v912 = vld [vmem:[%s708 + $0x4bc] sm:$0xff]
                  %913 = vst [vmem:[%s709 + $0x194] sm:$0xff] %v912
                  %v914 = vld [vmem:[%s708 + $0x4c8] sm:$0xff]
                  %915 = vst [vmem:[%s709 + $0x198] sm:$0xff] %v914
                  %v916 = vld [vmem:[%s708 + $0x4d4] sm:$0xff]
                  %917 = vst [vmem:[%s709 + $0x19c] sm:$0xff] %v916
                  %v918 = vld [vmem:[%s708 + $0x4e0] sm:$0xff]
                  %919 = vst [vmem:[%s709 + $0x1a0] sm:$0xff] %v918
                  %v920 = vld [vmem:[%s708 + $0x4ec] sm:$0xff]
                  %921 = vst [vmem:[%s709 + $0x1a4] sm:$0xff] %v920
                  %v922 = vld [vmem:[%s708 + $0x4f8] sm:$0xff]
                  %923 = vst [vmem:[%s709 + $0x1a8] sm:$0xff] %v922
                  %v924 = vld [vmem:[%s708 + $0x504] sm:$0xff]
                  %925 = vst [vmem:[%s709 + $0x1ac] sm:$0xff] %v924
                  %v926 = vld [vmem:[%s708 + $0x510] sm:$0xff]
                  %927 = vst [vmem:[%s709 + $0x1b0] sm:$0xff] %v926
                  %v928 = vld [vmem:[%s708 + $0x51c] sm:$0xff]
                  %929 = vst [vmem:[%s709 + $0x1b4] sm:$0xff] %v928
                  %v930 = vld [vmem:[%s708 + $0x528] sm:$0xff]
                  %931 = vst [vmem:[%s709 + $0x1b8] sm:$0xff] %v930
                  %v932 = vld [vmem:[%s708 + $0x534] sm:$0xff]
                  %933 = vst [vmem:[%s709 + $0x1bc] sm:$0xff] %v932
                  %v934 = vld [vmem:[%s708 + $0x540] sm:$0xff]
                  %935 = vst [vmem:[%s709 + $0x1c0] sm:$0xff] %v934
                  %v936 = vld [vmem:[%s708 + $0x54c] sm:$0xff]
                  %937 = vst [vmem:[%s709 + $0x1c4] sm:$0xff] %v936
                  %v938 = vld [vmem:[%s708 + $0x558] sm:$0xff]
                  %939 = vst [vmem:[%s709 + $0x1c8] sm:$0xff] %v938
                  %v940 = vld [vmem:[%s708 + $0x564] sm:$0xff]
                  %941 = vst [vmem:[%s709 + $0x1cc] sm:$0xff] %v940
                  %v942 = vld [vmem:[%s708 + $0x570] sm:$0xff]
                  %943 = vst [vmem:[%s709 + $0x1d0] sm:$0xff] %v942
                  %v944 = vld [vmem:[%s708 + $0x57c] sm:$0xff]
                  %945 = vst [vmem:[%s709 + $0x1d4] sm:$0xff] %v944
                  %v946 = vld [vmem:[%s708 + $0x588] sm:$0xff]
                  %947 = vst [vmem:[%s709 + $0x1d8] sm:$0xff] %v946
                  %v948 = vld [vmem:[%s708 + $0x594] sm:$0xff]
                  %949 = vst [vmem:[%s709 + $0x1dc] sm:$0xff] %v948
                  %v950 = vld [vmem:[%s708 + $0x5a0] sm:$0xff]
                  %951 = vst [vmem:[%s709 + $0x1e0] sm:$0xff] %v950
                  %v952 = vld [vmem:[%s708 + $0x5ac] sm:$0xff]
                  %953 = vst [vmem:[%s709 + $0x1e4] sm:$0xff] %v952
                  %v954 = vld [vmem:[%s708 + $0x5b8] sm:$0xff]
                  %955 = vst [vmem:[%s709 + $0x1e8] sm:$0xff] %v954
                  %v956 = vld [vmem:[%s708 + $0x5c4] sm:$0xff]
                  %957 = vst [vmem:[%s709 + $0x1ec] sm:$0xff] %v956
                  %v958 = vld [vmem:[%s708 + $0x5d0] sm:$0xff]
                  %959 = vst [vmem:[%s709 + $0x1f0] sm:$0xff] %v958
                  %v960 = vld [vmem:[%s708 + $0x5dc] sm:$0xff]
                  %961 = vst [vmem:[%s709 + $0x1f4] sm:$0xff] %v960
                  %v962 = vld [vmem:[%s708 + $0x5e8] sm:$0xff]
                  %963 = vst [vmem:[%s709 + $0x1f8] sm:$0xff] %v962
                  %v964 = vld [vmem:[%s708 + $0x5f4] sm:$0xff]
                  %965 = vst [vmem:[%s709 + $0x1fc] sm:$0xff] %v964
                  %v966 = vld [vmem:[%s708 + $0x600] sm:$0xff]
                  %967 = vst [vmem:[%s709 + $0x200] sm:$0xff] %v966
                  %v968 = vld [vmem:[%s708 + $0x60c] sm:$0xff]
                  %969 = vst [vmem:[%s709 + $0x204] sm:$0xff] %v968
                  %v970 = vld [vmem:[%s708 + $0x618] sm:$0xff]
                  %971 = vst [vmem:[%s709 + $0x208] sm:$0xff] %v970
                  %v972 = vld [vmem:[%s708 + $0x624] sm:$0xff]
                  %973 = vst [vmem:[%s709 + $0x20c] sm:$0xff] %v972
                  %v974 = vld [vmem:[%s708 + $0x630] sm:$0xff]
                  %975 = vst [vmem:[%s709 + $0x210] sm:$0xff] %v974
                  %v976 = vld [vmem:[%s708 + $0x63c] sm:$0xff]
                  %977 = vst [vmem:[%s709 + $0x214] sm:$0xff] %v976
                  %v978 = vld [vmem:[%s708 + $0x648] sm:$0xff]
                  %979 = vst [vmem:[%s709 + $0x218] sm:$0xff] %v978
                  %v980 = vld [vmem:[%s708 + $0x654] sm:$0xff]
                  %981 = vst [vmem:[%s709 + $0x21c] sm:$0xff] %v980
                  %v982 = vld [vmem:[%s708 + $0x660] sm:$0xff]
                  %983 = vst [vmem:[%s709 + $0x220] sm:$0xff] %v982
                  %v984 = vld [vmem:[%s708 + $0x66c] sm:$0xff]
                  %985 = vst [vmem:[%s709 + $0x224] sm:$0xff] %v984
                  %v986 = vld [vmem:[%s708 + $0x678] sm:$0xff]
                  %987 = vst [vmem:[%s709 + $0x228] sm:$0xff] %v986
                  %v988 = vld [vmem:[%s708 + $0x684] sm:$0xff]
                  %989 = vst [vmem:[%s709 + $0x22c] sm:$0xff] %v988
                  %v990 = vld [vmem:[%s708 + $0x690] sm:$0xff]
                  %991 = vst [vmem:[%s709 + $0x230] sm:$0xff] %v990
                  %v992 = vld [vmem:[%s708 + $0x69c] sm:$0xff]
                  %993 = vst [vmem:[%s709 + $0x234] sm:$0xff] %v992
                  %v994 = vld [vmem:[%s708 + $0x6a8] sm:$0xff]
                  %995 = vst [vmem:[%s709 + $0x238] sm:$0xff] %v994
                  %v996 = vld [vmem:[%s708 + $0x6b4] sm:$0xff]
                  %997 = vst [vmem:[%s709 + $0x23c] sm:$0xff] %v996
                  %v998 = vld [vmem:[%s708 + $0x6c0] sm:$0xff]
                  %999 = vst [vmem:[%s709 + $0x240] sm:$0xff] %v998
                  %v1000 = vld [vmem:[%s708 + $0x6cc] sm:$0xff]
                  %1001 = vst [vmem:[%s709 + $0x244] sm:$0xff] %v1000
                  %v1002 = vld [vmem:[%s708 + $0x6d8] sm:$0xff]
                  %1003 = vst [vmem:[%s709 + $0x248] sm:$0xff] %v1002
                  %v1004 = vld [vmem:[%s708 + $0x6e4] sm:$0xff]
                  %1005 = vst [vmem:[%s709 + $0x24c] sm:$0xff] %v1004
                  %v1006 = vld [vmem:[%s708 + $0x6f0] sm:$0xff]
                  %1007 = vst [vmem:[%s709 + $0x250] sm:$0xff] %v1006
                  %v1008 = vld [vmem:[%s708 + $0x6fc] sm:$0xff]
                  %1009 = vst [vmem:[%s709 + $0x254] sm:$0xff] %v1008
                  %v1010 = vld [vmem:[%s708 + $0x708] sm:$0xff]
                  %1011 = vst [vmem:[%s709 + $0x258] sm:$0xff] %v1010
                  %v1012 = vld [vmem:[%s708 + $0x714] sm:$0xff]
                  %1013 = vst [vmem:[%s709 + $0x25c] sm:$0xff] %v1012
                  %v1014 = vld [vmem:[%s708 + $0x720] sm:$0xff]
                  %1015 = vst [vmem:[%s709 + $0x260] sm:$0xff] %v1014
                  %v1016 = vld [vmem:[%s708 + $0x72c] sm:$0xff]
                  %1017 = vst [vmem:[%s709 + $0x264] sm:$0xff] %v1016
                  %v1018 = vld [vmem:[%s708 + $0x738] sm:$0xff]
                  %1019 = vst [vmem:[%s709 + $0x268] sm:$0xff] %v1018
                  %v1020 = vld [vmem:[%s708 + $0x744] sm:$0xff]
                  %1021 = vst [vmem:[%s709 + $0x26c] sm:$0xff] %v1020
                  %v1022 = vld [vmem:[%s708 + $0x750] sm:$0xff]
                  %1023 = vst [vmem:[%s709 + $0x270] sm:$0xff] %v1022
                  %v1024 = vld [vmem:[%s708 + $0x75c] sm:$0xff]
                  %1025 = vst [vmem:[%s709 + $0x274] sm:$0xff] %v1024
                  %v1026 = vld [vmem:[%s708 + $0x768] sm:$0xff]
                  %1027 = vst [vmem:[%s709 + $0x278] sm:$0xff] %v1026
                  %v1028 = vld [vmem:[%s708 + $0x774] sm:$0xff]
                  %1029 = vst [vmem:[%s709 + $0x27c] sm:$0xff] %v1028
                  %v1030 = vld [vmem:[%s708 + $0x780] sm:$0xff]
                  %1031 = vst [vmem:[%s709 + $0x280] sm:$0xff] %v1030
                  %v1032 = vld [vmem:[%s708 + $0x78c] sm:$0xff]
                  %1033 = vst [vmem:[%s709 + $0x284] sm:$0xff] %v1032
                  %v1034 = vld [vmem:[%s708 + $0x798] sm:$0xff]
                  %1035 = vst [vmem:[%s709 + $0x288] sm:$0xff] %v1034
                  %v1036 = vld [vmem:[%s708 + $0x7a4] sm:$0xff]
                  %1037 = vst [vmem:[%s709 + $0x28c] sm:$0xff] %v1036
                  %v1038 = vld [vmem:[%s708 + $0x7b0] sm:$0xff]
                  %1039 = vst [vmem:[%s709 + $0x290] sm:$0xff] %v1038
                  %v1040 = vld [vmem:[%s708 + $0x7bc] sm:$0xff]
                  %1041 = vst [vmem:[%s709 + $0x294] sm:$0xff] %v1040
                  %v1042 = vld [vmem:[%s708 + $0x7c8] sm:$0xff]
                  %1043 = vst [vmem:[%s709 + $0x298] sm:$0xff] %v1042
                  %v1044 = vld [vmem:[%s708 + $0x7d4] sm:$0xff]
                  %1045 = vst [vmem:[%s709 + $0x29c] sm:$0xff] %v1044
                  %v1046 = vld [vmem:[%s708 + $0x7e0] sm:$0xff]
                  %1047 = vst [vmem:[%s709 + $0x2a0] sm:$0xff] %v1046
                  %v1048 = vld [vmem:[%s708 + $0x7ec] sm:$0xff]
                  %1049 = vst [vmem:[%s709 + $0x2a4] sm:$0xff] %v1048
                  %v1050 = vld [vmem:[%s708 + $0x7f8] sm:$0xff]
                  %1051 = vst [vmem:[%s709 + $0x2a8] sm:$0xff] %v1050
                  %v1052 = vld [vmem:[%s708 + $0x804] sm:$0xff]
                  %1053 = vst [vmem:[%s709 + $0x2ac] sm:$0xff] %v1052
                  %v1054 = vld [vmem:[%s708 + $0x810] sm:$0xff]
                  %1055 = vst [vmem:[%s709 + $0x2b0] sm:$0xff] %v1054
                  %v1056 = vld [vmem:[%s708 + $0x81c] sm:$0xff]
                  %1057 = vst [vmem:[%s709 + $0x2b4] sm:$0xff] %v1056
                  %v1058 = vld [vmem:[%s708 + $0x828] sm:$0xff]
                  %1059 = vst [vmem:[%s709 + $0x2b8] sm:$0xff] %v1058
                  %v1060 = vld [vmem:[%s708 + $0x834] sm:$0xff]
                  %1061 = vst [vmem:[%s709 + $0x2bc] sm:$0xff] %v1060
                  %v1062 = vld [vmem:[%s708 + $0x840] sm:$0xff]
                  %1063 = vst [vmem:[%s709 + $0x2c0] sm:$0xff] %v1062
                  %v1064 = vld [vmem:[%s708 + $0x84c] sm:$0xff]
                  %1065 = vst [vmem:[%s709 + $0x2c4] sm:$0xff] %v1064
                  %v1066 = vld [vmem:[%s708 + $0x858] sm:$0xff]
                  %1067 = vst [vmem:[%s709 + $0x2c8] sm:$0xff] %v1066
                  %v1068 = vld [vmem:[%s708 + $0x864] sm:$0xff]
                  %1069 = vst [vmem:[%s709 + $0x2cc] sm:$0xff] %v1068
                  %v1070 = vld [vmem:[%s708 + $0x870] sm:$0xff]
                  %1071 = vst [vmem:[%s709 + $0x2d0] sm:$0xff] %v1070
                  %v1072 = vld [vmem:[%s708 + $0x87c] sm:$0xff]
                  %1073 = vst [vmem:[%s709 + $0x2d4] sm:$0xff] %v1072
                  %v1074 = vld [vmem:[%s708 + $0x888] sm:$0xff]
                  %1075 = vst [vmem:[%s709 + $0x2d8] sm:$0xff] %v1074
                  %v1076 = vld [vmem:[%s708 + $0x894] sm:$0xff]
                  %1077 = vst [vmem:[%s709 + $0x2dc] sm:$0xff] %v1076
                  %v1078 = vld [vmem:[%s708 + $0x8a0] sm:$0xff]
                  %1079 = vst [vmem:[%s709 + $0x2e0] sm:$0xff] %v1078
                  %v1080 = vld [vmem:[%s708 + $0x8ac] sm:$0xff]
                  %1081 = vst [vmem:[%s709 + $0x2e4] sm:$0xff] %v1080
                  %v1082 = vld [vmem:[%s708 + $0x8b8] sm:$0xff]
                  %1083 = vst [vmem:[%s709 + $0x2e8] sm:$0xff] %v1082
                  %v1084 = vld [vmem:[%s708 + $0x8c4] sm:$0xff]
                  %1085 = vst [vmem:[%s709 + $0x2ec] sm:$0xff] %v1084
                  %v1086 = vld [vmem:[%s708 + $0x8d0] sm:$0xff]
                  %1087 = vst [vmem:[%s709 + $0x2f0] sm:$0xff] %v1086
                  %v1088 = vld [vmem:[%s708 + $0x8dc] sm:$0xff]
                  %1089 = vst [vmem:[%s709 + $0x2f4] sm:$0xff] %v1088
                  %v1090 = vld [vmem:[%s708 + $0x8e8] sm:$0xff]
                  %1091 = vst [vmem:[%s709 + $0x2f8] sm:$0xff] %v1090
                  %v1092 = vld [vmem:[%s708 + $0x8f4] sm:$0xff]
                  %1093 = vst [vmem:[%s709 + $0x2fc] sm:$0xff] %v1092
                  %v1094 = vld [vmem:[%s708 + $0x900] sm:$0xff]
                  %1095 = vst [vmem:[%s709 + $0x300] sm:$0xff] %v1094
                  %v1096 = vld [vmem:[%s708 + $0x90c] sm:$0xff]
                  %1097 = vst [vmem:[%s709 + $0x304] sm:$0xff] %v1096
                  %v1098 = vld [vmem:[%s708 + $0x918] sm:$0xff]
                  %1099 = vst [vmem:[%s709 + $0x308] sm:$0xff] %v1098
                  %v1100 = vld [vmem:[%s708 + $0x924] sm:$0xff]
                  %1101 = vst [vmem:[%s709 + $0x30c] sm:$0xff] %v1100
                  %v1102 = vld [vmem:[%s708 + $0x930] sm:$0xff]
                  %1103 = vst [vmem:[%s709 + $0x310] sm:$0xff] %v1102
                  %v1104 = vld [vmem:[%s708 + $0x93c] sm:$0xff]
                  %1105 = vst [vmem:[%s709 + $0x314] sm:$0xff] %v1104
                  %v1106 = vld [vmem:[%s708 + $0x948] sm:$0xff]
                  %1107 = vst [vmem:[%s709 + $0x318] sm:$0xff] %v1106
                  %v1108 = vld [vmem:[%s708 + $0x954] sm:$0xff]
                  %1109 = vst [vmem:[%s709 + $0x31c] sm:$0xff] %v1108
                  %v1110 = vld [vmem:[%s708 + $0x960] sm:$0xff]
                  %1111 = vst [vmem:[%s709 + $0x320] sm:$0xff] %v1110
                  %v1112 = vld [vmem:[%s708 + $0x96c] sm:$0xff]
                  %1113 = vst [vmem:[%s709 + $0x324] sm:$0xff] %v1112
                  %v1114 = vld [vmem:[%s708 + $0x978] sm:$0xff]
                  %1115 = vst [vmem:[%s709 + $0x328] sm:$0xff] %v1114
                  %v1116 = vld [vmem:[%s708 + $0x984] sm:$0xff]
                  %1117 = vst [vmem:[%s709 + $0x32c] sm:$0xff] %v1116
                  %v1118 = vld [vmem:[%s708 + $0x990] sm:$0xff]
                  %1119 = vst [vmem:[%s709 + $0x330] sm:$0xff] %v1118
                  %v1120 = vld [vmem:[%s708 + $0x99c] sm:$0xff]
                  %1121 = vst [vmem:[%s709 + $0x334] sm:$0xff] %v1120
                  %v1122 = vld [vmem:[%s708 + $0x9a8] sm:$0xff]
                  %1123 = vst [vmem:[%s709 + $0x338] sm:$0xff] %v1122
                  %v1124 = vld [vmem:[%s708 + $0x9b4] sm:$0xff]
                  %1125 = vst [vmem:[%s709 + $0x33c] sm:$0xff] %v1124
                  %v1126 = vld [vmem:[%s708 + $0x9c0] sm:$0xff]
                  %1127 = vst [vmem:[%s709 + $0x340] sm:$0xff] %v1126
                  %v1128 = vld [vmem:[%s708 + $0x9cc] sm:$0xff]
                  %1129 = vst [vmem:[%s709 + $0x344] sm:$0xff] %v1128
                  %v1130 = vld [vmem:[%s708 + $0x9d8] sm:$0xff]
                  %1131 = vst [vmem:[%s709 + $0x348] sm:$0xff] %v1130
                  %v1132 = vld [vmem:[%s708 + $0x9e4] sm:$0xff]
                  %1133 = vst [vmem:[%s709 + $0x34c] sm:$0xff] %v1132
                  %v1134 = vld [vmem:[%s708 + $0x9f0] sm:$0xff]
                  %1135 = vst [vmem:[%s709 + $0x350] sm:$0xff] %v1134
                  %v1136 = vld [vmem:[%s708 + $0x9fc] sm:$0xff]
                  %1137 = vst [vmem:[%s709 + $0x354] sm:$0xff] %v1136
                  %v1138 = vld [vmem:[%s708 + $0xa08] sm:$0xff]
                  %1139 = vst [vmem:[%s709 + $0x358] sm:$0xff] %v1138
                  %v1140 = vld [vmem:[%s708 + $0xa14] sm:$0xff]
                  %1141 = vst [vmem:[%s709 + $0x35c] sm:$0xff] %v1140
                  %v1142 = vld [vmem:[%s708 + $0xa20] sm:$0xff]
                  %1143 = vst [vmem:[%s709 + $0x360] sm:$0xff] %v1142
                  %v1144 = vld [vmem:[%s708 + $0xa2c] sm:$0xff]
                  %1145 = vst [vmem:[%s709 + $0x364] sm:$0xff] %v1144
                  %v1146 = vld [vmem:[%s708 + $0xa38] sm:$0xff]
                  %1147 = vst [vmem:[%s709 + $0x368] sm:$0xff] %v1146
                  %v1148 = vld [vmem:[%s708 + $0xa44] sm:$0xff]
                  %1149 = vst [vmem:[%s709 + $0x36c] sm:$0xff] %v1148
                  %v1150 = vld [vmem:[%s708 + $0xa50] sm:$0xff]
                  %1151 = vst [vmem:[%s709 + $0x370] sm:$0xff] %v1150
                  %v1152 = vld [vmem:[%s708 + $0xa5c] sm:$0xff]
                  %1153 = vst [vmem:[%s709 + $0x374] sm:$0xff] %v1152
                  %v1154 = vld [vmem:[%s708 + $0xa68] sm:$0xff]
                  %1155 = vst [vmem:[%s709 + $0x378] sm:$0xff] %v1154
                  %v1156 = vld [vmem:[%s708 + $0xa74] sm:$0xff]
                  %1157 = vst [vmem:[%s709 + $0x37c] sm:$0xff] %v1156
                  %v1158 = vld [vmem:[%s708 + $0xa80] sm:$0xff]
                  %1159 = vst [vmem:[%s709 + $0x380] sm:$0xff] %v1158
                  %v1160 = vld [vmem:[%s708 + $0xa8c] sm:$0xff]
                  %1161 = vst [vmem:[%s709 + $0x384] sm:$0xff] %v1160
                  %v1162 = vld [vmem:[%s708 + $0xa98] sm:$0xff]
                  %1163 = vst [vmem:[%s709 + $0x388] sm:$0xff] %v1162
                  %v1164 = vld [vmem:[%s708 + $0xaa4] sm:$0xff]
                  %1165 = vst [vmem:[%s709 + $0x38c] sm:$0xff] %v1164
                  %v1166 = vld [vmem:[%s708 + $0xab0] sm:$0xff]
                  %1167 = vst [vmem:[%s709 + $0x390] sm:$0xff] %v1166
                  %v1168 = vld [vmem:[%s708 + $0xabc] sm:$0xff]
                  %1169 = vst [vmem:[%s709 + $0x394] sm:$0xff] %v1168
                  %v1170 = vld [vmem:[%s708 + $0xac8] sm:$0xff]
                  %1171 = vst [vmem:[%s709 + $0x398] sm:$0xff] %v1170
                  %v1172 = vld [vmem:[%s708 + $0xad4] sm:$0xff]
                  %1173 = vst [vmem:[%s709 + $0x39c] sm:$0xff] %v1172
                  %v1174 = vld [vmem:[%s708 + $0xae0] sm:$0xff]
                  %1175 = vst [vmem:[%s709 + $0x3a0] sm:$0xff] %v1174
                  %v1176 = vld [vmem:[%s708 + $0xaec] sm:$0xff]
                  %1177 = vst [vmem:[%s709 + $0x3a4] sm:$0xff] %v1176
                  %v1178 = vld [vmem:[%s708 + $0xaf8] sm:$0xff]
                  %1179 = vst [vmem:[%s709 + $0x3a8] sm:$0xff] %v1178
                  %v1180 = vld [vmem:[%s708 + $0xb04] sm:$0xff]
                  %1181 = vst [vmem:[%s709 + $0x3ac] sm:$0xff] %v1180
                  %v1182 = vld [vmem:[%s708 + $0xb10] sm:$0xff]
                  %1183 = vst [vmem:[%s709 + $0x3b0] sm:$0xff] %v1182
                  %v1184 = vld [vmem:[%s708 + $0xb1c] sm:$0xff]
                  %1185 = vst [vmem:[%s709 + $0x3b4] sm:$0xff] %v1184
                  %v1186 = vld [vmem:[%s708 + $0xb28] sm:$0xff]
                  %1187 = vst [vmem:[%s709 + $0x3b8] sm:$0xff] %v1186
                  %v1188 = vld [vmem:[%s708 + $0xb34] sm:$0xff]
                  %1189 = vst [vmem:[%s709 + $0x3bc] sm:$0xff] %v1188
                  %v1190 = vld [vmem:[%s708 + $0xb40] sm:$0xff]
                  %1191 = vst [vmem:[%s709 + $0x3c0] sm:$0xff] %v1190
                  %v1192 = vld [vmem:[%s708 + $0xb4c] sm:$0xff]
                  %1193 = vst [vmem:[%s709 + $0x3c4] sm:$0xff] %v1192
                  %v1194 = vld [vmem:[%s708 + $0xb58] sm:$0xff]
                  %1195 = vst [vmem:[%s709 + $0x3c8] sm:$0xff] %v1194
                  %v1196 = vld [vmem:[%s708 + $0xb64] sm:$0xff]
                  %1197 = vst [vmem:[%s709 + $0x3cc] sm:$0xff] %v1196
                  %v1198 = vld [vmem:[%s708 + $0xb70] sm:$0xff]
                  %1199 = vst [vmem:[%s709 + $0x3d0] sm:$0xff] %v1198
                  %v1200 = vld [vmem:[%s708 + $0xb7c] sm:$0xff]
                  %1201 = vst [vmem:[%s709 + $0x3d4] sm:$0xff] %v1200
                  %v1202 = vld [vmem:[%s708 + $0xb88] sm:$0xff]
                  %1203 = vst [vmem:[%s709 + $0x3d8] sm:$0xff] %v1202
                  %v1204 = vld [vmem:[%s708 + $0xb94] sm:$0xff]
                  %1205 = vst [vmem:[%s709 + $0x3dc] sm:$0xff] %v1204
                  %v1206 = vld [vmem:[%s708 + $0xba0] sm:$0xff]
                  %1207 = vst [vmem:[%s709 + $0x3e0] sm:$0xff] %v1206
                  %v1208 = vld [vmem:[%s708 + $0xbac] sm:$0xff]
                  %1209 = vst [vmem:[%s709 + $0x3e4] sm:$0xff] %v1208
                  %v1210 = vld [vmem:[%s708 + $0xbb8] sm:$0xff]
                  %1211 = vst [vmem:[%s709 + $0x3e8] sm:$0xff] %v1210
                  %v1212 = vld [vmem:[%s708 + $0xbc4] sm:$0xff]
                  %1213 = vst [vmem:[%s709 + $0x3ec] sm:$0xff] %v1212
                  %v1214 = vld [vmem:[%s708 + $0xbd0] sm:$0xff]
                  %1215 = vst [vmem:[%s709 + $0x3f0] sm:$0xff] %v1214
                  %v1216 = vld [vmem:[%s708 + $0xbdc] sm:$0xff]
                  %1217 = vst [vmem:[%s709 + $0x3f4] sm:$0xff] %v1216
                  %v1218 = vld [vmem:[%s708 + $0xbe8] sm:$0xff]
                  %1219 = vst [vmem:[%s709 + $0x3f8] sm:$0xff] %v1218
                  %v1220 = vld [vmem:[%s708 + $0xbf4] sm:$0xff]
                  %1221 = vst [vmem:[%s709 + $0x3fc] sm:$0xff] %v1220
                  %v1222 = vld [vmem:[%s708 + $0xc00] sm:$0xff]
                  %1223 = vst [vmem:[%s709 + $0x400] sm:$0xff] %v1222
                  %v1224 = vld [vmem:[%s708 + $0xc0c] sm:$0xff]
                  %1225 = vst [vmem:[%s709 + $0x404] sm:$0xff] %v1224
                  %v1226 = vld [vmem:[%s708 + $0xc18] sm:$0xff]
                  %1227 = vst [vmem:[%s709 + $0x408] sm:$0xff] %v1226
                  %v1228 = vld [vmem:[%s708 + $0xc24] sm:$0xff]
                  %1229 = vst [vmem:[%s709 + $0x40c] sm:$0xff] %v1228
                  %v1230 = vld [vmem:[%s708 + $0xc30] sm:$0xff]
                  %1231 = vst [vmem:[%s709 + $0x410] sm:$0xff] %v1230
                  %v1232 = vld [vmem:[%s708 + $0xc3c] sm:$0xff]
                  %1233 = vst [vmem:[%s709 + $0x414] sm:$0xff] %v1232
                  %v1234 = vld [vmem:[%s708 + $0xc48] sm:$0xff]
                  %1235 = vst [vmem:[%s709 + $0x418] sm:$0xff] %v1234
                  %v1236 = vld [vmem:[%s708 + $0xc54] sm:$0xff]
                  %1237 = vst [vmem:[%s709 + $0x41c] sm:$0xff] %v1236
                  %v1238 = vld [vmem:[%s708 + $0xc60] sm:$0xff]
                  %1239 = vst [vmem:[%s709 + $0x420] sm:$0xff] %v1238
                  %v1240 = vld [vmem:[%s708 + $0xc6c] sm:$0xff]
                  %1241 = vst [vmem:[%s709 + $0x424] sm:$0xff] %v1240
                  %v1242 = vld [vmem:[%s708 + $0xc78] sm:$0xff]
                  %1243 = vst [vmem:[%s709 + $0x428] sm:$0xff] %v1242
                  %v1244 = vld [vmem:[%s708 + $0xc84] sm:$0xff]
                  %1245 = vst [vmem:[%s709 + $0x42c] sm:$0xff] %v1244
                  %v1246 = vld [vmem:[%s708 + $0xc90] sm:$0xff]
                  %1247 = vst [vmem:[%s709 + $0x430] sm:$0xff] %v1246
                  %v1248 = vld [vmem:[%s708 + $0xc9c] sm:$0xff]
                  %1249 = vst [vmem:[%s709 + $0x434] sm:$0xff] %v1248
                  %v1250 = vld [vmem:[%s708 + $0xca8] sm:$0xff]
                  %1251 = vst [vmem:[%s709 + $0x438] sm:$0xff] %v1250
                  %v1252 = vld [vmem:[%s708 + $0xcb4] sm:$0xff]
                  %1253 = vst [vmem:[%s709 + $0x43c] sm:$0xff] %v1252
                  %s1254 = sadd.s32 1, %s707
                  %p1255 = scmp.ge.s32.totalorder %s1254, 0
                  %s1256 = scalar_select %p1255, 0, %s1254
                  %s1257 = smul.u32 %s1256, 8
                  %s1258 = smul.u32 %s1256, 8
                  %s1259 = scalar_lea.vmem %s138, %s1257
                  %s1260 = scalar_lea.vmem %s136, %s1258 [#allocation2]
                $region52: #{block8.10} parent=46 // loop_footer
                  %s706 = sadd.s32 1, %s702
                $region53: #{block8.10} parent=46 // loop_footer_branch
                  %701 = sbr.rel target = $region49
                $region54: #{block8.10} parent=46 // loop_exit
                  _
              $region47: #{block8.10} parent=31 // pred_fallthru
                _
              // Predicated region
              $region55: #{block8.10} parent=31 // pred_check
                _
              $region56: #{block8.10} parent=31 // pred_check_branch
                %1262 = sbr.rel (0) target = $region58
              $region57: #{block8.10} parent=31 // pred_region
                loop: start=0, step=1, limit=0
                $region59: #{block8.10} parent=57 // loop_pre_header
                  _
                $region60: #{block8.10} parent=57 // loop_header
                  %s1264 = sphi 0, %s1268
                  %p1265 = scmp.ge.s32.totalorder %s1264, 0
                  %s1269 = sphi 0, %s1818
                  %s1270 = sphi %s138, %s1821
                  %s1271 = sphi %s136, %s1822
                $region61: #{block8.10} parent=57 // loop_header_branch
                  %1267 = sbr.rel (%p1265) target = $region65
                $region62: #{block8.10} parent=57 // loop_body
                  %v1272 = vld [vmem:[%s1270] sm:$0xff]
                  %1273 = vst [vmem:[%s1271] sm:$0xff] %v1272
                  %v1274 = vld [vmem:[%s1270 + $0xc] sm:$0xff]
                  %1275 = vst [vmem:[%s1271 + $0x4] sm:$0xff] %v1274
                  %v1276 = vld [vmem:[%s1270 + $0x18] sm:$0xff]
                  %1277 = vst [vmem:[%s1271 + $0x8] sm:$0xff] %v1276
                  %v1278 = vld [vmem:[%s1270 + $0x24] sm:$0xff]
                  %1279 = vst [vmem:[%s1271 + $0xc] sm:$0xff] %v1278
                  %v1280 = vld [vmem:[%s1270 + $0x30] sm:$0xff]
                  %1281 = vst [vmem:[%s1271 + $0x10] sm:$0xff] %v1280
                  %v1282 = vld [vmem:[%s1270 + $0x3c] sm:$0xff]
                  %1283 = vst [vmem:[%s1271 + $0x14] sm:$0xff] %v1282
                  %v1284 = vld [vmem:[%s1270 + $0x48] sm:$0xff]
                  %1285 = vst [vmem:[%s1271 + $0x18] sm:$0xff] %v1284
                  %v1286 = vld [vmem:[%s1270 + $0x54] sm:$0xff]
                  %1287 = vst [vmem:[%s1271 + $0x1c] sm:$0xff] %v1286
                  %v1288 = vld [vmem:[%s1270 + $0x60] sm:$0xff]
                  %1289 = vst [vmem:[%s1271 + $0x20] sm:$0xff] %v1288
                  %v1290 = vld [vmem:[%s1270 + $0x6c] sm:$0xff]
                  %1291 = vst [vmem:[%s1271 + $0x24] sm:$0xff] %v1290
                  %v1292 = vld [vmem:[%s1270 + $0x78] sm:$0xff]
                  %1293 = vst [vmem:[%s1271 + $0x28] sm:$0xff] %v1292
                  %v1294 = vld [vmem:[%s1270 + $0x84] sm:$0xff]
                  %1295 = vst [vmem:[%s1271 + $0x2c] sm:$0xff] %v1294
                  %v1296 = vld [vmem:[%s1270 + $0x90] sm:$0xff]
                  %1297 = vst [vmem:[%s1271 + $0x30] sm:$0xff] %v1296
                  %v1298 = vld [vmem:[%s1270 + $0x9c] sm:$0xff]
                  %1299 = vst [vmem:[%s1271 + $0x34] sm:$0xff] %v1298
                  %v1300 = vld [vmem:[%s1270 + $0xa8] sm:$0xff]
                  %1301 = vst [vmem:[%s1271 + $0x38] sm:$0xff] %v1300
                  %v1302 = vld [vmem:[%s1270 + $0xb4] sm:$0xff]
                  %1303 = vst [vmem:[%s1271 + $0x3c] sm:$0xff] %v1302
                  %v1304 = vld [vmem:[%s1270 + $0xc0] sm:$0xff]
                  %1305 = vst [vmem:[%s1271 + $0x40] sm:$0xff] %v1304
                  %v1306 = vld [vmem:[%s1270 + $0xcc] sm:$0xff]
                  %1307 = vst [vmem:[%s1271 + $0x44] sm:$0xff] %v1306
                  %v1308 = vld [vmem:[%s1270 + $0xd8] sm:$0xff]
                  %1309 = vst [vmem:[%s1271 + $0x48] sm:$0xff] %v1308
                  %v1310 = vld [vmem:[%s1270 + $0xe4] sm:$0xff]
                  %1311 = vst [vmem:[%s1271 + $0x4c] sm:$0xff] %v1310
                  %v1312 = vld [vmem:[%s1270 + $0xf0] sm:$0xff]
                  %1313 = vst [vmem:[%s1271 + $0x50] sm:$0xff] %v1312
                  %v1314 = vld [vmem:[%s1270 + $0xfc] sm:$0xff]
                  %1315 = vst [vmem:[%s1271 + $0x54] sm:$0xff] %v1314
                  %v1316 = vld [vmem:[%s1270 + $0x108] sm:$0xff]
                  %1317 = vst [vmem:[%s1271 + $0x58] sm:$0xff] %v1316
                  %v1318 = vld [vmem:[%s1270 + $0x114] sm:$0xff]
                  %1319 = vst [vmem:[%s1271 + $0x5c] sm:$0xff] %v1318
                  %v1320 = vld [vmem:[%s1270 + $0x120] sm:$0xff]
                  %1321 = vst [vmem:[%s1271 + $0x60] sm:$0xff] %v1320
                  %v1322 = vld [vmem:[%s1270 + $0x12c] sm:$0xff]
                  %1323 = vst [vmem:[%s1271 + $0x64] sm:$0xff] %v1322
                  %v1324 = vld [vmem:[%s1270 + $0x138] sm:$0xff]
                  %1325 = vst [vmem:[%s1271 + $0x68] sm:$0xff] %v1324
                  %v1326 = vld [vmem:[%s1270 + $0x144] sm:$0xff]
                  %1327 = vst [vmem:[%s1271 + $0x6c] sm:$0xff] %v1326
                  %v1328 = vld [vmem:[%s1270 + $0x150] sm:$0xff]
                  %1329 = vst [vmem:[%s1271 + $0x70] sm:$0xff] %v1328
                  %v1330 = vld [vmem:[%s1270 + $0x15c] sm:$0xff]
                  %1331 = vst [vmem:[%s1271 + $0x74] sm:$0xff] %v1330
                  %v1332 = vld [vmem:[%s1270 + $0x168] sm:$0xff]
                  %1333 = vst [vmem:[%s1271 + $0x78] sm:$0xff] %v1332
                  %v1334 = vld [vmem:[%s1270 + $0x174] sm:$0xff]
                  %1335 = vst [vmem:[%s1271 + $0x7c] sm:$0xff] %v1334
                  %v1336 = vld [vmem:[%s1270 + $0x180] sm:$0xff]
                  %1337 = vst [vmem:[%s1271 + $0x80] sm:$0xff] %v1336
                  %v1338 = vld [vmem:[%s1270 + $0x18c] sm:$0xff]
                  %1339 = vst [vmem:[%s1271 + $0x84] sm:$0xff] %v1338
                  %v1340 = vld [vmem:[%s1270 + $0x198] sm:$0xff]
                  %1341 = vst [vmem:[%s1271 + $0x88] sm:$0xff] %v1340
                  %v1342 = vld [vmem:[%s1270 + $0x1a4] sm:$0xff]
                  %1343 = vst [vmem:[%s1271 + $0x8c] sm:$0xff] %v1342
                  %v1344 = vld [vmem:[%s1270 + $0x1b0] sm:$0xff]
                  %1345 = vst [vmem:[%s1271 + $0x90] sm:$0xff] %v1344
                  %v1346 = vld [vmem:[%s1270 + $0x1bc] sm:$0xff]
                  %1347 = vst [vmem:[%s1271 + $0x94] sm:$0xff] %v1346
                  %v1348 = vld [vmem:[%s1270 + $0x1c8] sm:$0xff]
                  %1349 = vst [vmem:[%s1271 + $0x98] sm:$0xff] %v1348
                  %v1350 = vld [vmem:[%s1270 + $0x1d4] sm:$0xff]
                  %1351 = vst [vmem:[%s1271 + $0x9c] sm:$0xff] %v1350
                  %v1352 = vld [vmem:[%s1270 + $0x1e0] sm:$0xff]
                  %1353 = vst [vmem:[%s1271 + $0xa0] sm:$0xff] %v1352
                  %v1354 = vld [vmem:[%s1270 + $0x1ec] sm:$0xff]
                  %1355 = vst [vmem:[%s1271 + $0xa4] sm:$0xff] %v1354
                  %v1356 = vld [vmem:[%s1270 + $0x1f8] sm:$0xff]
                  %1357 = vst [vmem:[%s1271 + $0xa8] sm:$0xff] %v1356
                  %v1358 = vld [vmem:[%s1270 + $0x204] sm:$0xff]
                  %1359 = vst [vmem:[%s1271 + $0xac] sm:$0xff] %v1358
                  %v1360 = vld [vmem:[%s1270 + $0x210] sm:$0xff]
                  %1361 = vst [vmem:[%s1271 + $0xb0] sm:$0xff] %v1360
                  %v1362 = vld [vmem:[%s1270 + $0x21c] sm:$0xff]
                  %1363 = vst [vmem:[%s1271 + $0xb4] sm:$0xff] %v1362
                  %v1364 = vld [vmem:[%s1270 + $0x228] sm:$0xff]
                  %1365 = vst [vmem:[%s1271 + $0xb8] sm:$0xff] %v1364
                  %v1366 = vld [vmem:[%s1270 + $0x234] sm:$0xff]
                  %1367 = vst [vmem:[%s1271 + $0xbc] sm:$0xff] %v1366
                  %v1368 = vld [vmem:[%s1270 + $0x240] sm:$0xff]
                  %1369 = vst [vmem:[%s1271 + $0xc0] sm:$0xff] %v1368
                  %v1370 = vld [vmem:[%s1270 + $0x24c] sm:$0xff]
                  %1371 = vst [vmem:[%s1271 + $0xc4] sm:$0xff] %v1370
                  %v1372 = vld [vmem:[%s1270 + $0x258] sm:$0xff]
                  %1373 = vst [vmem:[%s1271 + $0xc8] sm:$0xff] %v1372
                  %v1374 = vld [vmem:[%s1270 + $0x264] sm:$0xff]
                  %1375 = vst [vmem:[%s1271 + $0xcc] sm:$0xff] %v1374
                  %v1376 = vld [vmem:[%s1270 + $0x270] sm:$0xff]
                  %1377 = vst [vmem:[%s1271 + $0xd0] sm:$0xff] %v1376
                  %v1378 = vld [vmem:[%s1270 + $0x27c] sm:$0xff]
                  %1379 = vst [vmem:[%s1271 + $0xd4] sm:$0xff] %v1378
                  %v1380 = vld [vmem:[%s1270 + $0x288] sm:$0xff]
                  %1381 = vst [vmem:[%s1271 + $0xd8] sm:$0xff] %v1380
                  %v1382 = vld [vmem:[%s1270 + $0x294] sm:$0xff]
                  %1383 = vst [vmem:[%s1271 + $0xdc] sm:$0xff] %v1382
                  %v1384 = vld [vmem:[%s1270 + $0x2a0] sm:$0xff]
                  %1385 = vst [vmem:[%s1271 + $0xe0] sm:$0xff] %v1384
                  %v1386 = vld [vmem:[%s1270 + $0x2ac] sm:$0xff]
                  %1387 = vst [vmem:[%s1271 + $0xe4] sm:$0xff] %v1386
                  %v1388 = vld [vmem:[%s1270 + $0x2b8] sm:$0xff]
                  %1389 = vst [vmem:[%s1271 + $0xe8] sm:$0xff] %v1388
                  %v1390 = vld [vmem:[%s1270 + $0x2c4] sm:$0xff]
                  %1391 = vst [vmem:[%s1271 + $0xec] sm:$0xff] %v1390
                  %v1392 = vld [vmem:[%s1270 + $0x2d0] sm:$0xff]
                  %1393 = vst [vmem:[%s1271 + $0xf0] sm:$0xff] %v1392
                  %v1394 = vld [vmem:[%s1270 + $0x2dc] sm:$0xff]
                  %1395 = vst [vmem:[%s1271 + $0xf4] sm:$0xff] %v1394
                  %v1396 = vld [vmem:[%s1270 + $0x2e8] sm:$0xff]
                  %1397 = vst [vmem:[%s1271 + $0xf8] sm:$0xff] %v1396
                  %v1398 = vld [vmem:[%s1270 + $0x2f4] sm:$0xff]
                  %1399 = vst [vmem:[%s1271 + $0xfc] sm:$0xff] %v1398
                  %v1400 = vld [vmem:[%s1270 + $0x300] sm:$0xff]
                  %1401 = vst [vmem:[%s1271 + $0x100] sm:$0xff] %v1400
                  %v1402 = vld [vmem:[%s1270 + $0x30c] sm:$0xff]
                  %1403 = vst [vmem:[%s1271 + $0x104] sm:$0xff] %v1402
                  %v1404 = vld [vmem:[%s1270 + $0x318] sm:$0xff]
                  %1405 = vst [vmem:[%s1271 + $0x108] sm:$0xff] %v1404
                  %v1406 = vld [vmem:[%s1270 + $0x324] sm:$0xff]
                  %1407 = vst [vmem:[%s1271 + $0x10c] sm:$0xff] %v1406
                  %v1408 = vld [vmem:[%s1270 + $0x330] sm:$0xff]
                  %1409 = vst [vmem:[%s1271 + $0x110] sm:$0xff] %v1408
                  %v1410 = vld [vmem:[%s1270 + $0x33c] sm:$0xff]
                  %1411 = vst [vmem:[%s1271 + $0x114] sm:$0xff] %v1410
                  %v1412 = vld [vmem:[%s1270 + $0x348] sm:$0xff]
                  %1413 = vst [vmem:[%s1271 + $0x118] sm:$0xff] %v1412
                  %v1414 = vld [vmem:[%s1270 + $0x354] sm:$0xff]
                  %1415 = vst [vmem:[%s1271 + $0x11c] sm:$0xff] %v1414
                  %v1416 = vld [vmem:[%s1270 + $0x360] sm:$0xff]
                  %1417 = vst [vmem:[%s1271 + $0x120] sm:$0xff] %v1416
                  %v1418 = vld [vmem:[%s1270 + $0x36c] sm:$0xff]
                  %1419 = vst [vmem:[%s1271 + $0x124] sm:$0xff] %v1418
                  %v1420 = vld [vmem:[%s1270 + $0x378] sm:$0xff]
                  %1421 = vst [vmem:[%s1271 + $0x128] sm:$0xff] %v1420
                  %v1422 = vld [vmem:[%s1270 + $0x384] sm:$0xff]
                  %1423 = vst [vmem:[%s1271 + $0x12c] sm:$0xff] %v1422
                  %v1424 = vld [vmem:[%s1270 + $0x390] sm:$0xff]
                  %1425 = vst [vmem:[%s1271 + $0x130] sm:$0xff] %v1424
                  %v1426 = vld [vmem:[%s1270 + $0x39c] sm:$0xff]
                  %1427 = vst [vmem:[%s1271 + $0x134] sm:$0xff] %v1426
                  %v1428 = vld [vmem:[%s1270 + $0x3a8] sm:$0xff]
                  %1429 = vst [vmem:[%s1271 + $0x138] sm:$0xff] %v1428
                  %v1430 = vld [vmem:[%s1270 + $0x3b4] sm:$0xff]
                  %1431 = vst [vmem:[%s1271 + $0x13c] sm:$0xff] %v1430
                  %v1432 = vld [vmem:[%s1270 + $0x3c0] sm:$0xff]
                  %1433 = vst [vmem:[%s1271 + $0x140] sm:$0xff] %v1432
                  %v1434 = vld [vmem:[%s1270 + $0x3cc] sm:$0xff]
                  %1435 = vst [vmem:[%s1271 + $0x144] sm:$0xff] %v1434
                  %v1436 = vld [vmem:[%s1270 + $0x3d8] sm:$0xff]
                  %1437 = vst [vmem:[%s1271 + $0x148] sm:$0xff] %v1436
                  %v1438 = vld [vmem:[%s1270 + $0x3e4] sm:$0xff]
                  %1439 = vst [vmem:[%s1271 + $0x14c] sm:$0xff] %v1438
                  %v1440 = vld [vmem:[%s1270 + $0x3f0] sm:$0xff]
                  %1441 = vst [vmem:[%s1271 + $0x150] sm:$0xff] %v1440
                  %v1442 = vld [vmem:[%s1270 + $0x3fc] sm:$0xff]
                  %1443 = vst [vmem:[%s1271 + $0x154] sm:$0xff] %v1442
                  %v1444 = vld [vmem:[%s1270 + $0x408] sm:$0xff]
                  %1445 = vst [vmem:[%s1271 + $0x158] sm:$0xff] %v1444
                  %v1446 = vld [vmem:[%s1270 + $0x414] sm:$0xff]
                  %1447 = vst [vmem:[%s1271 + $0x15c] sm:$0xff] %v1446
                  %v1448 = vld [vmem:[%s1270 + $0x420] sm:$0xff]
                  %1449 = vst [vmem:[%s1271 + $0x160] sm:$0xff] %v1448
                  %v1450 = vld [vmem:[%s1270 + $0x42c] sm:$0xff]
                  %1451 = vst [vmem:[%s1271 + $0x164] sm:$0xff] %v1450
                  %v1452 = vld [vmem:[%s1270 + $0x438] sm:$0xff]
                  %1453 = vst [vmem:[%s1271 + $0x168] sm:$0xff] %v1452
                  %v1454 = vld [vmem:[%s1270 + $0x444] sm:$0xff]
                  %1455 = vst [vmem:[%s1271 + $0x16c] sm:$0xff] %v1454
                  %v1456 = vld [vmem:[%s1270 + $0x450] sm:$0xff]
                  %1457 = vst [vmem:[%s1271 + $0x170] sm:$0xff] %v1456
                  %v1458 = vld [vmem:[%s1270 + $0x45c] sm:$0xff]
                  %1459 = vst [vmem:[%s1271 + $0x174] sm:$0xff] %v1458
                  %v1460 = vld [vmem:[%s1270 + $0x468] sm:$0xff]
                  %1461 = vst [vmem:[%s1271 + $0x178] sm:$0xff] %v1460
                  %v1462 = vld [vmem:[%s1270 + $0x474] sm:$0xff]
                  %1463 = vst [vmem:[%s1271 + $0x17c] sm:$0xff] %v1462
                  %v1464 = vld [vmem:[%s1270 + $0x480] sm:$0xff]
                  %1465 = vst [vmem:[%s1271 + $0x180] sm:$0xff] %v1464
                  %v1466 = vld [vmem:[%s1270 + $0x48c] sm:$0xff]
                  %1467 = vst [vmem:[%s1271 + $0x184] sm:$0xff] %v1466
                  %v1468 = vld [vmem:[%s1270 + $0x498] sm:$0xff]
                  %1469 = vst [vmem:[%s1271 + $0x188] sm:$0xff] %v1468
                  %v1470 = vld [vmem:[%s1270 + $0x4a4] sm:$0xff]
                  %1471 = vst [vmem:[%s1271 + $0x18c] sm:$0xff] %v1470
                  %v1472 = vld [vmem:[%s1270 + $0x4b0] sm:$0xff]
                  %1473 = vst [vmem:[%s1271 + $0x190] sm:$0xff] %v1472
                  %v1474 = vld [vmem:[%s1270 + $0x4bc] sm:$0xff]
                  %1475 = vst [vmem:[%s1271 + $0x194] sm:$0xff] %v1474
                  %v1476 = vld [vmem:[%s1270 + $0x4c8] sm:$0xff]
                  %1477 = vst [vmem:[%s1271 + $0x198] sm:$0xff] %v1476
                  %v1478 = vld [vmem:[%s1270 + $0x4d4] sm:$0xff]
                  %1479 = vst [vmem:[%s1271 + $0x19c] sm:$0xff] %v1478
                  %v1480 = vld [vmem:[%s1270 + $0x4e0] sm:$0xff]
                  %1481 = vst [vmem:[%s1271 + $0x1a0] sm:$0xff] %v1480
                  %v1482 = vld [vmem:[%s1270 + $0x4ec] sm:$0xff]
                  %1483 = vst [vmem:[%s1271 + $0x1a4] sm:$0xff] %v1482
                  %v1484 = vld [vmem:[%s1270 + $0x4f8] sm:$0xff]
                  %1485 = vst [vmem:[%s1271 + $0x1a8] sm:$0xff] %v1484
                  %v1486 = vld [vmem:[%s1270 + $0x504] sm:$0xff]
                  %1487 = vst [vmem:[%s1271 + $0x1ac] sm:$0xff] %v1486
                  %v1488 = vld [vmem:[%s1270 + $0x510] sm:$0xff]
                  %1489 = vst [vmem:[%s1271 + $0x1b0] sm:$0xff] %v1488
                  %v1490 = vld [vmem:[%s1270 + $0x51c] sm:$0xff]
                  %1491 = vst [vmem:[%s1271 + $0x1b4] sm:$0xff] %v1490
                  %v1492 = vld [vmem:[%s1270 + $0x528] sm:$0xff]
                  %1493 = vst [vmem:[%s1271 + $0x1b8] sm:$0xff] %v1492
                  %v1494 = vld [vmem:[%s1270 + $0x534] sm:$0xff]
                  %1495 = vst [vmem:[%s1271 + $0x1bc] sm:$0xff] %v1494
                  %v1496 = vld [vmem:[%s1270 + $0x540] sm:$0xff]
                  %1497 = vst [vmem:[%s1271 + $0x1c0] sm:$0xff] %v1496
                  %v1498 = vld [vmem:[%s1270 + $0x54c] sm:$0xff]
                  %1499 = vst [vmem:[%s1271 + $0x1c4] sm:$0xff] %v1498
                  %v1500 = vld [vmem:[%s1270 + $0x558] sm:$0xff]
                  %1501 = vst [vmem:[%s1271 + $0x1c8] sm:$0xff] %v1500
                  %v1502 = vld [vmem:[%s1270 + $0x564] sm:$0xff]
                  %1503 = vst [vmem:[%s1271 + $0x1cc] sm:$0xff] %v1502
                  %v1504 = vld [vmem:[%s1270 + $0x570] sm:$0xff]
                  %1505 = vst [vmem:[%s1271 + $0x1d0] sm:$0xff] %v1504
                  %v1506 = vld [vmem:[%s1270 + $0x57c] sm:$0xff]
                  %1507 = vst [vmem:[%s1271 + $0x1d4] sm:$0xff] %v1506
                  %v1508 = vld [vmem:[%s1270 + $0x588] sm:$0xff]
                  %1509 = vst [vmem:[%s1271 + $0x1d8] sm:$0xff] %v1508
                  %v1510 = vld [vmem:[%s1270 + $0x594] sm:$0xff]
                  %1511 = vst [vmem:[%s1271 + $0x1dc] sm:$0xff] %v1510
                  %v1512 = vld [vmem:[%s1270 + $0x5a0] sm:$0xff]
                  %1513 = vst [vmem:[%s1271 + $0x1e0] sm:$0xff] %v1512
                  %v1514 = vld [vmem:[%s1270 + $0x5ac] sm:$0xff]
                  %1515 = vst [vmem:[%s1271 + $0x1e4] sm:$0xff] %v1514
                  %v1516 = vld [vmem:[%s1270 + $0x5b8] sm:$0xff]
                  %1517 = vst [vmem:[%s1271 + $0x1e8] sm:$0xff] %v1516
                  %v1518 = vld [vmem:[%s1270 + $0x5c4] sm:$0xff]
                  %1519 = vst [vmem:[%s1271 + $0x1ec] sm:$0xff] %v1518
                  %v1520 = vld [vmem:[%s1270 + $0x5d0] sm:$0xff]
                  %1521 = vst [vmem:[%s1271 + $0x1f0] sm:$0xff] %v1520
                  %v1522 = vld [vmem:[%s1270 + $0x5dc] sm:$0xff]
                  %1523 = vst [vmem:[%s1271 + $0x1f4] sm:$0xff] %v1522
                  %v1524 = vld [vmem:[%s1270 + $0x5e8] sm:$0xff]
                  %1525 = vst [vmem:[%s1271 + $0x1f8] sm:$0xff] %v1524
                  %v1526 = vld [vmem:[%s1270 + $0x5f4] sm:$0xff]
                  %1527 = vst [vmem:[%s1271 + $0x1fc] sm:$0xff] %v1526
                  %v1528 = vld [vmem:[%s1270 + $0x600] sm:$0xff]
                  %1529 = vst [vmem:[%s1271 + $0x200] sm:$0xff] %v1528
                  %v1530 = vld [vmem:[%s1270 + $0x60c] sm:$0xff]
                  %1531 = vst [vmem:[%s1271 + $0x204] sm:$0xff] %v1530
                  %v1532 = vld [vmem:[%s1270 + $0x618] sm:$0xff]
                  %1533 = vst [vmem:[%s1271 + $0x208] sm:$0xff] %v1532
                  %v1534 = vld [vmem:[%s1270 + $0x624] sm:$0xff]
                  %1535 = vst [vmem:[%s1271 + $0x20c] sm:$0xff] %v1534
                  %v1536 = vld [vmem:[%s1270 + $0x630] sm:$0xff]
                  %1537 = vst [vmem:[%s1271 + $0x210] sm:$0xff] %v1536
                  %v1538 = vld [vmem:[%s1270 + $0x63c] sm:$0xff]
                  %1539 = vst [vmem:[%s1271 + $0x214] sm:$0xff] %v1538
                  %v1540 = vld [vmem:[%s1270 + $0x648] sm:$0xff]
                  %1541 = vst [vmem:[%s1271 + $0x218] sm:$0xff] %v1540
                  %v1542 = vld [vmem:[%s1270 + $0x654] sm:$0xff]
                  %1543 = vst [vmem:[%s1271 + $0x21c] sm:$0xff] %v1542
                  %v1544 = vld [vmem:[%s1270 + $0x660] sm:$0xff]
                  %1545 = vst [vmem:[%s1271 + $0x220] sm:$0xff] %v1544
                  %v1546 = vld [vmem:[%s1270 + $0x66c] sm:$0xff]
                  %1547 = vst [vmem:[%s1271 + $0x224] sm:$0xff] %v1546
                  %v1548 = vld [vmem:[%s1270 + $0x678] sm:$0xff]
                  %1549 = vst [vmem:[%s1271 + $0x228] sm:$0xff] %v1548
                  %v1550 = vld [vmem:[%s1270 + $0x684] sm:$0xff]
                  %1551 = vst [vmem:[%s1271 + $0x22c] sm:$0xff] %v1550
                  %v1552 = vld [vmem:[%s1270 + $0x690] sm:$0xff]
                  %1553 = vst [vmem:[%s1271 + $0x230] sm:$0xff] %v1552
                  %v1554 = vld [vmem:[%s1270 + $0x69c] sm:$0xff]
                  %1555 = vst [vmem:[%s1271 + $0x234] sm:$0xff] %v1554
                  %v1556 = vld [vmem:[%s1270 + $0x6a8] sm:$0xff]
                  %1557 = vst [vmem:[%s1271 + $0x238] sm:$0xff] %v1556
                  %v1558 = vld [vmem:[%s1270 + $0x6b4] sm:$0xff]
                  %1559 = vst [vmem:[%s1271 + $0x23c] sm:$0xff] %v1558
                  %v1560 = vld [vmem:[%s1270 + $0x6c0] sm:$0xff]
                  %1561 = vst [vmem:[%s1271 + $0x240] sm:$0xff] %v1560
                  %v1562 = vld [vmem:[%s1270 + $0x6cc] sm:$0xff]
                  %1563 = vst [vmem:[%s1271 + $0x244] sm:$0xff] %v1562
                  %v1564 = vld [vmem:[%s1270 + $0x6d8] sm:$0xff]
                  %1565 = vst [vmem:[%s1271 + $0x248] sm:$0xff] %v1564
                  %v1566 = vld [vmem:[%s1270 + $0x6e4] sm:$0xff]
                  %1567 = vst [vmem:[%s1271 + $0x24c] sm:$0xff] %v1566
                  %v1568 = vld [vmem:[%s1270 + $0x6f0] sm:$0xff]
                  %1569 = vst [vmem:[%s1271 + $0x250] sm:$0xff] %v1568
                  %v1570 = vld [vmem:[%s1270 + $0x6fc] sm:$0xff]
                  %1571 = vst [vmem:[%s1271 + $0x254] sm:$0xff] %v1570
                  %v1572 = vld [vmem:[%s1270 + $0x708] sm:$0xff]
                  %1573 = vst [vmem:[%s1271 + $0x258] sm:$0xff] %v1572
                  %v1574 = vld [vmem:[%s1270 + $0x714] sm:$0xff]
                  %1575 = vst [vmem:[%s1271 + $0x25c] sm:$0xff] %v1574
                  %v1576 = vld [vmem:[%s1270 + $0x720] sm:$0xff]
                  %1577 = vst [vmem:[%s1271 + $0x260] sm:$0xff] %v1576
                  %v1578 = vld [vmem:[%s1270 + $0x72c] sm:$0xff]
                  %1579 = vst [vmem:[%s1271 + $0x264] sm:$0xff] %v1578
                  %v1580 = vld [vmem:[%s1270 + $0x738] sm:$0xff]
                  %1581 = vst [vmem:[%s1271 + $0x268] sm:$0xff] %v1580
                  %v1582 = vld [vmem:[%s1270 + $0x744] sm:$0xff]
                  %1583 = vst [vmem:[%s1271 + $0x26c] sm:$0xff] %v1582
                  %v1584 = vld [vmem:[%s1270 + $0x750] sm:$0xff]
                  %1585 = vst [vmem:[%s1271 + $0x270] sm:$0xff] %v1584
                  %v1586 = vld [vmem:[%s1270 + $0x75c] sm:$0xff]
                  %1587 = vst [vmem:[%s1271 + $0x274] sm:$0xff] %v1586
                  %v1588 = vld [vmem:[%s1270 + $0x768] sm:$0xff]
                  %1589 = vst [vmem:[%s1271 + $0x278] sm:$0xff] %v1588
                  %v1590 = vld [vmem:[%s1270 + $0x774] sm:$0xff]
                  %1591 = vst [vmem:[%s1271 + $0x27c] sm:$0xff] %v1590
                  %v1592 = vld [vmem:[%s1270 + $0x780] sm:$0xff]
                  %1593 = vst [vmem:[%s1271 + $0x280] sm:$0xff] %v1592
                  %v1594 = vld [vmem:[%s1270 + $0x78c] sm:$0xff]
                  %1595 = vst [vmem:[%s1271 + $0x284] sm:$0xff] %v1594
                  %v1596 = vld [vmem:[%s1270 + $0x798] sm:$0xff]
                  %1597 = vst [vmem:[%s1271 + $0x288] sm:$0xff] %v1596
                  %v1598 = vld [vmem:[%s1270 + $0x7a4] sm:$0xff]
                  %1599 = vst [vmem:[%s1271 + $0x28c] sm:$0xff] %v1598
                  %v1600 = vld [vmem:[%s1270 + $0x7b0] sm:$0xff]
                  %1601 = vst [vmem:[%s1271 + $0x290] sm:$0xff] %v1600
                  %v1602 = vld [vmem:[%s1270 + $0x7bc] sm:$0xff]
                  %1603 = vst [vmem:[%s1271 + $0x294] sm:$0xff] %v1602
                  %v1604 = vld [vmem:[%s1270 + $0x7c8] sm:$0xff]
                  %1605 = vst [vmem:[%s1271 + $0x298] sm:$0xff] %v1604
                  %v1606 = vld [vmem:[%s1270 + $0x7d4] sm:$0xff]
                  %1607 = vst [vmem:[%s1271 + $0x29c] sm:$0xff] %v1606
                  %v1608 = vld [vmem:[%s1270 + $0x7e0] sm:$0xff]
                  %1609 = vst [vmem:[%s1271 + $0x2a0] sm:$0xff] %v1608
                  %v1610 = vld [vmem:[%s1270 + $0x7ec] sm:$0xff]
                  %1611 = vst [vmem:[%s1271 + $0x2a4] sm:$0xff] %v1610
                  %v1612 = vld [vmem:[%s1270 + $0x7f8] sm:$0xff]
                  %1613 = vst [vmem:[%s1271 + $0x2a8] sm:$0xff] %v1612
                  %v1614 = vld [vmem:[%s1270 + $0x804] sm:$0xff]
                  %1615 = vst [vmem:[%s1271 + $0x2ac] sm:$0xff] %v1614
                  %v1616 = vld [vmem:[%s1270 + $0x810] sm:$0xff]
                  %1617 = vst [vmem:[%s1271 + $0x2b0] sm:$0xff] %v1616
                  %v1618 = vld [vmem:[%s1270 + $0x81c] sm:$0xff]
                  %1619 = vst [vmem:[%s1271 + $0x2b4] sm:$0xff] %v1618
                  %v1620 = vld [vmem:[%s1270 + $0x828] sm:$0xff]
                  %1621 = vst [vmem:[%s1271 + $0x2b8] sm:$0xff] %v1620
                  %v1622 = vld [vmem:[%s1270 + $0x834] sm:$0xff]
                  %1623 = vst [vmem:[%s1271 + $0x2bc] sm:$0xff] %v1622
                  %v1624 = vld [vmem:[%s1270 + $0x840] sm:$0xff]
                  %1625 = vst [vmem:[%s1271 + $0x2c0] sm:$0xff] %v1624
                  %v1626 = vld [vmem:[%s1270 + $0x84c] sm:$0xff]
                  %1627 = vst [vmem:[%s1271 + $0x2c4] sm:$0xff] %v1626
                  %v1628 = vld [vmem:[%s1270 + $0x858] sm:$0xff]
                  %1629 = vst [vmem:[%s1271 + $0x2c8] sm:$0xff] %v1628
                  %v1630 = vld [vmem:[%s1270 + $0x864] sm:$0xff]
                  %1631 = vst [vmem:[%s1271 + $0x2cc] sm:$0xff] %v1630
                  %v1632 = vld [vmem:[%s1270 + $0x870] sm:$0xff]
                  %1633 = vst [vmem:[%s1271 + $0x2d0] sm:$0xff] %v1632
                  %v1634 = vld [vmem:[%s1270 + $0x87c] sm:$0xff]
                  %1635 = vst [vmem:[%s1271 + $0x2d4] sm:$0xff] %v1634
                  %v1636 = vld [vmem:[%s1270 + $0x888] sm:$0xff]
                  %1637 = vst [vmem:[%s1271 + $0x2d8] sm:$0xff] %v1636
                  %v1638 = vld [vmem:[%s1270 + $0x894] sm:$0xff]
                  %1639 = vst [vmem:[%s1271 + $0x2dc] sm:$0xff] %v1638
                  %v1640 = vld [vmem:[%s1270 + $0x8a0] sm:$0xff]
                  %1641 = vst [vmem:[%s1271 + $0x2e0] sm:$0xff] %v1640
                  %v1642 = vld [vmem:[%s1270 + $0x8ac] sm:$0xff]
                  %1643 = vst [vmem:[%s1271 + $0x2e4] sm:$0xff] %v1642
                  %v1644 = vld [vmem:[%s1270 + $0x8b8] sm:$0xff]
                  %1645 = vst [vmem:[%s1271 + $0x2e8] sm:$0xff] %v1644
                  %v1646 = vld [vmem:[%s1270 + $0x8c4] sm:$0xff]
                  %1647 = vst [vmem:[%s1271 + $0x2ec] sm:$0xff] %v1646
                  %v1648 = vld [vmem:[%s1270 + $0x8d0] sm:$0xff]
                  %1649 = vst [vmem:[%s1271 + $0x2f0] sm:$0xff] %v1648
                  %v1650 = vld [vmem:[%s1270 + $0x8dc] sm:$0xff]
                  %1651 = vst [vmem:[%s1271 + $0x2f4] sm:$0xff] %v1650
                  %v1652 = vld [vmem:[%s1270 + $0x8e8] sm:$0xff]
                  %1653 = vst [vmem:[%s1271 + $0x2f8] sm:$0xff] %v1652
                  %v1654 = vld [vmem:[%s1270 + $0x8f4] sm:$0xff]
                  %1655 = vst [vmem:[%s1271 + $0x2fc] sm:$0xff] %v1654
                  %v1656 = vld [vmem:[%s1270 + $0x900] sm:$0xff]
                  %1657 = vst [vmem:[%s1271 + $0x300] sm:$0xff] %v1656
                  %v1658 = vld [vmem:[%s1270 + $0x90c] sm:$0xff]
                  %1659 = vst [vmem:[%s1271 + $0x304] sm:$0xff] %v1658
                  %v1660 = vld [vmem:[%s1270 + $0x918] sm:$0xff]
                  %1661 = vst [vmem:[%s1271 + $0x308] sm:$0xff] %v1660
                  %v1662 = vld [vmem:[%s1270 + $0x924] sm:$0xff]
                  %1663 = vst [vmem:[%s1271 + $0x30c] sm:$0xff] %v1662
                  %v1664 = vld [vmem:[%s1270 + $0x930] sm:$0xff]
                  %1665 = vst [vmem:[%s1271 + $0x310] sm:$0xff] %v1664
                  %v1666 = vld [vmem:[%s1270 + $0x93c] sm:$0xff]
                  %1667 = vst [vmem:[%s1271 + $0x314] sm:$0xff] %v1666
                  %v1668 = vld [vmem:[%s1270 + $0x948] sm:$0xff]
                  %1669 = vst [vmem:[%s1271 + $0x318] sm:$0xff] %v1668
                  %v1670 = vld [vmem:[%s1270 + $0x954] sm:$0xff]
                  %1671 = vst [vmem:[%s1271 + $0x31c] sm:$0xff] %v1670
                  %v1672 = vld [vmem:[%s1270 + $0x960] sm:$0xff]
                  %1673 = vst [vmem:[%s1271 + $0x320] sm:$0xff] %v1672
                  %v1674 = vld [vmem:[%s1270 + $0x96c] sm:$0xff]
                  %1675 = vst [vmem:[%s1271 + $0x324] sm:$0xff] %v1674
                  %v1676 = vld [vmem:[%s1270 + $0x978] sm:$0xff]
                  %1677 = vst [vmem:[%s1271 + $0x328] sm:$0xff] %v1676
                  %v1678 = vld [vmem:[%s1270 + $0x984] sm:$0xff]
                  %1679 = vst [vmem:[%s1271 + $0x32c] sm:$0xff] %v1678
                  %v1680 = vld [vmem:[%s1270 + $0x990] sm:$0xff]
                  %1681 = vst [vmem:[%s1271 + $0x330] sm:$0xff] %v1680
                  %v1682 = vld [vmem:[%s1270 + $0x99c] sm:$0xff]
                  %1683 = vst [vmem:[%s1271 + $0x334] sm:$0xff] %v1682
                  %v1684 = vld [vmem:[%s1270 + $0x9a8] sm:$0xff]
                  %1685 = vst [vmem:[%s1271 + $0x338] sm:$0xff] %v1684
                  %v1686 = vld [vmem:[%s1270 + $0x9b4] sm:$0xff]
                  %1687 = vst [vmem:[%s1271 + $0x33c] sm:$0xff] %v1686
                  %v1688 = vld [vmem:[%s1270 + $0x9c0] sm:$0xff]
                  %1689 = vst [vmem:[%s1271 + $0x340] sm:$0xff] %v1688
                  %v1690 = vld [vmem:[%s1270 + $0x9cc] sm:$0xff]
                  %1691 = vst [vmem:[%s1271 + $0x344] sm:$0xff] %v1690
                  %v1692 = vld [vmem:[%s1270 + $0x9d8] sm:$0xff]
                  %1693 = vst [vmem:[%s1271 + $0x348] sm:$0xff] %v1692
                  %v1694 = vld [vmem:[%s1270 + $0x9e4] sm:$0xff]
                  %1695 = vst [vmem:[%s1271 + $0x34c] sm:$0xff] %v1694
                  %v1696 = vld [vmem:[%s1270 + $0x9f0] sm:$0xff]
                  %1697 = vst [vmem:[%s1271 + $0x350] sm:$0xff] %v1696
                  %v1698 = vld [vmem:[%s1270 + $0x9fc] sm:$0xff]
                  %1699 = vst [vmem:[%s1271 + $0x354] sm:$0xff] %v1698
                  %v1700 = vld [vmem:[%s1270 + $0xa08] sm:$0xff]
                  %1701 = vst [vmem:[%s1271 + $0x358] sm:$0xff] %v1700
                  %v1702 = vld [vmem:[%s1270 + $0xa14] sm:$0xff]
                  %1703 = vst [vmem:[%s1271 + $0x35c] sm:$0xff] %v1702
                  %v1704 = vld [vmem:[%s1270 + $0xa20] sm:$0xff]
                  %1705 = vst [vmem:[%s1271 + $0x360] sm:$0xff] %v1704
                  %v1706 = vld [vmem:[%s1270 + $0xa2c] sm:$0xff]
                  %1707 = vst [vmem:[%s1271 + $0x364] sm:$0xff] %v1706
                  %v1708 = vld [vmem:[%s1270 + $0xa38] sm:$0xff]
                  %1709 = vst [vmem:[%s1271 + $0x368] sm:$0xff] %v1708
                  %v1710 = vld [vmem:[%s1270 + $0xa44] sm:$0xff]
                  %1711 = vst [vmem:[%s1271 + $0x36c] sm:$0xff] %v1710
                  %v1712 = vld [vmem:[%s1270 + $0xa50] sm:$0xff]
                  %1713 = vst [vmem:[%s1271 + $0x370] sm:$0xff] %v1712
                  %v1714 = vld [vmem:[%s1270 + $0xa5c] sm:$0xff]
                  %1715 = vst [vmem:[%s1271 + $0x374] sm:$0xff] %v1714
                  %v1716 = vld [vmem:[%s1270 + $0xa68] sm:$0xff]
                  %1717 = vst [vmem:[%s1271 + $0x378] sm:$0xff] %v1716
                  %v1718 = vld [vmem:[%s1270 + $0xa74] sm:$0xff]
                  %1719 = vst [vmem:[%s1271 + $0x37c] sm:$0xff] %v1718
                  %v1720 = vld [vmem:[%s1270 + $0xa80] sm:$0xff]
                  %1721 = vst [vmem:[%s1271 + $0x380] sm:$0xff] %v1720
                  %v1722 = vld [vmem:[%s1270 + $0xa8c] sm:$0xff]
                  %1723 = vst [vmem:[%s1271 + $0x384] sm:$0xff] %v1722
                  %v1724 = vld [vmem:[%s1270 + $0xa98] sm:$0xff]
                  %1725 = vst [vmem:[%s1271 + $0x388] sm:$0xff] %v1724
                  %v1726 = vld [vmem:[%s1270 + $0xaa4] sm:$0xff]
                  %1727 = vst [vmem:[%s1271 + $0x38c] sm:$0xff] %v1726
                  %v1728 = vld [vmem:[%s1270 + $0xab0] sm:$0xff]
                  %1729 = vst [vmem:[%s1271 + $0x390] sm:$0xff] %v1728
                  %v1730 = vld [vmem:[%s1270 + $0xabc] sm:$0xff]
                  %1731 = vst [vmem:[%s1271 + $0x394] sm:$0xff] %v1730
                  %v1732 = vld [vmem:[%s1270 + $0xac8] sm:$0xff]
                  %1733 = vst [vmem:[%s1271 + $0x398] sm:$0xff] %v1732
                  %v1734 = vld [vmem:[%s1270 + $0xad4] sm:$0xff]
                  %1735 = vst [vmem:[%s1271 + $0x39c] sm:$0xff] %v1734
                  %v1736 = vld [vmem:[%s1270 + $0xae0] sm:$0xff]
                  %1737 = vst [vmem:[%s1271 + $0x3a0] sm:$0xff] %v1736
                  %v1738 = vld [vmem:[%s1270 + $0xaec] sm:$0xff]
                  %1739 = vst [vmem:[%s1271 + $0x3a4] sm:$0xff] %v1738
                  %v1740 = vld [vmem:[%s1270 + $0xaf8] sm:$0xff]
                  %1741 = vst [vmem:[%s1271 + $0x3a8] sm:$0xff] %v1740
                  %v1742 = vld [vmem:[%s1270 + $0xb04] sm:$0xff]
                  %1743 = vst [vmem:[%s1271 + $0x3ac] sm:$0xff] %v1742
                  %v1744 = vld [vmem:[%s1270 + $0xb10] sm:$0xff]
                  %1745 = vst [vmem:[%s1271 + $0x3b0] sm:$0xff] %v1744
                  %v1746 = vld [vmem:[%s1270 + $0xb1c] sm:$0xff]
                  %1747 = vst [vmem:[%s1271 + $0x3b4] sm:$0xff] %v1746
                  %v1748 = vld [vmem:[%s1270 + $0xb28] sm:$0xff]
                  %1749 = vst [vmem:[%s1271 + $0x3b8] sm:$0xff] %v1748
                  %v1750 = vld [vmem:[%s1270 + $0xb34] sm:$0xff]
                  %1751 = vst [vmem:[%s1271 + $0x3bc] sm:$0xff] %v1750
                  %v1752 = vld [vmem:[%s1270 + $0xb40] sm:$0xff]
                  %1753 = vst [vmem:[%s1271 + $0x3c0] sm:$0xff] %v1752
                  %v1754 = vld [vmem:[%s1270 + $0xb4c] sm:$0xff]
                  %1755 = vst [vmem:[%s1271 + $0x3c4] sm:$0xff] %v1754
                  %v1756 = vld [vmem:[%s1270 + $0xb58] sm:$0xff]
                  %1757 = vst [vmem:[%s1271 + $0x3c8] sm:$0xff] %v1756
                  %v1758 = vld [vmem:[%s1270 + $0xb64] sm:$0xff]
                  %1759 = vst [vmem:[%s1271 + $0x3cc] sm:$0xff] %v1758
                  %v1760 = vld [vmem:[%s1270 + $0xb70] sm:$0xff]
                  %1761 = vst [vmem:[%s1271 + $0x3d0] sm:$0xff] %v1760
                  %v1762 = vld [vmem:[%s1270 + $0xb7c] sm:$0xff]
                  %1763 = vst [vmem:[%s1271 + $0x3d4] sm:$0xff] %v1762
                  %v1764 = vld [vmem:[%s1270 + $0xb88] sm:$0xff]
                  %1765 = vst [vmem:[%s1271 + $0x3d8] sm:$0xff] %v1764
                  %v1766 = vld [vmem:[%s1270 + $0xb94] sm:$0xff]
                  %1767 = vst [vmem:[%s1271 + $0x3dc] sm:$0xff] %v1766
                  %v1768 = vld [vmem:[%s1270 + $0xba0] sm:$0xff]
                  %1769 = vst [vmem:[%s1271 + $0x3e0] sm:$0xff] %v1768
                  %v1770 = vld [vmem:[%s1270 + $0xbac] sm:$0xff]
                  %1771 = vst [vmem:[%s1271 + $0x3e4] sm:$0xff] %v1770
                  %v1772 = vld [vmem:[%s1270 + $0xbb8] sm:$0xff]
                  %1773 = vst [vmem:[%s1271 + $0x3e8] sm:$0xff] %v1772
                  %v1774 = vld [vmem:[%s1270 + $0xbc4] sm:$0xff]
                  %1775 = vst [vmem:[%s1271 + $0x3ec] sm:$0xff] %v1774
                  %v1776 = vld [vmem:[%s1270 + $0xbd0] sm:$0xff]
                  %1777 = vst [vmem:[%s1271 + $0x3f0] sm:$0xff] %v1776
                  %v1778 = vld [vmem:[%s1270 + $0xbdc] sm:$0xff]
                  %1779 = vst [vmem:[%s1271 + $0x3f4] sm:$0xff] %v1778
                  %v1780 = vld [vmem:[%s1270 + $0xbe8] sm:$0xff]
                  %1781 = vst [vmem:[%s1271 + $0x3f8] sm:$0xff] %v1780
                  %v1782 = vld [vmem:[%s1270 + $0xbf4] sm:$0xff]
                  %1783 = vst [vmem:[%s1271 + $0x3fc] sm:$0xff] %v1782
                  %v1784 = vld [vmem:[%s1270 + $0xc00] sm:$0xff]
                  %1785 = vst [vmem:[%s1271 + $0x400] sm:$0xff] %v1784
                  %v1786 = vld [vmem:[%s1270 + $0xc0c] sm:$0xff]
                  %1787 = vst [vmem:[%s1271 + $0x404] sm:$0xff] %v1786
                  %v1788 = vld [vmem:[%s1270 + $0xc18] sm:$0xff]
                  %1789 = vst [vmem:[%s1271 + $0x408] sm:$0xff] %v1788
                  %v1790 = vld [vmem:[%s1270 + $0xc24] sm:$0xff]
                  %1791 = vst [vmem:[%s1271 + $0x40c] sm:$0xff] %v1790
                  %v1792 = vld [vmem:[%s1270 + $0xc30] sm:$0xff]
                  %1793 = vst [vmem:[%s1271 + $0x410] sm:$0xff] %v1792
                  %v1794 = vld [vmem:[%s1270 + $0xc3c] sm:$0xff]
                  %1795 = vst [vmem:[%s1271 + $0x414] sm:$0xff] %v1794
                  %v1796 = vld [vmem:[%s1270 + $0xc48] sm:$0xff]
                  %1797 = vst [vmem:[%s1271 + $0x418] sm:$0xff] %v1796
                  %v1798 = vld [vmem:[%s1270 + $0xc54] sm:$0xff]
                  %1799 = vst [vmem:[%s1271 + $0x41c] sm:$0xff] %v1798
                  %v1800 = vld [vmem:[%s1270 + $0xc60] sm:$0xff]
                  %1801 = vst [vmem:[%s1271 + $0x420] sm:$0xff] %v1800
                  %v1802 = vld [vmem:[%s1270 + $0xc6c] sm:$0xff]
                  %1803 = vst [vmem:[%s1271 + $0x424] sm:$0xff] %v1802
                  %v1804 = vld [vmem:[%s1270 + $0xc78] sm:$0xff]
                  %1805 = vst [vmem:[%s1271 + $0x428] sm:$0xff] %v1804
                  %v1806 = vld [vmem:[%s1270 + $0xc84] sm:$0xff]
                  %1807 = vst [vmem:[%s1271 + $0x42c] sm:$0xff] %v1806
                  %v1808 = vld [vmem:[%s1270 + $0xc90] sm:$0xff]
                  %1809 = vst [vmem:[%s1271 + $0x430] sm:$0xff] %v1808
                  %v1810 = vld [vmem:[%s1270 + $0xc9c] sm:$0xff]
                  %1811 = vst [vmem:[%s1271 + $0x434] sm:$0xff] %v1810
                  %v1812 = vld [vmem:[%s1270 + $0xca8] sm:$0xff]
                  %1813 = vst [vmem:[%s1271 + $0x438] sm:$0xff] %v1812
                  %v1814 = vld [vmem:[%s1270 + $0xcb4] sm:$0xff]
                  %1815 = vst [vmem:[%s1271 + $0x43c] sm:$0xff] %v1814
                  %s1816 = sadd.s32 1, %s1269
                  %p1817 = scmp.ge.s32.totalorder %s1816, 0
                  %s1818 = scalar_select %p1817, 0, %s1816
                  %s1819 = smul.u32 %s1818, 8
                  %s1820 = smul.u32 %s1818, 8
                  %s1821 = scalar_lea.vmem %s138, %s1819
                  %s1822 = scalar_lea.vmem %s136, %s1820 [#allocation2]
                $region63: #{block8.10} parent=57 // loop_footer
                  %s1268 = sadd.s32 1, %s1264
                $region64: #{block8.10} parent=57 // loop_footer_branch
                  %1263 = sbr.rel target = $region60
                $region65: #{block8.10} parent=57 // loop_exit
                  _
                %s1824 = ssub.s32 16, 1
                loop: start=0, step=1, limit=1
                $region66: #{block8.10} parent=57 // loop_pre_header
                  _
                $region67: #{block8.10} parent=57 // loop_header
                  %s1826 = sphi 0, %s1830
                  %p1827 = scmp.ge.s32.totalorder %s1826, 1
                  %s1831 = sphi %s138, %s138
                  %s1832 = sphi %s136, %s136
                $region68: #{block8.10} parent=57 // loop_header_branch
                  %1829 = sbr.rel (%p1827) target = $region72
                $region69: #{block8.10} parent=57 // loop_body
                  %v1833 = vld [vmem:[%s1831] sm:%s1824]
                  %1834 = vst [vmem:[%s1832] sm:%s1824] %v1833
                  %v1835 = vld [vmem:[%s1831 + $0xc] sm:%s1824]
                  %1836 = vst [vmem:[%s1832 + $0x4] sm:%s1824] %v1835
                  %v1837 = vld [vmem:[%s1831 + $0x18] sm:%s1824]
                  %1838 = vst [vmem:[%s1832 + $0x8] sm:%s1824] %v1837
                  %v1839 = vld [vmem:[%s1831 + $0x24] sm:%s1824]
                  %1840 = vst [vmem:[%s1832 + $0xc] sm:%s1824] %v1839
                  %v1841 = vld [vmem:[%s1831 + $0x30] sm:%s1824]
                  %1842 = vst [vmem:[%s1832 + $0x10] sm:%s1824] %v1841
                  %v1843 = vld [vmem:[%s1831 + $0x3c] sm:%s1824]
                  %1844 = vst [vmem:[%s1832 + $0x14] sm:%s1824] %v1843
                  %v1845 = vld [vmem:[%s1831 + $0x48] sm:%s1824]
                  %1846 = vst [vmem:[%s1832 + $0x18] sm:%s1824] %v1845
                  %v1847 = vld [vmem:[%s1831 + $0x54] sm:%s1824]
                  %1848 = vst [vmem:[%s1832 + $0x1c] sm:%s1824] %v1847
                  %v1849 = vld [vmem:[%s1831 + $0x60] sm:%s1824]
                  %1850 = vst [vmem:[%s1832 + $0x20] sm:%s1824] %v1849
                  %v1851 = vld [vmem:[%s1831 + $0x6c] sm:%s1824]
                  %1852 = vst [vmem:[%s1832 + $0x24] sm:%s1824] %v1851
                  %v1853 = vld [vmem:[%s1831 + $0x78] sm:%s1824]
                  %1854 = vst [vmem:[%s1832 + $0x28] sm:%s1824] %v1853
                  %v1855 = vld [vmem:[%s1831 + $0x84] sm:%s1824]
                  %1856 = vst [vmem:[%s1832 + $0x2c] sm:%s1824] %v1855
                  %v1857 = vld [vmem:[%s1831 + $0x90] sm:%s1824]
                  %1858 = vst [vmem:[%s1832 + $0x30] sm:%s1824] %v1857
                  %v1859 = vld [vmem:[%s1831 + $0x9c] sm:%s1824]
                  %1860 = vst [vmem:[%s1832 + $0x34] sm:%s1824] %v1859
                  %v1861 = vld [vmem:[%s1831 + $0xa8] sm:%s1824]
                  %1862 = vst [vmem:[%s1832 + $0x38] sm:%s1824] %v1861
                  %v1863 = vld [vmem:[%s1831 + $0xb4] sm:%s1824]
                  %1864 = vst [vmem:[%s1832 + $0x3c] sm:%s1824] %v1863
                  %v1865 = vld [vmem:[%s1831 + $0xc0] sm:%s1824]
                  %1866 = vst [vmem:[%s1832 + $0x40] sm:%s1824] %v1865
                  %v1867 = vld [vmem:[%s1831 + $0xcc] sm:%s1824]
                  %1868 = vst [vmem:[%s1832 + $0x44] sm:%s1824] %v1867
                  %v1869 = vld [vmem:[%s1831 + $0xd8] sm:%s1824]
                  %1870 = vst [vmem:[%s1832 + $0x48] sm:%s1824] %v1869
                  %v1871 = vld [vmem:[%s1831 + $0xe4] sm:%s1824]
                  %1872 = vst [vmem:[%s1832 + $0x4c] sm:%s1824] %v1871
                  %v1873 = vld [vmem:[%s1831 + $0xf0] sm:%s1824]
                  %1874 = vst [vmem:[%s1832 + $0x50] sm:%s1824] %v1873
                  %v1875 = vld [vmem:[%s1831 + $0xfc] sm:%s1824]
                  %1876 = vst [vmem:[%s1832 + $0x54] sm:%s1824] %v1875
                  %v1877 = vld [vmem:[%s1831 + $0x108] sm:%s1824]
                  %1878 = vst [vmem:[%s1832 + $0x58] sm:%s1824] %v1877
                  %v1879 = vld [vmem:[%s1831 + $0x114] sm:%s1824]
                  %1880 = vst [vmem:[%s1832 + $0x5c] sm:%s1824] %v1879
                  %v1881 = vld [vmem:[%s1831 + $0x120] sm:%s1824]
                  %1882 = vst [vmem:[%s1832 + $0x60] sm:%s1824] %v1881
                  %v1883 = vld [vmem:[%s1831 + $0x12c] sm:%s1824]
                  %1884 = vst [vmem:[%s1832 + $0x64] sm:%s1824] %v1883
                  %v1885 = vld [vmem:[%s1831 + $0x138] sm:%s1824]
                  %1886 = vst [vmem:[%s1832 + $0x68] sm:%s1824] %v1885
                  %v1887 = vld [vmem:[%s1831 + $0x144] sm:%s1824]
                  %1888 = vst [vmem:[%s1832 + $0x6c] sm:%s1824] %v1887
                  %v1889 = vld [vmem:[%s1831 + $0x150] sm:%s1824]
                  %1890 = vst [vmem:[%s1832 + $0x70] sm:%s1824] %v1889
                  %v1891 = vld [vmem:[%s1831 + $0x15c] sm:%s1824]
                  %1892 = vst [vmem:[%s1832 + $0x74] sm:%s1824] %v1891
                  %v1893 = vld [vmem:[%s1831 + $0x168] sm:%s1824]
                  %1894 = vst [vmem:[%s1832 + $0x78] sm:%s1824] %v1893
                  %v1895 = vld [vmem:[%s1831 + $0x174] sm:%s1824]
                  %1896 = vst [vmem:[%s1832 + $0x7c] sm:%s1824] %v1895
                  %v1897 = vld [vmem:[%s1831 + $0x180] sm:%s1824]
                  %1898 = vst [vmem:[%s1832 + $0x80] sm:%s1824] %v1897
                  %v1899 = vld [vmem:[%s1831 + $0x18c] sm:%s1824]
                  %1900 = vst [vmem:[%s1832 + $0x84] sm:%s1824] %v1899
                  %v1901 = vld [vmem:[%s1831 + $0x198] sm:%s1824]
                  %1902 = vst [vmem:[%s1832 + $0x88] sm:%s1824] %v1901
                  %v1903 = vld [vmem:[%s1831 + $0x1a4] sm:%s1824]
                  %1904 = vst [vmem:[%s1832 + $0x8c] sm:%s1824] %v1903
                  %v1905 = vld [vmem:[%s1831 + $0x1b0] sm:%s1824]
                  %1906 = vst [vmem:[%s1832 + $0x90] sm:%s1824] %v1905
                  %v1907 = vld [vmem:[%s1831 + $0x1bc] sm:%s1824]
                  %1908 = vst [vmem:[%s1832 + $0x94] sm:%s1824] %v1907
                  %v1909 = vld [vmem:[%s1831 + $0x1c8] sm:%s1824]
                  %1910 = vst [vmem:[%s1832 + $0x98] sm:%s1824] %v1909
                  %v1911 = vld [vmem:[%s1831 + $0x1d4] sm:%s1824]
                  %1912 = vst [vmem:[%s1832 + $0x9c] sm:%s1824] %v1911
                  %v1913 = vld [vmem:[%s1831 + $0x1e0] sm:%s1824]
                  %1914 = vst [vmem:[%s1832 + $0xa0] sm:%s1824] %v1913
                  %v1915 = vld [vmem:[%s1831 + $0x1ec] sm:%s1824]
                  %1916 = vst [vmem:[%s1832 + $0xa4] sm:%s1824] %v1915
                  %v1917 = vld [vmem:[%s1831 + $0x1f8] sm:%s1824]
                  %1918 = vst [vmem:[%s1832 + $0xa8] sm:%s1824] %v1917
                  %v1919 = vld [vmem:[%s1831 + $0x204] sm:%s1824]
                  %1920 = vst [vmem:[%s1832 + $0xac] sm:%s1824] %v1919
                  %v1921 = vld [vmem:[%s1831 + $0x210] sm:%s1824]
                  %1922 = vst [vmem:[%s1832 + $0xb0] sm:%s1824] %v1921
                  %v1923 = vld [vmem:[%s1831 + $0x21c] sm:%s1824]
                  %1924 = vst [vmem:[%s1832 + $0xb4] sm:%s1824] %v1923
                  %v1925 = vld [vmem:[%s1831 + $0x228] sm:%s1824]
                  %1926 = vst [vmem:[%s1832 + $0xb8] sm:%s1824] %v1925
                  %v1927 = vld [vmem:[%s1831 + $0x234] sm:%s1824]
                  %1928 = vst [vmem:[%s1832 + $0xbc] sm:%s1824] %v1927
                  %v1929 = vld [vmem:[%s1831 + $0x240] sm:%s1824]
                  %1930 = vst [vmem:[%s1832 + $0xc0] sm:%s1824] %v1929
                  %v1931 = vld [vmem:[%s1831 + $0x24c] sm:%s1824]
                  %1932 = vst [vmem:[%s1832 + $0xc4] sm:%s1824] %v1931
                  %v1933 = vld [vmem:[%s1831 + $0x258] sm:%s1824]
                  %1934 = vst [vmem:[%s1832 + $0xc8] sm:%s1824] %v1933
                  %v1935 = vld [vmem:[%s1831 + $0x264] sm:%s1824]
                  %1936 = vst [vmem:[%s1832 + $0xcc] sm:%s1824] %v1935
                  %v1937 = vld [vmem:[%s1831 + $0x270] sm:%s1824]
                  %1938 = vst [vmem:[%s1832 + $0xd0] sm:%s1824] %v1937
                  %v1939 = vld [vmem:[%s1831 + $0x27c] sm:%s1824]
                  %1940 = vst [vmem:[%s1832 + $0xd4] sm:%s1824] %v1939
                  %v1941 = vld [vmem:[%s1831 + $0x288] sm:%s1824]
                  %1942 = vst [vmem:[%s1832 + $0xd8] sm:%s1824] %v1941
                  %v1943 = vld [vmem:[%s1831 + $0x294] sm:%s1824]
                  %1944 = vst [vmem:[%s1832 + $0xdc] sm:%s1824] %v1943
                  %v1945 = vld [vmem:[%s1831 + $0x2a0] sm:%s1824]
                  %1946 = vst [vmem:[%s1832 + $0xe0] sm:%s1824] %v1945
                  %v1947 = vld [vmem:[%s1831 + $0x2ac] sm:%s1824]
                  %1948 = vst [vmem:[%s1832 + $0xe4] sm:%s1824] %v1947
                  %v1949 = vld [vmem:[%s1831 + $0x2b8] sm:%s1824]
                  %1950 = vst [vmem:[%s1832 + $0xe8] sm:%s1824] %v1949
                  %v1951 = vld [vmem:[%s1831 + $0x2c4] sm:%s1824]
                  %1952 = vst [vmem:[%s1832 + $0xec] sm:%s1824] %v1951
                  %v1953 = vld [vmem:[%s1831 + $0x2d0] sm:%s1824]
                  %1954 = vst [vmem:[%s1832 + $0xf0] sm:%s1824] %v1953
                  %v1955 = vld [vmem:[%s1831 + $0x2dc] sm:%s1824]
                  %1956 = vst [vmem:[%s1832 + $0xf4] sm:%s1824] %v1955
                  %v1957 = vld [vmem:[%s1831 + $0x2e8] sm:%s1824]
                  %1958 = vst [vmem:[%s1832 + $0xf8] sm:%s1824] %v1957
                  %v1959 = vld [vmem:[%s1831 + $0x2f4] sm:%s1824]
                  %1960 = vst [vmem:[%s1832 + $0xfc] sm:%s1824] %v1959
                  %v1961 = vld [vmem:[%s1831 + $0x300] sm:%s1824]
                  %1962 = vst [vmem:[%s1832 + $0x100] sm:%s1824] %v1961
                  %v1963 = vld [vmem:[%s1831 + $0x30c] sm:%s1824]
                  %1964 = vst [vmem:[%s1832 + $0x104] sm:%s1824] %v1963
                  %v1965 = vld [vmem:[%s1831 + $0x318] sm:%s1824]
                  %1966 = vst [vmem:[%s1832 + $0x108] sm:%s1824] %v1965
                  %v1967 = vld [vmem:[%s1831 + $0x324] sm:%s1824]
                  %1968 = vst [vmem:[%s1832 + $0x10c] sm:%s1824] %v1967
                  %v1969 = vld [vmem:[%s1831 + $0x330] sm:%s1824]
                  %1970 = vst [vmem:[%s1832 + $0x110] sm:%s1824] %v1969
                  %v1971 = vld [vmem:[%s1831 + $0x33c] sm:%s1824]
                  %1972 = vst [vmem:[%s1832 + $0x114] sm:%s1824] %v1971
                  %v1973 = vld [vmem:[%s1831 + $0x348] sm:%s1824]
                  %1974 = vst [vmem:[%s1832 + $0x118] sm:%s1824] %v1973
                  %v1975 = vld [vmem:[%s1831 + $0x354] sm:%s1824]
                  %1976 = vst [vmem:[%s1832 + $0x11c] sm:%s1824] %v1975
                  %v1977 = vld [vmem:[%s1831 + $0x360] sm:%s1824]
                  %1978 = vst [vmem:[%s1832 + $0x120] sm:%s1824] %v1977
                  %v1979 = vld [vmem:[%s1831 + $0x36c] sm:%s1824]
                  %1980 = vst [vmem:[%s1832 + $0x124] sm:%s1824] %v1979
                  %v1981 = vld [vmem:[%s1831 + $0x378] sm:%s1824]
                  %1982 = vst [vmem:[%s1832 + $0x128] sm:%s1824] %v1981
                  %v1983 = vld [vmem:[%s1831 + $0x384] sm:%s1824]
                  %1984 = vst [vmem:[%s1832 + $0x12c] sm:%s1824] %v1983
                  %v1985 = vld [vmem:[%s1831 + $0x390] sm:%s1824]
                  %1986 = vst [vmem:[%s1832 + $0x130] sm:%s1824] %v1985
                  %v1987 = vld [vmem:[%s1831 + $0x39c] sm:%s1824]
                  %1988 = vst [vmem:[%s1832 + $0x134] sm:%s1824] %v1987
                  %v1989 = vld [vmem:[%s1831 + $0x3a8] sm:%s1824]
                  %1990 = vst [vmem:[%s1832 + $0x138] sm:%s1824] %v1989
                  %v1991 = vld [vmem:[%s1831 + $0x3b4] sm:%s1824]
                  %1992 = vst [vmem:[%s1832 + $0x13c] sm:%s1824] %v1991
                  %v1993 = vld [vmem:[%s1831 + $0x3c0] sm:%s1824]
                  %1994 = vst [vmem:[%s1832 + $0x140] sm:%s1824] %v1993
                  %v1995 = vld [vmem:[%s1831 + $0x3cc] sm:%s1824]
                  %1996 = vst [vmem:[%s1832 + $0x144] sm:%s1824] %v1995
                  %v1997 = vld [vmem:[%s1831 + $0x3d8] sm:%s1824]
                  %1998 = vst [vmem:[%s1832 + $0x148] sm:%s1824] %v1997
                  %v1999 = vld [vmem:[%s1831 + $0x3e4] sm:%s1824]
                  %2000 = vst [vmem:[%s1832 + $0x14c] sm:%s1824] %v1999
                  %v2001 = vld [vmem:[%s1831 + $0x3f0] sm:%s1824]
                  %2002 = vst [vmem:[%s1832 + $0x150] sm:%s1824] %v2001
                  %v2003 = vld [vmem:[%s1831 + $0x3fc] sm:%s1824]
                  %2004 = vst [vmem:[%s1832 + $0x154] sm:%s1824] %v2003
                  %v2005 = vld [vmem:[%s1831 + $0x408] sm:%s1824]
                  %2006 = vst [vmem:[%s1832 + $0x158] sm:%s1824] %v2005
                  %v2007 = vld [vmem:[%s1831 + $0x414] sm:%s1824]
                  %2008 = vst [vmem:[%s1832 + $0x15c] sm:%s1824] %v2007
                  %v2009 = vld [vmem:[%s1831 + $0x420] sm:%s1824]
                  %2010 = vst [vmem:[%s1832 + $0x160] sm:%s1824] %v2009
                  %v2011 = vld [vmem:[%s1831 + $0x42c] sm:%s1824]
                  %2012 = vst [vmem:[%s1832 + $0x164] sm:%s1824] %v2011
                  %v2013 = vld [vmem:[%s1831 + $0x438] sm:%s1824]
                  %2014 = vst [vmem:[%s1832 + $0x168] sm:%s1824] %v2013
                  %v2015 = vld [vmem:[%s1831 + $0x444] sm:%s1824]
                  %2016 = vst [vmem:[%s1832 + $0x16c] sm:%s1824] %v2015
                  %v2017 = vld [vmem:[%s1831 + $0x450] sm:%s1824]
                  %2018 = vst [vmem:[%s1832 + $0x170] sm:%s1824] %v2017
                  %v2019 = vld [vmem:[%s1831 + $0x45c] sm:%s1824]
                  %2020 = vst [vmem:[%s1832 + $0x174] sm:%s1824] %v2019
                  %v2021 = vld [vmem:[%s1831 + $0x468] sm:%s1824]
                  %2022 = vst [vmem:[%s1832 + $0x178] sm:%s1824] %v2021
                  %v2023 = vld [vmem:[%s1831 + $0x474] sm:%s1824]
                  %2024 = vst [vmem:[%s1832 + $0x17c] sm:%s1824] %v2023
                  %v2025 = vld [vmem:[%s1831 + $0x480] sm:%s1824]
                  %2026 = vst [vmem:[%s1832 + $0x180] sm:%s1824] %v2025
                  %v2027 = vld [vmem:[%s1831 + $0x48c] sm:%s1824]
                  %2028 = vst [vmem:[%s1832 + $0x184] sm:%s1824] %v2027
                  %v2029 = vld [vmem:[%s1831 + $0x498] sm:%s1824]
                  %2030 = vst [vmem:[%s1832 + $0x188] sm:%s1824] %v2029
                  %v2031 = vld [vmem:[%s1831 + $0x4a4] sm:%s1824]
                  %2032 = vst [vmem:[%s1832 + $0x18c] sm:%s1824] %v2031
                  %v2033 = vld [vmem:[%s1831 + $0x4b0] sm:%s1824]
                  %2034 = vst [vmem:[%s1832 + $0x190] sm:%s1824] %v2033
                  %v2035 = vld [vmem:[%s1831 + $0x4bc] sm:%s1824]
                  %2036 = vst [vmem:[%s1832 + $0x194] sm:%s1824] %v2035
                  %v2037 = vld [vmem:[%s1831 + $0x4c8] sm:%s1824]
                  %2038 = vst [vmem:[%s1832 + $0x198] sm:%s1824] %v2037
                  %v2039 = vld [vmem:[%s1831 + $0x4d4] sm:%s1824]
                  %2040 = vst [vmem:[%s1832 + $0x19c] sm:%s1824] %v2039
                  %v2041 = vld [vmem:[%s1831 + $0x4e0] sm:%s1824]
                  %2042 = vst [vmem:[%s1832 + $0x1a0] sm:%s1824] %v2041
                  %v2043 = vld [vmem:[%s1831 + $0x4ec] sm:%s1824]
                  %2044 = vst [vmem:[%s1832 + $0x1a4] sm:%s1824] %v2043
                  %v2045 = vld [vmem:[%s1831 + $0x4f8] sm:%s1824]
                  %2046 = vst [vmem:[%s1832 + $0x1a8] sm:%s1824] %v2045
                  %v2047 = vld [vmem:[%s1831 + $0x504] sm:%s1824]
                  %2048 = vst [vmem:[%s1832 + $0x1ac] sm:%s1824] %v2047
                  %v2049 = vld [vmem:[%s1831 + $0x510] sm:%s1824]
                  %2050 = vst [vmem:[%s1832 + $0x1b0] sm:%s1824] %v2049
                  %v2051 = vld [vmem:[%s1831 + $0x51c] sm:%s1824]
                  %2052 = vst [vmem:[%s1832 + $0x1b4] sm:%s1824] %v2051
                  %v2053 = vld [vmem:[%s1831 + $0x528] sm:%s1824]
                  %2054 = vst [vmem:[%s1832 + $0x1b8] sm:%s1824] %v2053
                  %v2055 = vld [vmem:[%s1831 + $0x534] sm:%s1824]
                  %2056 = vst [vmem:[%s1832 + $0x1bc] sm:%s1824] %v2055
                  %v2057 = vld [vmem:[%s1831 + $0x540] sm:%s1824]
                  %2058 = vst [vmem:[%s1832 + $0x1c0] sm:%s1824] %v2057
                  %v2059 = vld [vmem:[%s1831 + $0x54c] sm:%s1824]
                  %2060 = vst [vmem:[%s1832 + $0x1c4] sm:%s1824] %v2059
                  %v2061 = vld [vmem:[%s1831 + $0x558] sm:%s1824]
                  %2062 = vst [vmem:[%s1832 + $0x1c8] sm:%s1824] %v2061
                  %v2063 = vld [vmem:[%s1831 + $0x564] sm:%s1824]
                  %2064 = vst [vmem:[%s1832 + $0x1cc] sm:%s1824] %v2063
                  %v2065 = vld [vmem:[%s1831 + $0x570] sm:%s1824]
                  %2066 = vst [vmem:[%s1832 + $0x1d0] sm:%s1824] %v2065
                  %v2067 = vld [vmem:[%s1831 + $0x57c] sm:%s1824]
                  %2068 = vst [vmem:[%s1832 + $0x1d4] sm:%s1824] %v2067
                  %v2069 = vld [vmem:[%s1831 + $0x588] sm:%s1824]
                  %2070 = vst [vmem:[%s1832 + $0x1d8] sm:%s1824] %v2069
                  %v2071 = vld [vmem:[%s1831 + $0x594] sm:%s1824]
                  %2072 = vst [vmem:[%s1832 + $0x1dc] sm:%s1824] %v2071
                  %v2073 = vld [vmem:[%s1831 + $0x5a0] sm:%s1824]
                  %2074 = vst [vmem:[%s1832 + $0x1e0] sm:%s1824] %v2073
                  %v2075 = vld [vmem:[%s1831 + $0x5ac] sm:%s1824]
                  %2076 = vst [vmem:[%s1832 + $0x1e4] sm:%s1824] %v2075
                  %v2077 = vld [vmem:[%s1831 + $0x5b8] sm:%s1824]
                  %2078 = vst [vmem:[%s1832 + $0x1e8] sm:%s1824] %v2077
                  %v2079 = vld [vmem:[%s1831 + $0x5c4] sm:%s1824]
                  %2080 = vst [vmem:[%s1832 + $0x1ec] sm:%s1824] %v2079
                  %v2081 = vld [vmem:[%s1831 + $0x5d0] sm:%s1824]
                  %2082 = vst [vmem:[%s1832 + $0x1f0] sm:%s1824] %v2081
                  %v2083 = vld [vmem:[%s1831 + $0x5dc] sm:%s1824]
                  %2084 = vst [vmem:[%s1832 + $0x1f4] sm:%s1824] %v2083
                  %v2085 = vld [vmem:[%s1831 + $0x5e8] sm:%s1824]
                  %2086 = vst [vmem:[%s1832 + $0x1f8] sm:%s1824] %v2085
                  %v2087 = vld [vmem:[%s1831 + $0x5f4] sm:%s1824]
                  %2088 = vst [vmem:[%s1832 + $0x1fc] sm:%s1824] %v2087
                  %v2089 = vld [vmem:[%s1831 + $0x600] sm:%s1824]
                  %2090 = vst [vmem:[%s1832 + $0x200] sm:%s1824] %v2089
                  %v2091 = vld [vmem:[%s1831 + $0x60c] sm:%s1824]
                  %2092 = vst [vmem:[%s1832 + $0x204] sm:%s1824] %v2091
                  %v2093 = vld [vmem:[%s1831 + $0x618] sm:%s1824]
                  %2094 = vst [vmem:[%s1832 + $0x208] sm:%s1824] %v2093
                  %v2095 = vld [vmem:[%s1831 + $0x624] sm:%s1824]
                  %2096 = vst [vmem:[%s1832 + $0x20c] sm:%s1824] %v2095
                  %v2097 = vld [vmem:[%s1831 + $0x630] sm:%s1824]
                  %2098 = vst [vmem:[%s1832 + $0x210] sm:%s1824] %v2097
                  %v2099 = vld [vmem:[%s1831 + $0x63c] sm:%s1824]
                  %2100 = vst [vmem:[%s1832 + $0x214] sm:%s1824] %v2099
                  %v2101 = vld [vmem:[%s1831 + $0x648] sm:%s1824]
                  %2102 = vst [vmem:[%s1832 + $0x218] sm:%s1824] %v2101
                  %v2103 = vld [vmem:[%s1831 + $0x654] sm:%s1824]
                  %2104 = vst [vmem:[%s1832 + $0x21c] sm:%s1824] %v2103
                  %v2105 = vld [vmem:[%s1831 + $0x660] sm:%s1824]
                  %2106 = vst [vmem:[%s1832 + $0x220] sm:%s1824] %v2105
                  %v2107 = vld [vmem:[%s1831 + $0x66c] sm:%s1824]
                  %2108 = vst [vmem:[%s1832 + $0x224] sm:%s1824] %v2107
                  %v2109 = vld [vmem:[%s1831 + $0x678] sm:%s1824]
                  %2110 = vst [vmem:[%s1832 + $0x228] sm:%s1824] %v2109
                  %v2111 = vld [vmem:[%s1831 + $0x684] sm:%s1824]
                  %2112 = vst [vmem:[%s1832 + $0x22c] sm:%s1824] %v2111
                  %v2113 = vld [vmem:[%s1831 + $0x690] sm:%s1824]
                  %2114 = vst [vmem:[%s1832 + $0x230] sm:%s1824] %v2113
                  %v2115 = vld [vmem:[%s1831 + $0x69c] sm:%s1824]
                  %2116 = vst [vmem:[%s1832 + $0x234] sm:%s1824] %v2115
                  %v2117 = vld [vmem:[%s1831 + $0x6a8] sm:%s1824]
                  %2118 = vst [vmem:[%s1832 + $0x238] sm:%s1824] %v2117
                  %v2119 = vld [vmem:[%s1831 + $0x6b4] sm:%s1824]
                  %2120 = vst [vmem:[%s1832 + $0x23c] sm:%s1824] %v2119
                  %v2121 = vld [vmem:[%s1831 + $0x6c0] sm:%s1824]
                  %2122 = vst [vmem:[%s1832 + $0x240] sm:%s1824] %v2121
                  %v2123 = vld [vmem:[%s1831 + $0x6cc] sm:%s1824]
                  %2124 = vst [vmem:[%s1832 + $0x244] sm:%s1824] %v2123
                  %v2125 = vld [vmem:[%s1831 + $0x6d8] sm:%s1824]
                  %2126 = vst [vmem:[%s1832 + $0x248] sm:%s1824] %v2125
                  %v2127 = vld [vmem:[%s1831 + $0x6e4] sm:%s1824]
                  %2128 = vst [vmem:[%s1832 + $0x24c] sm:%s1824] %v2127
                  %v2129 = vld [vmem:[%s1831 + $0x6f0] sm:%s1824]
                  %2130 = vst [vmem:[%s1832 + $0x250] sm:%s1824] %v2129
                  %v2131 = vld [vmem:[%s1831 + $0x6fc] sm:%s1824]
                  %2132 = vst [vmem:[%s1832 + $0x254] sm:%s1824] %v2131
                  %v2133 = vld [vmem:[%s1831 + $0x708] sm:%s1824]
                  %2134 = vst [vmem:[%s1832 + $0x258] sm:%s1824] %v2133
                  %v2135 = vld [vmem:[%s1831 + $0x714] sm:%s1824]
                  %2136 = vst [vmem:[%s1832 + $0x25c] sm:%s1824] %v2135
                  %v2137 = vld [vmem:[%s1831 + $0x720] sm:%s1824]
                  %2138 = vst [vmem:[%s1832 + $0x260] sm:%s1824] %v2137
                  %v2139 = vld [vmem:[%s1831 + $0x72c] sm:%s1824]
                  %2140 = vst [vmem:[%s1832 + $0x264] sm:%s1824] %v2139
                  %v2141 = vld [vmem:[%s1831 + $0x738] sm:%s1824]
                  %2142 = vst [vmem:[%s1832 + $0x268] sm:%s1824] %v2141
                  %v2143 = vld [vmem:[%s1831 + $0x744] sm:%s1824]
                  %2144 = vst [vmem:[%s1832 + $0x26c] sm:%s1824] %v2143
                  %v2145 = vld [vmem:[%s1831 + $0x750] sm:%s1824]
                  %2146 = vst [vmem:[%s1832 + $0x270] sm:%s1824] %v2145
                  %v2147 = vld [vmem:[%s1831 + $0x75c] sm:%s1824]
                  %2148 = vst [vmem:[%s1832 + $0x274] sm:%s1824] %v2147
                  %v2149 = vld [vmem:[%s1831 + $0x768] sm:%s1824]
                  %2150 = vst [vmem:[%s1832 + $0x278] sm:%s1824] %v2149
                  %v2151 = vld [vmem:[%s1831 + $0x774] sm:%s1824]
                  %2152 = vst [vmem:[%s1832 + $0x27c] sm:%s1824] %v2151
                  %v2153 = vld [vmem:[%s1831 + $0x780] sm:%s1824]
                  %2154 = vst [vmem:[%s1832 + $0x280] sm:%s1824] %v2153
                  %v2155 = vld [vmem:[%s1831 + $0x78c] sm:%s1824]
                  %2156 = vst [vmem:[%s1832 + $0x284] sm:%s1824] %v2155
                  %v2157 = vld [vmem:[%s1831 + $0x798] sm:%s1824]
                  %2158 = vst [vmem:[%s1832 + $0x288] sm:%s1824] %v2157
                  %v2159 = vld [vmem:[%s1831 + $0x7a4] sm:%s1824]
                  %2160 = vst [vmem:[%s1832 + $0x28c] sm:%s1824] %v2159
                  %v2161 = vld [vmem:[%s1831 + $0x7b0] sm:%s1824]
                  %2162 = vst [vmem:[%s1832 + $0x290] sm:%s1824] %v2161
                  %v2163 = vld [vmem:[%s1831 + $0x7bc] sm:%s1824]
                  %2164 = vst [vmem:[%s1832 + $0x294] sm:%s1824] %v2163
                  %v2165 = vld [vmem:[%s1831 + $0x7c8] sm:%s1824]
                  %2166 = vst [vmem:[%s1832 + $0x298] sm:%s1824] %v2165
                  %v2167 = vld [vmem:[%s1831 + $0x7d4] sm:%s1824]
                  %2168 = vst [vmem:[%s1832 + $0x29c] sm:%s1824] %v2167
                  %v2169 = vld [vmem:[%s1831 + $0x7e0] sm:%s1824]
                  %2170 = vst [vmem:[%s1832 + $0x2a0] sm:%s1824] %v2169
                  %v2171 = vld [vmem:[%s1831 + $0x7ec] sm:%s1824]
                  %2172 = vst [vmem:[%s1832 + $0x2a4] sm:%s1824] %v2171
                  %v2173 = vld [vmem:[%s1831 + $0x7f8] sm:%s1824]
                  %2174 = vst [vmem:[%s1832 + $0x2a8] sm:%s1824] %v2173
                  %v2175 = vld [vmem:[%s1831 + $0x804] sm:%s1824]
                  %2176 = vst [vmem:[%s1832 + $0x2ac] sm:%s1824] %v2175
                  %v2177 = vld [vmem:[%s1831 + $0x810] sm:%s1824]
                  %2178 = vst [vmem:[%s1832 + $0x2b0] sm:%s1824] %v2177
                  %v2179 = vld [vmem:[%s1831 + $0x81c] sm:%s1824]
                  %2180 = vst [vmem:[%s1832 + $0x2b4] sm:%s1824] %v2179
                  %v2181 = vld [vmem:[%s1831 + $0x828] sm:%s1824]
                  %2182 = vst [vmem:[%s1832 + $0x2b8] sm:%s1824] %v2181
                  %v2183 = vld [vmem:[%s1831 + $0x834] sm:%s1824]
                  %2184 = vst [vmem:[%s1832 + $0x2bc] sm:%s1824] %v2183
                  %v2185 = vld [vmem:[%s1831 + $0x840] sm:%s1824]
                  %2186 = vst [vmem:[%s1832 + $0x2c0] sm:%s1824] %v2185
                  %v2187 = vld [vmem:[%s1831 + $0x84c] sm:%s1824]
                  %2188 = vst [vmem:[%s1832 + $0x2c4] sm:%s1824] %v2187
                  %v2189 = vld [vmem:[%s1831 + $0x858] sm:%s1824]
                  %2190 = vst [vmem:[%s1832 + $0x2c8] sm:%s1824] %v2189
                  %v2191 = vld [vmem:[%s1831 + $0x864] sm:%s1824]
                  %2192 = vst [vmem:[%s1832 + $0x2cc] sm:%s1824] %v2191
                  %v2193 = vld [vmem:[%s1831 + $0x870] sm:%s1824]
                  %2194 = vst [vmem:[%s1832 + $0x2d0] sm:%s1824] %v2193
                  %v2195 = vld [vmem:[%s1831 + $0x87c] sm:%s1824]
                  %2196 = vst [vmem:[%s1832 + $0x2d4] sm:%s1824] %v2195
                  %v2197 = vld [vmem:[%s1831 + $0x888] sm:%s1824]
                  %2198 = vst [vmem:[%s1832 + $0x2d8] sm:%s1824] %v2197
                  %v2199 = vld [vmem:[%s1831 + $0x894] sm:%s1824]
                  %2200 = vst [vmem:[%s1832 + $0x2dc] sm:%s1824] %v2199
                  %v2201 = vld [vmem:[%s1831 + $0x8a0] sm:%s1824]
                  %2202 = vst [vmem:[%s1832 + $0x2e0] sm:%s1824] %v2201
                  %v2203 = vld [vmem:[%s1831 + $0x8ac] sm:%s1824]
                  %2204 = vst [vmem:[%s1832 + $0x2e4] sm:%s1824] %v2203
                  %v2205 = vld [vmem:[%s1831 + $0x8b8] sm:%s1824]
                  %2206 = vst [vmem:[%s1832 + $0x2e8] sm:%s1824] %v2205
                  %v2207 = vld [vmem:[%s1831 + $0x8c4] sm:%s1824]
                  %2208 = vst [vmem:[%s1832 + $0x2ec] sm:%s1824] %v2207
                  %v2209 = vld [vmem:[%s1831 + $0x8d0] sm:%s1824]
                  %2210 = vst [vmem:[%s1832 + $0x2f0] sm:%s1824] %v2209
                  %v2211 = vld [vmem:[%s1831 + $0x8dc] sm:%s1824]
                  %2212 = vst [vmem:[%s1832 + $0x2f4] sm:%s1824] %v2211
                  %v2213 = vld [vmem:[%s1831 + $0x8e8] sm:%s1824]
                  %2214 = vst [vmem:[%s1832 + $0x2f8] sm:%s1824] %v2213
                  %v2215 = vld [vmem:[%s1831 + $0x8f4] sm:%s1824]
                  %2216 = vst [vmem:[%s1832 + $0x2fc] sm:%s1824] %v2215
                  %v2217 = vld [vmem:[%s1831 + $0x900] sm:%s1824]
                  %2218 = vst [vmem:[%s1832 + $0x300] sm:%s1824] %v2217
                  %v2219 = vld [vmem:[%s1831 + $0x90c] sm:%s1824]
                  %2220 = vst [vmem:[%s1832 + $0x304] sm:%s1824] %v2219
                  %v2221 = vld [vmem:[%s1831 + $0x918] sm:%s1824]
                  %2222 = vst [vmem:[%s1832 + $0x308] sm:%s1824] %v2221
                  %v2223 = vld [vmem:[%s1831 + $0x924] sm:%s1824]
                  %2224 = vst [vmem:[%s1832 + $0x30c] sm:%s1824] %v2223
                  %v2225 = vld [vmem:[%s1831 + $0x930] sm:%s1824]
                  %2226 = vst [vmem:[%s1832 + $0x310] sm:%s1824] %v2225
                  %v2227 = vld [vmem:[%s1831 + $0x93c] sm:%s1824]
                  %2228 = vst [vmem:[%s1832 + $0x314] sm:%s1824] %v2227
                  %v2229 = vld [vmem:[%s1831 + $0x948] sm:%s1824]
                  %2230 = vst [vmem:[%s1832 + $0x318] sm:%s1824] %v2229
                  %v2231 = vld [vmem:[%s1831 + $0x954] sm:%s1824]
                  %2232 = vst [vmem:[%s1832 + $0x31c] sm:%s1824] %v2231
                  %v2233 = vld [vmem:[%s1831 + $0x960] sm:%s1824]
                  %2234 = vst [vmem:[%s1832 + $0x320] sm:%s1824] %v2233
                  %v2235 = vld [vmem:[%s1831 + $0x96c] sm:%s1824]
                  %2236 = vst [vmem:[%s1832 + $0x324] sm:%s1824] %v2235
                  %v2237 = vld [vmem:[%s1831 + $0x978] sm:%s1824]
                  %2238 = vst [vmem:[%s1832 + $0x328] sm:%s1824] %v2237
                  %v2239 = vld [vmem:[%s1831 + $0x984] sm:%s1824]
                  %2240 = vst [vmem:[%s1832 + $0x32c] sm:%s1824] %v2239
                  %v2241 = vld [vmem:[%s1831 + $0x990] sm:%s1824]
                  %2242 = vst [vmem:[%s1832 + $0x330] sm:%s1824] %v2241
                  %v2243 = vld [vmem:[%s1831 + $0x99c] sm:%s1824]
                  %2244 = vst [vmem:[%s1832 + $0x334] sm:%s1824] %v2243
                  %v2245 = vld [vmem:[%s1831 + $0x9a8] sm:%s1824]
                  %2246 = vst [vmem:[%s1832 + $0x338] sm:%s1824] %v2245
                  %v2247 = vld [vmem:[%s1831 + $0x9b4] sm:%s1824]
                  %2248 = vst [vmem:[%s1832 + $0x33c] sm:%s1824] %v2247
                  %v2249 = vld [vmem:[%s1831 + $0x9c0] sm:%s1824]
                  %2250 = vst [vmem:[%s1832 + $0x340] sm:%s1824] %v2249
                  %v2251 = vld [vmem:[%s1831 + $0x9cc] sm:%s1824]
                  %2252 = vst [vmem:[%s1832 + $0x344] sm:%s1824] %v2251
                  %v2253 = vld [vmem:[%s1831 + $0x9d8] sm:%s1824]
                  %2254 = vst [vmem:[%s1832 + $0x348] sm:%s1824] %v2253
                  %v2255 = vld [vmem:[%s1831 + $0x9e4] sm:%s1824]
                  %2256 = vst [vmem:[%s1832 + $0x34c] sm:%s1824] %v2255
                  %v2257 = vld [vmem:[%s1831 + $0x9f0] sm:%s1824]
                  %2258 = vst [vmem:[%s1832 + $0x350] sm:%s1824] %v2257
                  %v2259 = vld [vmem:[%s1831 + $0x9fc] sm:%s1824]
                  %2260 = vst [vmem:[%s1832 + $0x354] sm:%s1824] %v2259
                  %v2261 = vld [vmem:[%s1831 + $0xa08] sm:%s1824]
                  %2262 = vst [vmem:[%s1832 + $0x358] sm:%s1824] %v2261
                  %v2263 = vld [vmem:[%s1831 + $0xa14] sm:%s1824]
                  %2264 = vst [vmem:[%s1832 + $0x35c] sm:%s1824] %v2263
                  %v2265 = vld [vmem:[%s1831 + $0xa20] sm:%s1824]
                  %2266 = vst [vmem:[%s1832 + $0x360] sm:%s1824] %v2265
                  %v2267 = vld [vmem:[%s1831 + $0xa2c] sm:%s1824]
                  %2268 = vst [vmem:[%s1832 + $0x364] sm:%s1824] %v2267
                  %v2269 = vld [vmem:[%s1831 + $0xa38] sm:%s1824]
                  %2270 = vst [vmem:[%s1832 + $0x368] sm:%s1824] %v2269
                  %v2271 = vld [vmem:[%s1831 + $0xa44] sm:%s1824]
                  %2272 = vst [vmem:[%s1832 + $0x36c] sm:%s1824] %v2271
                  %v2273 = vld [vmem:[%s1831 + $0xa50] sm:%s1824]
                  %2274 = vst [vmem:[%s1832 + $0x370] sm:%s1824] %v2273
                  %v2275 = vld [vmem:[%s1831 + $0xa5c] sm:%s1824]
                  %2276 = vst [vmem:[%s1832 + $0x374] sm:%s1824] %v2275
                  %v2277 = vld [vmem:[%s1831 + $0xa68] sm:%s1824]
                  %2278 = vst [vmem:[%s1832 + $0x378] sm:%s1824] %v2277
                  %v2279 = vld [vmem:[%s1831 + $0xa74] sm:%s1824]
                  %2280 = vst [vmem:[%s1832 + $0x37c] sm:%s1824] %v2279
                  %v2281 = vld [vmem:[%s1831 + $0xa80] sm:%s1824]
                  %2282 = vst [vmem:[%s1832 + $0x380] sm:%s1824] %v2281
                  %v2283 = vld [vmem:[%s1831 + $0xa8c] sm:%s1824]
                  %2284 = vst [vmem:[%s1832 + $0x384] sm:%s1824] %v2283
                  %v2285 = vld [vmem:[%s1831 + $0xa98] sm:%s1824]
                  %2286 = vst [vmem:[%s1832 + $0x388] sm:%s1824] %v2285
                  %v2287 = vld [vmem:[%s1831 + $0xaa4] sm:%s1824]
                  %2288 = vst [vmem:[%s1832 + $0x38c] sm:%s1824] %v2287
                  %v2289 = vld [vmem:[%s1831 + $0xab0] sm:%s1824]
                  %2290 = vst [vmem:[%s1832 + $0x390] sm:%s1824] %v2289
                  %v2291 = vld [vmem:[%s1831 + $0xabc] sm:%s1824]
                  %2292 = vst [vmem:[%s1832 + $0x394] sm:%s1824] %v2291
                  %v2293 = vld [vmem:[%s1831 + $0xac8] sm:%s1824]
                  %2294 = vst [vmem:[%s1832 + $0x398] sm:%s1824] %v2293
                  %v2295 = vld [vmem:[%s1831 + $0xad4] sm:%s1824]
                  %2296 = vst [vmem:[%s1832 + $0x39c] sm:%s1824] %v2295
                  %v2297 = vld [vmem:[%s1831 + $0xae0] sm:%s1824]
                  %2298 = vst [vmem:[%s1832 + $0x3a0] sm:%s1824] %v2297
                  %v2299 = vld [vmem:[%s1831 + $0xaec] sm:%s1824]
                  %2300 = vst [vmem:[%s1832 + $0x3a4] sm:%s1824] %v2299
                  %v2301 = vld [vmem:[%s1831 + $0xaf8] sm:%s1824]
                  %2302 = vst [vmem:[%s1832 + $0x3a8] sm:%s1824] %v2301
                  %v2303 = vld [vmem:[%s1831 + $0xb04] sm:%s1824]
                  %2304 = vst [vmem:[%s1832 + $0x3ac] sm:%s1824] %v2303
                  %v2305 = vld [vmem:[%s1831 + $0xb10] sm:%s1824]
                  %2306 = vst [vmem:[%s1832 + $0x3b0] sm:%s1824] %v2305
                  %v2307 = vld [vmem:[%s1831 + $0xb1c] sm:%s1824]
                  %2308 = vst [vmem:[%s1832 + $0x3b4] sm:%s1824] %v2307
                  %v2309 = vld [vmem:[%s1831 + $0xb28] sm:%s1824]
                  %2310 = vst [vmem:[%s1832 + $0x3b8] sm:%s1824] %v2309
                  %v2311 = vld [vmem:[%s1831 + $0xb34] sm:%s1824]
                  %2312 = vst [vmem:[%s1832 + $0x3bc] sm:%s1824] %v2311
                  %v2313 = vld [vmem:[%s1831 + $0xb40] sm:%s1824]
                  %2314 = vst [vmem:[%s1832 + $0x3c0] sm:%s1824] %v2313
                  %v2315 = vld [vmem:[%s1831 + $0xb4c] sm:%s1824]
                  %2316 = vst [vmem:[%s1832 + $0x3c4] sm:%s1824] %v2315
                  %v2317 = vld [vmem:[%s1831 + $0xb58] sm:%s1824]
                  %2318 = vst [vmem:[%s1832 + $0x3c8] sm:%s1824] %v2317
                  %v2319 = vld [vmem:[%s1831 + $0xb64] sm:%s1824]
                  %2320 = vst [vmem:[%s1832 + $0x3cc] sm:%s1824] %v2319
                  %v2321 = vld [vmem:[%s1831 + $0xb70] sm:%s1824]
                  %2322 = vst [vmem:[%s1832 + $0x3d0] sm:%s1824] %v2321
                  %v2323 = vld [vmem:[%s1831 + $0xb7c] sm:%s1824]
                  %2324 = vst [vmem:[%s1832 + $0x3d4] sm:%s1824] %v2323
                  %v2325 = vld [vmem:[%s1831 + $0xb88] sm:%s1824]
                  %2326 = vst [vmem:[%s1832 + $0x3d8] sm:%s1824] %v2325
                  %v2327 = vld [vmem:[%s1831 + $0xb94] sm:%s1824]
                  %2328 = vst [vmem:[%s1832 + $0x3dc] sm:%s1824] %v2327
                  %v2329 = vld [vmem:[%s1831 + $0xba0] sm:%s1824]
                  %2330 = vst [vmem:[%s1832 + $0x3e0] sm:%s1824] %v2329
                  %v2331 = vld [vmem:[%s1831 + $0xbac] sm:%s1824]
                  %2332 = vst [vmem:[%s1832 + $0x3e4] sm:%s1824] %v2331
                  %v2333 = vld [vmem:[%s1831 + $0xbb8] sm:%s1824]
                  %2334 = vst [vmem:[%s1832 + $0x3e8] sm:%s1824] %v2333
                  %v2335 = vld [vmem:[%s1831 + $0xbc4] sm:%s1824]
                  %2336 = vst [vmem:[%s1832 + $0x3ec] sm:%s1824] %v2335
                  %v2337 = vld [vmem:[%s1831 + $0xbd0] sm:%s1824]
                  %2338 = vst [vmem:[%s1832 + $0x3f0] sm:%s1824] %v2337
                  %v2339 = vld [vmem:[%s1831 + $0xbdc] sm:%s1824]
                  %2340 = vst [vmem:[%s1832 + $0x3f4] sm:%s1824] %v2339
                  %v2341 = vld [vmem:[%s1831 + $0xbe8] sm:%s1824]
                  %2342 = vst [vmem:[%s1832 + $0x3f8] sm:%s1824] %v2341
                  %v2343 = vld [vmem:[%s1831 + $0xbf4] sm:%s1824]
                  %2344 = vst [vmem:[%s1832 + $0x3fc] sm:%s1824] %v2343
                  %v2345 = vld [vmem:[%s1831 + $0xc00] sm:%s1824]
                  %2346 = vst [vmem:[%s1832 + $0x400] sm:%s1824] %v2345
                  %v2347 = vld [vmem:[%s1831 + $0xc0c] sm:%s1824]
                  %2348 = vst [vmem:[%s1832 + $0x404] sm:%s1824] %v2347
                  %v2349 = vld [vmem:[%s1831 + $0xc18] sm:%s1824]
                  %2350 = vst [vmem:[%s1832 + $0x408] sm:%s1824] %v2349
                  %v2351 = vld [vmem:[%s1831 + $0xc24] sm:%s1824]
                  %2352 = vst [vmem:[%s1832 + $0x40c] sm:%s1824] %v2351
                  %v2353 = vld [vmem:[%s1831 + $0xc30] sm:%s1824]
                  %2354 = vst [vmem:[%s1832 + $0x410] sm:%s1824] %v2353
                  %v2355 = vld [vmem:[%s1831 + $0xc3c] sm:%s1824]
                  %2356 = vst [vmem:[%s1832 + $0x414] sm:%s1824] %v2355
                  %v2357 = vld [vmem:[%s1831 + $0xc48] sm:%s1824]
                  %2358 = vst [vmem:[%s1832 + $0x418] sm:%s1824] %v2357
                  %v2359 = vld [vmem:[%s1831 + $0xc54] sm:%s1824]
                  %2360 = vst [vmem:[%s1832 + $0x41c] sm:%s1824] %v2359
                  %v2361 = vld [vmem:[%s1831 + $0xc60] sm:%s1824]
                  %2362 = vst [vmem:[%s1832 + $0x420] sm:%s1824] %v2361
                  %v2363 = vld [vmem:[%s1831 + $0xc6c] sm:%s1824]
                  %2364 = vst [vmem:[%s1832 + $0x424] sm:%s1824] %v2363
                  %v2365 = vld [vmem:[%s1831 + $0xc78] sm:%s1824]
                  %2366 = vst [vmem:[%s1832 + $0x428] sm:%s1824] %v2365
                  %v2367 = vld [vmem:[%s1831 + $0xc84] sm:%s1824]
                  %2368 = vst [vmem:[%s1832 + $0x42c] sm:%s1824] %v2367
                  %v2369 = vld [vmem:[%s1831 + $0xc90] sm:%s1824]
                  %2370 = vst [vmem:[%s1832 + $0x430] sm:%s1824] %v2369
                  %v2371 = vld [vmem:[%s1831 + $0xc9c] sm:%s1824]
                  %2372 = vst [vmem:[%s1832 + $0x434] sm:%s1824] %v2371
                  %v2373 = vld [vmem:[%s1831 + $0xca8] sm:%s1824]
                  %2374 = vst [vmem:[%s1832 + $0x438] sm:%s1824] %v2373
                  %v2375 = vld [vmem:[%s1831 + $0xcb4] sm:%s1824]
                  %2376 = vst [vmem:[%s1832 + $0x43c] sm:%s1824] %v2375
                $region70: #{block8.10} parent=57 // loop_footer
                  %s1830 = sadd.s32 1, %s1826
                $region71: #{block8.10} parent=57 // loop_footer_branch
                  %1825 = sbr.rel target = $region67
                $region72: #{block8.10} parent=57 // loop_exit
                  _
              $region58: #{block8.10} parent=31 // pred_fallthru
                _
            $region32: #{block8.10} parent=27 // pred_fallthru
              _
            // Predicated region
            $region33: #{block8.10} parent=27 // pred_check
              _
            $region34: #{block8.10} parent=27 // pred_check_branch
              %144 = sbr.rel (0) target = $region36
            $region35: #{block8.10} parent=27 // pred_region
              %s146 = ssub.s32 16, 1
              loop: start=0, step=1, limit=1
              $region37: #{block8.10} parent=35 // loop_pre_header
                _
              $region38: #{block8.10} parent=35 // loop_header
                %s148 = sphi 0, %s152
                %p149 = scmp.ge.s32.totalorder %s148, 1
                %s153 = sphi %s138, %s138
                %s154 = sphi %s136, %s136
              $region39: #{block8.10} parent=35 // loop_header_branch
                %151 = sbr.rel (%p149) target = $region43
              $region40: #{block8.10} parent=35 // loop_body
                %v155 = vld [vmem:[%s153] sm:%s146]
                %156 = vst [vmem:[%s154] sm:%s146] %v155
                %v157 = vld [vmem:[%s153 + $0xc] sm:%s146]
                %158 = vst [vmem:[%s154 + $0x4] sm:%s146] %v157
                %v159 = vld [vmem:[%s153 + $0x18] sm:%s146]
                %160 = vst [vmem:[%s154 + $0x8] sm:%s146] %v159
                %v161 = vld [vmem:[%s153 + $0x24] sm:%s146]
                %162 = vst [vmem:[%s154 + $0xc] sm:%s146] %v161
                %v163 = vld [vmem:[%s153 + $0x30] sm:%s146]
                %164 = vst [vmem:[%s154 + $0x10] sm:%s146] %v163
                %v165 = vld [vmem:[%s153 + $0x3c] sm:%s146]
                %166 = vst [vmem:[%s154 + $0x14] sm:%s146] %v165
                %v167 = vld [vmem:[%s153 + $0x48] sm:%s146]
                %168 = vst [vmem:[%s154 + $0x18] sm:%s146] %v167
                %v169 = vld [vmem:[%s153 + $0x54] sm:%s146]
                %170 = vst [vmem:[%s154 + $0x1c] sm:%s146] %v169
                %v171 = vld [vmem:[%s153 + $0x60] sm:%s146]
                %172 = vst [vmem:[%s154 + $0x20] sm:%s146] %v171
                %v173 = vld [vmem:[%s153 + $0x6c] sm:%s146]
                %174 = vst [vmem:[%s154 + $0x24] sm:%s146] %v173
                %v175 = vld [vmem:[%s153 + $0x78] sm:%s146]
                %176 = vst [vmem:[%s154 + $0x28] sm:%s146] %v175
                %v177 = vld [vmem:[%s153 + $0x84] sm:%s146]
                %178 = vst [vmem:[%s154 + $0x2c] sm:%s146] %v177
                %v179 = vld [vmem:[%s153 + $0x90] sm:%s146]
                %180 = vst [vmem:[%s154 + $0x30] sm:%s146] %v179
                %v181 = vld [vmem:[%s153 + $0x9c] sm:%s146]
                %182 = vst [vmem:[%s154 + $0x34] sm:%s146] %v181
                %v183 = vld [vmem:[%s153 + $0xa8] sm:%s146]
                %184 = vst [vmem:[%s154 + $0x38] sm:%s146] %v183
                %v185 = vld [vmem:[%s153 + $0xb4] sm:%s146]
                %186 = vst [vmem:[%s154 + $0x3c] sm:%s146] %v185
                %v187 = vld [vmem:[%s153 + $0xc0] sm:%s146]
                %188 = vst [vmem:[%s154 + $0x40] sm:%s146] %v187
                %v189 = vld [vmem:[%s153 + $0xcc] sm:%s146]
                %190 = vst [vmem:[%s154 + $0x44] sm:%s146] %v189
                %v191 = vld [vmem:[%s153 + $0xd8] sm:%s146]
                %192 = vst [vmem:[%s154 + $0x48] sm:%s146] %v191
                %v193 = vld [vmem:[%s153 + $0xe4] sm:%s146]
                %194 = vst [vmem:[%s154 + $0x4c] sm:%s146] %v193
                %v195 = vld [vmem:[%s153 + $0xf0] sm:%s146]
                %196 = vst [vmem:[%s154 + $0x50] sm:%s146] %v195
                %v197 = vld [vmem:[%s153 + $0xfc] sm:%s146]
                %198 = vst [vmem:[%s154 + $0x54] sm:%s146] %v197
                %v199 = vld [vmem:[%s153 + $0x108] sm:%s146]
                %200 = vst [vmem:[%s154 + $0x58] sm:%s146] %v199
                %v201 = vld [vmem:[%s153 + $0x114] sm:%s146]
                %202 = vst [vmem:[%s154 + $0x5c] sm:%s146] %v201
                %v203 = vld [vmem:[%s153 + $0x120] sm:%s146]
                %204 = vst [vmem:[%s154 + $0x60] sm:%s146] %v203
                %v205 = vld [vmem:[%s153 + $0x12c] sm:%s146]
                %206 = vst [vmem:[%s154 + $0x64] sm:%s146] %v205
                %v207 = vld [vmem:[%s153 + $0x138] sm:%s146]
                %208 = vst [vmem:[%s154 + $0x68] sm:%s146] %v207
                %v209 = vld [vmem:[%s153 + $0x144] sm:%s146]
                %210 = vst [vmem:[%s154 + $0x6c] sm:%s146] %v209
                %v211 = vld [vmem:[%s153 + $0x150] sm:%s146]
                %212 = vst [vmem:[%s154 + $0x70] sm:%s146] %v211
                %v213 = vld [vmem:[%s153 + $0x15c] sm:%s146]
                %214 = vst [vmem:[%s154 + $0x74] sm:%s146] %v213
                %v215 = vld [vmem:[%s153 + $0x168] sm:%s146]
                %216 = vst [vmem:[%s154 + $0x78] sm:%s146] %v215
                %v217 = vld [vmem:[%s153 + $0x174] sm:%s146]
                %218 = vst [vmem:[%s154 + $0x7c] sm:%s146] %v217
                %v219 = vld [vmem:[%s153 + $0x180] sm:%s146]
                %220 = vst [vmem:[%s154 + $0x80] sm:%s146] %v219
                %v221 = vld [vmem:[%s153 + $0x18c] sm:%s146]
                %222 = vst [vmem:[%s154 + $0x84] sm:%s146] %v221
                %v223 = vld [vmem:[%s153 + $0x198] sm:%s146]
                %224 = vst [vmem:[%s154 + $0x88] sm:%s146] %v223
                %v225 = vld [vmem:[%s153 + $0x1a4] sm:%s146]
                %226 = vst [vmem:[%s154 + $0x8c] sm:%s146] %v225
                %v227 = vld [vmem:[%s153 + $0x1b0] sm:%s146]
                %228 = vst [vmem:[%s154 + $0x90] sm:%s146] %v227
                %v229 = vld [vmem:[%s153 + $0x1bc] sm:%s146]
                %230 = vst [vmem:[%s154 + $0x94] sm:%s146] %v229
                %v231 = vld [vmem:[%s153 + $0x1c8] sm:%s146]
                %232 = vst [vmem:[%s154 + $0x98] sm:%s146] %v231
                %v233 = vld [vmem:[%s153 + $0x1d4] sm:%s146]
                %234 = vst [vmem:[%s154 + $0x9c] sm:%s146] %v233
                %v235 = vld [vmem:[%s153 + $0x1e0] sm:%s146]
                %236 = vst [vmem:[%s154 + $0xa0] sm:%s146] %v235
                %v237 = vld [vmem:[%s153 + $0x1ec] sm:%s146]
                %238 = vst [vmem:[%s154 + $0xa4] sm:%s146] %v237
                %v239 = vld [vmem:[%s153 + $0x1f8] sm:%s146]
                %240 = vst [vmem:[%s154 + $0xa8] sm:%s146] %v239
                %v241 = vld [vmem:[%s153 + $0x204] sm:%s146]
                %242 = vst [vmem:[%s154 + $0xac] sm:%s146] %v241
                %v243 = vld [vmem:[%s153 + $0x210] sm:%s146]
                %244 = vst [vmem:[%s154 + $0xb0] sm:%s146] %v243
                %v245 = vld [vmem:[%s153 + $0x21c] sm:%s146]
                %246 = vst [vmem:[%s154 + $0xb4] sm:%s146] %v245
                %v247 = vld [vmem:[%s153 + $0x228] sm:%s146]
                %248 = vst [vmem:[%s154 + $0xb8] sm:%s146] %v247
                %v249 = vld [vmem:[%s153 + $0x234] sm:%s146]
                %250 = vst [vmem:[%s154 + $0xbc] sm:%s146] %v249
                %v251 = vld [vmem:[%s153 + $0x240] sm:%s146]
                %252 = vst [vmem:[%s154 + $0xc0] sm:%s146] %v251
                %v253 = vld [vmem:[%s153 + $0x24c] sm:%s146]
                %254 = vst [vmem:[%s154 + $0xc4] sm:%s146] %v253
                %v255 = vld [vmem:[%s153 + $0x258] sm:%s146]
                %256 = vst [vmem:[%s154 + $0xc8] sm:%s146] %v255
                %v257 = vld [vmem:[%s153 + $0x264] sm:%s146]
                %258 = vst [vmem:[%s154 + $0xcc] sm:%s146] %v257
                %v259 = vld [vmem:[%s153 + $0x270] sm:%s146]
                %260 = vst [vmem:[%s154 + $0xd0] sm:%s146] %v259
                %v261 = vld [vmem:[%s153 + $0x27c] sm:%s146]
                %262 = vst [vmem:[%s154 + $0xd4] sm:%s146] %v261
                %v263 = vld [vmem:[%s153 + $0x288] sm:%s146]
                %264 = vst [vmem:[%s154 + $0xd8] sm:%s146] %v263
                %v265 = vld [vmem:[%s153 + $0x294] sm:%s146]
                %266 = vst [vmem:[%s154 + $0xdc] sm:%s146] %v265
                %v267 = vld [vmem:[%s153 + $0x2a0] sm:%s146]
                %268 = vst [vmem:[%s154 + $0xe0] sm:%s146] %v267
                %v269 = vld [vmem:[%s153 + $0x2ac] sm:%s146]
                %270 = vst [vmem:[%s154 + $0xe4] sm:%s146] %v269
                %v271 = vld [vmem:[%s153 + $0x2b8] sm:%s146]
                %272 = vst [vmem:[%s154 + $0xe8] sm:%s146] %v271
                %v273 = vld [vmem:[%s153 + $0x2c4] sm:%s146]
                %274 = vst [vmem:[%s154 + $0xec] sm:%s146] %v273
                %v275 = vld [vmem:[%s153 + $0x2d0] sm:%s146]
                %276 = vst [vmem:[%s154 + $0xf0] sm:%s146] %v275
                %v277 = vld [vmem:[%s153 + $0x2dc] sm:%s146]
                %278 = vst [vmem:[%s154 + $0xf4] sm:%s146] %v277
                %v279 = vld [vmem:[%s153 + $0x2e8] sm:%s146]
                %280 = vst [vmem:[%s154 + $0xf8] sm:%s146] %v279
                %v281 = vld [vmem:[%s153 + $0x2f4] sm:%s146]
                %282 = vst [vmem:[%s154 + $0xfc] sm:%s146] %v281
                %v283 = vld [vmem:[%s153 + $0x300] sm:%s146]
                %284 = vst [vmem:[%s154 + $0x100] sm:%s146] %v283
                %v285 = vld [vmem:[%s153 + $0x30c] sm:%s146]
                %286 = vst [vmem:[%s154 + $0x104] sm:%s146] %v285
                %v287 = vld [vmem:[%s153 + $0x318] sm:%s146]
                %288 = vst [vmem:[%s154 + $0x108] sm:%s146] %v287
                %v289 = vld [vmem:[%s153 + $0x324] sm:%s146]
                %290 = vst [vmem:[%s154 + $0x10c] sm:%s146] %v289
                %v291 = vld [vmem:[%s153 + $0x330] sm:%s146]
                %292 = vst [vmem:[%s154 + $0x110] sm:%s146] %v291
                %v293 = vld [vmem:[%s153 + $0x33c] sm:%s146]
                %294 = vst [vmem:[%s154 + $0x114] sm:%s146] %v293
                %v295 = vld [vmem:[%s153 + $0x348] sm:%s146]
                %296 = vst [vmem:[%s154 + $0x118] sm:%s146] %v295
                %v297 = vld [vmem:[%s153 + $0x354] sm:%s146]
                %298 = vst [vmem:[%s154 + $0x11c] sm:%s146] %v297
                %v299 = vld [vmem:[%s153 + $0x360] sm:%s146]
                %300 = vst [vmem:[%s154 + $0x120] sm:%s146] %v299
                %v301 = vld [vmem:[%s153 + $0x36c] sm:%s146]
                %302 = vst [vmem:[%s154 + $0x124] sm:%s146] %v301
                %v303 = vld [vmem:[%s153 + $0x378] sm:%s146]
                %304 = vst [vmem:[%s154 + $0x128] sm:%s146] %v303
                %v305 = vld [vmem:[%s153 + $0x384] sm:%s146]
                %306 = vst [vmem:[%s154 + $0x12c] sm:%s146] %v305
                %v307 = vld [vmem:[%s153 + $0x390] sm:%s146]
                %308 = vst [vmem:[%s154 + $0x130] sm:%s146] %v307
                %v309 = vld [vmem:[%s153 + $0x39c] sm:%s146]
                %310 = vst [vmem:[%s154 + $0x134] sm:%s146] %v309
                %v311 = vld [vmem:[%s153 + $0x3a8] sm:%s146]
                %312 = vst [vmem:[%s154 + $0x138] sm:%s146] %v311
                %v313 = vld [vmem:[%s153 + $0x3b4] sm:%s146]
                %314 = vst [vmem:[%s154 + $0x13c] sm:%s146] %v313
                %v315 = vld [vmem:[%s153 + $0x3c0] sm:%s146]
                %316 = vst [vmem:[%s154 + $0x140] sm:%s146] %v315
                %v317 = vld [vmem:[%s153 + $0x3cc] sm:%s146]
                %318 = vst [vmem:[%s154 + $0x144] sm:%s146] %v317
                %v319 = vld [vmem:[%s153 + $0x3d8] sm:%s146]
                %320 = vst [vmem:[%s154 + $0x148] sm:%s146] %v319
                %v321 = vld [vmem:[%s153 + $0x3e4] sm:%s146]
                %322 = vst [vmem:[%s154 + $0x14c] sm:%s146] %v321
                %v323 = vld [vmem:[%s153 + $0x3f0] sm:%s146]
                %324 = vst [vmem:[%s154 + $0x150] sm:%s146] %v323
                %v325 = vld [vmem:[%s153 + $0x3fc] sm:%s146]
                %326 = vst [vmem:[%s154 + $0x154] sm:%s146] %v325
                %v327 = vld [vmem:[%s153 + $0x408] sm:%s146]
                %328 = vst [vmem:[%s154 + $0x158] sm:%s146] %v327
                %v329 = vld [vmem:[%s153 + $0x414] sm:%s146]
                %330 = vst [vmem:[%s154 + $0x15c] sm:%s146] %v329
                %v331 = vld [vmem:[%s153 + $0x420] sm:%s146]
                %332 = vst [vmem:[%s154 + $0x160] sm:%s146] %v331
                %v333 = vld [vmem:[%s153 + $0x42c] sm:%s146]
                %334 = vst [vmem:[%s154 + $0x164] sm:%s146] %v333
                %v335 = vld [vmem:[%s153 + $0x438] sm:%s146]
                %336 = vst [vmem:[%s154 + $0x168] sm:%s146] %v335
                %v337 = vld [vmem:[%s153 + $0x444] sm:%s146]
                %338 = vst [vmem:[%s154 + $0x16c] sm:%s146] %v337
                %v339 = vld [vmem:[%s153 + $0x450] sm:%s146]
                %340 = vst [vmem:[%s154 + $0x170] sm:%s146] %v339
                %v341 = vld [vmem:[%s153 + $0x45c] sm:%s146]
                %342 = vst [vmem:[%s154 + $0x174] sm:%s146] %v341
                %v343 = vld [vmem:[%s153 + $0x468] sm:%s146]
                %344 = vst [vmem:[%s154 + $0x178] sm:%s146] %v343
                %v345 = vld [vmem:[%s153 + $0x474] sm:%s146]
                %346 = vst [vmem:[%s154 + $0x17c] sm:%s146] %v345
                %v347 = vld [vmem:[%s153 + $0x480] sm:%s146]
                %348 = vst [vmem:[%s154 + $0x180] sm:%s146] %v347
                %v349 = vld [vmem:[%s153 + $0x48c] sm:%s146]
                %350 = vst [vmem:[%s154 + $0x184] sm:%s146] %v349
                %v351 = vld [vmem:[%s153 + $0x498] sm:%s146]
                %352 = vst [vmem:[%s154 + $0x188] sm:%s146] %v351
                %v353 = vld [vmem:[%s153 + $0x4a4] sm:%s146]
                %354 = vst [vmem:[%s154 + $0x18c] sm:%s146] %v353
                %v355 = vld [vmem:[%s153 + $0x4b0] sm:%s146]
                %356 = vst [vmem:[%s154 + $0x190] sm:%s146] %v355
                %v357 = vld [vmem:[%s153 + $0x4bc] sm:%s146]
                %358 = vst [vmem:[%s154 + $0x194] sm:%s146] %v357
                %v359 = vld [vmem:[%s153 + $0x4c8] sm:%s146]
                %360 = vst [vmem:[%s154 + $0x198] sm:%s146] %v359
                %v361 = vld [vmem:[%s153 + $0x4d4] sm:%s146]
                %362 = vst [vmem:[%s154 + $0x19c] sm:%s146] %v361
                %v363 = vld [vmem:[%s153 + $0x4e0] sm:%s146]
                %364 = vst [vmem:[%s154 + $0x1a0] sm:%s146] %v363
                %v365 = vld [vmem:[%s153 + $0x4ec] sm:%s146]
                %366 = vst [vmem:[%s154 + $0x1a4] sm:%s146] %v365
                %v367 = vld [vmem:[%s153 + $0x4f8] sm:%s146]
                %368 = vst [vmem:[%s154 + $0x1a8] sm:%s146] %v367
                %v369 = vld [vmem:[%s153 + $0x504] sm:%s146]
                %370 = vst [vmem:[%s154 + $0x1ac] sm:%s146] %v369
                %v371 = vld [vmem:[%s153 + $0x510] sm:%s146]
                %372 = vst [vmem:[%s154 + $0x1b0] sm:%s146] %v371
                %v373 = vld [vmem:[%s153 + $0x51c] sm:%s146]
                %374 = vst [vmem:[%s154 + $0x1b4] sm:%s146] %v373
                %v375 = vld [vmem:[%s153 + $0x528] sm:%s146]
                %376 = vst [vmem:[%s154 + $0x1b8] sm:%s146] %v375
                %v377 = vld [vmem:[%s153 + $0x534] sm:%s146]
                %378 = vst [vmem:[%s154 + $0x1bc] sm:%s146] %v377
                %v379 = vld [vmem:[%s153 + $0x540] sm:%s146]
                %380 = vst [vmem:[%s154 + $0x1c0] sm:%s146] %v379
                %v381 = vld [vmem:[%s153 + $0x54c] sm:%s146]
                %382 = vst [vmem:[%s154 + $0x1c4] sm:%s146] %v381
                %v383 = vld [vmem:[%s153 + $0x558] sm:%s146]
                %384 = vst [vmem:[%s154 + $0x1c8] sm:%s146] %v383
                %v385 = vld [vmem:[%s153 + $0x564] sm:%s146]
                %386 = vst [vmem:[%s154 + $0x1cc] sm:%s146] %v385
                %v387 = vld [vmem:[%s153 + $0x570] sm:%s146]
                %388 = vst [vmem:[%s154 + $0x1d0] sm:%s146] %v387
                %v389 = vld [vmem:[%s153 + $0x57c] sm:%s146]
                %390 = vst [vmem:[%s154 + $0x1d4] sm:%s146] %v389
                %v391 = vld [vmem:[%s153 + $0x588] sm:%s146]
                %392 = vst [vmem:[%s154 + $0x1d8] sm:%s146] %v391
                %v393 = vld [vmem:[%s153 + $0x594] sm:%s146]
                %394 = vst [vmem:[%s154 + $0x1dc] sm:%s146] %v393
                %v395 = vld [vmem:[%s153 + $0x5a0] sm:%s146]
                %396 = vst [vmem:[%s154 + $0x1e0] sm:%s146] %v395
                %v397 = vld [vmem:[%s153 + $0x5ac] sm:%s146]
                %398 = vst [vmem:[%s154 + $0x1e4] sm:%s146] %v397
                %v399 = vld [vmem:[%s153 + $0x5b8] sm:%s146]
                %400 = vst [vmem:[%s154 + $0x1e8] sm:%s146] %v399
                %v401 = vld [vmem:[%s153 + $0x5c4] sm:%s146]
                %402 = vst [vmem:[%s154 + $0x1ec] sm:%s146] %v401
                %v403 = vld [vmem:[%s153 + $0x5d0] sm:%s146]
                %404 = vst [vmem:[%s154 + $0x1f0] sm:%s146] %v403
                %v405 = vld [vmem:[%s153 + $0x5dc] sm:%s146]
                %406 = vst [vmem:[%s154 + $0x1f4] sm:%s146] %v405
                %v407 = vld [vmem:[%s153 + $0x5e8] sm:%s146]
                %408 = vst [vmem:[%s154 + $0x1f8] sm:%s146] %v407
                %v409 = vld [vmem:[%s153 + $0x5f4] sm:%s146]
                %410 = vst [vmem:[%s154 + $0x1fc] sm:%s146] %v409
                %v411 = vld [vmem:[%s153 + $0x600] sm:%s146]
                %412 = vst [vmem:[%s154 + $0x200] sm:%s146] %v411
                %v413 = vld [vmem:[%s153 + $0x60c] sm:%s146]
                %414 = vst [vmem:[%s154 + $0x204] sm:%s146] %v413
                %v415 = vld [vmem:[%s153 + $0x618] sm:%s146]
                %416 = vst [vmem:[%s154 + $0x208] sm:%s146] %v415
                %v417 = vld [vmem:[%s153 + $0x624] sm:%s146]
                %418 = vst [vmem:[%s154 + $0x20c] sm:%s146] %v417
                %v419 = vld [vmem:[%s153 + $0x630] sm:%s146]
                %420 = vst [vmem:[%s154 + $0x210] sm:%s146] %v419
                %v421 = vld [vmem:[%s153 + $0x63c] sm:%s146]
                %422 = vst [vmem:[%s154 + $0x214] sm:%s146] %v421
                %v423 = vld [vmem:[%s153 + $0x648] sm:%s146]
                %424 = vst [vmem:[%s154 + $0x218] sm:%s146] %v423
                %v425 = vld [vmem:[%s153 + $0x654] sm:%s146]
                %426 = vst [vmem:[%s154 + $0x21c] sm:%s146] %v425
                %v427 = vld [vmem:[%s153 + $0x660] sm:%s146]
                %428 = vst [vmem:[%s154 + $0x220] sm:%s146] %v427
                %v429 = vld [vmem:[%s153 + $0x66c] sm:%s146]
                %430 = vst [vmem:[%s154 + $0x224] sm:%s146] %v429
                %v431 = vld [vmem:[%s153 + $0x678] sm:%s146]
                %432 = vst [vmem:[%s154 + $0x228] sm:%s146] %v431
                %v433 = vld [vmem:[%s153 + $0x684] sm:%s146]
                %434 = vst [vmem:[%s154 + $0x22c] sm:%s146] %v433
                %v435 = vld [vmem:[%s153 + $0x690] sm:%s146]
                %436 = vst [vmem:[%s154 + $0x230] sm:%s146] %v435
                %v437 = vld [vmem:[%s153 + $0x69c] sm:%s146]
                %438 = vst [vmem:[%s154 + $0x234] sm:%s146] %v437
                %v439 = vld [vmem:[%s153 + $0x6a8] sm:%s146]
                %440 = vst [vmem:[%s154 + $0x238] sm:%s146] %v439
                %v441 = vld [vmem:[%s153 + $0x6b4] sm:%s146]
                %442 = vst [vmem:[%s154 + $0x23c] sm:%s146] %v441
                %v443 = vld [vmem:[%s153 + $0x6c0] sm:%s146]
                %444 = vst [vmem:[%s154 + $0x240] sm:%s146] %v443
                %v445 = vld [vmem:[%s153 + $0x6cc] sm:%s146]
                %446 = vst [vmem:[%s154 + $0x244] sm:%s146] %v445
                %v447 = vld [vmem:[%s153 + $0x6d8] sm:%s146]
                %448 = vst [vmem:[%s154 + $0x248] sm:%s146] %v447
                %v449 = vld [vmem:[%s153 + $0x6e4] sm:%s146]
                %450 = vst [vmem:[%s154 + $0x24c] sm:%s146] %v449
                %v451 = vld [vmem:[%s153 + $0x6f0] sm:%s146]
                %452 = vst [vmem:[%s154 + $0x250] sm:%s146] %v451
                %v453 = vld [vmem:[%s153 + $0x6fc] sm:%s146]
                %454 = vst [vmem:[%s154 + $0x254] sm:%s146] %v453
                %v455 = vld [vmem:[%s153 + $0x708] sm:%s146]
                %456 = vst [vmem:[%s154 + $0x258] sm:%s146] %v455
                %v457 = vld [vmem:[%s153 + $0x714] sm:%s146]
                %458 = vst [vmem:[%s154 + $0x25c] sm:%s146] %v457
                %v459 = vld [vmem:[%s153 + $0x720] sm:%s146]
                %460 = vst [vmem:[%s154 + $0x260] sm:%s146] %v459
                %v461 = vld [vmem:[%s153 + $0x72c] sm:%s146]
                %462 = vst [vmem:[%s154 + $0x264] sm:%s146] %v461
                %v463 = vld [vmem:[%s153 + $0x738] sm:%s146]
                %464 = vst [vmem:[%s154 + $0x268] sm:%s146] %v463
                %v465 = vld [vmem:[%s153 + $0x744] sm:%s146]
                %466 = vst [vmem:[%s154 + $0x26c] sm:%s146] %v465
                %v467 = vld [vmem:[%s153 + $0x750] sm:%s146]
                %468 = vst [vmem:[%s154 + $0x270] sm:%s146] %v467
                %v469 = vld [vmem:[%s153 + $0x75c] sm:%s146]
                %470 = vst [vmem:[%s154 + $0x274] sm:%s146] %v469
                %v471 = vld [vmem:[%s153 + $0x768] sm:%s146]
                %472 = vst [vmem:[%s154 + $0x278] sm:%s146] %v471
                %v473 = vld [vmem:[%s153 + $0x774] sm:%s146]
                %474 = vst [vmem:[%s154 + $0x27c] sm:%s146] %v473
                %v475 = vld [vmem:[%s153 + $0x780] sm:%s146]
                %476 = vst [vmem:[%s154 + $0x280] sm:%s146] %v475
                %v477 = vld [vmem:[%s153 + $0x78c] sm:%s146]
                %478 = vst [vmem:[%s154 + $0x284] sm:%s146] %v477
                %v479 = vld [vmem:[%s153 + $0x798] sm:%s146]
                %480 = vst [vmem:[%s154 + $0x288] sm:%s146] %v479
                %v481 = vld [vmem:[%s153 + $0x7a4] sm:%s146]
                %482 = vst [vmem:[%s154 + $0x28c] sm:%s146] %v481
                %v483 = vld [vmem:[%s153 + $0x7b0] sm:%s146]
                %484 = vst [vmem:[%s154 + $0x290] sm:%s146] %v483
                %v485 = vld [vmem:[%s153 + $0x7bc] sm:%s146]
                %486 = vst [vmem:[%s154 + $0x294] sm:%s146] %v485
                %v487 = vld [vmem:[%s153 + $0x7c8] sm:%s146]
                %488 = vst [vmem:[%s154 + $0x298] sm:%s146] %v487
                %v489 = vld [vmem:[%s153 + $0x7d4] sm:%s146]
                %490 = vst [vmem:[%s154 + $0x29c] sm:%s146] %v489
                %v491 = vld [vmem:[%s153 + $0x7e0] sm:%s146]
                %492 = vst [vmem:[%s154 + $0x2a0] sm:%s146] %v491
                %v493 = vld [vmem:[%s153 + $0x7ec] sm:%s146]
                %494 = vst [vmem:[%s154 + $0x2a4] sm:%s146] %v493
                %v495 = vld [vmem:[%s153 + $0x7f8] sm:%s146]
                %496 = vst [vmem:[%s154 + $0x2a8] sm:%s146] %v495
                %v497 = vld [vmem:[%s153 + $0x804] sm:%s146]
                %498 = vst [vmem:[%s154 + $0x2ac] sm:%s146] %v497
                %v499 = vld [vmem:[%s153 + $0x810] sm:%s146]
                %500 = vst [vmem:[%s154 + $0x2b0] sm:%s146] %v499
                %v501 = vld [vmem:[%s153 + $0x81c] sm:%s146]
                %502 = vst [vmem:[%s154 + $0x2b4] sm:%s146] %v501
                %v503 = vld [vmem:[%s153 + $0x828] sm:%s146]
                %504 = vst [vmem:[%s154 + $0x2b8] sm:%s146] %v503
                %v505 = vld [vmem:[%s153 + $0x834] sm:%s146]
                %506 = vst [vmem:[%s154 + $0x2bc] sm:%s146] %v505
                %v507 = vld [vmem:[%s153 + $0x840] sm:%s146]
                %508 = vst [vmem:[%s154 + $0x2c0] sm:%s146] %v507
                %v509 = vld [vmem:[%s153 + $0x84c] sm:%s146]
                %510 = vst [vmem:[%s154 + $0x2c4] sm:%s146] %v509
                %v511 = vld [vmem:[%s153 + $0x858] sm:%s146]
                %512 = vst [vmem:[%s154 + $0x2c8] sm:%s146] %v511
                %v513 = vld [vmem:[%s153 + $0x864] sm:%s146]
                %514 = vst [vmem:[%s154 + $0x2cc] sm:%s146] %v513
                %v515 = vld [vmem:[%s153 + $0x870] sm:%s146]
                %516 = vst [vmem:[%s154 + $0x2d0] sm:%s146] %v515
                %v517 = vld [vmem:[%s153 + $0x87c] sm:%s146]
                %518 = vst [vmem:[%s154 + $0x2d4] sm:%s146] %v517
                %v519 = vld [vmem:[%s153 + $0x888] sm:%s146]
                %520 = vst [vmem:[%s154 + $0x2d8] sm:%s146] %v519
                %v521 = vld [vmem:[%s153 + $0x894] sm:%s146]
                %522 = vst [vmem:[%s154 + $0x2dc] sm:%s146] %v521
                %v523 = vld [vmem:[%s153 + $0x8a0] sm:%s146]
                %524 = vst [vmem:[%s154 + $0x2e0] sm:%s146] %v523
                %v525 = vld [vmem:[%s153 + $0x8ac] sm:%s146]
                %526 = vst [vmem:[%s154 + $0x2e4] sm:%s146] %v525
                %v527 = vld [vmem:[%s153 + $0x8b8] sm:%s146]
                %528 = vst [vmem:[%s154 + $0x2e8] sm:%s146] %v527
                %v529 = vld [vmem:[%s153 + $0x8c4] sm:%s146]
                %530 = vst [vmem:[%s154 + $0x2ec] sm:%s146] %v529
                %v531 = vld [vmem:[%s153 + $0x8d0] sm:%s146]
                %532 = vst [vmem:[%s154 + $0x2f0] sm:%s146] %v531
                %v533 = vld [vmem:[%s153 + $0x8dc] sm:%s146]
                %534 = vst [vmem:[%s154 + $0x2f4] sm:%s146] %v533
                %v535 = vld [vmem:[%s153 + $0x8e8] sm:%s146]
                %536 = vst [vmem:[%s154 + $0x2f8] sm:%s146] %v535
                %v537 = vld [vmem:[%s153 + $0x8f4] sm:%s146]
                %538 = vst [vmem:[%s154 + $0x2fc] sm:%s146] %v537
                %v539 = vld [vmem:[%s153 + $0x900] sm:%s146]
                %540 = vst [vmem:[%s154 + $0x300] sm:%s146] %v539
                %v541 = vld [vmem:[%s153 + $0x90c] sm:%s146]
                %542 = vst [vmem:[%s154 + $0x304] sm:%s146] %v541
                %v543 = vld [vmem:[%s153 + $0x918] sm:%s146]
                %544 = vst [vmem:[%s154 + $0x308] sm:%s146] %v543
                %v545 = vld [vmem:[%s153 + $0x924] sm:%s146]
                %546 = vst [vmem:[%s154 + $0x30c] sm:%s146] %v545
                %v547 = vld [vmem:[%s153 + $0x930] sm:%s146]
                %548 = vst [vmem:[%s154 + $0x310] sm:%s146] %v547
                %v549 = vld [vmem:[%s153 + $0x93c] sm:%s146]
                %550 = vst [vmem:[%s154 + $0x314] sm:%s146] %v549
                %v551 = vld [vmem:[%s153 + $0x948] sm:%s146]
                %552 = vst [vmem:[%s154 + $0x318] sm:%s146] %v551
                %v553 = vld [vmem:[%s153 + $0x954] sm:%s146]
                %554 = vst [vmem:[%s154 + $0x31c] sm:%s146] %v553
                %v555 = vld [vmem:[%s153 + $0x960] sm:%s146]
                %556 = vst [vmem:[%s154 + $0x320] sm:%s146] %v555
                %v557 = vld [vmem:[%s153 + $0x96c] sm:%s146]
                %558 = vst [vmem:[%s154 + $0x324] sm:%s146] %v557
                %v559 = vld [vmem:[%s153 + $0x978] sm:%s146]
                %560 = vst [vmem:[%s154 + $0x328] sm:%s146] %v559
                %v561 = vld [vmem:[%s153 + $0x984] sm:%s146]
                %562 = vst [vmem:[%s154 + $0x32c] sm:%s146] %v561
                %v563 = vld [vmem:[%s153 + $0x990] sm:%s146]
                %564 = vst [vmem:[%s154 + $0x330] sm:%s146] %v563
                %v565 = vld [vmem:[%s153 + $0x99c] sm:%s146]
                %566 = vst [vmem:[%s154 + $0x334] sm:%s146] %v565
                %v567 = vld [vmem:[%s153 + $0x9a8] sm:%s146]
                %568 = vst [vmem:[%s154 + $0x338] sm:%s146] %v567
                %v569 = vld [vmem:[%s153 + $0x9b4] sm:%s146]
                %570 = vst [vmem:[%s154 + $0x33c] sm:%s146] %v569
                %v571 = vld [vmem:[%s153 + $0x9c0] sm:%s146]
                %572 = vst [vmem:[%s154 + $0x340] sm:%s146] %v571
                %v573 = vld [vmem:[%s153 + $0x9cc] sm:%s146]
                %574 = vst [vmem:[%s154 + $0x344] sm:%s146] %v573
                %v575 = vld [vmem:[%s153 + $0x9d8] sm:%s146]
                %576 = vst [vmem:[%s154 + $0x348] sm:%s146] %v575
                %v577 = vld [vmem:[%s153 + $0x9e4] sm:%s146]
                %578 = vst [vmem:[%s154 + $0x34c] sm:%s146] %v577
                %v579 = vld [vmem:[%s153 + $0x9f0] sm:%s146]
                %580 = vst [vmem:[%s154 + $0x350] sm:%s146] %v579
                %v581 = vld [vmem:[%s153 + $0x9fc] sm:%s146]
                %582 = vst [vmem:[%s154 + $0x354] sm:%s146] %v581
                %v583 = vld [vmem:[%s153 + $0xa08] sm:%s146]
                %584 = vst [vmem:[%s154 + $0x358] sm:%s146] %v583
                %v585 = vld [vmem:[%s153 + $0xa14] sm:%s146]
                %586 = vst [vmem:[%s154 + $0x35c] sm:%s146] %v585
                %v587 = vld [vmem:[%s153 + $0xa20] sm:%s146]
                %588 = vst [vmem:[%s154 + $0x360] sm:%s146] %v587
                %v589 = vld [vmem:[%s153 + $0xa2c] sm:%s146]
                %590 = vst [vmem:[%s154 + $0x364] sm:%s146] %v589
                %v591 = vld [vmem:[%s153 + $0xa38] sm:%s146]
                %592 = vst [vmem:[%s154 + $0x368] sm:%s146] %v591
                %v593 = vld [vmem:[%s153 + $0xa44] sm:%s146]
                %594 = vst [vmem:[%s154 + $0x36c] sm:%s146] %v593
                %v595 = vld [vmem:[%s153 + $0xa50] sm:%s146]
                %596 = vst [vmem:[%s154 + $0x370] sm:%s146] %v595
                %v597 = vld [vmem:[%s153 + $0xa5c] sm:%s146]
                %598 = vst [vmem:[%s154 + $0x374] sm:%s146] %v597
                %v599 = vld [vmem:[%s153 + $0xa68] sm:%s146]
                %600 = vst [vmem:[%s154 + $0x378] sm:%s146] %v599
                %v601 = vld [vmem:[%s153 + $0xa74] sm:%s146]
                %602 = vst [vmem:[%s154 + $0x37c] sm:%s146] %v601
                %v603 = vld [vmem:[%s153 + $0xa80] sm:%s146]
                %604 = vst [vmem:[%s154 + $0x380] sm:%s146] %v603
                %v605 = vld [vmem:[%s153 + $0xa8c] sm:%s146]
                %606 = vst [vmem:[%s154 + $0x384] sm:%s146] %v605
                %v607 = vld [vmem:[%s153 + $0xa98] sm:%s146]
                %608 = vst [vmem:[%s154 + $0x388] sm:%s146] %v607
                %v609 = vld [vmem:[%s153 + $0xaa4] sm:%s146]
                %610 = vst [vmem:[%s154 + $0x38c] sm:%s146] %v609
                %v611 = vld [vmem:[%s153 + $0xab0] sm:%s146]
                %612 = vst [vmem:[%s154 + $0x390] sm:%s146] %v611
                %v613 = vld [vmem:[%s153 + $0xabc] sm:%s146]
                %614 = vst [vmem:[%s154 + $0x394] sm:%s146] %v613
                %v615 = vld [vmem:[%s153 + $0xac8] sm:%s146]
                %616 = vst [vmem:[%s154 + $0x398] sm:%s146] %v615
                %v617 = vld [vmem:[%s153 + $0xad4] sm:%s146]
                %618 = vst [vmem:[%s154 + $0x39c] sm:%s146] %v617
                %v619 = vld [vmem:[%s153 + $0xae0] sm:%s146]
                %620 = vst [vmem:[%s154 + $0x3a0] sm:%s146] %v619
                %v621 = vld [vmem:[%s153 + $0xaec] sm:%s146]
                %622 = vst [vmem:[%s154 + $0x3a4] sm:%s146] %v621
                %v623 = vld [vmem:[%s153 + $0xaf8] sm:%s146]
                %624 = vst [vmem:[%s154 + $0x3a8] sm:%s146] %v623
                %v625 = vld [vmem:[%s153 + $0xb04] sm:%s146]
                %626 = vst [vmem:[%s154 + $0x3ac] sm:%s146] %v625
                %v627 = vld [vmem:[%s153 + $0xb10] sm:%s146]
                %628 = vst [vmem:[%s154 + $0x3b0] sm:%s146] %v627
                %v629 = vld [vmem:[%s153 + $0xb1c] sm:%s146]
                %630 = vst [vmem:[%s154 + $0x3b4] sm:%s146] %v629
                %v631 = vld [vmem:[%s153 + $0xb28] sm:%s146]
                %632 = vst [vmem:[%s154 + $0x3b8] sm:%s146] %v631
                %v633 = vld [vmem:[%s153 + $0xb34] sm:%s146]
                %634 = vst [vmem:[%s154 + $0x3bc] sm:%s146] %v633
                %v635 = vld [vmem:[%s153 + $0xb40] sm:%s146]
                %636 = vst [vmem:[%s154 + $0x3c0] sm:%s146] %v635
                %v637 = vld [vmem:[%s153 + $0xb4c] sm:%s146]
                %638 = vst [vmem:[%s154 + $0x3c4] sm:%s146] %v637
                %v639 = vld [vmem:[%s153 + $0xb58] sm:%s146]
                %640 = vst [vmem:[%s154 + $0x3c8] sm:%s146] %v639
                %v641 = vld [vmem:[%s153 + $0xb64] sm:%s146]
                %642 = vst [vmem:[%s154 + $0x3cc] sm:%s146] %v641
                %v643 = vld [vmem:[%s153 + $0xb70] sm:%s146]
                %644 = vst [vmem:[%s154 + $0x3d0] sm:%s146] %v643
                %v645 = vld [vmem:[%s153 + $0xb7c] sm:%s146]
                %646 = vst [vmem:[%s154 + $0x3d4] sm:%s146] %v645
                %v647 = vld [vmem:[%s153 + $0xb88] sm:%s146]
                %648 = vst [vmem:[%s154 + $0x3d8] sm:%s146] %v647
                %v649 = vld [vmem:[%s153 + $0xb94] sm:%s146]
                %650 = vst [vmem:[%s154 + $0x3dc] sm:%s146] %v649
                %v651 = vld [vmem:[%s153 + $0xba0] sm:%s146]
                %652 = vst [vmem:[%s154 + $0x3e0] sm:%s146] %v651
                %v653 = vld [vmem:[%s153 + $0xbac] sm:%s146]
                %654 = vst [vmem:[%s154 + $0x3e4] sm:%s146] %v653
                %v655 = vld [vmem:[%s153 + $0xbb8] sm:%s146]
                %656 = vst [vmem:[%s154 + $0x3e8] sm:%s146] %v655
                %v657 = vld [vmem:[%s153 + $0xbc4] sm:%s146]
                %658 = vst [vmem:[%s154 + $0x3ec] sm:%s146] %v657
                %v659 = vld [vmem:[%s153 + $0xbd0] sm:%s146]
                %660 = vst [vmem:[%s154 + $0x3f0] sm:%s146] %v659
                %v661 = vld [vmem:[%s153 + $0xbdc] sm:%s146]
                %662 = vst [vmem:[%s154 + $0x3f4] sm:%s146] %v661
                %v663 = vld [vmem:[%s153 + $0xbe8] sm:%s146]
                %664 = vst [vmem:[%s154 + $0x3f8] sm:%s146] %v663
                %v665 = vld [vmem:[%s153 + $0xbf4] sm:%s146]
                %666 = vst [vmem:[%s154 + $0x3fc] sm:%s146] %v665
                %v667 = vld [vmem:[%s153 + $0xc00] sm:%s146]
                %668 = vst [vmem:[%s154 + $0x400] sm:%s146] %v667
                %v669 = vld [vmem:[%s153 + $0xc0c] sm:%s146]
                %670 = vst [vmem:[%s154 + $0x404] sm:%s146] %v669
                %v671 = vld [vmem:[%s153 + $0xc18] sm:%s146]
                %672 = vst [vmem:[%s154 + $0x408] sm:%s146] %v671
                %v673 = vld [vmem:[%s153 + $0xc24] sm:%s146]
                %674 = vst [vmem:[%s154 + $0x40c] sm:%s146] %v673
                %v675 = vld [vmem:[%s153 + $0xc30] sm:%s146]
                %676 = vst [vmem:[%s154 + $0x410] sm:%s146] %v675
                %v677 = vld [vmem:[%s153 + $0xc3c] sm:%s146]
                %678 = vst [vmem:[%s154 + $0x414] sm:%s146] %v677
                %v679 = vld [vmem:[%s153 + $0xc48] sm:%s146]
                %680 = vst [vmem:[%s154 + $0x418] sm:%s146] %v679
                %v681 = vld [vmem:[%s153 + $0xc54] sm:%s146]
                %682 = vst [vmem:[%s154 + $0x41c] sm:%s146] %v681
                %v683 = vld [vmem:[%s153 + $0xc60] sm:%s146]
                %684 = vst [vmem:[%s154 + $0x420] sm:%s146] %v683
                %v685 = vld [vmem:[%s153 + $0xc6c] sm:%s146]
                %686 = vst [vmem:[%s154 + $0x424] sm:%s146] %v685
                %v687 = vld [vmem:[%s153 + $0xc78] sm:%s146]
                %688 = vst [vmem:[%s154 + $0x428] sm:%s146] %v687
                %v689 = vld [vmem:[%s153 + $0xc84] sm:%s146]
                %690 = vst [vmem:[%s154 + $0x42c] sm:%s146] %v689
                %v691 = vld [vmem:[%s153 + $0xc90] sm:%s146]
                %692 = vst [vmem:[%s154 + $0x430] sm:%s146] %v691
                %v693 = vld [vmem:[%s153 + $0xc9c] sm:%s146]
                %694 = vst [vmem:[%s154 + $0x434] sm:%s146] %v693
                %v695 = vld [vmem:[%s153 + $0xca8] sm:%s146]
                %696 = vst [vmem:[%s154 + $0x438] sm:%s146] %v695
                %v697 = vld [vmem:[%s153 + $0xcb4] sm:%s146]
                %698 = vst [vmem:[%s154 + $0x43c] sm:%s146] %v697
              $region41: #{block8.10} parent=35 // loop_footer
                %s152 = sadd.s32 1, %s148
              $region42: #{block8.10} parent=35 // loop_footer_branch
                %147 = sbr.rel target = $region38
              $region43: #{block8.10} parent=35 // loop_exit
                _
            $region36: #{block8.10} parent=27 // pred_fallthru
              _
          $region28: #{block8.10} parent=23 // pred_fallthru
            _
          %2377 = vnop
        $region24: #{block8.10} parent=19 // pred_fallthru
          _
        // Predicated region
        $region73: #{block8.10} parent=19 // pred_check
          %p2378 = pneg %p76
        $region74: #{block8.10} parent=19 // pred_check_branch
          %2380 = sbr.rel (%p2378) target = $region76
        $region75: #{block8.10} parent=19 // pred_region
          %p2381 = scmp.lt.s32.totalorder %s9, 2
          %s2382 = scalar_select %p2381, %s9, 2
          %s2383 = scalar_lea.vmem %s2, %s2382
        $region76: #{block8.10} parent=19 // pred_fallthru
          _
      $region20: #{block8.10} parent=5 // pred_fallthru
        _
      %p2384 = scmp.le.s32.totalorder 1, %s9
      %p2385 = scmp.lt.s32.totalorder %s9, 4
      %p2386 = pnand %p2384, %p2385
      %p2387 = pneg %p2386
      // Predicated region
      $region77: #{block8.10} parent=5 // pred_check
        _
      $region78: #{block8.10} parent=5 // pred_check_branch
        %2389 = sbr.rel (%p2386) target = $region80
      $region79: #{block8.10} parent=5 // pred_region
        %s2390 = ssub.s32 %s9, 1
        %s2391 = sand.u32 %s43, 1
        %s2392 = sand.u32 %s43, 1
        %s2393 = smul.addr %s2392, 1088
        %s2394 = scalar_lea.vmem [#allocation2], %s2393
        // Predicated region
        $region81: #{block8.10} parent=79 // pred_check
          %p2395 = pneg %p56
        $region82: #{block8.10} parent=79 // pred_check_branch
          %2397 = sbr.rel (%p2395) target = $region84
        $region83: #{block8.10} parent=79 // pred_region
          _
        $region84: #{block8.10} parent=79 // pred_fallthru
          _
        %p2398 = pneg %p30
        %p2399 = pneg %p27
        %s2400 = sand.u32 %s43, 1
        %s2401 = sand.u32 %s43, 1
        %s2402 = smul.addr %s2401, 1088
        %s2403 = scalar_lea.vmem [#allocation2], %s2402
        %p2404 = pneg %p56
        %p2405 = pneg %p53
        %p2406 = scmp.lt.s32.totalorder %s14, 2
        %s2407 = scalar_select %p2406, %s14, 2
        %s2408 = scalar_lea.vmem %s2, %s2407
        %p2409 = pneg %p82
        %p2410 = pneg %p79
        %p2411 = pneg %p108
        %p2412 = pneg %p105
        %s2413 = sand.u32 %s95, 1
        %s2414 = sand.u32 %s95, 1
        %s2415 = smul.addr %s2414, 32
        %s2416 = scalar_lea.vmem [#allocation3], %s2415
        %p2417 = scmp.lt.s32.totalorder %s14, 2
        %s2418 = scalar_select %p2417, %s14, 2
        %s2419 = scalar_lea.vmem %s2, %s2418
        %v2420 = vld [vmem:[%s0] sm:$0xff]
        %v2421 = vld [vmem:[%s0 + $0x8] sm:$0xff]
        %v2422 = vld [vmem:[%s0 + $0x10] sm:$0xff]
        %v2423 = vld [vmem:[%s0 + $0x18] sm:$0xff]
        %v2424 = vld [vmem:[%s0 + $0x20] sm:$0xff]
        %v2425 = vld [vmem:[%s0 + $0x28] sm:$0xff]
        %v2426 = vld [vmem:[%s0 + $0x30] sm:$0xff]
        %v2427 = vld [vmem:[%s0 + $0x38] sm:$0xff]
        %v2428 = vld [vmem:[%s0 + $0x40] sm:$0xf]
        %v2429 = vld [vmem:[%s0 + $0x44] sm:$0xff]
        %v2430 = vld [vmem:[%s0 + $0x4c] sm:$0xff]
        %v2431 = vld [vmem:[%s0 + $0x54] sm:$0xff]
        %v2432 = vld [vmem:[%s0 + $0x5c] sm:$0xff]
        %v2433 = vld [vmem:[%s0 + $0x64] sm:$0xff]
        %v2434 = vld [vmem:[%s0 + $0x6c] sm:$0xff]
        %v2435 = vld [vmem:[%s0 + $0x74] sm:$0xff]
        %v2436 = vld [vmem:[%s0 + $0x7c] sm:$0xff]
        %v2437 = vld [vmem:[%s0 + $0x84] sm:$0xf]
        %v2438 = vld [vmem:[%s0 + $0x88] sm:$0xff]
        %v2439 = vld [vmem:[%s0 + $0x90] sm:$0xff]
        %v2440 = vld [vmem:[%s0 + $0x98] sm:$0xff]
        %v2441 = vld [vmem:[%s0 + $0xa0] sm:$0xff]
        %v2442 = vld [vmem:[%s0 + $0xa8] sm:$0xff]
        %v2443 = vld [vmem:[%s0 + $0xb0] sm:$0xff]
        %v2444 = vld [vmem:[%s0 + $0xb8] sm:$0xff]
        %v2445 = vld [vmem:[%s0 + $0xc0] sm:$0xff]
        %v2446 = vld [vmem:[%s0 + $0xc8] sm:$0xf]
        %v2447 = vld [vmem:[%s0 + $0xcc] sm:$0xff]
        %v2448 = vld [vmem:[%s0 + $0xd4] sm:$0xff]
        %v2449 = vld [vmem:[%s0 + $0xdc] sm:$0xff]
        %v2450 = vld [vmem:[%s0 + $0xe4] sm:$0xff]
        %v2451 = vld [vmem:[%s0 + $0xec] sm:$0xff]
        %v2452 = vld [vmem:[%s0 + $0xf4] sm:$0xff]
        %v2453 = vld [vmem:[%s0 + $0xfc] sm:$0xff]
        %v2454 = vld [vmem:[%s0 + $0x104] sm:$0xff]
        %v2455 = vld [vmem:[%s0 + $0x10c] sm:$0xf]
        %v2456 = vld [vmem:[%s2394] sm:$0xf]
        %v2457 = vld [vmem:[%s2394 + $0x4] sm:$0xf]
        %v2458 = vld [vmem:[%s2394 + $0x8] sm:$0xf]
        %v2459 = vld [vmem:[%s2394 + $0xc] sm:$0xf]
        %v2460 = vld [vmem:[%s2394 + $0x10] sm:$0xf]
        %v2461 = vld [vmem:[%s2394 + $0x14] sm:$0xf]
        %v2462 = vld [vmem:[%s2394 + $0x18] sm:$0xf]
        %v2463 = vld [vmem:[%s2394 + $0x1c] sm:$0xf]
        %v2464 = vld [vmem:[%s2394 + $0x20] sm:$0xf]
        %v2465 = vld [vmem:[%s2394 + $0x24] sm:$0xf]
        %v2466 = vld [vmem:[%s2394 + $0x28] sm:$0xf]
        %v2467 = vld [vmem:[%s2394 + $0x2c] sm:$0xf]
        %v2468 = vld [vmem:[%s2394 + $0x30] sm:$0xf]
        %v2469 = vld [vmem:[%s2394 + $0x34] sm:$0xf]
        %v2470 = vld [vmem:[%s2394 + $0x38] sm:$0xf]
        %v2471 = vld [vmem:[%s2394 + $0x3c] sm:$0xf]
        %v2472 = vld [vmem:[%s2394 + $0x40] sm:$0xf]
        %v2473 = vld [vmem:[%s2394 + $0x44] sm:$0xf]
        %v2474 = vld [vmem:[%s2394 + $0x48] sm:$0xf]
        %v2475 = vld [vmem:[%s2394 + $0x4c] sm:$0xf]
        %v2476 = vld [vmem:[%s2394 + $0x50] sm:$0xf]
        %v2477 = vld [vmem:[%s2394 + $0x54] sm:$0xf]
        %v2478 = vld [vmem:[%s2394 + $0x58] sm:$0xf]
        %v2479 = vld [vmem:[%s2394 + $0x5c] sm:$0xf]
        %v2480 = vld [vmem:[%s2394 + $0x60] sm:$0xf]
        %v2481 = vld [vmem:[%s2394 + $0x64] sm:$0xf]
        %v2482 = vld [vmem:[%s2394 + $0x68] sm:$0xf]
        %v2483 = vld [vmem:[%s2394 + $0x6c] sm:$0xf]
        %v2484 = vld [vmem:[%s2394 + $0x70] sm:$0xf]
        %v2485 = vld [vmem:[%s2394 + $0x74] sm:$0xf]
        %v2486 = vld [vmem:[%s2394 + $0x78] sm:$0xf]
        %v2487 = vld [vmem:[%s2394 + $0x7c] sm:$0xf]
        %v2488 = vld [vmem:[%s2394 + $0x80] sm:$0xf]
        %v2489 = vld [vmem:[%s2394 + $0x84] sm:$0xf]
        %v2490 = vld [vmem:[%s2394 + $0x88] sm:$0xf]
        %v2491 = vld [vmem:[%s2394 + $0x8c] sm:$0xf]
        %v2492 = vld [vmem:[%s2394 + $0x90] sm:$0xf]
        %v2493 = vld [vmem:[%s2394 + $0x94] sm:$0xf]
        %v2494 = vld [vmem:[%s2394 + $0x98] sm:$0xf]
        %v2495 = vld [vmem:[%s2394 + $0x9c] sm:$0xf]
        %v2496 = vld [vmem:[%s2394 + $0xa0] sm:$0xf]
        %v2497 = vld [vmem:[%s2394 + $0xa4] sm:$0xf]
        %v2498 = vld [vmem:[%s2394 + $0xa8] sm:$0xf]
        %v2499 = vld [vmem:[%s2394 + $0xac] sm:$0xf]
        %v2500 = vld [vmem:[%s2394 + $0xb0] sm:$0xf]
        %v2501 = vld [vmem:[%s2394 + $0xb4] sm:$0xf]
        %v2502 = vld [vmem:[%s2394 + $0xb8] sm:$0xf]
        %v2503 = vld [vmem:[%s2394 + $0xbc] sm:$0xf]
        %v2504 = vld [vmem:[%s2394 + $0xc0] sm:$0xf]
        %v2505 = vld [vmem:[%s2394 + $0xc4] sm:$0xf]
        %v2506 = vld [vmem:[%s2394 + $0xc8] sm:$0xf]
        %v2507 = vld [vmem:[%s2394 + $0xcc] sm:$0xf]
        %v2508 = vld [vmem:[%s2394 + $0xd0] sm:$0xf]
        %v2509 = vld [vmem:[%s2394 + $0xd4] sm:$0xf]
        %v2510 = vld [vmem:[%s2394 + $0xd8] sm:$0xf]
        %v2511 = vld [vmem:[%s2394 + $0xdc] sm:$0xf]
        %v2512 = vld [vmem:[%s2394 + $0xe0] sm:$0xf]
        %v2513 = vld [vmem:[%s2394 + $0xe4] sm:$0xf]
        %v2514 = vld [vmem:[%s2394 + $0xe8] sm:$0xf]
        %v2515 = vld [vmem:[%s2394 + $0xec] sm:$0xf]
        %v2516 = vld [vmem:[%s2394 + $0xf0] sm:$0xf]
        %v2517 = vld [vmem:[%s2394 + $0xf4] sm:$0xf]
        %v2518 = vld [vmem:[%s2394 + $0xf8] sm:$0xf]
        %v2519 = vld [vmem:[%s2394 + $0xfc] sm:$0xf]
        %v2520 = vld [vmem:[%s2394 + $0x100] sm:$0xf]
        %v2521 = vld [vmem:[%s2394 + $0x104] sm:$0xf]
        %v2522 = vld [vmem:[%s2394 + $0x108] sm:$0xf]
        %v2523 = vld [vmem:[%s2394 + $0x10c] sm:$0xf]
        %v2524 = vld [vmem:[%s2394 + $0x110] sm:$0xf]
        %v2525 = vld [vmem:[%s2394 + $0x114] sm:$0xf]
        %v2526 = vld [vmem:[%s2394 + $0x118] sm:$0xf]
        %v2527 = vld [vmem:[%s2394 + $0x11c] sm:$0xf]
        %v2528 = vld [vmem:[%s2394 + $0x120] sm:$0xf]
        %v2529 = vld [vmem:[%s2394 + $0x124] sm:$0xf]
        %v2530 = vld [vmem:[%s2394 + $0x128] sm:$0xf]
        %v2531 = vld [vmem:[%s2394 + $0x12c] sm:$0xf]
        %v2532 = vld [vmem:[%s2394 + $0x130] sm:$0xf]
        %v2533 = vld [vmem:[%s2394 + $0x134] sm:$0xf]
        %v2534 = vld [vmem:[%s2394 + $0x138] sm:$0xf]
        %v2535 = vld [vmem:[%s2394 + $0x13c] sm:$0xf]
        %v2536 = vld [vmem:[%s2394 + $0x140] sm:$0xf]
        %v2537 = vld [vmem:[%s2394 + $0x144] sm:$0xf]
        %v2538 = vld [vmem:[%s2394 + $0x148] sm:$0xf]
        %v2539 = vld [vmem:[%s2394 + $0x14c] sm:$0xf]
        %v2540 = vld [vmem:[%s2394 + $0x150] sm:$0xf]
        %v2541 = vld [vmem:[%s2394 + $0x154] sm:$0xf]
        %v2542 = vld [vmem:[%s2394 + $0x158] sm:$0xf]
        %v2543 = vld [vmem:[%s2394 + $0x15c] sm:$0xf]
        %v2544 = vld [vmem:[%s2394 + $0x160] sm:$0xf]
        %v2545 = vld [vmem:[%s2394 + $0x164] sm:$0xf]
        %v2546 = vld [vmem:[%s2394 + $0x168] sm:$0xf]
        %v2547 = vld [vmem:[%s2394 + $0x16c] sm:$0xf]
        %v2548 = vld [vmem:[%s2394 + $0x170] sm:$0xf]
        %v2549 = vld [vmem:[%s2394 + $0x174] sm:$0xf]
        %v2550 = vld [vmem:[%s2394 + $0x178] sm:$0xf]
        %v2551 = vld [vmem:[%s2394 + $0x17c] sm:$0xf]
        %v2552 = vld [vmem:[%s2394 + $0x180] sm:$0xf]
        %v2553 = vld [vmem:[%s2394 + $0x184] sm:$0xf]
        %v2554 = vld [vmem:[%s2394 + $0x188] sm:$0xf]
        %v2555 = vld [vmem:[%s2394 + $0x18c] sm:$0xf]
        %v2556 = vld [vmem:[%s2394 + $0x190] sm:$0xf]
        %v2557 = vld [vmem:[%s2394 + $0x194] sm:$0xf]
        %v2558 = vld [vmem:[%s2394 + $0x198] sm:$0xf]
        %v2559 = vld [vmem:[%s2394 + $0x19c] sm:$0xf]
        %v2560 = vld [vmem:[%s2394 + $0x1a0] sm:$0xf]
        %v2561 = vld [vmem:[%s2394 + $0x1a4] sm:$0xf]
        %v2562 = vld [vmem:[%s2394 + $0x1a8] sm:$0xf]
        %v2563 = vld [vmem:[%s2394 + $0x1ac] sm:$0xf]
        %v2564 = vld [vmem:[%s2394 + $0x1b0] sm:$0xf]
        %v2565 = vld [vmem:[%s2394 + $0x1b4] sm:$0xf]
        %v2566 = vld [vmem:[%s2394 + $0x1b8] sm:$0xf]
        %v2567 = vld [vmem:[%s2394 + $0x1bc] sm:$0xf]
        %v2568 = vld [vmem:[%s2394 + $0x1c0] sm:$0xf]
        %v2569 = vld [vmem:[%s2394 + $0x1c4] sm:$0xf]
        %v2570 = vld [vmem:[%s2394 + $0x1c8] sm:$0xf]
        %v2571 = vld [vmem:[%s2394 + $0x1cc] sm:$0xf]
        %v2572 = vld [vmem:[%s2394 + $0x1d0] sm:$0xf]
        %v2573 = vld [vmem:[%s2394 + $0x1d4] sm:$0xf]
        %v2574 = vld [vmem:[%s2394 + $0x1d8] sm:$0xf]
        %v2575 = vld [vmem:[%s2394 + $0x1dc] sm:$0xf]
        %v2576 = vld [vmem:[%s2394 + $0x1e0] sm:$0xf]
        %v2577 = vld [vmem:[%s2394 + $0x1e4] sm:$0xf]
        %v2578 = vld [vmem:[%s2394 + $0x1e8] sm:$0xf]
        %v2579 = vld [vmem:[%s2394 + $0x1ec] sm:$0xf]
        %v2580 = vld [vmem:[%s2394 + $0x1f0] sm:$0xf]
        %v2581 = vld [vmem:[%s2394 + $0x1f4] sm:$0xf]
        %v2582 = vld [vmem:[%s2394 + $0x1f8] sm:$0xf]
        %v2583 = vld [vmem:[%s2394 + $0x1fc] sm:$0xf]
        %v2584 = vld [vmem:[%s2394 + $0x200] sm:$0xf]
        %v2585 = vld [vmem:[%s2394 + $0x204] sm:$0xf]
        %v2586 = vld [vmem:[%s2394 + $0x208] sm:$0xf]
        %v2587 = vld [vmem:[%s2394 + $0x20c] sm:$0xf]
        %v2588 = vld [vmem:[%s2394 + $0x210] sm:$0xf]
        %v2589 = vld [vmem:[%s2394 + $0x214] sm:$0xf]
        %v2590 = vld [vmem:[%s2394 + $0x218] sm:$0xf]
        %v2591 = vld [vmem:[%s2394 + $0x21c] sm:$0xf]
        %v2592 = vld [vmem:[%s2394 + $0x220] sm:$0xf]
        %v2593 = vld [vmem:[%s2394 + $0x224] sm:$0xf]
        %v2594 = vld [vmem:[%s2394 + $0x228] sm:$0xf]
        %v2595 = vld [vmem:[%s2394 + $0x22c] sm:$0xf]
        %v2596 = vld [vmem:[%s2394 + $0x230] sm:$0xf]
        %v2597 = vld [vmem:[%s2394 + $0x234] sm:$0xf]
        %v2598 = vld [vmem:[%s2394 + $0x238] sm:$0xf]
        %v2599 = vld [vmem:[%s2394 + $0x23c] sm:$0xf]
        %v2600 = vld [vmem:[%s2394 + $0x240] sm:$0xf]
        %v2601 = vld [vmem:[%s2394 + $0x244] sm:$0xf]
        %v2602 = vld [vmem:[%s2394 + $0x248] sm:$0xf]
        %v2603 = vld [vmem:[%s2394 + $0x24c] sm:$0xf]
        %v2604 = vld [vmem:[%s2394 + $0x250] sm:$0xf]
        %v2605 = vld [vmem:[%s2394 + $0x254] sm:$0xf]
        %v2606 = vld [vmem:[%s2394 + $0x258] sm:$0xf]
        %v2607 = vld [vmem:[%s2394 + $0x25c] sm:$0xf]
        %v2608 = vld [vmem:[%s2394 + $0x260] sm:$0xf]
        %v2609 = vld [vmem:[%s2394 + $0x264] sm:$0xf]
        %v2610 = vld [vmem:[%s2394 + $0x268] sm:$0xf]
        %v2611 = vld [vmem:[%s2394 + $0x26c] sm:$0xf]
        %v2612 = vld [vmem:[%s2394 + $0x270] sm:$0xf]
        %v2613 = vld [vmem:[%s2394 + $0x274] sm:$0xf]
        %v2614 = vld [vmem:[%s2394 + $0x278] sm:$0xf]
        %v2615 = vld [vmem:[%s2394 + $0x27c] sm:$0xf]
        %v2616 = vld [vmem:[%s2394 + $0x280] sm:$0xf]
        %v2617 = vld [vmem:[%s2394 + $0x284] sm:$0xf]
        %v2618 = vld [vmem:[%s2394 + $0x288] sm:$0xf]
        %v2619 = vld [vmem:[%s2394 + $0x28c] sm:$0xf]
        %v2620 = vld [vmem:[%s2394 + $0x290] sm:$0xf]
        %v2621 = vld [vmem:[%s2394 + $0x294] sm:$0xf]
        %v2622 = vld [vmem:[%s2394 + $0x298] sm:$0xf]
        %v2623 = vld [vmem:[%s2394 + $0x29c] sm:$0xf]
        %v2624 = vld [vmem:[%s2394 + $0x2a0] sm:$0xf]
        %v2625 = vld [vmem:[%s2394 + $0x2a4] sm:$0xf]
        %v2626 = vld [vmem:[%s2394 + $0x2a8] sm:$0xf]
        %v2627 = vld [vmem:[%s2394 + $0x2ac] sm:$0xf]
        %v2628 = vld [vmem:[%s2394 + $0x2b0] sm:$0xf]
        %v2629 = vld [vmem:[%s2394 + $0x2b4] sm:$0xf]
        %v2630 = vld [vmem:[%s2394 + $0x2b8] sm:$0xf]
        %v2631 = vld [vmem:[%s2394 + $0x2bc] sm:$0xf]
        %v2632 = vld [vmem:[%s2394 + $0x2c0] sm:$0xf]
        %v2633 = vld [vmem:[%s2394 + $0x2c4] sm:$0xf]
        %v2634 = vld [vmem:[%s2394 + $0x2c8] sm:$0xf]
        %v2635 = vld [vmem:[%s2394 + $0x2cc] sm:$0xf]
        %v2636 = vld [vmem:[%s2394 + $0x2d0] sm:$0xf]
        %v2637 = vld [vmem:[%s2394 + $0x2d4] sm:$0xf]
        %v2638 = vld [vmem:[%s2394 + $0x2d8] sm:$0xf]
        %v2639 = vld [vmem:[%s2394 + $0x2dc] sm:$0xf]
        %v2640 = vld [vmem:[%s2394 + $0x2e0] sm:$0xf]
        %v2641 = vld [vmem:[%s2394 + $0x2e4] sm:$0xf]
        %v2642 = vld [vmem:[%s2394 + $0x2e8] sm:$0xf]
        %v2643 = vld [vmem:[%s2394 + $0x2ec] sm:$0xf]
        %v2644 = vld [vmem:[%s2394 + $0x2f0] sm:$0xf]
        %v2645 = vld [vmem:[%s2394 + $0x2f4] sm:$0xf]
        %v2646 = vld [vmem:[%s2394 + $0x2f8] sm:$0xf]
        %v2647 = vld [vmem:[%s2394 + $0x2fc] sm:$0xf]
        %v2648 = vld [vmem:[%s2394 + $0x300] sm:$0xf]
        %v2649 = vld [vmem:[%s2394 + $0x304] sm:$0xf]
        %v2650 = vld [vmem:[%s2394 + $0x308] sm:$0xf]
        %v2651 = vld [vmem:[%s2394 + $0x30c] sm:$0xf]
        %v2652 = vld [vmem:[%s2394 + $0x310] sm:$0xf]
        %v2653 = vld [vmem:[%s2394 + $0x314] sm:$0xf]
        %v2654 = vld [vmem:[%s2394 + $0x318] sm:$0xf]
        %v2655 = vld [vmem:[%s2394 + $0x31c] sm:$0xf]
        %v2656 = vld [vmem:[%s2394 + $0x320] sm:$0xf]
        %v2657 = vld [vmem:[%s2394 + $0x324] sm:$0xf]
        %v2658 = vld [vmem:[%s2394 + $0x328] sm:$0xf]
        %v2659 = vld [vmem:[%s2394 + $0x32c] sm:$0xf]
        %v2660 = vld [vmem:[%s2394 + $0x330] sm:$0xf]
        %v2661 = vld [vmem:[%s2394 + $0x334] sm:$0xf]
        %v2662 = vld [vmem:[%s2394 + $0x338] sm:$0xf]
        %v2663 = vld [vmem:[%s2394 + $0x33c] sm:$0xf]
        %v2664 = vld [vmem:[%s2394 + $0x340] sm:$0xf]
        %v2665 = vld [vmem:[%s2394 + $0x344] sm:$0xf]
        %v2666 = vld [vmem:[%s2394 + $0x348] sm:$0xf]
        %v2667 = vld [vmem:[%s2394 + $0x34c] sm:$0xf]
        %v2668 = vld [vmem:[%s2394 + $0x350] sm:$0xf]
        %v2669 = vld [vmem:[%s2394 + $0x354] sm:$0xf]
        %v2670 = vld [vmem:[%s2394 + $0x358] sm:$0xf]
        %v2671 = vld [vmem:[%s2394 + $0x35c] sm:$0xf]
        %v2672 = vld [vmem:[%s2394 + $0x360] sm:$0xf]
        %v2673 = vld [vmem:[%s2394 + $0x364] sm:$0xf]
        %v2674 = vld [vmem:[%s2394 + $0x368] sm:$0xf]
        %v2675 = vld [vmem:[%s2394 + $0x36c] sm:$0xf]
        %v2676 = vld [vmem:[%s2394 + $0x370] sm:$0xf]
        %v2677 = vld [vmem:[%s2394 + $0x374] sm:$0xf]
        %v2678 = vld [vmem:[%s2394 + $0x378] sm:$0xf]
        %v2679 = vld [vmem:[%s2394 + $0x37c] sm:$0xf]
        %v2680 = vld [vmem:[%s2394 + $0x380] sm:$0xf]
        %v2681 = vld [vmem:[%s2394 + $0x384] sm:$0xf]
        %v2682 = vld [vmem:[%s2394 + $0x388] sm:$0xf]
        %v2683 = vld [vmem:[%s2394 + $0x38c] sm:$0xf]
        %v2684 = vld [vmem:[%s2394 + $0x390] sm:$0xf]
        %v2685 = vld [vmem:[%s2394 + $0x394] sm:$0xf]
        %v2686 = vld [vmem:[%s2394 + $0x398] sm:$0xf]
        %v2687 = vld [vmem:[%s2394 + $0x39c] sm:$0xf]
        %v2688 = vld [vmem:[%s2394 + $0x3a0] sm:$0xf]
        %v2689 = vld [vmem:[%s2394 + $0x3a4] sm:$0xf]
        %v2690 = vld [vmem:[%s2394 + $0x3a8] sm:$0xf]
        %v2691 = vld [vmem:[%s2394 + $0x3ac] sm:$0xf]
        %v2692 = vld [vmem:[%s2394 + $0x3b0] sm:$0xf]
        %v2693 = vld [vmem:[%s2394 + $0x3b4] sm:$0xf]
        %v2694 = vld [vmem:[%s2394 + $0x3b8] sm:$0xf]
        %v2695 = vld [vmem:[%s2394 + $0x3bc] sm:$0xf]
        %v2696 = vld [vmem:[%s2394 + $0x3c0] sm:$0xf]
        %v2697 = vld [vmem:[%s2394 + $0x3c4] sm:$0xf]
        %v2698 = vld [vmem:[%s2394 + $0x3c8] sm:$0xf]
        %v2699 = vld [vmem:[%s2394 + $0x3cc] sm:$0xf]
        %v2700 = vld [vmem:[%s2394 + $0x3d0] sm:$0xf]
        %v2701 = vld [vmem:[%s2394 + $0x3d4] sm:$0xf]
        %v2702 = vld [vmem:[%s2394 + $0x3d8] sm:$0xf]
        %v2703 = vld [vmem:[%s2394 + $0x3dc] sm:$0xf]
        %v2704 = vld [vmem:[%s2394 + $0x3e0] sm:$0xf]
        %v2705 = vld [vmem:[%s2394 + $0x3e4] sm:$0xf]
        %v2706 = vld [vmem:[%s2394 + $0x3e8] sm:$0xf]
        %v2707 = vld [vmem:[%s2394 + $0x3ec] sm:$0xf]
        %v2708 = vld [vmem:[%s2394 + $0x3f0] sm:$0xf]
        %v2709 = vld [vmem:[%s2394 + $0x3f4] sm:$0xf]
        %v2710 = vld [vmem:[%s2394 + $0x3f8] sm:$0xf]
        %v2711 = vld [vmem:[%s2394 + $0x3fc] sm:$0xf]
        %v2712 = vld [vmem:[%s2394 + $0x400] sm:$0xf]
        %v2713 = vld [vmem:[%s2394 + $0x404] sm:$0xf]
        %v2714 = vld [vmem:[%s2394 + $0x408] sm:$0xf]
        %v2715 = vld [vmem:[%s2394 + $0x40c] sm:$0xf]
        %v2716 = vld [vmem:[%s2394 + $0x410] sm:$0xf]
        %v2717 = vld [vmem:[%s2394 + $0x414] sm:$0xf]
        %v2718 = vld [vmem:[%s2394 + $0x418] sm:$0xf]
        %v2719 = vld [vmem:[%s2394 + $0x41c] sm:$0xf]
        %v2720 = vld [vmem:[%s2394 + $0x420] sm:$0xf]
        %v2721 = vld [vmem:[%s2394 + $0x424] sm:$0xf]
        %v2722 = vld [vmem:[%s2394 + $0x428] sm:$0xf]
        %v2723 = vld [vmem:[%s2394 + $0x42c] sm:$0xf]
        %v2724 = vld [vmem:[%s2394 + $0x430] sm:$0xf]
        %v2725 = vld [vmem:[%s2394 + $0x434] sm:$0xf]
        %v2726 = vld [vmem:[%s2394 + $0x438] sm:$0xf]
        %v2727 = vld [vmem:[%s2394 + $0x43c] sm:$0xf]
        %v2728 = vld [vmem:[%s2419] sm:$0x1]
        %v2730 = vperm.slane %v2728, 0
        %v2768 = vunpack.c.l.b16 %v2420
        %v2769 = vunpack.c.h.b16 %v2420
        %v2770 = vunpack.c.l.b16 %v2421
        %v2771 = vunpack.c.h.b16 %v2421
        %v2772 = vunpack.c.l.b16 %v2422
        %v2773 = vunpack.c.h.b16 %v2422
        %v2774 = vunpack.c.l.b16 %v2423
        %v2775 = vunpack.c.h.b16 %v2423
        %v2776 = vunpack.c.l.b16 %v2424
        %v2777 = vunpack.c.h.b16 %v2424
        %v2778 = vunpack.c.l.b16 %v2425
        %v2779 = vunpack.c.h.b16 %v2425
        %v2780 = vunpack.c.l.b16 %v2426
        %v2781 = vunpack.c.h.b16 %v2426
        %v2782 = vunpack.c.l.b16 %v2427
        %v2783 = vunpack.c.h.b16 %v2427
        %v2784 = vunpack.c.l.b16 %v2428
        %v2785 = vunpack.c.l.b16 %v2429
        %v2786 = vunpack.c.h.b16 %v2429
        %v2787 = vunpack.c.l.b16 %v2430
        %v2788 = vunpack.c.h.b16 %v2430
        %v2789 = vunpack.c.l.b16 %v2431
        %v2790 = vunpack.c.h.b16 %v2431
        %v2791 = vunpack.c.l.b16 %v2432
        %v2792 = vunpack.c.h.b16 %v2432
        %v2793 = vunpack.c.l.b16 %v2433
        %v2794 = vunpack.c.h.b16 %v2433
        %v2795 = vunpack.c.l.b16 %v2434
        %v2796 = vunpack.c.h.b16 %v2434
        %v2797 = vunpack.c.l.b16 %v2435
        %v2798 = vunpack.c.h.b16 %v2435
        %v2799 = vunpack.c.l.b16 %v2436
        %v2800 = vunpack.c.h.b16 %v2436
        %v2801 = vunpack.c.l.b16 %v2437
        %v2802 = vunpack.c.l.b16 %v2438
        %v2803 = vunpack.c.h.b16 %v2438
        %v2804 = vunpack.c.l.b16 %v2439
        %v2805 = vunpack.c.h.b16 %v2439
        %v2806 = vunpack.c.l.b16 %v2440
        %v2807 = vunpack.c.h.b16 %v2440
        %v2808 = vunpack.c.l.b16 %v2441
        %v2809 = vunpack.c.h.b16 %v2441
        %v2810 = vunpack.c.l.b16 %v2442
        %v2811 = vunpack.c.h.b16 %v2442
        %v2812 = vunpack.c.l.b16 %v2443
        %v2813 = vunpack.c.h.b16 %v2443
        %v2814 = vunpack.c.l.b16 %v2444
        %v2815 = vunpack.c.h.b16 %v2444
        %v2816 = vunpack.c.l.b16 %v2445
        %v2817 = vunpack.c.h.b16 %v2445
        %v2818 = vunpack.c.l.b16 %v2446
        %v2819 = vunpack.c.l.b16 %v2447
        %v2820 = vunpack.c.h.b16 %v2447
        %v2821 = vunpack.c.l.b16 %v2448
        %v2822 = vunpack.c.h.b16 %v2448
        %v2823 = vunpack.c.l.b16 %v2449
        %v2824 = vunpack.c.h.b16 %v2449
        %v2825 = vunpack.c.l.b16 %v2450
        %v2826 = vunpack.c.h.b16 %v2450
        %v2827 = vunpack.c.l.b16 %v2451
        %v2828 = vunpack.c.h.b16 %v2451
        %v2829 = vunpack.c.l.b16 %v2452
        %v2830 = vunpack.c.h.b16 %v2452
        %v2831 = vunpack.c.l.b16 %v2453
        %v2832 = vunpack.c.h.b16 %v2453
        %v2833 = vunpack.c.l.b16 %v2454
        %v2834 = vunpack.c.h.b16 %v2454
        %v2835 = vunpack.c.l.b16 %v2455
        %v2836 = vpack.c.b16 %v2785, %v2768
        %v2837 = vpack.c.b16 %v2786, %v2769
        %v2838 = vpack.c.b16 %v2787, %v2770
        %v2839 = vpack.c.b16 %v2788, %v2771
        %v2840 = vpack.c.b16 %v2789, %v2772
        %v2841 = vpack.c.b16 %v2790, %v2773
        %v2842 = vpack.c.b16 %v2791, %v2774
        %v2843 = vpack.c.b16 %v2792, %v2775
        %v2844 = vpack.c.b16 %v2793, %v2776
        %v2845 = vpack.c.b16 %v2794, %v2777
        %v2846 = vpack.c.b16 %v2795, %v2778
        %v2847 = vpack.c.b16 %v2796, %v2779
        %v2848 = vpack.c.b16 %v2797, %v2780
        %v2849 = vpack.c.b16 %v2798, %v2781
        %v2850 = vpack.c.b16 %v2799, %v2782
        %v2851 = vpack.c.b16 %v2800, %v2783
        %v2852 = vpack.c.b16 %v2801, %v2784
        %v2853 = vpack.c.b16 %v2819, %v2802
        %v2854 = vpack.c.b16 %v2820, %v2803
        %v2855 = vpack.c.b16 %v2821, %v2804
        %v2856 = vpack.c.b16 %v2822, %v2805
        %v2857 = vpack.c.b16 %v2823, %v2806
        %v2858 = vpack.c.b16 %v2824, %v2807
        %v2859 = vpack.c.b16 %v2825, %v2808
        %v2860 = vpack.c.b16 %v2826, %v2809
        %v2861 = vpack.c.b16 %v2827, %v2810
        %v2862 = vpack.c.b16 %v2828, %v2811
        %v2863 = vpack.c.b16 %v2829, %v2812
        %v2864 = vpack.c.b16 %v2830, %v2813
        %v2865 = vpack.c.b16 %v2831, %v2814
        %v2866 = vpack.c.b16 %v2832, %v2815
        %v2867 = vpack.c.b16 %v2833, %v2816
        %v2868 = vpack.c.b16 %v2834, %v2817
        %v2869 = vpack.c.b16 %v2835, %v2818
        %v3176 = vunpack.c.l.b16 %v2456
        %v3177 = vunpack.c.l.b16 %v2457
        %v3178 = vunpack.c.l.b16 %v2458
        %v3179 = vunpack.c.l.b16 %v2459
        %v3180 = vunpack.c.l.b16 %v2460
        %v3181 = vunpack.c.l.b16 %v2461
        %v3182 = vunpack.c.l.b16 %v2462
        %v3183 = vunpack.c.l.b16 %v2463
        %v3184 = vunpack.c.l.b16 %v2464
        %v3185 = vunpack.c.l.b16 %v2465
        %v3186 = vunpack.c.l.b16 %v2466
        %v3187 = vunpack.c.l.b16 %v2467
        %v3188 = vunpack.c.l.b16 %v2468
        %v3189 = vunpack.c.l.b16 %v2469
        %v3190 = vunpack.c.l.b16 %v2470
        %v3191 = vunpack.c.l.b16 %v2471
        %v3192 = vunpack.c.l.b16 %v2472
        %v3193 = vunpack.c.l.b16 %v2473
        %v3194 = vunpack.c.l.b16 %v2474
        %v3195 = vunpack.c.l.b16 %v2475
        %v3196 = vunpack.c.l.b16 %v2476
        %v3197 = vunpack.c.l.b16 %v2477
        %v3198 = vunpack.c.l.b16 %v2478
        %v3199 = vunpack.c.l.b16 %v2479
        %v3200 = vunpack.c.l.b16 %v2480
        %v3201 = vunpack.c.l.b16 %v2481
        %v3202 = vunpack.c.l.b16 %v2482
        %v3203 = vunpack.c.l.b16 %v2483
        %v3204 = vunpack.c.l.b16 %v2484
        %v3205 = vunpack.c.l.b16 %v2485
        %v3206 = vunpack.c.l.b16 %v2486
        %v3207 = vunpack.c.l.b16 %v2487
        %v3208 = vunpack.c.l.b16 %v2488
        %v3209 = vunpack.c.l.b16 %v2489
        %v3210 = vunpack.c.l.b16 %v2490
        %v3211 = vunpack.c.l.b16 %v2491
        %v3212 = vunpack.c.l.b16 %v2492
        %v3213 = vunpack.c.l.b16 %v2493
        %v3214 = vunpack.c.l.b16 %v2494
        %v3215 = vunpack.c.l.b16 %v2495
        %v3216 = vunpack.c.l.b16 %v2496
        %v3217 = vunpack.c.l.b16 %v2497
        %v3218 = vunpack.c.l.b16 %v2498
        %v3219 = vunpack.c.l.b16 %v2499
        %v3220 = vunpack.c.l.b16 %v2500
        %v3221 = vunpack.c.l.b16 %v2501
        %v3222 = vunpack.c.l.b16 %v2502
        %v3223 = vunpack.c.l.b16 %v2503
        %v3224 = vunpack.c.l.b16 %v2504
        %v3225 = vunpack.c.l.b16 %v2505
        %v3226 = vunpack.c.l.b16 %v2506
        %v3227 = vunpack.c.l.b16 %v2507
        %v3228 = vunpack.c.l.b16 %v2508
        %v3229 = vunpack.c.l.b16 %v2509
        %v3230 = vunpack.c.l.b16 %v2510
        %v3231 = vunpack.c.l.b16 %v2511
        %v3232 = vunpack.c.l.b16 %v2512
        %v3233 = vunpack.c.l.b16 %v2513
        %v3234 = vunpack.c.l.b16 %v2514
        %v3235 = vunpack.c.l.b16 %v2515
        %v3236 = vunpack.c.l.b16 %v2516
        %v3237 = vunpack.c.l.b16 %v2517
        %v3238 = vunpack.c.l.b16 %v2518
        %v3239 = vunpack.c.l.b16 %v2519
        %v3240 = vunpack.c.l.b16 %v2520
        %v3241 = vunpack.c.l.b16 %v2521
        %v3242 = vunpack.c.l.b16 %v2522
        %v3243 = vunpack.c.l.b16 %v2523
        %v3244 = vunpack.c.l.b16 %v2524
        %v3245 = vunpack.c.l.b16 %v2525
        %v3246 = vunpack.c.l.b16 %v2526
        %v3247 = vunpack.c.l.b16 %v2527
        %v3248 = vunpack.c.l.b16 %v2528
        %v3249 = vunpack.c.l.b16 %v2529
        %v3250 = vunpack.c.l.b16 %v2530
        %v3251 = vunpack.c.l.b16 %v2531
        %v3252 = vunpack.c.l.b16 %v2532
        %v3253 = vunpack.c.l.b16 %v2533
        %v3254 = vunpack.c.l.b16 %v2534
        %v3255 = vunpack.c.l.b16 %v2535
        %v3256 = vunpack.c.l.b16 %v2536
        %v3257 = vunpack.c.l.b16 %v2537
        %v3258 = vunpack.c.l.b16 %v2538
        %v3259 = vunpack.c.l.b16 %v2539
        %v3260 = vunpack.c.l.b16 %v2540
        %v3261 = vunpack.c.l.b16 %v2541
        %v3262 = vunpack.c.l.b16 %v2542
        %v3263 = vunpack.c.l.b16 %v2543
        %v3264 = vunpack.c.l.b16 %v2544
        %v3265 = vunpack.c.l.b16 %v2545
        %v3266 = vunpack.c.l.b16 %v2546
        %v3267 = vunpack.c.l.b16 %v2547
        %v3268 = vunpack.c.l.b16 %v2548
        %v3269 = vunpack.c.l.b16 %v2549
        %v3270 = vunpack.c.l.b16 %v2550
        %v3271 = vunpack.c.l.b16 %v2551
        %v3272 = vunpack.c.l.b16 %v2552
        %v3273 = vunpack.c.l.b16 %v2553
        %v3274 = vunpack.c.l.b16 %v2554
        %v3275 = vunpack.c.l.b16 %v2555
        %v3276 = vunpack.c.l.b16 %v2556
        %v3277 = vunpack.c.l.b16 %v2557
        %v3278 = vunpack.c.l.b16 %v2558
        %v3279 = vunpack.c.l.b16 %v2559
        %v3280 = vunpack.c.l.b16 %v2560
        %v3281 = vunpack.c.l.b16 %v2561
        %v3282 = vunpack.c.l.b16 %v2562
        %v3283 = vunpack.c.l.b16 %v2563
        %v3284 = vunpack.c.l.b16 %v2564
        %v3285 = vunpack.c.l.b16 %v2565
        %v3286 = vunpack.c.l.b16 %v2566
        %v3287 = vunpack.c.l.b16 %v2567
        %v3288 = vunpack.c.l.b16 %v2568
        %v3289 = vunpack.c.l.b16 %v2569
        %v3290 = vunpack.c.l.b16 %v2570
        %v3291 = vunpack.c.l.b16 %v2571
        %v3292 = vunpack.c.l.b16 %v2572
        %v3293 = vunpack.c.l.b16 %v2573
        %v3294 = vunpack.c.l.b16 %v2574
        %v3295 = vunpack.c.l.b16 %v2575
        %v3296 = vunpack.c.l.b16 %v2576
        %v3297 = vunpack.c.l.b16 %v2577
        %v3298 = vunpack.c.l.b16 %v2578
        %v3299 = vunpack.c.l.b16 %v2579
        %v3300 = vunpack.c.l.b16 %v2580
        %v3301 = vunpack.c.l.b16 %v2581
        %v3302 = vunpack.c.l.b16 %v2582
        %v3303 = vunpack.c.l.b16 %v2583
        %v3304 = vunpack.c.l.b16 %v2584
        %v3305 = vunpack.c.l.b16 %v2585
        %v3306 = vunpack.c.l.b16 %v2586
        %v3307 = vunpack.c.l.b16 %v2587
        %v3308 = vunpack.c.l.b16 %v2588
        %v3309 = vunpack.c.l.b16 %v2589
        %v3310 = vunpack.c.l.b16 %v2590
        %v3311 = vunpack.c.l.b16 %v2591
        %v3312 = vunpack.c.l.b16 %v2592
        %v3313 = vunpack.c.l.b16 %v2593
        %v3314 = vunpack.c.l.b16 %v2594
        %v3315 = vunpack.c.l.b16 %v2595
        %v3316 = vunpack.c.l.b16 %v2596
        %v3317 = vunpack.c.l.b16 %v2597
        %v3318 = vunpack.c.l.b16 %v2598
        %v3319 = vunpack.c.l.b16 %v2599
        %v3320 = vunpack.c.l.b16 %v2600
        %v3321 = vunpack.c.l.b16 %v2601
        %v3322 = vunpack.c.l.b16 %v2602
        %v3323 = vunpack.c.l.b16 %v2603
        %v3324 = vunpack.c.l.b16 %v2604
        %v3325 = vunpack.c.l.b16 %v2605
        %v3326 = vunpack.c.l.b16 %v2606
        %v3327 = vunpack.c.l.b16 %v2607
        %v3328 = vunpack.c.l.b16 %v2608
        %v3329 = vunpack.c.l.b16 %v2609
        %v3330 = vunpack.c.l.b16 %v2610
        %v3331 = vunpack.c.l.b16 %v2611
        %v3332 = vunpack.c.l.b16 %v2612
        %v3333 = vunpack.c.l.b16 %v2613
        %v3334 = vunpack.c.l.b16 %v2614
        %v3335 = vunpack.c.l.b16 %v2615
        %v3336 = vunpack.c.l.b16 %v2616
        %v3337 = vunpack.c.l.b16 %v2617
        %v3338 = vunpack.c.l.b16 %v2618
        %v3339 = vunpack.c.l.b16 %v2619
        %v3340 = vunpack.c.l.b16 %v2620
        %v3341 = vunpack.c.l.b16 %v2621
        %v3342 = vunpack.c.l.b16 %v2622
        %v3343 = vunpack.c.l.b16 %v2623
        %v3344 = vunpack.c.l.b16 %v2624
        %v3345 = vunpack.c.l.b16 %v2625
        %v3346 = vunpack.c.l.b16 %v2626
        %v3347 = vunpack.c.l.b16 %v2627
        %v3348 = vunpack.c.l.b16 %v2628
        %v3349 = vunpack.c.l.b16 %v2629
        %v3350 = vunpack.c.l.b16 %v2630
        %v3351 = vunpack.c.l.b16 %v2631
        %v3352 = vunpack.c.l.b16 %v2632
        %v3353 = vunpack.c.l.b16 %v2633
        %v3354 = vunpack.c.l.b16 %v2634
        %v3355 = vunpack.c.l.b16 %v2635
        %v3356 = vunpack.c.l.b16 %v2636
        %v3357 = vunpack.c.l.b16 %v2637
        %v3358 = vunpack.c.l.b16 %v2638
        %v3359 = vunpack.c.l.b16 %v2639
        %v3360 = vunpack.c.l.b16 %v2640
        %v3361 = vunpack.c.l.b16 %v2641
        %v3362 = vunpack.c.l.b16 %v2642
        %v3363 = vunpack.c.l.b16 %v2643
        %v3364 = vunpack.c.l.b16 %v2644
        %v3365 = vunpack.c.l.b16 %v2645
        %v3366 = vunpack.c.l.b16 %v2646
        %v3367 = vunpack.c.l.b16 %v2647
        %v3368 = vunpack.c.l.b16 %v2648
        %v3369 = vunpack.c.l.b16 %v2649
        %v3370 = vunpack.c.l.b16 %v2650
        %v3371 = vunpack.c.l.b16 %v2651
        %v3372 = vunpack.c.l.b16 %v2652
        %v3373 = vunpack.c.l.b16 %v2653
        %v3374 = vunpack.c.l.b16 %v2654
        %v3375 = vunpack.c.l.b16 %v2655
        %v3376 = vunpack.c.l.b16 %v2656
        %v3377 = vunpack.c.l.b16 %v2657
        %v3378 = vunpack.c.l.b16 %v2658
        %v3379 = vunpack.c.l.b16 %v2659
        %v3380 = vunpack.c.l.b16 %v2660
        %v3381 = vunpack.c.l.b16 %v2661
        %v3382 = vunpack.c.l.b16 %v2662
        %v3383 = vunpack.c.l.b16 %v2663
        %v3384 = vunpack.c.l.b16 %v2664
        %v3385 = vunpack.c.l.b16 %v2665
        %v3386 = vunpack.c.l.b16 %v2666
        %v3387 = vunpack.c.l.b16 %v2667
        %v3388 = vunpack.c.l.b16 %v2668
        %v3389 = vunpack.c.l.b16 %v2669
        %v3390 = vunpack.c.l.b16 %v2670
        %v3391 = vunpack.c.l.b16 %v2671
        %v3392 = vunpack.c.l.b16 %v2672
        %v3393 = vunpack.c.l.b16 %v2673
        %v3394 = vunpack.c.l.b16 %v2674
        %v3395 = vunpack.c.l.b16 %v2675
        %v3396 = vunpack.c.l.b16 %v2676
        %v3397 = vunpack.c.l.b16 %v2677
        %v3398 = vunpack.c.l.b16 %v2678
        %v3399 = vunpack.c.l.b16 %v2679
        %v3400 = vunpack.c.l.b16 %v2680
        %v3401 = vunpack.c.l.b16 %v2681
        %v3402 = vunpack.c.l.b16 %v2682
        %v3403 = vunpack.c.l.b16 %v2683
        %v3404 = vunpack.c.l.b16 %v2684
        %v3405 = vunpack.c.l.b16 %v2685
        %v3406 = vunpack.c.l.b16 %v2686
        %v3407 = vunpack.c.l.b16 %v2687
        %v3408 = vunpack.c.l.b16 %v2688
        %v3409 = vunpack.c.l.b16 %v2689
        %v3410 = vunpack.c.l.b16 %v2690
        %v3411 = vunpack.c.l.b16 %v2691
        %v3412 = vunpack.c.l.b16 %v2692
        %v3413 = vunpack.c.l.b16 %v2693
        %v3414 = vunpack.c.l.b16 %v2694
        %v3415 = vunpack.c.l.b16 %v2695
        %v3416 = vunpack.c.l.b16 %v2696
        %v3417 = vunpack.c.l.b16 %v2697
        %v3418 = vunpack.c.l.b16 %v2698
        %v3419 = vunpack.c.l.b16 %v2699
        %v3420 = vunpack.c.l.b16 %v2700
        %v3421 = vunpack.c.l.b16 %v2701
        %v3422 = vunpack.c.l.b16 %v2702
        %v3423 = vunpack.c.l.b16 %v2703
        %v3424 = vunpack.c.l.b16 %v2704
        %v3425 = vunpack.c.l.b16 %v2705
        %v3426 = vunpack.c.l.b16 %v2706
        %v3427 = vunpack.c.l.b16 %v2707
        %v3428 = vunpack.c.l.b16 %v2708
        %v3429 = vunpack.c.l.b16 %v2709
        %v3430 = vunpack.c.l.b16 %v2710
        %v3431 = vunpack.c.l.b16 %v2711
        %v3432 = vunpack.c.l.b16 %v2712
        %v3433 = vunpack.c.l.b16 %v2713
        %v3434 = vunpack.c.l.b16 %v2714
        %v3435 = vunpack.c.l.b16 %v2715
        %v3436 = vunpack.c.l.b16 %v2716
        %v3437 = vunpack.c.l.b16 %v2717
        %v3438 = vunpack.c.l.b16 %v2718
        %v3439 = vunpack.c.l.b16 %v2719
        %v3440 = vunpack.c.l.b16 %v2720
        %v3441 = vunpack.c.l.b16 %v2721
        %v3442 = vunpack.c.l.b16 %v2722
        %v3443 = vunpack.c.l.b16 %v2723
        %v3444 = vunpack.c.l.b16 %v2724
        %v3445 = vunpack.c.l.b16 %v2725
        %v3446 = vunpack.c.l.b16 %v2726
        %v3447 = vunpack.c.l.b16 %v2727
        %v3448 = vpack.c.b16 %v3177, %v3176
        %v3449 = vpack.c.b16 %v3179, %v3178
        %v3450 = vpack.c.b16 %v3181, %v3180
        %v3451 = vpack.c.b16 %v3183, %v3182
        %v3452 = vpack.c.b16 %v3185, %v3184
        %v3453 = vpack.c.b16 %v3187, %v3186
        %v3454 = vpack.c.b16 %v3189, %v3188
        %v3455 = vpack.c.b16 %v3191, %v3190
        %v3456 = vpack.c.b16 %v3193, %v3192
        %v3457 = vpack.c.b16 %v3195, %v3194
        %v3458 = vpack.c.b16 %v3197, %v3196
        %v3459 = vpack.c.b16 %v3199, %v3198
        %v3460 = vpack.c.b16 %v3201, %v3200
        %v3461 = vpack.c.b16 %v3203, %v3202
        %v3462 = vpack.c.b16 %v3205, %v3204
        %v3463 = vpack.c.b16 %v3207, %v3206
        %v3464 = vpack.c.b16 %v3209, %v3208
        %v3465 = vpack.c.b16 %v3211, %v3210
        %v3466 = vpack.c.b16 %v3213, %v3212
        %v3467 = vpack.c.b16 %v3215, %v3214
        %v3468 = vpack.c.b16 %v3217, %v3216
        %v3469 = vpack.c.b16 %v3219, %v3218
        %v3470 = vpack.c.b16 %v3221, %v3220
        %v3471 = vpack.c.b16 %v3223, %v3222
        %v3472 = vpack.c.b16 %v3225, %v3224
        %v3473 = vpack.c.b16 %v3227, %v3226
        %v3474 = vpack.c.b16 %v3229, %v3228
        %v3475 = vpack.c.b16 %v3231, %v3230
        %v3476 = vpack.c.b16 %v3233, %v3232
        %v3477 = vpack.c.b16 %v3235, %v3234
        %v3478 = vpack.c.b16 %v3237, %v3236
        %v3479 = vpack.c.b16 %v3239, %v3238
        %v3480 = vpack.c.b16 %v3241, %v3240
        %v3481 = vpack.c.b16 %v3243, %v3242
        %v3482 = vpack.c.b16 %v3245, %v3244
        %v3483 = vpack.c.b16 %v3247, %v3246
        %v3484 = vpack.c.b16 %v3249, %v3248
        %v3485 = vpack.c.b16 %v3251, %v3250
        %v3486 = vpack.c.b16 %v3253, %v3252
        %v3487 = vpack.c.b16 %v3255, %v3254
        %v3488 = vpack.c.b16 %v3257, %v3256
        %v3489 = vpack.c.b16 %v3259, %v3258
        %v3490 = vpack.c.b16 %v3261, %v3260
        %v3491 = vpack.c.b16 %v3263, %v3262
        %v3492 = vpack.c.b16 %v3265, %v3264
        %v3493 = vpack.c.b16 %v3267, %v3266
        %v3494 = vpack.c.b16 %v3269, %v3268
        %v3495 = vpack.c.b16 %v3271, %v3270
        %v3496 = vpack.c.b16 %v3273, %v3272
        %v3497 = vpack.c.b16 %v3275, %v3274
        %v3498 = vpack.c.b16 %v3277, %v3276
        %v3499 = vpack.c.b16 %v3279, %v3278
        %v3500 = vpack.c.b16 %v3281, %v3280
        %v3501 = vpack.c.b16 %v3283, %v3282
        %v3502 = vpack.c.b16 %v3285, %v3284
        %v3503 = vpack.c.b16 %v3287, %v3286
        %v3504 = vpack.c.b16 %v3289, %v3288
        %v3505 = vpack.c.b16 %v3291, %v3290
        %v3506 = vpack.c.b16 %v3293, %v3292
        %v3507 = vpack.c.b16 %v3295, %v3294
        %v3508 = vpack.c.b16 %v3297, %v3296
        %v3509 = vpack.c.b16 %v3299, %v3298
        %v3510 = vpack.c.b16 %v3301, %v3300
        %v3511 = vpack.c.b16 %v3303, %v3302
        %v3512 = vpack.c.b16 %v3305, %v3304
        %v3513 = vpack.c.b16 %v3307, %v3306
        %v3514 = vpack.c.b16 %v3309, %v3308
        %v3515 = vpack.c.b16 %v3311, %v3310
        %v3516 = vpack.c.b16 %v3313, %v3312
        %v3517 = vpack.c.b16 %v3315, %v3314
        %v3518 = vpack.c.b16 %v3317, %v3316
        %v3519 = vpack.c.b16 %v3319, %v3318
        %v3520 = vpack.c.b16 %v3321, %v3320
        %v3521 = vpack.c.b16 %v3323, %v3322
        %v3522 = vpack.c.b16 %v3325, %v3324
        %v3523 = vpack.c.b16 %v3327, %v3326
        %v3524 = vpack.c.b16 %v3329, %v3328
        %v3525 = vpack.c.b16 %v3331, %v3330
        %v3526 = vpack.c.b16 %v3333, %v3332
        %v3527 = vpack.c.b16 %v3335, %v3334
        %v3528 = vpack.c.b16 %v3337, %v3336
        %v3529 = vpack.c.b16 %v3339, %v3338
        %v3530 = vpack.c.b16 %v3341, %v3340
        %v3531 = vpack.c.b16 %v3343, %v3342
        %v3532 = vpack.c.b16 %v3345, %v3344
        %v3533 = vpack.c.b16 %v3347, %v3346
        %v3534 = vpack.c.b16 %v3349, %v3348
        %v3535 = vpack.c.b16 %v3351, %v3350
        %v3536 = vpack.c.b16 %v3353, %v3352
        %v3537 = vpack.c.b16 %v3355, %v3354
        %v3538 = vpack.c.b16 %v3357, %v3356
        %v3539 = vpack.c.b16 %v3359, %v3358
        %v3540 = vpack.c.b16 %v3361, %v3360
        %v3541 = vpack.c.b16 %v3363, %v3362
        %v3542 = vpack.c.b16 %v3365, %v3364
        %v3543 = vpack.c.b16 %v3367, %v3366
        %v3544 = vpack.c.b16 %v3369, %v3368
        %v3545 = vpack.c.b16 %v3371, %v3370
        %v3546 = vpack.c.b16 %v3373, %v3372
        %v3547 = vpack.c.b16 %v3375, %v3374
        %v3548 = vpack.c.b16 %v3377, %v3376
        %v3549 = vpack.c.b16 %v3379, %v3378
        %v3550 = vpack.c.b16 %v3381, %v3380
        %v3551 = vpack.c.b16 %v3383, %v3382
        %v3552 = vpack.c.b16 %v3385, %v3384
        %v3553 = vpack.c.b16 %v3387, %v3386
        %v3554 = vpack.c.b16 %v3389, %v3388
        %v3555 = vpack.c.b16 %v3391, %v3390
        %v3556 = vpack.c.b16 %v3393, %v3392
        %v3557 = vpack.c.b16 %v3395, %v3394
        %v3558 = vpack.c.b16 %v3397, %v3396
        %v3559 = vpack.c.b16 %v3399, %v3398
        %v3560 = vpack.c.b16 %v3401, %v3400
        %v3561 = vpack.c.b16 %v3403, %v3402
        %v3562 = vpack.c.b16 %v3405, %v3404
        %v3563 = vpack.c.b16 %v3407, %v3406
        %v3564 = vpack.c.b16 %v3409, %v3408
        %v3565 = vpack.c.b16 %v3411, %v3410
        %v3566 = vpack.c.b16 %v3413, %v3412
        %v3567 = vpack.c.b16 %v3415, %v3414
        %v3568 = vpack.c.b16 %v3417, %v3416
        %v3569 = vpack.c.b16 %v3419, %v3418
        %v3570 = vpack.c.b16 %v3421, %v3420
        %v3571 = vpack.c.b16 %v3423, %v3422
        %v3572 = vpack.c.b16 %v3425, %v3424
        %v3573 = vpack.c.b16 %v3427, %v3426
        %v3574 = vpack.c.b16 %v3429, %v3428
        %v3575 = vpack.c.b16 %v3431, %v3430
        %v3576 = vpack.c.b16 %v3433, %v3432
        %v3577 = vpack.c.b16 %v3435, %v3434
        %v3578 = vpack.c.b16 %v3437, %v3436
        %v3579 = vpack.c.b16 %v3439, %v3438
        %v3580 = vpack.c.b16 %v3441, %v3440
        %v3581 = vpack.c.b16 %v3443, %v3442
        %v3582 = vpack.c.b16 %v3445, %v3444
        %v3583 = vpack.c.b16 %v3447, %v3446
        %3720 = vmatpush.bf16.msra.mxu0 %v3455
        %3721 = vmatpush.bf16.msra.mxu0 %v3454
        %3722 = vmatpush.bf16.msra.mxu0 %v3453
        %3723 = vmatpush.bf16.msra.mxu0 %v3452
        %3724 = vmatpush.bf16.msra.mxu0 %v3451
        %3725 = vmatpush.bf16.msra.mxu0 %v3450
        %3726 = vmatpush.bf16.msra.mxu0 %v3449
        %3727 = vmatpush.bf16.msra.mxu0 %v3448
        %3728 = vmatmul.bf16.gmra.mxu0 %v2836
        %v3729 = vpop.f32.mrf.mxu0
        %v3730 = vadd.f32 %v2730, %v3729
        %v3731 = vpop.f32.mrf.mxu0
        %v3732 = vadd.f32 %v2730, %v3731
        %3733 = vmatmul.bf16.gmra.mxu0 %v2853
        %v3734 = vpop.f32.mrf.mxu0
        %v3735 = vadd.f32 %v2730, %v3734
        %v3736 = vpop.f32.mrf.mxu0
        %v3737 = vadd.f32 %v2730, %v3736
        %3738 = vdwg.mxu0
        %3739 = vmatpush.bf16.msra.mxu0 %v3463
        %3740 = vmatpush.bf16.msra.mxu0 %v3462
        %3741 = vmatpush.bf16.msra.mxu0 %v3461
        %3742 = vmatpush.bf16.msra.mxu0 %v3460
        %3743 = vmatpush.bf16.msra.mxu0 %v3459
        %3744 = vmatpush.bf16.msra.mxu0 %v3458
        %3745 = vmatpush.bf16.msra.mxu0 %v3457
        %3746 = vmatpush.bf16.msra.mxu0 %v3456
        %3747 = vmatmul.bf16.gmra.mxu0 %v2837
        %v3748 = vpop.f32.mrf.mxu0
        %v3749 = vadd.f32 %v3730, %v3748
        %v3750 = vpop.f32.mrf.mxu0
        %v3751 = vadd.f32 %v3732, %v3750
        %3752 = vmatmul.bf16.gmra.mxu0 %v2854
        %v3753 = vpop.f32.mrf.mxu0
        %v3754 = vadd.f32 %v3735, %v3753
        %v3755 = vpop.f32.mrf.mxu0
        %v3756 = vadd.f32 %v3737, %v3755
        %3757 = vdwg.mxu0
        %3758 = vmatpush.bf16.msra.mxu0 %v3471
        %3759 = vmatpush.bf16.msra.mxu0 %v3470
        %3760 = vmatpush.bf16.msra.mxu0 %v3469
        %3761 = vmatpush.bf16.msra.mxu0 %v3468
        %3762 = vmatpush.bf16.msra.mxu0 %v3467
        %3763 = vmatpush.bf16.msra.mxu0 %v3466
        %3764 = vmatpush.bf16.msra.mxu0 %v3465
        %3765 = vmatpush.bf16.msra.mxu0 %v3464
        %3766 = vmatmul.bf16.gmra.mxu0 %v2838
        %v3767 = vpop.f32.mrf.mxu0
        %v3768 = vadd.f32 %v3749, %v3767
        %v3769 = vpop.f32.mrf.mxu0
        %v3770 = vadd.f32 %v3751, %v3769
        %3771 = vmatmul.bf16.gmra.mxu0 %v2855
        %v3772 = vpop.f32.mrf.mxu0
        %v3773 = vadd.f32 %v3754, %v3772
        %v3774 = vpop.f32.mrf.mxu0
        %v3775 = vadd.f32 %v3756, %v3774
        %3776 = vdwg.mxu0
        %3777 = vmatpush.bf16.msra.mxu0 %v3479
        %3778 = vmatpush.bf16.msra.mxu0 %v3478
        %3779 = vmatpush.bf16.msra.mxu0 %v3477
        %3780 = vmatpush.bf16.msra.mxu0 %v3476
        %3781 = vmatpush.bf16.msra.mxu0 %v3475
        %3782 = vmatpush.bf16.msra.mxu0 %v3474
        %3783 = vmatpush.bf16.msra.mxu0 %v3473
        %3784 = vmatpush.bf16.msra.mxu0 %v3472
        %3785 = vmatmul.bf16.gmra.mxu0 %v2839
        %v3786 = vpop.f32.mrf.mxu0
        %v3787 = vadd.f32 %v3768, %v3786
        %v3788 = vpop.f32.mrf.mxu0
        %v3789 = vadd.f32 %v3770, %v3788
        %3790 = vmatmul.bf16.gmra.mxu0 %v2856
        %v3791 = vpop.f32.mrf.mxu0
        %v3792 = vadd.f32 %v3773, %v3791
        %v3793 = vpop.f32.mrf.mxu0
        %v3794 = vadd.f32 %v3775, %v3793
        %3795 = vdwg.mxu0
        %3796 = vmatpush.bf16.msra.mxu0 %v3487
        %3797 = vmatpush.bf16.msra.mxu0 %v3486
        %3798 = vmatpush.bf16.msra.mxu0 %v3485
        %3799 = vmatpush.bf16.msra.mxu0 %v3484
        %3800 = vmatpush.bf16.msra.mxu0 %v3483
        %3801 = vmatpush.bf16.msra.mxu0 %v3482
        %3802 = vmatpush.bf16.msra.mxu0 %v3481
        %3803 = vmatpush.bf16.msra.mxu0 %v3480
        %3804 = vmatmul.bf16.gmra.mxu0 %v2840
        %v3805 = vpop.f32.mrf.mxu0
        %v3806 = vadd.f32 %v3787, %v3805
        %v3807 = vpop.f32.mrf.mxu0
        %v3808 = vadd.f32 %v3789, %v3807
        %3809 = vmatmul.bf16.gmra.mxu0 %v2857
        %v3810 = vpop.f32.mrf.mxu0
        %v3811 = vadd.f32 %v3792, %v3810
        %v3812 = vpop.f32.mrf.mxu0
        %v3813 = vadd.f32 %v3794, %v3812
        %3814 = vdwg.mxu0
        %3815 = vmatpush.bf16.msra.mxu0 %v3495
        %3816 = vmatpush.bf16.msra.mxu0 %v3494
        %3817 = vmatpush.bf16.msra.mxu0 %v3493
        %3818 = vmatpush.bf16.msra.mxu0 %v3492
        %3819 = vmatpush.bf16.msra.mxu0 %v3491
        %3820 = vmatpush.bf16.msra.mxu0 %v3490
        %3821 = vmatpush.bf16.msra.mxu0 %v3489
        %3822 = vmatpush.bf16.msra.mxu0 %v3488
        %3823 = vmatmul.bf16.gmra.mxu0 %v2841
        %v3824 = vpop.f32.mrf.mxu0
        %v3825 = vadd.f32 %v3806, %v3824
        %v3826 = vpop.f32.mrf.mxu0
        %v3827 = vadd.f32 %v3808, %v3826
        %3828 = vmatmul.bf16.gmra.mxu0 %v2858
        %v3829 = vpop.f32.mrf.mxu0
        %v3830 = vadd.f32 %v3811, %v3829
        %v3831 = vpop.f32.mrf.mxu0
        %v3832 = vadd.f32 %v3813, %v3831
        %3833 = vdwg.mxu0
        %3834 = vmatpush.bf16.msra.mxu0 %v3503
        %3835 = vmatpush.bf16.msra.mxu0 %v3502
        %3836 = vmatpush.bf16.msra.mxu0 %v3501
        %3837 = vmatpush.bf16.msra.mxu0 %v3500
        %3838 = vmatpush.bf16.msra.mxu0 %v3499
        %3839 = vmatpush.bf16.msra.mxu0 %v3498
        %3840 = vmatpush.bf16.msra.mxu0 %v3497
        %3841 = vmatpush.bf16.msra.mxu0 %v3496
        %3842 = vmatmul.bf16.gmra.mxu0 %v2842
        %v3843 = vpop.f32.mrf.mxu0
        %v3844 = vadd.f32 %v3825, %v3843
        %v3845 = vpop.f32.mrf.mxu0
        %v3846 = vadd.f32 %v3827, %v3845
        %3847 = vmatmul.bf16.gmra.mxu0 %v2859
        %v3848 = vpop.f32.mrf.mxu0
        %v3849 = vadd.f32 %v3830, %v3848
        %v3850 = vpop.f32.mrf.mxu0
        %v3851 = vadd.f32 %v3832, %v3850
        %3852 = vdwg.mxu0
        %3853 = vmatpush.bf16.msra.mxu0 %v3511
        %3854 = vmatpush.bf16.msra.mxu0 %v3510
        %3855 = vmatpush.bf16.msra.mxu0 %v3509
        %3856 = vmatpush.bf16.msra.mxu0 %v3508
        %3857 = vmatpush.bf16.msra.mxu0 %v3507
        %3858 = vmatpush.bf16.msra.mxu0 %v3506
        %3859 = vmatpush.bf16.msra.mxu0 %v3505
        %3860 = vmatpush.bf16.msra.mxu0 %v3504
        %3861 = vmatmul.bf16.gmra.mxu0 %v2843
        %v3862 = vpop.f32.mrf.mxu0
        %v3863 = vadd.f32 %v3844, %v3862
        %v3864 = vpop.f32.mrf.mxu0
        %v3865 = vadd.f32 %v3846, %v3864
        %3866 = vmatmul.bf16.gmra.mxu0 %v2860
        %v3867 = vpop.f32.mrf.mxu0
        %v3868 = vadd.f32 %v3849, %v3867
        %v3869 = vpop.f32.mrf.mxu0
        %v3870 = vadd.f32 %v3851, %v3869
        %3871 = vdwg.mxu0
        %3872 = vmatpush.bf16.msra.mxu0 %v3519
        %3873 = vmatpush.bf16.msra.mxu0 %v3518
        %3874 = vmatpush.bf16.msra.mxu0 %v3517
        %3875 = vmatpush.bf16.msra.mxu0 %v3516
        %3876 = vmatpush.bf16.msra.mxu0 %v3515
        %3877 = vmatpush.bf16.msra.mxu0 %v3514
        %3878 = vmatpush.bf16.msra.mxu0 %v3513
        %3879 = vmatpush.bf16.msra.mxu0 %v3512
        %3880 = vmatmul.bf16.gmra.mxu0 %v2844
        %v3881 = vpop.f32.mrf.mxu0
        %v3882 = vadd.f32 %v3863, %v3881
        %v3883 = vpop.f32.mrf.mxu0
        %v3884 = vadd.f32 %v3865, %v3883
        %3885 = vmatmul.bf16.gmra.mxu0 %v2861
        %v3886 = vpop.f32.mrf.mxu0
        %v3887 = vadd.f32 %v3868, %v3886
        %v3888 = vpop.f32.mrf.mxu0
        %v3889 = vadd.f32 %v3870, %v3888
        %3890 = vdwg.mxu0
        %3891 = vmatpush.bf16.msra.mxu0 %v3527
        %3892 = vmatpush.bf16.msra.mxu0 %v3526
        %3893 = vmatpush.bf16.msra.mxu0 %v3525
        %3894 = vmatpush.bf16.msra.mxu0 %v3524
        %3895 = vmatpush.bf16.msra.mxu0 %v3523
        %3896 = vmatpush.bf16.msra.mxu0 %v3522
        %3897 = vmatpush.bf16.msra.mxu0 %v3521
        %3898 = vmatpush.bf16.msra.mxu0 %v3520
        %3899 = vmatmul.bf16.gmra.mxu0 %v2845
        %v3900 = vpop.f32.mrf.mxu0
        %v3901 = vadd.f32 %v3882, %v3900
        %v3902 = vpop.f32.mrf.mxu0
        %v3903 = vadd.f32 %v3884, %v3902
        %3904 = vmatmul.bf16.gmra.mxu0 %v2862
        %v3905 = vpop.f32.mrf.mxu0
        %v3906 = vadd.f32 %v3887, %v3905
        %v3907 = vpop.f32.mrf.mxu0
        %v3908 = vadd.f32 %v3889, %v3907
        %3909 = vdwg.mxu0
        %3910 = vmatpush.bf16.msra.mxu0 %v3535
        %3911 = vmatpush.bf16.msra.mxu0 %v3534
        %3912 = vmatpush.bf16.msra.mxu0 %v3533
        %3913 = vmatpush.bf16.msra.mxu0 %v3532
        %3914 = vmatpush.bf16.msra.mxu0 %v3531
        %3915 = vmatpush.bf16.msra.mxu0 %v3530
        %3916 = vmatpush.bf16.msra.mxu0 %v3529
        %3917 = vmatpush.bf16.msra.mxu0 %v3528
        %3918 = vmatmul.bf16.gmra.mxu0 %v2846
        %v3919 = vpop.f32.mrf.mxu0
        %v3920 = vadd.f32 %v3901, %v3919
        %v3921 = vpop.f32.mrf.mxu0
        %v3922 = vadd.f32 %v3903, %v3921
        %3923 = vmatmul.bf16.gmra.mxu0 %v2863
        %v3924 = vpop.f32.mrf.mxu0
        %v3925 = vadd.f32 %v3906, %v3924
        %v3926 = vpop.f32.mrf.mxu0
        %v3927 = vadd.f32 %v3908, %v3926
        %3928 = vdwg.mxu0
        %3929 = vmatpush.bf16.msra.mxu0 %v3543
        %3930 = vmatpush.bf16.msra.mxu0 %v3542
        %3931 = vmatpush.bf16.msra.mxu0 %v3541
        %3932 = vmatpush.bf16.msra.mxu0 %v3540
        %3933 = vmatpush.bf16.msra.mxu0 %v3539
        %3934 = vmatpush.bf16.msra.mxu0 %v3538
        %3935 = vmatpush.bf16.msra.mxu0 %v3537
        %3936 = vmatpush.bf16.msra.mxu0 %v3536
        %3937 = vmatmul.bf16.gmra.mxu0 %v2847
        %v3938 = vpop.f32.mrf.mxu0
        %v3939 = vadd.f32 %v3920, %v3938
        %v3940 = vpop.f32.mrf.mxu0
        %v3941 = vadd.f32 %v3922, %v3940
        %3942 = vmatmul.bf16.gmra.mxu0 %v2864
        %v3943 = vpop.f32.mrf.mxu0
        %v3944 = vadd.f32 %v3925, %v3943
        %v3945 = vpop.f32.mrf.mxu0
        %v3946 = vadd.f32 %v3927, %v3945
        %3947 = vdwg.mxu0
        %3948 = vmatpush.bf16.msra.mxu0 %v3551
        %3949 = vmatpush.bf16.msra.mxu0 %v3550
        %3950 = vmatpush.bf16.msra.mxu0 %v3549
        %3951 = vmatpush.bf16.msra.mxu0 %v3548
        %3952 = vmatpush.bf16.msra.mxu0 %v3547
        %3953 = vmatpush.bf16.msra.mxu0 %v3546
        %3954 = vmatpush.bf16.msra.mxu0 %v3545
        %3955 = vmatpush.bf16.msra.mxu0 %v3544
        %3956 = vmatmul.bf16.gmra.mxu0 %v2848
        %v3957 = vpop.f32.mrf.mxu0
        %v3958 = vadd.f32 %v3939, %v3957
        %v3959 = vpop.f32.mrf.mxu0
        %v3960 = vadd.f32 %v3941, %v3959
        %3961 = vmatmul.bf16.gmra.mxu0 %v2865
        %v3962 = vpop.f32.mrf.mxu0
        %v3963 = vadd.f32 %v3944, %v3962
        %v3964 = vpop.f32.mrf.mxu0
        %v3965 = vadd.f32 %v3946, %v3964
        %3966 = vdwg.mxu0
        %3967 = vmatpush.bf16.msra.mxu0 %v3559
        %3968 = vmatpush.bf16.msra.mxu0 %v3558
        %3969 = vmatpush.bf16.msra.mxu0 %v3557
        %3970 = vmatpush.bf16.msra.mxu0 %v3556
        %3971 = vmatpush.bf16.msra.mxu0 %v3555
        %3972 = vmatpush.bf16.msra.mxu0 %v3554
        %3973 = vmatpush.bf16.msra.mxu0 %v3553
        %3974 = vmatpush.bf16.msra.mxu0 %v3552
        %3975 = vmatmul.bf16.gmra.mxu0 %v2849
        %v3976 = vpop.f32.mrf.mxu0
        %v3977 = vadd.f32 %v3958, %v3976
        %v3978 = vpop.f32.mrf.mxu0
        %v3979 = vadd.f32 %v3960, %v3978
        %3980 = vmatmul.bf16.gmra.mxu0 %v2866
        %v3981 = vpop.f32.mrf.mxu0
        %v3982 = vadd.f32 %v3963, %v3981
        %v3983 = vpop.f32.mrf.mxu0
        %v3984 = vadd.f32 %v3965, %v3983
        %3985 = vdwg.mxu0
        %3986 = vmatpush.bf16.msra.mxu0 %v3567
        %3987 = vmatpush.bf16.msra.mxu0 %v3566
        %3988 = vmatpush.bf16.msra.mxu0 %v3565
        %3989 = vmatpush.bf16.msra.mxu0 %v3564
        %3990 = vmatpush.bf16.msra.mxu0 %v3563
        %3991 = vmatpush.bf16.msra.mxu0 %v3562
        %3992 = vmatpush.bf16.msra.mxu0 %v3561
        %3993 = vmatpush.bf16.msra.mxu0 %v3560
        %3994 = vmatmul.bf16.gmra.mxu0 %v2850
        %v3995 = vpop.f32.mrf.mxu0
        %v3996 = vadd.f32 %v3977, %v3995
        %v3997 = vpop.f32.mrf.mxu0
        %v3998 = vadd.f32 %v3979, %v3997
        %3999 = vmatmul.bf16.gmra.mxu0 %v2867
        %v4000 = vpop.f32.mrf.mxu0
        %v4001 = vadd.f32 %v3982, %v4000
        %v4002 = vpop.f32.mrf.mxu0
        %v4003 = vadd.f32 %v3984, %v4002
        %4004 = vdwg.mxu0
        %4005 = vmatpush.bf16.msra.mxu0 %v3575
        %4006 = vmatpush.bf16.msra.mxu0 %v3574
        %4007 = vmatpush.bf16.msra.mxu0 %v3573
        %4008 = vmatpush.bf16.msra.mxu0 %v3572
        %4009 = vmatpush.bf16.msra.mxu0 %v3571
        %4010 = vmatpush.bf16.msra.mxu0 %v3570
        %4011 = vmatpush.bf16.msra.mxu0 %v3569
        %4012 = vmatpush.bf16.msra.mxu0 %v3568
        %4013 = vmatmul.bf16.gmra.mxu0 %v2851
        %v4014 = vpop.f32.mrf.mxu0
        %v4015 = vadd.f32 %v3996, %v4014
        %v4016 = vpop.f32.mrf.mxu0
        %v4017 = vadd.f32 %v3998, %v4016
        %4018 = vmatmul.bf16.gmra.mxu0 %v2868
        %v4019 = vpop.f32.mrf.mxu0
        %v4020 = vadd.f32 %v4001, %v4019
        %v4021 = vpop.f32.mrf.mxu0
        %v4022 = vadd.f32 %v4003, %v4021
        %4023 = vdwg.mxu0
        %4024 = vmatpush.bf16.msra.mxu0 %v3583
        %4025 = vmatpush.bf16.msra.mxu0 %v3582
        %4026 = vmatpush.bf16.msra.mxu0 %v3581
        %4027 = vmatpush.bf16.msra.mxu0 %v3580
        %4028 = vmatpush.bf16.msra.mxu0 %v3579
        %4029 = vmatpush.bf16.msra.mxu0 %v3578
        %4030 = vmatpush.bf16.msra.mxu0 %v3577
        %4031 = vmatpush.bf16.msra.mxu0 %v3576
        %4032 = vmatmul.bf16.gmra.mxu0 %v2852
        %v4033 = vpop.f32.mrf.mxu0
        %v4034 = vadd.f32 %v4015, %v4033
        %v4035 = vpop.f32.mrf.mxu0
        %v4036 = vadd.f32 %v4017, %v4035
        %4037 = vmatmul.bf16.gmra.mxu0 %v2869
        %v4038 = vpop.f32.mrf.mxu0
        %v4039 = vadd.f32 %v4020, %v4038
        %v4040 = vpop.f32.mrf.mxu0
        %v4041 = vadd.f32 %v4022, %v4040
        %4042 = vdwg.mxu0
        %4043 = vst [vmem:[%s2416] sm:$0xff] %v4034
        %4044 = vst [vmem:[%s2416 + $0x8] sm:$0xff] %v4036
        %4045 = vst [vmem:[%s2416 + $0x10] sm:$0xff] %v4039
        %4046 = vst [vmem:[%s2416 + $0x18] sm:$0xff] %v4041
        %s4047 = sand.u32 %s95, 1
        %s4048 = sand.u32 %s95, 1
        %s4049 = smul.addr %s4048, 32
        %s4050 = scalar_lea.vmem [#allocation3], %s4049
        // Predicated region
        $region85: #{block8.10} parent=79 // pred_check
          %p4051 = pneg %p105
        $region86: #{block8.10} parent=79 // pred_check_branch
          %4053 = sbr.rel (%p4051) target = $region88
        $region87: #{block8.10} parent=79 // pred_region
          %s4054 = smul.addr %s14, 8
          %s4055 = scalar_lea.vmem %s3, %s4054
          // Predicated region
          $region89: #{block8.10} parent=87 // pred_check
            _
          $region90: #{block8.10} parent=87 // pred_check_branch
            %4057 = sbr.rel (0) target = $region92
          $region91: #{block8.10} parent=87 // pred_region
            // Predicated region
            $region93: #{block8.10} parent=91 // pred_check
              _
            $region94: #{block8.10} parent=91 // pred_check_branch
              %4059 = sbr.rel (0) target = $region96
            $region95: #{block8.10} parent=91 // pred_region
              // Predicated region
              $region108: #{block8.10} parent=95 // pred_check
                _
              $region109: #{block8.10} parent=95 // pred_check_branch
                %4081 = sbr.rel (0) target = $region111
              $region110: #{block8.10} parent=95 // pred_region
                loop: start=0, step=1, limit=1
                $region112: #{block8.10} parent=110 // loop_pre_header
                  _
                $region113: #{block8.10} parent=110 // loop_header
                  %s4083 = sphi 0, %s4087
                  %p4084 = scmp.ge.s32.totalorder %s4083, 1
                  %s4088 = sphi %s4050, %s4050
                  %s4089 = sphi %s4055, %s4055
                $region114: #{block8.10} parent=110 // loop_header_branch
                  %4086 = sbr.rel (%p4084) target = $region118
                $region115: #{block8.10} parent=110 // loop_body
                  %v4090 = vld [vmem:[%s4088] sm:$0xff]
                  %4091 = vst [vmem:[%s4089] sm:$0xff] %v4090
                  %v4092 = vld [vmem:[%s4088 + $0x8] sm:$0xff]
                  %4093 = vst [vmem:[%s4089 + $0x18] sm:$0xff] %v4092
                  %v4094 = vld [vmem:[%s4088 + $0x10] sm:$0xff]
                  %4095 = vst [vmem:[%s4089 + $0x30] sm:$0xff] %v4094
                  %v4096 = vld [vmem:[%s4088 + $0x18] sm:$0xff]
                  %4097 = vst [vmem:[%s4089 + $0x48] sm:$0xff] %v4096
                $region116: #{block8.10} parent=110 // loop_footer
                  %s4087 = sadd.s32 1, %s4083
                $region117: #{block8.10} parent=110 // loop_footer_branch
                  %4082 = sbr.rel target = $region113
                $region118: #{block8.10} parent=110 // loop_exit
                  _
              $region111: #{block8.10} parent=95 // pred_fallthru
                _
              // Predicated region
              $region119: #{block8.10} parent=95 // pred_check
                _
              $region120: #{block8.10} parent=95 // pred_check_branch
                %4099 = sbr.rel target = $region122
              $region121: #{block8.10} parent=95 // pred_region
                _
              $region122: #{block8.10} parent=95 // pred_fallthru
                _
            $region96: #{block8.10} parent=91 // pred_fallthru
              _
            // Predicated region
            $region97: #{block8.10} parent=91 // pred_check
              _
            $region98: #{block8.10} parent=91 // pred_check_branch
              %4061 = sbr.rel target = $region100
            $region99: #{block8.10} parent=91 // pred_region
              %s4063 = ssub.s32 256, 1
              loop: start=0, step=1, limit=1
              $region101: #{block8.10} parent=99 // loop_pre_header
                _
              $region102: #{block8.10} parent=99 // loop_header
                %s4065 = sphi 0, %s4069
                %p4066 = scmp.ge.s32.totalorder %s4065, 1
                %s4070 = sphi %s4050, %s4050
                %s4071 = sphi %s4055, %s4055
              $region103: #{block8.10} parent=99 // loop_header_branch
                %4068 = sbr.rel (%p4066) target = $region107
              $region104: #{block8.10} parent=99 // loop_body
                %v4072 = vld [vmem:[%s4070] sm:%s4063]
                %4073 = vst [vmem:[%s4071] sm:%s4063] %v4072
                %v4074 = vld [vmem:[%s4070 + $0x8] sm:%s4063]
                %4075 = vst [vmem:[%s4071 + $0x18] sm:%s4063] %v4074
                %v4076 = vld [vmem:[%s4070 + $0x10] sm:%s4063]
                %4077 = vst [vmem:[%s4071 + $0x30] sm:%s4063] %v4076
                %v4078 = vld [vmem:[%s4070 + $0x18] sm:%s4063]
                %4079 = vst [vmem:[%s4071 + $0x48] sm:%s4063] %v4078
              $region105: #{block8.10} parent=99 // loop_footer
                %s4069 = sadd.s32 1, %s4065
              $region106: #{block8.10} parent=99 // loop_footer_branch
                %4064 = sbr.rel target = $region102
              $region107: #{block8.10} parent=99 // loop_exit
                _
            $region100: #{block8.10} parent=91 // pred_fallthru
              _
          $region92: #{block8.10} parent=87 // pred_fallthru
            _
          %4100 = vnop
        $region88: #{block8.10} parent=79 // pred_fallthru
          _
      $region80: #{block8.10} parent=5 // pred_fallthru
        _
      %p4101 = scmp.le.s32.totalorder 2, %s9
      // Predicated region
      $region123: #{block8.10} parent=5 // pred_check
        %p4102 = pneg %p4101
      $region124: #{block8.10} parent=5 // pred_check_branch
        %4104 = sbr.rel (%p4102) target = $region126
      $region125: #{block8.10} parent=5 // pred_region
        %s4105 = ssub.s32 %s9, 2
        // Predicated region
        $region127: #{block8.10} parent=125 // pred_check
          %p4106 = pneg %p111
        $region128: #{block8.10} parent=125 // pred_check_branch
          %4108 = sbr.rel (%p4106) target = $region130
        $region129: #{block8.10} parent=125 // pred_region
          %s4109 = sand.u32 %s96, 1
          %s4110 = sand.u32 %s96, 1
          %s4111 = smul.addr %s4110, 32
          %s4112 = scalar_lea.vmem [#allocation3], %s4111
        $region130: #{block8.10} parent=125 // pred_fallthru
          _
      $region126: #{block8.10} parent=5 // pred_fallthru
        _
    $region6: #{block8.10} parent=1 // loop_footer
      %s13 = sadd.s32 1, %s9
    $region7: #{block8.10} parent=1 // loop_footer_branch
      %8 = sbr.rel target = $region3
    $region8: #{block8.10} parent=1 // loop_exit
      _

</llo_original>
